<compile_context>
chip_gen: v5e
topology: v5e:2x2
jax: 0.10.0
libtpu: 0.0.40
codegen_flags: <defaults>
</compile_context>

<pallas_src>
import functools

import jax
import jax.numpy as jnp
from jax.experimental import pallas as pl
from jax.experimental.pallas import tpu as pltpu


def _round_up(x, m):
    return (x + m - 1) // m * m


def _pad_geometry(H, W):
    """Row geometry of the flattened, zero-padded activation scratch (bf16 -> 16-row align)."""
    base = _round_up(W + 1, 16)                    # zero rows above the image
    pad = _round_up(base + H * W + W + 1, 16)      # total scratch rows (>= W+1 rows below)
    return base, pad


def _enlayer_kernel(x_ref, w1_ref, b1_ref, w2_ref, b2_ref, o_ref,
                    s1_ref, s2_ref, col1_ref, col2_ref, *, H, W):
    # x_ref  : (1, H*W, Cin)      bf16 input, channels on the lane axis
    # w1_ref : (9*Cin,  Cmid)     bf16, rows ordered (dy, dx, ci)
    # b1_ref : (1, Cmid)          f32
    # w2_ref : (9*Cmid, Cout)     bf16
    # b2_ref : (1, Cout)          f32
    # o_ref  : (1, H*W//2, 2*Cout) f32 lane-dense output slab (top|bottom halves)
    # s1_ref : (PAD, Cin)   bf16  padded conv1 input scratch
    # s2_ref : (PAD, Cmid)  bf16  padded conv2 input scratch (ReLU'd intermediate)
    # col1_ref: (H*W, 9*Cin)  bf16  im2col scratch for conv1
    # col2_ref: (H*W, 9*Cmid) bf16  im2col scratch for conv2
    HW = H * W
    half = HW // 2
    base, pad = _pad_geometry(H, W)
    c_in = s1_ref.shape[-1]
    c_mid = s2_ref.shape[-1]
    c_out = w2_ref.shape[-1]
    tail = pad - base - HW

    # W-boundary masks for the flattened layout: the dx==0 tap must not read the
    # previous row's last pixel, the dx==2 tap must not read the next row's first.
    col_idx = jax.lax.broadcasted_iota(jnp.int32, (HW, 1), 0) % W
    not_left = col_idx != 0
    not_right = col_idx != (W - 1)

    def fill_im2col(s_ref, col_ref, cin):
        # One (HW, cin) copy per tap; boundary zeroing folded into the fill so the
        # matmul itself sees no masks / extra adds.
        for dy in range(3):
            for dx in range(3):
                start = base + (dy - 1) * W + (dx - 1)          # static offset
                tap = s_ref[pl.ds(start, HW), :]                # (HW, cin) bf16
                if dx == 0:
                    tap = jnp.where(not_left, tap, 0)
                elif dx == 2:
                    tap = jnp.where(not_right, tap, 0)
                t = dy * 3 + dx
                col_ref[:, t * cin:(t + 1) * cin] = tap

    def conv_half(col_ref, w_ref, b_ref, row0):
        # single K = 9*cin MXU matmul over half the image rows, bias folded in f32
        y = jnp.dot(col_ref[pl.ds(row0, half), :], w_ref[...],
                    preferred_element_type=jnp.float32)
        return y + b_ref[...]                                   # (half, cout) f32

    # Zero the halo rows of both padded scratches (cheap; done every grid step so
    # the kernel stays correct however the grid is sharded across cores).
    s1_ref[pl.ds(0, base), :] = jnp.zeros((base, c_in), jnp.bfloat16)
    s1_ref[pl.ds(base + HW, tail), :] = jnp.zeros((tail, c_in), jnp.bfloat16)
    s2_ref[pl.ds(0, base), :] = jnp.zeros((base, c_mid), jnp.bfloat16)
    s2_ref[pl.ds(base + HW, tail), :] = jnp.zeros((tail, c_mid), jnp.bfloat16)

    # conv1: pad -> im2col -> two (HW/2, 576)@(576, Cmid) dots -> bias + ReLU (f32)
    s1_ref[pl.ds(base, HW), :] = x_ref[0]
    fill_im2col(s1_ref, col1_ref, c_in)
    for r in (0, half):
        h = jnp.maximum(conv_half(col1_ref, w1_ref, b1_ref, r), 0.0)
        s2_ref[pl.ds(base + r, half), :] = h.astype(jnp.bfloat16)   # stays in VMEM

    # conv2: same structure; results written as a lane-dense (HW/2, 2*Cout) slab.
    fill_im2col(s2_ref, col2_ref, c_mid)
    o_ref[0, :, 0:c_out] = conv_half(col2_ref, w2_ref, b2_ref, 0).astype(o_ref.dtype)
    o_ref[0, :, c_out:2 * c_out] = conv_half(col2_ref, w2_ref, b2_ref, half).astype(o_ref.dtype)


def en_layer_nhwc(x_nhwc, params):
    """Core EnLayer: NHWC in -> NHWC out.

    Use this entry point when stacking layers so activations never pay an
    NCHW<->NHWC HBM relayout between layers.
    """
    N, H, W, Cin = x_nhwc.shape
    Cmid = params["w1"].shape[-1]
    Cout = params["w2"].shape[-1]
    assert params["w1"].shape == (3, 3, Cin, Cmid)
    assert params["w2"].shape == (3, 3, Cmid, Cout)
    HW = H * W
    assert HW % 16 == 0, "flattened spatial dim must be a multiple of 16 (bf16 sublane packing)"

    # Flatten spatial dims; cast to bf16 once at the HBM boundary (the kernel uses
    # bf16 matmul operands anyway, so this only halves the input DMA bytes).
    x_flat = x_nhwc.reshape(N, HW, Cin).astype(jnp.bfloat16)

    # Weights: HWIO -> (9*Cin, Cout) rows ordered (dy, dx, ci); bf16 once. Biases f32.
    w1 = params["w1"].reshape(9 * Cin, Cmid).astype(jnp.bfloat16)
    w2 = params["w2"].reshape(9 * Cmid, Cout).astype(jnp.bfloat16)
    b1 = params["b1"].reshape(1, Cmid).astype(jnp.float32)
    b2 = params["b2"].reshape(1, Cout).astype(jnp.float32)

    _, pad = _pad_geometry(H, W)
    kernel = functools.partial(_enlayer_kernel, H=H, W=W)

    out_pairs = pl.pallas_call(
        kernel,
        out_shape=jax.ShapeDtypeStruct((N, HW // 2, 2 * Cout), jnp.float32),
        grid_spec=pltpu.PrefetchScalarGridSpec(
            num_scalar_prefetch=0,
            grid=(N,),
            in_specs=[
                pl.BlockSpec((1, HW, Cin), lambda n: (n, 0, 0)),
                # weight/bias blocks are grid-invariant (same block index every step,
                # so they are DMA'd only once by the pipeline)
                pl.BlockSpec((9 * Cin, Cmid), lambda n: (0, 0)),
                pl.BlockSpec((1, Cmid), lambda n: (0, 0)),
                pl.BlockSpec((9 * Cmid, Cout), lambda n: (0, 0)),
                pl.BlockSpec((1, Cout), lambda n: (0, 0)),
            ],
            out_specs=pl.BlockSpec((1, HW // 2, 2 * Cout), lambda n: (n, 0, 0)),
            scratch_shapes=[
                pltpu.VMEM((pad, Cin), jnp.bfloat16),        # padded conv1 input
                pltpu.VMEM((pad, Cmid), jnp.bfloat16),       # padded conv2 input
                pltpu.VMEM((HW, 9 * Cin), jnp.bfloat16),     # im2col for conv1
                pltpu.VMEM((HW, 9 * Cmid), jnp.bfloat16),    # im2col for conv2
            ],
        ),
        compiler_params=pltpu.CompilerParams(
            dimension_semantics=("parallel",)),
    )(x_flat, w1, b1, w2, b2)

    # Un-shuffle the lane-paired (top|bottom) halves back to NHWC.  These are pure
    # layout ops; XLA fuses them with whatever relayout the caller does next.
    y = out_pairs.reshape(N, HW // 2, 2, Cout)           # [n, i, j, c] = pixel j*HW/2 + i
    y = jnp.transpose(y, (0, 2, 1, 3)).reshape(N, H, W, Cout)
    return y


def en_layer(x_nchw, params):
    """EnLayer.forward with PyTorch semantics: NCHW in -> NCHW out (f32)."""
    y = en_layer_nhwc(jnp.transpose(x_nchw, (0, 2, 3, 1)), params)
    return jnp.transpose(y, (0, 3, 1, 2)).astype(x_nchw.dtype)


def init_params(key, in_channel=64, mid_channel=64, out_channel=64):
    k1, k2, k3, k4 = jax.random.split(key, 4)
    scale = 0.05
    return {
        "w1": scale * jax.random.normal(k1, (3, 3, in_channel, mid_channel), jnp.float32),
        "b1": scale * jax.random.normal(k2, (1, mid_channel), jnp.float32),
        "w2": scale * jax.random.normal(k3, (3, 3, mid_channel, out_channel), jnp.float32),
        "b2": scale * jax.random.normal(k4, (1, out_channel), jnp.float32),
    }


def _ref_forward(x_nchw, params):
    """Pure-JAX reference modelling the kernel's bf16 operands / f32 accumulation."""
    def conv(x_nhwc, w, b):
        xb = x_nhwc.astype(jnp.bfloat16).astype(jnp.float32)
        wb = w.astype(jnp.bfloat16).astype(jnp.float32)
        y = jax.lax.conv_general_dilated(
            xb, wb, window_strides=(1, 1), padding="SAME",
            dimension_numbers=("NHWC", "HWIO", "NHWC"),
            precision=jax.lax.Precision.HIGHEST)
        return y + b.reshape(1, 1, 1, -1)

    x = jnp.transpose(x_nchw, (0, 2, 3, 1))
    h = jnp.maximum(conv(x, params["w1"], params["b1"]), 0.0)
    y = conv(h, params["w2"], params["b2"])
    return jnp.transpose(y, (0, 3, 1, 2))


if __name__ == "__main__":
    key = jax.random.PRNGKey(0)
    kx, kp = jax.random.split(key)

    # Small shapes consistent with the module (in_channel defaults to 64).
    N, C, H, W = 2, 64, 16, 16
    x = jax.random.normal(kx, (N, C, H, W), jnp.float32)
    params = init_params(kp, in_channel=C)

    out = jax.block_until_ready(jax.jit(en_layer)(x, params))

    y_ref = _ref_forward(x, params)
    assert out.shape == (N, 64, H, W), out.shape
    max_err = float(jnp.max(jnp.abs(out - y_ref)))
    assert jnp.allclose(out, y_ref, rtol=1e-2, atol=1e-2), max_err
    print("KERNEL_OK")
</pallas_src>

<mosaic_0001>
module attributes {stable_mosaic.version = 11 : i64} {
  func.func @_enlayer_kernel(%arg0: i32, %arg1: memref<1x256x64xbf16, #tpu.memory_space<vmem>>, %arg2: memref<576x64xbf16, #tpu.memory_space<vmem>>, %arg3: memref<1x64xf32, #tpu.memory_space<vmem>>, %arg4: memref<576x64xbf16, #tpu.memory_space<vmem>>, %arg5: memref<1x64xf32, #tpu.memory_space<vmem>>, %arg6: memref<1x128x128xf32, #tpu.memory_space<vmem>>, %arg7: memref<320x64xbf16, #tpu.memory_space<vmem>>, %arg8: memref<320x64xbf16, #tpu.memory_space<vmem>>, %arg9: memref<256x576xbf16, #tpu.memory_space<vmem>>, %arg10: memref<256x576xbf16, #tpu.memory_space<vmem>>) attributes {dimension_semantics = [#tpu.dimension_semantics<parallel>], iteration_bounds = array<i64: 2>, scalar_prefetch = 0 : i64, scratch_operands = 4 : i64, tpu.core_type = #tpu.core_type<tc>, window_params = [{transform_indices = @transform_0, window_bounds = array<i64: 1, 256, 64>}, {pipeline_mode = #tpu.pipeline_mode<synchronous>, transform_indices = @transform_1, window_bounds = array<i64: 576, 64>}, {pipeline_mode = #tpu.pipeline_mode<synchronous>, transform_indices = @transform_2, window_bounds = array<i64: 1, 64>}, {pipeline_mode = #tpu.pipeline_mode<synchronous>, transform_indices = @transform_3, window_bounds = array<i64: 576, 64>}, {pipeline_mode = #tpu.pipeline_mode<synchronous>, transform_indices = @transform_4, window_bounds = array<i64: 1, 64>}, {transform_indices = @transform_5, window_bounds = array<i64: 1, 128, 128>}]} {
    %0 = tpu.iota {dimensions = array<i32: 0>} : vector<256x1xi32>
    %c16_i32 = arith.constant 16 : i32
    %c0_i32 = arith.constant 0 : i32
    %1 = arith.cmpi eq, %c16_i32, %c0_i32 : i32
    %c1_i32 = arith.constant 1 : i32
    %2 = arith.select %1, %c1_i32, %c16_i32 : i32
    %3 = vector.broadcast %2 : i32 to vector<256x1xi32>
    %4 = arith.remsi %0, %3 : vector<256x1xi32>
    %c0_i32_0 = arith.constant 0 : i32
    %5 = vector.broadcast %c0_i32_0 : i32 to vector<256x1xi32>
    %6 = arith.cmpi ne, %4, %5 : vector<256x1xi32>
    %c0_i32_1 = arith.constant 0 : i32
    %7 = vector.broadcast %c0_i32_1 : i32 to vector<256x1xi32>
    %8 = arith.cmpi slt, %4, %7 : vector<256x1xi32>
    %c0_i32_2 = arith.constant 0 : i32
    %9 = arith.cmpi slt, %2, %c0_i32_2 : i32
    %10 = vector.broadcast %9 : i1 to vector<256x1xi1>
    %11 = vector.broadcast %10 : vector<256x1xi1> to vector<256x1xi1>
    %12 = arith.xori %8, %11 : vector<256x1xi1>
    %13 = arith.andi %12, %6 : vector<256x1xi1>
    %14 = vector.broadcast %2 : i32 to vector<256x1xi32>
    %15 = arith.addi %4, %14 : vector<256x1xi32>
    %16 = arith.select %13, %15, %4 : vector<256x1xi1>, vector<256x1xi32>
    %c0_i32_3 = arith.constant 0 : i32
    %17 = vector.broadcast %c0_i32_3 : i32 to vector<256x1xi32>
    %18 = arith.cmpi ne, %16, %17 : vector<256x1xi32>
    %c15_i32 = arith.constant 15 : i32
    %19 = vector.broadcast %c15_i32 : i32 to vector<256x1xi32>
    %20 = arith.cmpi ne, %16, %19 : vector<256x1xi32>
    %cst = arith.constant 0.000000e+00 : bf16
    %21 = vector.broadcast %cst : bf16 to vector<32x64xbf16>
    %c0 = arith.constant 0 : index
    %c0_4 = arith.constant 0 : index
    %22 = vector.load %arg7[%c0, %c0_4] : memref<320x64xbf16, #tpu.memory_space<vmem>>, vector<32x64xbf16>
    tpu.vector_store %arg7[%c0, %c0_4], %21 {strides = array<i32>} : memref<320x64xbf16, #tpu.memory_space<vmem>>, vector<32x64xbf16>,
    %cst_5 = arith.constant 0.000000e+00 : bf16
    %23 = vector.broadcast %cst_5 : bf16 to vector<32x64xbf16>
    %c288 = arith.constant 288 : index
    %c0_6 = arith.constant 0 : index
    %24 = vector.load %arg7[%c288, %c0_6] : memref<320x64xbf16, #tpu.memory_space<vmem>>, vector<32x64xbf16>
    tpu.vector_store %arg7[%c288, %c0_6], %23 {strides = array<i32>} : memref<320x64xbf16, #tpu.memory_space<vmem>>, vector<32x64xbf16>,
    %cst_7 = arith.constant 0.000000e+00 : bf16
    %25 = vector.broadcast %cst_7 : bf16 to vector<32x64xbf16>
    %c0_8 = arith.constant 0 : index
    %c0_9 = arith.constant 0 : index
    %26 = vector.load %arg8[%c0_8, %c0_9] : memref<320x64xbf16, #tpu.memory_space<vmem>>, vector<32x64xbf16>
    tpu.vector_store %arg8[%c0_8, %c0_9], %25 {strides = array<i32>} : memref<320x64xbf16, #tpu.memory_space<vmem>>, vector<32x64xbf16>,
    %cst_10 = arith.constant 0.000000e+00 : bf16
    %27 = vector.broadcast %cst_10 : bf16 to vector<32x64xbf16>
    %c288_11 = arith.constant 288 : index
    %c0_12 = arith.constant 0 : index
    %28 = vector.load %arg8[%c288_11, %c0_12] : memref<320x64xbf16, #tpu.memory_space<vmem>>, vector<32x64xbf16>
    tpu.vector_store %arg8[%c288_11, %c0_12], %27 {strides = array<i32>} : memref<320x64xbf16, #tpu.memory_space<vmem>>, vector<32x64xbf16>,
    %c0_13 = arith.constant 0 : index
    %c0_14 = arith.constant 0 : index
    %c0_15 = arith.constant 0 : index
    %29 = vector.load %arg1[%c0_13, %c0_14, %c0_15] : memref<1x256x64xbf16, #tpu.memory_space<vmem>>, vector<1x256x64xbf16>
    %30 = vector.shape_cast %29 : vector<1x256x64xbf16> to vector<256x64xbf16>
    %c32 = arith.constant 32 : index
    %c0_16 = arith.constant 0 : index
    %31 = vector.load %arg7[%c32, %c0_16] : memref<320x64xbf16, #tpu.memory_space<vmem>>, vector<256x64xbf16>
    tpu.vector_store %arg7[%c32, %c0_16], %30 {strides = array<i32>} : memref<320x64xbf16, #tpu.memory_space<vmem>>, vector<256x64xbf16>,
    %c15 = arith.constant 15 : index
    %c0_17 = arith.constant 0 : index
    %32 = vector.load %arg7[%c15, %c0_17] : memref<320x64xbf16, #tpu.memory_space<vmem>>, vector<256x64xbf16>
    %c0_i32_18 = arith.constant 0 : i32
    %33 = arith.sitofp %c0_i32_18 : i32 to bf16
    %34 = vector.shape_cast %18 : vector<256x1xi1> to vector<256x1xi1>
    %35 = vector.broadcast %34 : vector<256x1xi1> to vector<256x64xi1>
    %36 = vector.broadcast %33 : bf16 to vector<256x64xbf16>
    %37 = arith.select %35, %32, %36 : vector<256x64xi1>, vector<256x64xbf16>
    %c0_19 = arith.constant 0 : index
    %c0_20 = arith.constant 0 : index
    %38 = vector.load %arg9[%c0_19, %c0_20] : memref<256x576xbf16, #tpu.memory_space<vmem>>, vector<256x64xbf16>
    tpu.vector_store %arg9[%c0_19, %c0_20], %37 {strides = array<i32>} : memref<256x576xbf16, #tpu.memory_space<vmem>>, vector<256x64xbf16>,
    %c16 = arith.constant 16 : index
    %c0_21 = arith.constant 0 : index
    %39 = vector.load %arg7[%c16, %c0_21] : memref<320x64xbf16, #tpu.memory_space<vmem>>, vector<256x64xbf16>
    %c0_22 = arith.constant 0 : index
    %c64 = arith.constant 64 : index
    %40 = vector.load %arg9[%c0_22, %c64] : memref<256x576xbf16, #tpu.memory_space<vmem>>, vector<256x64xbf16>
    tpu.vector_store %arg9[%c0_22, %c64], %39 {strides = array<i32>} : memref<256x576xbf16, #tpu.memory_space<vmem>>, vector<256x64xbf16>,
    %c17 = arith.constant 17 : index
    %c0_23 = arith.constant 0 : index
    %41 = vector.load %arg7[%c17, %c0_23] : memref<320x64xbf16, #tpu.memory_space<vmem>>, vector<256x64xbf16>
    %c0_i32_24 = arith.constant 0 : i32
    %42 = arith.sitofp %c0_i32_24 : i32 to bf16
    %43 = vector.shape_cast %20 : vector<256x1xi1> to vector<256x1xi1>
    %44 = vector.broadcast %43 : vector<256x1xi1> to vector<256x64xi1>
    %45 = vector.broadcast %42 : bf16 to vector<256x64xbf16>
    %46 = arith.select %44, %41, %45 : vector<256x64xi1>, vector<256x64xbf16>
    %c0_25 = arith.constant 0 : index
    %c128 = arith.constant 128 : index
    %47 = vector.load %arg9[%c0_25, %c128] : memref<256x576xbf16, #tpu.memory_space<vmem>>, vector<256x64xbf16>
    tpu.vector_store %arg9[%c0_25, %c128], %46 {strides = array<i32>} : memref<256x576xbf16, #tpu.memory_space<vmem>>, vector<256x64xbf16>,
    %c31 = arith.constant 31 : index
    %c0_26 = arith.constant 0 : index
    %48 = vector.load %arg7[%c31, %c0_26] : memref<320x64xbf16, #tpu.memory_space<vmem>>, vector<256x64xbf16>
    %c0_i32_27 = arith.constant 0 : i32
    %49 = arith.sitofp %c0_i32_27 : i32 to bf16
    %50 = vector.shape_cast %18 : vector<256x1xi1> to vector<256x1xi1>
    %51 = vector.broadcast %50 : vector<256x1xi1> to vector<256x64xi1>
    %52 = vector.broadcast %49 : bf16 to vector<256x64xbf16>
    %53 = arith.select %51, %48, %52 : vector<256x64xi1>, vector<256x64xbf16>
    %c0_28 = arith.constant 0 : index
    %c192 = arith.constant 192 : index
    %54 = vector.load %arg9[%c0_28, %c192] : memref<256x576xbf16, #tpu.memory_space<vmem>>, vector<256x64xbf16>
    tpu.vector_store %arg9[%c0_28, %c192], %53 {strides = array<i32>} : memref<256x576xbf16, #tpu.memory_space<vmem>>, vector<256x64xbf16>,
    %c32_29 = arith.constant 32 : index
    %c0_30 = arith.constant 0 : index
    %55 = vector.load %arg7[%c32_29, %c0_30] : memref<320x64xbf16, #tpu.memory_space<vmem>>, vector<256x64xbf16>
    %c0_31 = arith.constant 0 : index
    %c256 = arith.constant 256 : index
    %56 = vector.load %arg9[%c0_31, %c256] : memref<256x576xbf16, #tpu.memory_space<vmem>>, vector<256x64xbf16>
    tpu.vector_store %arg9[%c0_31, %c256], %55 {strides = array<i32>} : memref<256x576xbf16, #tpu.memory_space<vmem>>, vector<256x64xbf16>,
    %c33 = arith.constant 33 : index
    %c0_32 = arith.constant 0 : index
    %57 = vector.load %arg7[%c33, %c0_32] : memref<320x64xbf16, #tpu.memory_space<vmem>>, vector<256x64xbf16>
    %c0_i32_33 = arith.constant 0 : i32
    %58 = arith.sitofp %c0_i32_33 : i32 to bf16
    %59 = vector.shape_cast %20 : vector<256x1xi1> to vector<256x1xi1>
    %60 = vector.broadcast %59 : vector<256x1xi1> to vector<256x64xi1>
    %61 = vector.broadcast %58 : bf16 to vector<256x64xbf16>
    %62 = arith.select %60, %57, %61 : vector<256x64xi1>, vector<256x64xbf16>
    %c0_34 = arith.constant 0 : index
    %c320 = arith.constant 320 : index
    %63 = vector.load %arg9[%c0_34, %c320] : memref<256x576xbf16, #tpu.memory_space<vmem>>, vector<256x64xbf16>
    tpu.vector_store %arg9[%c0_34, %c320], %62 {strides = array<i32>} : memref<256x576xbf16, #tpu.memory_space<vmem>>, vector<256x64xbf16>,
    %c47 = arith.constant 47 : index
    %c0_35 = arith.constant 0 : index
    %64 = vector.load %arg7[%c47, %c0_35] : memref<320x64xbf16, #tpu.memory_space<vmem>>, vector<256x64xbf16>
    %c0_i32_36 = arith.constant 0 : i32
    %65 = arith.sitofp %c0_i32_36 : i32 to bf16
    %66 = vector.shape_cast %18 : vector<256x1xi1> to vector<256x1xi1>
    %67 = vector.broadcast %66 : vector<256x1xi1> to vector<256x64xi1>
    %68 = vector.broadcast %65 : bf16 to vector<256x64xbf16>
    %69 = arith.select %67, %64, %68 : vector<256x64xi1>, vector<256x64xbf16>
    %c0_37 = arith.constant 0 : index
    %c384 = arith.constant 384 : index
    %70 = vector.load %arg9[%c0_37, %c384] : memref<256x576xbf16, #tpu.memory_space<vmem>>, vector<256x64xbf16>
    tpu.vector_store %arg9[%c0_37, %c384], %69 {strides = array<i32>} : memref<256x576xbf16, #tpu.memory_space<vmem>>, vector<256x64xbf16>,
    %c48 = arith.constant 48 : index
    %c0_38 = arith.constant 0 : index
    %71 = vector.load %arg7[%c48, %c0_38] : memref<320x64xbf16, #tpu.memory_space<vmem>>, vector<256x64xbf16>
    %c0_39 = arith.constant 0 : index
    %c448 = arith.constant 448 : index
    %72 = vector.load %arg9[%c0_39, %c448] : memref<256x576xbf16, #tpu.memory_space<vmem>>, vector<256x64xbf16>
    tpu.vector_store %arg9[%c0_39, %c448], %71 {strides = array<i32>} : memref<256x576xbf16, #tpu.memory_space<vmem>>, vector<256x64xbf16>,
    %c49 = arith.constant 49 : index
    %c0_40 = arith.constant 0 : index
    %73 = vector.load %arg7[%c49, %c0_40] : memref<320x64xbf16, #tpu.memory_space<vmem>>, vector<256x64xbf16>
    %c0_i32_41 = arith.constant 0 : i32
    %74 = arith.sitofp %c0_i32_41 : i32 to bf16
    %75 = vector.shape_cast %20 : vector<256x1xi1> to vector<256x1xi1>
    %76 = vector.broadcast %75 : vector<256x1xi1> to vector<256x64xi1>
    %77 = vector.broadcast %74 : bf16 to vector<256x64xbf16>
    %78 = arith.select %76, %73, %77 : vector<256x64xi1>, vector<256x64xbf16>
    %c0_42 = arith.constant 0 : index
    %c512 = arith.constant 512 : index
    %79 = vector.load %arg9[%c0_42, %c512] : memref<256x576xbf16, #tpu.memory_space<vmem>>, vector<256x64xbf16>
    tpu.vector_store %arg9[%c0_42, %c512], %78 {strides = array<i32>} : memref<256x576xbf16, #tpu.memory_space<vmem>>, vector<256x64xbf16>,
    %c0_43 = arith.constant 0 : index
    %c0_44 = arith.constant 0 : index
    %80 = vector.load %arg9[%c0_43, %c0_44] : memref<256x576xbf16, #tpu.memory_space<vmem>>, vector<128x576xbf16>
    %c0_45 = arith.constant 0 : index
    %c0_46 = arith.constant 0 : index
    %81 = vector.load %arg2[%c0_45, %c0_46] : memref<576x64xbf16, #tpu.memory_space<vmem>>, vector<576x64xbf16>
    %cst_47 = arith.constant dense<0.000000e+00> : vector<128x64xf32>
    %82 = tpu.matmul %80, %81, %cst_47 {dimension_numbers = #tpu.dot_dimension_numbers<[1], [0], [0], [1], [0, 0, 1, 1], [], []>} : vector<128x576xbf16>, vector<576x64xbf16>, vector<128x64xf32> -> vector<128x64xf32>
    %c0_48 = arith.constant 0 : index
    %c0_49 = arith.constant 0 : index
    %83 = vector.load %arg3[%c0_48, %c0_49] : memref<1x64xf32, #tpu.memory_space<vmem>>, vector<1x64xf32>
    %84 = vector.broadcast %83 : vector<1x64xf32> to vector<128x64xf32>
    %85 = arith.addf %82, %84 : vector<128x64xf32>
    %cst_50 = arith.constant 0.000000e+00 : f32
    %86 = vector.broadcast %cst_50 : f32 to vector<128x64xf32>
    %87 = arith.maximumf %85, %86 : vector<128x64xf32>
    %88 = arith.truncf %87 : vector<128x64xf32> to vector<128x64xbf16>
    %c32_51 = arith.constant 32 : index
    %c0_52 = arith.constant 0 : index
    %89 = vector.load %arg8[%c32_51, %c0_52] : memref<320x64xbf16, #tpu.memory_space<vmem>>, vector<128x64xbf16>
    tpu.vector_store %arg8[%c32_51, %c0_52], %88 {strides = array<i32>} : memref<320x64xbf16, #tpu.memory_space<vmem>>, vector<128x64xbf16>,
    %c128_53 = arith.constant 128 : index
    %c0_54 = arith.constant 0 : index
    %90 = vector.load %arg9[%c128_53, %c0_54] : memref<256x576xbf16, #tpu.memory_space<vmem>>, vector<128x576xbf16>
    %c0_55 = arith.constant 0 : index
    %c0_56 = arith.constant 0 : index
    %91 = vector.load %arg2[%c0_55, %c0_56] : memref<576x64xbf16, #tpu.memory_space<vmem>>, vector<576x64xbf16>
    %cst_57 = arith.constant dense<0.000000e+00> : vector<128x64xf32>
    %92 = tpu.matmul %90, %91, %cst_57 {dimension_numbers = #tpu.dot_dimension_numbers<[1], [0], [0], [1], [0, 0, 1, 1], [], []>} : vector<128x576xbf16>, vector<576x64xbf16>, vector<128x64xf32> -> vector<128x64xf32>
    %c0_58 = arith.constant 0 : index
    %c0_59 = arith.constant 0 : index
    %93 = vector.load %arg3[%c0_58, %c0_59] : memref<1x64xf32, #tpu.memory_space<vmem>>, vector<1x64xf32>
    %94 = vector.broadcast %93 : vector<1x64xf32> to vector<128x64xf32>
    %95 = arith.addf %92, %94 : vector<128x64xf32>
    %cst_60 = arith.constant 0.000000e+00 : f32
    %96 = vector.broadcast %cst_60 : f32 to vector<128x64xf32>
    %97 = arith.maximumf %95, %96 : vector<128x64xf32>
    %98 = arith.truncf %97 : vector<128x64xf32> to vector<128x64xbf16>
    %c160 = arith.constant 160 : index
    %c0_61 = arith.constant 0 : index
    %99 = vector.load %arg8[%c160, %c0_61] : memref<320x64xbf16, #tpu.memory_space<vmem>>, vector<128x64xbf16>
    tpu.vector_store %arg8[%c160, %c0_61], %98 {strides = array<i32>} : memref<320x64xbf16, #tpu.memory_space<vmem>>, vector<128x64xbf16>,
    %c15_62 = arith.constant 15 : index
    %c0_63 = arith.constant 0 : index
    %100 = vector.load %arg8[%c15_62, %c0_63] : memref<320x64xbf16, #tpu.memory_space<vmem>>, vector<256x64xbf16>
    %c0_i32_64 = arith.constant 0 : i32
    %101 = arith.sitofp %c0_i32_64 : i32 to bf16
    %102 = vector.shape_cast %18 : vector<256x1xi1> to vector<256x1xi1>
    %103 = vector.broadcast %102 : vector<256x1xi1> to vector<256x64xi1>
    %104 = vector.broadcast %101 : bf16 to vector<256x64xbf16>
    %105 = arith.select %103, %100, %104 : vector<256x64xi1>, vector<256x64xbf16>
    %c0_65 = arith.constant 0 : index
    %c0_66 = arith.constant 0 : index
    %106 = vector.load %arg10[%c0_65, %c0_66] : memref<256x576xbf16, #tpu.memory_space<vmem>>, vector<256x64xbf16>
    tpu.vector_store %arg10[%c0_65, %c0_66], %105 {strides = array<i32>} : memref<256x576xbf16, #tpu.memory_space<vmem>>, vector<256x64xbf16>,
    %c16_67 = arith.constant 16 : index
    %c0_68 = arith.constant 0 : index
    %107 = vector.load %arg8[%c16_67, %c0_68] : memref<320x64xbf16, #tpu.memory_space<vmem>>, vector<256x64xbf16>
    %c0_69 = arith.constant 0 : index
    %c64_70 = arith.constant 64 : index
    %108 = vector.load %arg10[%c0_69, %c64_70] : memref<256x576xbf16, #tpu.memory_space<vmem>>, vector<256x64xbf16>
    tpu.vector_store %arg10[%c0_69, %c64_70], %107 {strides = array<i32>} : memref<256x576xbf16, #tpu.memory_space<vmem>>, vector<256x64xbf16>,
    %c17_71 = arith.constant 17 : index
    %c0_72 = arith.constant 0 : index
    %109 = vector.load %arg8[%c17_71, %c0_72] : memref<320x64xbf16, #tpu.memory_space<vmem>>, vector<256x64xbf16>
    %c0_i32_73 = arith.constant 0 : i32
    %110 = arith.sitofp %c0_i32_73 : i32 to bf16
    %111 = vector.shape_cast %20 : vector<256x1xi1> to vector<256x1xi1>
    %112 = vector.broadcast %111 : vector<256x1xi1> to vector<256x64xi1>
    %113 = vector.broadcast %110 : bf16 to vector<256x64xbf16>
    %114 = arith.select %112, %109, %113 : vector<256x64xi1>, vector<256x64xbf16>
    %c0_74 = arith.constant 0 : index
    %c128_75 = arith.constant 128 : index
    %115 = vector.load %arg10[%c0_74, %c128_75] : memref<256x576xbf16, #tpu.memory_space<vmem>>, vector<256x64xbf16>
    tpu.vector_store %arg10[%c0_74, %c128_75], %114 {strides = array<i32>} : memref<256x576xbf16, #tpu.memory_space<vmem>>, vector<256x64xbf16>,
    %c31_76 = arith.constant 31 : index
    %c0_77 = arith.constant 0 : index
    %116 = vector.load %arg8[%c31_76, %c0_77] : memref<320x64xbf16, #tpu.memory_space<vmem>>, vector<256x64xbf16>
    %c0_i32_78 = arith.constant 0 : i32
    %117 = arith.sitofp %c0_i32_78 : i32 to bf16
    %118 = vector.shape_cast %18 : vector<256x1xi1> to vector<256x1xi1>
    %119 = vector.broadcast %118 : vector<256x1xi1> to vector<256x64xi1>
    %120 = vector.broadcast %117 : bf16 to vector<256x64xbf16>
    %121 = arith.select %119, %116, %120 : vector<256x64xi1>, vector<256x64xbf16>
    %c0_79 = arith.constant 0 : index
    %c192_80 = arith.constant 192 : index
    %122 = vector.load %arg10[%c0_79, %c192_80] : memref<256x576xbf16, #tpu.memory_space<vmem>>, vector<256x64xbf16>
    tpu.vector_store %arg10[%c0_79, %c192_80], %121 {strides = array<i32>} : memref<256x576xbf16, #tpu.memory_space<vmem>>, vector<256x64xbf16>,
    %c32_81 = arith.constant 32 : index
    %c0_82 = arith.constant 0 : index
    %123 = vector.load %arg8[%c32_81, %c0_82] : memref<320x64xbf16, #tpu.memory_space<vmem>>, vector<256x64xbf16>
    %c0_83 = arith.constant 0 : index
    %c256_84 = arith.constant 256 : index
    %124 = vector.load %arg10[%c0_83, %c256_84] : memref<256x576xbf16, #tpu.memory_space<vmem>>, vector<256x64xbf16>
    tpu.vector_store %arg10[%c0_83, %c256_84], %123 {strides = array<i32>} : memref<256x576xbf16, #tpu.memory_space<vmem>>, vector<256x64xbf16>,
    %c33_85 = arith.constant 33 : index
    %c0_86 = arith.constant 0 : index
    %125 = vector.load %arg8[%c33_85, %c0_86] : memref<320x64xbf16, #tpu.memory_space<vmem>>, vector<256x64xbf16>
    %c0_i32_87 = arith.constant 0 : i32
    %126 = arith.sitofp %c0_i32_87 : i32 to bf16
    %127 = vector.shape_cast %20 : vector<256x1xi1> to vector<256x1xi1>
    %128 = vector.broadcast %127 : vector<256x1xi1> to vector<256x64xi1>
    %129 = vector.broadcast %126 : bf16 to vector<256x64xbf16>
    %130 = arith.select %128, %125, %129 : vector<256x64xi1>, vector<256x64xbf16>
    %c0_88 = arith.constant 0 : index
    %c320_89 = arith.constant 320 : index
    %131 = vector.load %arg10[%c0_88, %c320_89] : memref<256x576xbf16, #tpu.memory_space<vmem>>, vector<256x64xbf16>
    tpu.vector_store %arg10[%c0_88, %c320_89], %130 {strides = array<i32>} : memref<256x576xbf16, #tpu.memory_space<vmem>>, vector<256x64xbf16>,
    %c47_90 = arith.constant 47 : index
    %c0_91 = arith.constant 0 : index
    %132 = vector.load %arg8[%c47_90, %c0_91] : memref<320x64xbf16, #tpu.memory_space<vmem>>, vector<256x64xbf16>
    %c0_i32_92 = arith.constant 0 : i32
    %133 = arith.sitofp %c0_i32_92 : i32 to bf16
    %134 = vector.shape_cast %18 : vector<256x1xi1> to vector<256x1xi1>
    %135 = vector.broadcast %134 : vector<256x1xi1> to vector<256x64xi1>
    %136 = vector.broadcast %133 : bf16 to vector<256x64xbf16>
    %137 = arith.select %135, %132, %136 : vector<256x64xi1>, vector<256x64xbf16>
    %c0_93 = arith.constant 0 : index
    %c384_94 = arith.constant 384 : index
    %138 = vector.load %arg10[%c0_93, %c384_94] : memref<256x576xbf16, #tpu.memory_space<vmem>>, vector<256x64xbf16>
    tpu.vector_store %arg10[%c0_93, %c384_94], %137 {strides = array<i32>} : memref<256x576xbf16, #tpu.memory_space<vmem>>, vector<256x64xbf16>,
    %c48_95 = arith.constant 48 : index
    %c0_96 = arith.constant 0 : index
    %139 = vector.load %arg8[%c48_95, %c0_96] : memref<320x64xbf16, #tpu.memory_space<vmem>>, vector<256x64xbf16>
    %c0_97 = arith.constant 0 : index
    %c448_98 = arith.constant 448 : index
    %140 = vector.load %arg10[%c0_97, %c448_98] : memref<256x576xbf16, #tpu.memory_space<vmem>>, vector<256x64xbf16>
    tpu.vector_store %arg10[%c0_97, %c448_98], %139 {strides = array<i32>} : memref<256x576xbf16, #tpu.memory_space<vmem>>, vector<256x64xbf16>,
    %c49_99 = arith.constant 49 : index
    %c0_100 = arith.constant 0 : index
    %141 = vector.load %arg8[%c49_99, %c0_100] : memref<320x64xbf16, #tpu.memory_space<vmem>>, vector<256x64xbf16>
    %c0_i32_101 = arith.constant 0 : i32
    %142 = arith.sitofp %c0_i32_101 : i32 to bf16
    %143 = vector.shape_cast %20 : vector<256x1xi1> to vector<256x1xi1>
    %144 = vector.broadcast %143 : vector<256x1xi1> to vector<256x64xi1>
    %145 = vector.broadcast %142 : bf16 to vector<256x64xbf16>
    %146 = arith.select %144, %141, %145 : vector<256x64xi1>, vector<256x64xbf16>
    %c0_102 = arith.constant 0 : index
    %c512_103 = arith.constant 512 : index
    %147 = vector.load %arg10[%c0_102, %c512_103] : memref<256x576xbf16, #tpu.memory_space<vmem>>, vector<256x64xbf16>
    tpu.vector_store %arg10[%c0_102, %c512_103], %146 {strides = array<i32>} : memref<256x576xbf16, #tpu.memory_space<vmem>>, vector<256x64xbf16>,
    %c0_104 = arith.constant 0 : index
    %c0_105 = arith.constant 0 : index
    %148 = vector.load %arg10[%c0_104, %c0_105] : memref<256x576xbf16, #tpu.memory_space<vmem>>, vector<128x576xbf16>
    %c0_106 = arith.constant 0 : index
    %c0_107 = arith.constant 0 : index
    %149 = vector.load %arg4[%c0_106, %c0_107] : memref<576x64xbf16, #tpu.memory_space<vmem>>, vector<576x64xbf16>
    %cst_108 = arith.constant dense<0.000000e+00> : vector<128x64xf32>
    %150 = tpu.matmul %148, %149, %cst_108 {dimension_numbers = #tpu.dot_dimension_numbers<[1], [0], [0], [1], [0, 0, 1, 1], [], []>} : vector<128x576xbf16>, vector<576x64xbf16>, vector<128x64xf32> -> vector<128x64xf32>
    %c0_109 = arith.constant 0 : index
    %c0_110 = arith.constant 0 : index
    %151 = vector.load %arg5[%c0_109, %c0_110] : memref<1x64xf32, #tpu.memory_space<vmem>>, vector<1x64xf32>
    %152 = vector.broadcast %151 : vector<1x64xf32> to vector<128x64xf32>
    %153 = arith.addf %150, %152 : vector<128x64xf32>
    %c0_111 = arith.constant 0 : index
    %c0_112 = arith.constant 0 : index
    %c0_113 = arith.constant 0 : index
    %154 = vector.load %arg6[%c0_111, %c0_112, %c0_113] : memref<1x128x128xf32, #tpu.memory_space<vmem>>, vector<1x128x64xf32>
    %155 = vector.shape_cast %154 : vector<1x128x64xf32> to vector<128x64xf32>
    %156 = vector.shape_cast %153 : vector<128x64xf32> to vector<1x128x64xf32>
    tpu.vector_store %arg6[%c0_111, %c0_112, %c0_113], %156 {strides = array<i32>} : memref<1x128x128xf32, #tpu.memory_space<vmem>>, vector<1x128x64xf32>,
    %c128_114 = arith.constant 128 : index
    %c0_115 = arith.constant 0 : index
    %157 = vector.load %arg10[%c128_114, %c0_115] : memref<256x576xbf16, #tpu.memory_space<vmem>>, vector<128x576xbf16>
    %c0_116 = arith.constant 0 : index
    %c0_117 = arith.constant 0 : index
    %158 = vector.load %arg4[%c0_116, %c0_117] : memref<576x64xbf16, #tpu.memory_space<vmem>>, vector<576x64xbf16>
    %cst_118 = arith.constant dense<0.000000e+00> : vector<128x64xf32>
    %159 = tpu.matmul %157, %158, %cst_118 {dimension_numbers = #tpu.dot_dimension_numbers<[1], [0], [0], [1], [0, 0, 1, 1], [], []>} : vector<128x576xbf16>, vector<576x64xbf16>, vector<128x64xf32> -> vector<128x64xf32>
    %c0_119 = arith.constant 0 : index
    %c0_120 = arith.constant 0 : index
    %160 = vector.load %arg5[%c0_119, %c0_120] : memref<1x64xf32, #tpu.memory_space<vmem>>, vector<1x64xf32>
    %161 = vector.broadcast %160 : vector<1x64xf32> to vector<128x64xf32>
    %162 = arith.addf %159, %161 : vector<128x64xf32>
    %c0_121 = arith.constant 0 : index
    %c0_122 = arith.constant 0 : index
    %c64_123 = arith.constant 64 : index
    %163 = vector.load %arg6[%c0_121, %c0_122, %c64_123] : memref<1x128x128xf32, #tpu.memory_space<vmem>>, vector<1x128x64xf32>
    %164 = vector.shape_cast %163 : vector<1x128x64xf32> to vector<128x64xf32>
    %165 = vector.shape_cast %162 : vector<128x64xf32> to vector<1x128x64xf32>
    tpu.vector_store %arg6[%c0_121, %c0_122, %c64_123], %165 {strides = array<i32>} : memref<1x128x128xf32, #tpu.memory_space<vmem>>, vector<1x128x64xf32>,
    return
  }
  func.func @transform_0(%arg0: i32) -> (i32, i32, i32) {
    %c0_i32 = arith.constant 0 : i32
    %c0_i32_0 = arith.constant 0 : i32
    %c0_i32_1 = arith.constant 0 : i32
    return %arg0, %c0_i32, %c0_i32_0 : i32, i32, i32
  }
  func.func @transform_1(%arg0: i32) -> (i32, i32) {
    %c0_i32 = arith.constant 0 : i32
    %c0_i32_0 = arith.constant 0 : i32
    %c0_i32_1 = arith.constant 0 : i32
    return %c0_i32, %c0_i32_0 : i32, i32
  }
  func.func @transform_2(%arg0: i32) -> (i32, i32) {
    %c0_i32 = arith.constant 0 : i32
    %c0_i32_0 = arith.constant 0 : i32
    %c0_i32_1 = arith.constant 0 : i32
    return %c0_i32, %c0_i32_0 : i32, i32
  }
  func.func @transform_3(%arg0: i32) -> (i32, i32) {
    %c0_i32 = arith.constant 0 : i32
    %c0_i32_0 = arith.constant 0 : i32
    %c0_i32_1 = arith.constant 0 : i32
    return %c0_i32, %c0_i32_0 : i32, i32
  }
  func.func @transform_4(%arg0: i32) -> (i32, i32) {
    %c0_i32 = arith.constant 0 : i32
    %c0_i32_0 = arith.constant 0 : i32
    %c0_i32_1 = arith.constant 0 : i32
    return %c0_i32, %c0_i32_0 : i32, i32
  }
  func.func @transform_5(%arg0: i32) -> (i32, i32, i32) {
    %c0_i32 = arith.constant 0 : i32
    %c0_i32_0 = arith.constant 0 : i32
    %c0_i32_1 = arith.constant 0 : i32
    return %arg0, %c0_i32, %c0_i32_0 : i32, i32, i32
  }
}

</mosaic_0001>

<llo_original>
// kernel: en_layer.1
$region0: #{en_layer.1}
  #allocation0 [shape = 'u32[]', space=smem, size = 0x4, offset = 0x4, fixed_abs, tag = 'smem constant byte address 0x4 - core index']
  #allocation1 [shape = 'u32[72,128]{1,0:T(1,128)}', space=vmem, size = 0x9000, scoped, tag = 'internal scratch']
  #allocation2 [shape = 'bf16[320,64]{1,0:T(8,128)(2,1)}', space=vmem, size = 0x14000, scoped, tag = 'scratch operand']
  #allocation3 [shape = 'bf16[320,64]{1,0:T(8,128)(2,1)}', space=vmem, size = 0x14000, scoped, tag = 'scratch operand']
  #allocation4 [shape = 'bf16[256,576]{1,0:T(8,128)(2,1)}', space=vmem, size = 0x50000, scoped, tag = 'scratch operand']
  #allocation5 [shape = 'bf16[256,576]{1,0:T(8,128)(2,1)}', space=vmem, size = 0x50000, scoped, tag = 'scratch operand']
  %s0 = inlined_call_operand.vmem [shape: bf16[2,256,64], index: 0, kind: input, shape index: {}]
  %s1 = inlined_call_operand.vmem [shape: bf16[576,64], index: 1, kind: input, shape index: {}]
  %s2 = inlined_call_operand.vmem [shape: f32[1,64], index: 2, kind: input, shape index: {}]
  %s3 = inlined_call_operand.vmem [shape: bf16[576,64], index: 3, kind: input, shape index: {}]
  %s4 = inlined_call_operand.vmem [shape: f32[1,64], index: 4, kind: input, shape index: {}]
  %s5 = inlined_call_operand.vmem [shape: f32[2,128,128], index: 5, kind: output, shape index: {}]
  %s6 = sld [smem:[#allocation0]]
  $region53: #{en_layer.1} parent=0
    _
  %s8 = ssub.s32 1, %s6
  %s9 = scalar_select 0, %s8, %s6
  loop: start=0, step=1, limit=4
  $region2: #{en_layer.1} parent=0 // loop_pre_header
    _
  $region3: #{en_layer.1} parent=0 // loop_header
    %s11 = sphi 0, %s15
    %p12 = scmp.ge.s32.totalorder %s11, 4
    %s21 = sphi 0, %s23
    %s24 = sphi 0, %s21
    %s25 = sphi 0, %s24
    %s41 = sphi 0, %s25
    %s45 = sphi 0, %s45
    %s47 = sphi 0, %s45
    %s48 = sphi 0, %s47
    %s62 = sphi 0, %s48
    %s66 = sphi 0, %s66
    %s68 = sphi 0, %s66
    %s69 = sphi 0, %s68
    %s83 = sphi 0, %s69
    %s87 = sphi 0, %s87
    %s89 = sphi 0, %s87
    %s90 = sphi 0, %s89
    %s104 = sphi 0, %s90
    %s108 = sphi 0, %s108
    %s110 = sphi 0, %s108
    %s111 = sphi 0, %s110
    %s125 = sphi 0, %s111
    %s131 = sphi 0, %s133
    %s134 = sphi 0, %s131
    %s135 = sphi 0, %s134
    %s151 = sphi 0, %s135
  $region4: #{en_layer.1} parent=0 // loop_header_branch
    %14 = sbr.rel (%p12) target = $region8
  $region5: #{en_layer.1} parent=0 // loop_body
    %s16 = ssub.s32 %s11, 1
    %s17 = ssub.s32 %s11, 2
    %s18 = sadd.s32 %s11, 1
    %s19 = ssub.s32 %s11, %s18
    %p20 = scmp.eq.s32.totalorder %s19, 0
    %s22 = sadd.s32 %s21, 1
    %s23 = scalar_select %p20, %s21, %s22
    %p26 = pneg %p20
    %p27 = scmp.eq.s32.totalorder %s11, 1
    %p28 = por %p26, %p27
    %p29 = scmp.ne.s32.totalorder %s21, %s24
    %p30 = scmp.eq.s32.totalorder %s11, 0
    %p31 = por %p29, %p30
    %p32 = scmp.ne.s32.totalorder %s21, %s24
    %p33 = scmp.eq.s32.totalorder %s16, 1
    %p34 = por %p32, %p33
    %p35 = scmp.ne.s32.totalorder %s24, %s25
    %p36 = scmp.eq.s32.totalorder %s16, 0
    %p37 = por %p35, %p36
    %p38 = scmp.ne.s32.totalorder %s24, %s25
    %p39 = scmp.eq.s32.totalorder %s17, 1
    %p40 = por %p38, %p39
    %p42 = scmp.ne.s32.totalorder %s25, %s41
    %p43 = scmp.eq.s32.totalorder %s17, 0
    %p44 = por %p42, %p43
    %s46 = sadd.s32 %s45, 1
    %p49 = scmp.eq.s32.totalorder %s11, 1
    %p50 = scmp.ne.s32.totalorder %s45, %s47
    %p51 = scmp.eq.s32.totalorder %s11, 0
    %p52 = por %p50, %p51
    %p53 = scmp.ne.s32.totalorder %s45, %s47
    %p54 = scmp.eq.s32.totalorder %s16, 1
    %p55 = por %p53, %p54
    %p56 = scmp.ne.s32.totalorder %s47, %s48
    %p57 = scmp.eq.s32.totalorder %s16, 0
    %p58 = por %p56, %p57
    %p59 = scmp.ne.s32.totalorder %s47, %s48
    %p60 = scmp.eq.s32.totalorder %s17, 1
    %p61 = por %p59, %p60
    %p63 = scmp.ne.s32.totalorder %s48, %s62
    %p64 = scmp.eq.s32.totalorder %s17, 0
    %p65 = por %p63, %p64
    %s67 = sadd.s32 %s66, 1
    %p70 = scmp.eq.s32.totalorder %s11, 1
    %p71 = scmp.ne.s32.totalorder %s66, %s68
    %p72 = scmp.eq.s32.totalorder %s11, 0
    %p73 = por %p71, %p72
    %p74 = scmp.ne.s32.totalorder %s66, %s68
    %p75 = scmp.eq.s32.totalorder %s16, 1
    %p76 = por %p74, %p75
    %p77 = scmp.ne.s32.totalorder %s68, %s69
    %p78 = scmp.eq.s32.totalorder %s16, 0
    %p79 = por %p77, %p78
    %p80 = scmp.ne.s32.totalorder %s68, %s69
    %p81 = scmp.eq.s32.totalorder %s17, 1
    %p82 = por %p80, %p81
    %p84 = scmp.ne.s32.totalorder %s69, %s83
    %p85 = scmp.eq.s32.totalorder %s17, 0
    %p86 = por %p84, %p85
    %s88 = sadd.s32 %s87, 1
    %p91 = scmp.eq.s32.totalorder %s11, 1
    %p92 = scmp.ne.s32.totalorder %s87, %s89
    %p93 = scmp.eq.s32.totalorder %s11, 0
    %p94 = por %p92, %p93
    %p95 = scmp.ne.s32.totalorder %s87, %s89
    %p96 = scmp.eq.s32.totalorder %s16, 1
    %p97 = por %p95, %p96
    %p98 = scmp.ne.s32.totalorder %s89, %s90
    %p99 = scmp.eq.s32.totalorder %s16, 0
    %p100 = por %p98, %p99
    %p101 = scmp.ne.s32.totalorder %s89, %s90
    %p102 = scmp.eq.s32.totalorder %s17, 1
    %p103 = por %p101, %p102
    %p105 = scmp.ne.s32.totalorder %s90, %s104
    %p106 = scmp.eq.s32.totalorder %s17, 0
    %p107 = por %p105, %p106
    %s109 = sadd.s32 %s108, 1
    %p112 = scmp.eq.s32.totalorder %s11, 1
    %p113 = scmp.ne.s32.totalorder %s108, %s110
    %p114 = scmp.eq.s32.totalorder %s11, 0
    %p115 = por %p113, %p114
    %p116 = scmp.ne.s32.totalorder %s108, %s110
    %p117 = scmp.eq.s32.totalorder %s16, 1
    %p118 = por %p116, %p117
    %p119 = scmp.ne.s32.totalorder %s110, %s111
    %p120 = scmp.eq.s32.totalorder %s16, 0
    %p121 = por %p119, %p120
    %p122 = scmp.ne.s32.totalorder %s110, %s111
    %p123 = scmp.eq.s32.totalorder %s17, 1
    %p124 = por %p122, %p123
    %p126 = scmp.ne.s32.totalorder %s111, %s125
    %p127 = scmp.eq.s32.totalorder %s17, 0
    %p128 = por %p126, %p127
    %s129 = ssub.s32 %s11, %s18
    %p130 = scmp.eq.s32.totalorder %s129, 0
    %s132 = sadd.s32 %s131, 1
    %s133 = scalar_select %p130, %s131, %s132
    %p136 = pneg %p130
    %p137 = scmp.eq.s32.totalorder %s11, 1
    %p138 = por %p136, %p137
    %p139 = scmp.ne.s32.totalorder %s131, %s134
    %p140 = scmp.eq.s32.totalorder %s11, 0
    %p141 = por %p139, %p140
    %p142 = scmp.ne.s32.totalorder %s131, %s134
    %p143 = scmp.eq.s32.totalorder %s16, 1
    %p144 = por %p142, %p143
    %p145 = scmp.ne.s32.totalorder %s134, %s135
    %p146 = scmp.eq.s32.totalorder %s16, 0
    %p147 = por %p145, %p146
    %p148 = scmp.ne.s32.totalorder %s134, %s135
    %p149 = scmp.eq.s32.totalorder %s17, 1
    %p150 = por %p148, %p149
    %p152 = scmp.ne.s32.totalorder %s135, %s151
    %p153 = scmp.eq.s32.totalorder %s17, 0
    %p154 = por %p152, %p153
    %p155 = scmp.le.s32.totalorder 1, %s11
    %p156 = scmp.lt.s32.totalorder %s11, 3
    %p157 = pnand %p155, %p156
    %p158 = pneg %p157
    // Predicated region
    $region9: #{en_layer.1} parent=5 // pred_check
      _
    $region10: #{en_layer.1} parent=5 // pred_check_branch
      %160 = sbr.rel (%p157) target = $region12
    $region11: #{en_layer.1} parent=5 // pred_region
      %s161 = ssub.s32 %s11, 1
      // Predicated region
      $region13: #{en_layer.1} parent=11 // pred_check
        %p162 = pneg %p58
      $region14: #{en_layer.1} parent=11 // pred_check_branch
        %164 = sbr.rel (%p162) target = $region16
      $region15: #{en_layer.1} parent=11 // pred_region
        _
      $region16: #{en_layer.1} parent=11 // pred_fallthru
        _
      // Predicated region
      $region17: #{en_layer.1} parent=11 // pred_check
        %p165 = pneg %p79
      $region18: #{en_layer.1} parent=11 // pred_check_branch
        %167 = sbr.rel (%p165) target = $region20
      $region19: #{en_layer.1} parent=11 // pred_region
        _
      $region20: #{en_layer.1} parent=11 // pred_fallthru
        _
      // Predicated region
      $region21: #{en_layer.1} parent=11 // pred_check
        %p168 = pneg %p100
      $region22: #{en_layer.1} parent=11 // pred_check_branch
        %170 = sbr.rel (%p168) target = $region24
      $region23: #{en_layer.1} parent=11 // pred_region
        _
      $region24: #{en_layer.1} parent=11 // pred_fallthru
        _
      // Predicated region
      $region25: #{en_layer.1} parent=11 // pred_check
        %p171 = pneg %p121
      $region26: #{en_layer.1} parent=11 // pred_check_branch
        %173 = sbr.rel (%p171) target = $region28
      $region27: #{en_layer.1} parent=11 // pred_region
        _
      $region28: #{en_layer.1} parent=11 // pred_fallthru
        _
    $region12: #{en_layer.1} parent=5 // pred_fallthru
      _
    %p174 = scmp.lt.s32.totalorder %s11, 2
    // Predicated region
    $region29: #{en_layer.1} parent=5 // pred_check
      %p175 = pneg %p174
    $region30: #{en_layer.1} parent=5 // pred_check_branch
      %177 = sbr.rel (%p175) target = $region32
    $region31: #{en_layer.1} parent=5 // pred_region
      // Predicated region
      $region33: #{en_layer.1} parent=31 // pred_check
        %p178 = pneg %p31
      $region34: #{en_layer.1} parent=31 // pred_check_branch
        %180 = sbr.rel (%p178) target = $region36
      $region35: #{en_layer.1} parent=31 // pred_region
        %p181 = scmp.lt.s32.totalorder %s11, 1
        %s182 = scalar_select %p181, %s11, 1
        %s183 = smul.addr %s182, 32
        %s184 = smul.addr %s183, 4
        %s185 = scalar_lea.vmem %s0, %s184
      $region36: #{en_layer.1} parent=31 // pred_fallthru
        _
    $region32: #{en_layer.1} parent=5 // pred_fallthru
      _
    %p186 = scmp.le.s32.totalorder 1, %s11
    %p187 = scmp.lt.s32.totalorder %s11, 3
    %p188 = pnand %p186, %p187
    %p189 = pneg %p188
    // Predicated region
    $region37: #{en_layer.1} parent=5 // pred_check
      _
    $region38: #{en_layer.1} parent=5 // pred_check_branch
      %191 = sbr.rel (%p188) target = $region40
    $region39: #{en_layer.1} parent=5 // pred_region
      %s192 = ssub.s32 %s11, 1
      %p193 = scmp.lt.s32.totalorder %s16, 1
      %s194 = scalar_select %p193, %s16, 1
      %s195 = smul.addr %s194, 32
      %s196 = smul.addr %s195, 4
      %s197 = scalar_lea.vmem %s0, %s196
      %p198 = pneg %p37
      %p199 = pneg %p34
      %p200 = pneg %p58
      %p201 = pneg %p55
      %p202 = pneg %p79
      %p203 = pneg %p76
      %p204 = pneg %p100
      %p205 = pneg %p97
      %p206 = pneg %p121
      %p207 = pneg %p118
      %p208 = pneg %p147
      %p209 = pneg %p144
      %p210 = scmp.lt.s32.totalorder %s16, 1
      %s211 = scalar_select %p210, %s16, 1
      %s212 = smul.addr %s211, 16
      %s213 = smul.addr %s212, 8
      %s214 = scalar_lea.vmem %s5, %s213
      %p215 = scmp.lt.s32.totalorder %s16, 1
      %s216 = scalar_select %p215, %s16, 1
      %s217 = smul.addr %s216, 32
      %s218 = smul.addr %s217, 4
      %s219 = scalar_lea.vmem %s0, %s218
      %p220 = scmp.lt.s32.totalorder %s16, 1
      %s221 = scalar_select %p220, %s16, 1
      %s222 = smul.addr %s221, 16
      %s223 = smul.addr %s222, 8
      %s224 = scalar_lea.vmem %s5, %s223
      %v228 = vlaneseq
      %v229 = vshrl.u32 %v228, 7
      %v230 = vadd.s32 %v229, 8
      %v231 = vadd.s32 %v229, 16
      %v232 = vadd.s32 %v229, 24
      %v233 = vadd.s32 %v229, 32
      %v234 = vadd.s32 %v229, 40
      %v235 = vadd.s32 %v229, 48
      %v236 = vadd.s32 %v229, 56
      %v237 = vadd.s32 %v229, 64
      %v238 = vadd.s32 %v229, 72
      %v239 = vadd.s32 %v229, 80
      %v240 = vadd.s32 %v229, 88
      %v241 = vadd.s32 %v229, 96
      %v242 = vadd.s32 %v229, 104
      %v243 = vadd.s32 %v229, 112
      %v244 = vadd.s32 %v229, 120
      %v245 = vadd.s32 %v229, 128
      %v246 = vadd.s32 %v229, 136
      %v247 = vadd.s32 %v229, 144
      %v248 = vadd.s32 %v229, 152
      %v249 = vadd.s32 %v229, 160
      %v250 = vadd.s32 %v229, 168
      %v251 = vadd.s32 %v229, 176
      %v252 = vadd.s32 %v229, 184
      %v253 = vadd.s32 %v229, 192
      %v254 = vadd.s32 %v229, 200
      %v255 = vadd.s32 %v229, 208
      %v256 = vadd.s32 %v229, 216
      %v257 = vadd.s32 %v229, 224
      %v258 = vadd.s32 %v229, 232
      %v259 = vadd.s32 %v229, 240
      %v260 = vadd.s32 %v229, 248
      %vm261 = vcmp.lt.s32.totalorder %v229, 0
      %v262 = vsub.s32 0, %v229
      %v263 = vsel %vm261, %v262, %v229
      %v264 = vshrl.u32 %v263, 4
      %v265 = vand.u32 %v263, 15
      %v266 = vsub.s32 0, %v265
      %v267 = vsel %vm261, %v266, %v265
      %vm268 = vcmp.lt.s32.totalorder %v230, 0
      %v269 = vsub.s32 0, %v230
      %v270 = vsel %vm268, %v269, %v230
      %v271 = vshrl.u32 %v270, 4
      %v272 = vand.u32 %v270, 15
      %v273 = vsub.s32 0, %v272
      %v274 = vsel %vm268, %v273, %v272
      %vm275 = vcmp.lt.s32.totalorder %v231, 0
      %v276 = vsub.s32 0, %v231
      %v277 = vsel %vm275, %v276, %v231
      %v278 = vshrl.u32 %v277, 4
      %v279 = vand.u32 %v277, 15
      %v280 = vsub.s32 0, %v279
      %v281 = vsel %vm275, %v280, %v279
      %vm282 = vcmp.lt.s32.totalorder %v232, 0
      %v283 = vsub.s32 0, %v232
      %v284 = vsel %vm282, %v283, %v232
      %v285 = vshrl.u32 %v284, 4
      %v286 = vand.u32 %v284, 15
      %v287 = vsub.s32 0, %v286
      %v288 = vsel %vm282, %v287, %v286
      %vm289 = vcmp.lt.s32.totalorder %v233, 0
      %v290 = vsub.s32 0, %v233
      %v291 = vsel %vm289, %v290, %v233
      %v292 = vshrl.u32 %v291, 4
      %v293 = vand.u32 %v291, 15
      %v294 = vsub.s32 0, %v293
      %v295 = vsel %vm289, %v294, %v293
      %vm296 = vcmp.lt.s32.totalorder %v234, 0
      %v297 = vsub.s32 0, %v234
      %v298 = vsel %vm296, %v297, %v234
      %v299 = vshrl.u32 %v298, 4
      %v300 = vand.u32 %v298, 15
      %v301 = vsub.s32 0, %v300
      %v302 = vsel %vm296, %v301, %v300
      %vm303 = vcmp.lt.s32.totalorder %v235, 0
      %v304 = vsub.s32 0, %v235
      %v305 = vsel %vm303, %v304, %v235
      %v306 = vshrl.u32 %v305, 4
      %v307 = vand.u32 %v305, 15
      %v308 = vsub.s32 0, %v307
      %v309 = vsel %vm303, %v308, %v307
      %vm310 = vcmp.lt.s32.totalorder %v236, 0
      %v311 = vsub.s32 0, %v236
      %v312 = vsel %vm310, %v311, %v236
      %v313 = vshrl.u32 %v312, 4
      %v314 = vand.u32 %v312, 15
      %v315 = vsub.s32 0, %v314
      %v316 = vsel %vm310, %v315, %v314
      %vm317 = vcmp.lt.s32.totalorder %v237, 0
      %v318 = vsub.s32 0, %v237
      %v319 = vsel %vm317, %v318, %v237
      %v320 = vshrl.u32 %v319, 4
      %v321 = vand.u32 %v319, 15
      %v322 = vsub.s32 0, %v321
      %v323 = vsel %vm317, %v322, %v321
      %vm324 = vcmp.lt.s32.totalorder %v238, 0
      %v325 = vsub.s32 0, %v238
      %v326 = vsel %vm324, %v325, %v238
      %v327 = vshrl.u32 %v326, 4
      %v328 = vand.u32 %v326, 15
      %v329 = vsub.s32 0, %v328
      %v330 = vsel %vm324, %v329, %v328
      %vm331 = vcmp.lt.s32.totalorder %v239, 0
      %v332 = vsub.s32 0, %v239
      %v333 = vsel %vm331, %v332, %v239
      %v334 = vshrl.u32 %v333, 4
      %v335 = vand.u32 %v333, 15
      %v336 = vsub.s32 0, %v335
      %v337 = vsel %vm331, %v336, %v335
      %vm338 = vcmp.lt.s32.totalorder %v240, 0
      %v339 = vsub.s32 0, %v240
      %v340 = vsel %vm338, %v339, %v240
      %v341 = vshrl.u32 %v340, 4
      %v342 = vand.u32 %v340, 15
      %v343 = vsub.s32 0, %v342
      %v344 = vsel %vm338, %v343, %v342
      %vm345 = vcmp.lt.s32.totalorder %v241, 0
      %v346 = vsub.s32 0, %v241
      %v347 = vsel %vm345, %v346, %v241
      %v348 = vshrl.u32 %v347, 4
      %v349 = vand.u32 %v347, 15
      %v350 = vsub.s32 0, %v349
      %v351 = vsel %vm345, %v350, %v349
      %vm352 = vcmp.lt.s32.totalorder %v242, 0
      %v353 = vsub.s32 0, %v242
      %v354 = vsel %vm352, %v353, %v242
      %v355 = vshrl.u32 %v354, 4
      %v356 = vand.u32 %v354, 15
      %v357 = vsub.s32 0, %v356
      %v358 = vsel %vm352, %v357, %v356
      %vm359 = vcmp.lt.s32.totalorder %v243, 0
      %v360 = vsub.s32 0, %v243
      %v361 = vsel %vm359, %v360, %v243
      %v362 = vshrl.u32 %v361, 4
      %v363 = vand.u32 %v361, 15
      %v364 = vsub.s32 0, %v363
      %v365 = vsel %vm359, %v364, %v363
      %vm366 = vcmp.lt.s32.totalorder %v244, 0
      %v367 = vsub.s32 0, %v244
      %v368 = vsel %vm366, %v367, %v244
      %v369 = vshrl.u32 %v368, 4
      %v370 = vand.u32 %v368, 15
      %v371 = vsub.s32 0, %v370
      %v372 = vsel %vm366, %v371, %v370
      %vm373 = vcmp.lt.s32.totalorder %v245, 0
      %v374 = vsub.s32 0, %v245
      %v375 = vsel %vm373, %v374, %v245
      %v376 = vshrl.u32 %v375, 4
      %v377 = vand.u32 %v375, 15
      %v378 = vsub.s32 0, %v377
      %v379 = vsel %vm373, %v378, %v377
      %vm380 = vcmp.lt.s32.totalorder %v246, 0
      %v381 = vsub.s32 0, %v246
      %v382 = vsel %vm380, %v381, %v246
      %v383 = vshrl.u32 %v382, 4
      %v384 = vand.u32 %v382, 15
      %v385 = vsub.s32 0, %v384
      %v386 = vsel %vm380, %v385, %v384
      %vm387 = vcmp.lt.s32.totalorder %v247, 0
      %v388 = vsub.s32 0, %v247
      %v389 = vsel %vm387, %v388, %v247
      %v390 = vshrl.u32 %v389, 4
      %v391 = vand.u32 %v389, 15
      %v392 = vsub.s32 0, %v391
      %v393 = vsel %vm387, %v392, %v391
      %vm394 = vcmp.lt.s32.totalorder %v248, 0
      %v395 = vsub.s32 0, %v248
      %v396 = vsel %vm394, %v395, %v248
      %v397 = vshrl.u32 %v396, 4
      %v398 = vand.u32 %v396, 15
      %v399 = vsub.s32 0, %v398
      %v400 = vsel %vm394, %v399, %v398
      %vm401 = vcmp.lt.s32.totalorder %v249, 0
      %v402 = vsub.s32 0, %v249
      %v403 = vsel %vm401, %v402, %v249
      %v404 = vshrl.u32 %v403, 4
      %v405 = vand.u32 %v403, 15
      %v406 = vsub.s32 0, %v405
      %v407 = vsel %vm401, %v406, %v405
      %vm408 = vcmp.lt.s32.totalorder %v250, 0
      %v409 = vsub.s32 0, %v250
      %v410 = vsel %vm408, %v409, %v250
      %v411 = vshrl.u32 %v410, 4
      %v412 = vand.u32 %v410, 15
      %v413 = vsub.s32 0, %v412
      %v414 = vsel %vm408, %v413, %v412
      %vm415 = vcmp.lt.s32.totalorder %v251, 0
      %v416 = vsub.s32 0, %v251
      %v417 = vsel %vm415, %v416, %v251
      %v418 = vshrl.u32 %v417, 4
      %v419 = vand.u32 %v417, 15
      %v420 = vsub.s32 0, %v419
      %v421 = vsel %vm415, %v420, %v419
      %vm422 = vcmp.lt.s32.totalorder %v252, 0
      %v423 = vsub.s32 0, %v252
      %v424 = vsel %vm422, %v423, %v252
      %v425 = vshrl.u32 %v424, 4
      %v426 = vand.u32 %v424, 15
      %v427 = vsub.s32 0, %v426
      %v428 = vsel %vm422, %v427, %v426
      %vm429 = vcmp.lt.s32.totalorder %v253, 0
      %v430 = vsub.s32 0, %v253
      %v431 = vsel %vm429, %v430, %v253
      %v432 = vshrl.u32 %v431, 4
      %v433 = vand.u32 %v431, 15
      %v434 = vsub.s32 0, %v433
      %v435 = vsel %vm429, %v434, %v433
      %vm436 = vcmp.lt.s32.totalorder %v254, 0
      %v437 = vsub.s32 0, %v254
      %v438 = vsel %vm436, %v437, %v254
      %v439 = vshrl.u32 %v438, 4
      %v440 = vand.u32 %v438, 15
      %v441 = vsub.s32 0, %v440
      %v442 = vsel %vm436, %v441, %v440
      %vm443 = vcmp.lt.s32.totalorder %v255, 0
      %v444 = vsub.s32 0, %v255
      %v445 = vsel %vm443, %v444, %v255
      %v446 = vshrl.u32 %v445, 4
      %v447 = vand.u32 %v445, 15
      %v448 = vsub.s32 0, %v447
      %v449 = vsel %vm443, %v448, %v447
      %vm450 = vcmp.lt.s32.totalorder %v256, 0
      %v451 = vsub.s32 0, %v256
      %v452 = vsel %vm450, %v451, %v256
      %v453 = vshrl.u32 %v452, 4
      %v454 = vand.u32 %v452, 15
      %v455 = vsub.s32 0, %v454
      %v456 = vsel %vm450, %v455, %v454
      %vm457 = vcmp.lt.s32.totalorder %v257, 0
      %v458 = vsub.s32 0, %v257
      %v459 = vsel %vm457, %v458, %v257
      %v460 = vshrl.u32 %v459, 4
      %v461 = vand.u32 %v459, 15
      %v462 = vsub.s32 0, %v461
      %v463 = vsel %vm457, %v462, %v461
      %vm464 = vcmp.lt.s32.totalorder %v258, 0
      %v465 = vsub.s32 0, %v258
      %v466 = vsel %vm464, %v465, %v258
      %v467 = vshrl.u32 %v466, 4
      %v468 = vand.u32 %v466, 15
      %v469 = vsub.s32 0, %v468
      %v470 = vsel %vm464, %v469, %v468
      %vm471 = vcmp.lt.s32.totalorder %v259, 0
      %v472 = vsub.s32 0, %v259
      %v473 = vsel %vm471, %v472, %v259
      %v474 = vshrl.u32 %v473, 4
      %v475 = vand.u32 %v473, 15
      %v476 = vsub.s32 0, %v475
      %v477 = vsel %vm471, %v476, %v475
      %vm478 = vcmp.lt.s32.totalorder %v260, 0
      %v479 = vsub.s32 0, %v260
      %v480 = vsel %vm478, %v479, %v260
      %v481 = vshrl.u32 %v480, 4
      %v482 = vand.u32 %v480, 15
      %v483 = vsub.s32 0, %v482
      %v484 = vsel %vm478, %v483, %v482
      %vm485 = vcmp.ne.s32.totalorder %v267, 0
      %vm486 = vcmp.ne.s32.totalorder %v274, 0
      %vm487 = vcmp.ne.s32.totalorder %v281, 0
      %vm488 = vcmp.ne.s32.totalorder %v288, 0
      %vm489 = vcmp.ne.s32.totalorder %v295, 0
      %vm490 = vcmp.ne.s32.totalorder %v302, 0
      %vm491 = vcmp.ne.s32.totalorder %v309, 0
      %vm492 = vcmp.ne.s32.totalorder %v316, 0
      %vm493 = vcmp.ne.s32.totalorder %v323, 0
      %vm494 = vcmp.ne.s32.totalorder %v330, 0
      %vm495 = vcmp.ne.s32.totalorder %v337, 0
      %vm496 = vcmp.ne.s32.totalorder %v344, 0
      %vm497 = vcmp.ne.s32.totalorder %v351, 0
      %vm498 = vcmp.ne.s32.totalorder %v358, 0
      %vm499 = vcmp.ne.s32.totalorder %v365, 0
      %vm500 = vcmp.ne.s32.totalorder %v372, 0
      %vm501 = vcmp.ne.s32.totalorder %v379, 0
      %vm502 = vcmp.ne.s32.totalorder %v386, 0
      %vm503 = vcmp.ne.s32.totalorder %v393, 0
      %vm504 = vcmp.ne.s32.totalorder %v400, 0
      %vm505 = vcmp.ne.s32.totalorder %v407, 0
      %vm506 = vcmp.ne.s32.totalorder %v414, 0
      %vm507 = vcmp.ne.s32.totalorder %v421, 0
      %vm508 = vcmp.ne.s32.totalorder %v428, 0
      %vm509 = vcmp.ne.s32.totalorder %v435, 0
      %vm510 = vcmp.ne.s32.totalorder %v442, 0
      %vm511 = vcmp.ne.s32.totalorder %v449, 0
      %vm512 = vcmp.ne.s32.totalorder %v456, 0
      %vm513 = vcmp.ne.s32.totalorder %v463, 0
      %vm514 = vcmp.ne.s32.totalorder %v470, 0
      %vm515 = vcmp.ne.s32.totalorder %v477, 0
      %vm516 = vcmp.ne.s32.totalorder %v484, 0
      %vm517 = vcmp.lt.s32.totalorder %v267, 0
      %vm518 = vcmp.lt.s32.totalorder %v274, 0
      %vm519 = vcmp.lt.s32.totalorder %v281, 0
      %vm520 = vcmp.lt.s32.totalorder %v288, 0
      %vm521 = vcmp.lt.s32.totalorder %v295, 0
      %vm522 = vcmp.lt.s32.totalorder %v302, 0
      %vm523 = vcmp.lt.s32.totalorder %v309, 0
      %vm524 = vcmp.lt.s32.totalorder %v316, 0
      %vm525 = vcmp.lt.s32.totalorder %v323, 0
      %vm526 = vcmp.lt.s32.totalorder %v330, 0
      %vm527 = vcmp.lt.s32.totalorder %v337, 0
      %vm528 = vcmp.lt.s32.totalorder %v344, 0
      %vm529 = vcmp.lt.s32.totalorder %v351, 0
      %vm530 = vcmp.lt.s32.totalorder %v358, 0
      %vm531 = vcmp.lt.s32.totalorder %v365, 0
      %vm532 = vcmp.lt.s32.totalorder %v372, 0
      %vm533 = vcmp.lt.s32.totalorder %v379, 0
      %vm534 = vcmp.lt.s32.totalorder %v386, 0
      %vm535 = vcmp.lt.s32.totalorder %v393, 0
      %vm536 = vcmp.lt.s32.totalorder %v400, 0
      %vm537 = vcmp.lt.s32.totalorder %v407, 0
      %vm538 = vcmp.lt.s32.totalorder %v414, 0
      %vm539 = vcmp.lt.s32.totalorder %v421, 0
      %vm540 = vcmp.lt.s32.totalorder %v428, 0
      %vm541 = vcmp.lt.s32.totalorder %v435, 0
      %vm542 = vcmp.lt.s32.totalorder %v442, 0
      %vm543 = vcmp.lt.s32.totalorder %v449, 0
      %vm544 = vcmp.lt.s32.totalorder %v456, 0
      %vm545 = vcmp.lt.s32.totalorder %v463, 0
      %vm546 = vcmp.lt.s32.totalorder %v470, 0
      %vm547 = vcmp.lt.s32.totalorder %v477, 0
      %vm548 = vcmp.lt.s32.totalorder %v484, 0
      %vm549 = vmand %vm517, %vm485
      %vm550 = vmand %vm518, %vm486
      %vm551 = vmand %vm519, %vm487
      %vm552 = vmand %vm520, %vm488
      %vm553 = vmand %vm521, %vm489
      %vm554 = vmand %vm522, %vm490
      %vm555 = vmand %vm523, %vm491
      %vm556 = vmand %vm524, %vm492
      %vm557 = vmand %vm525, %vm493
      %vm558 = vmand %vm526, %vm494
      %vm559 = vmand %vm527, %vm495
      %vm560 = vmand %vm528, %vm496
      %vm561 = vmand %vm529, %vm497
      %vm562 = vmand %vm530, %vm498
      %vm563 = vmand %vm531, %vm499
      %vm564 = vmand %vm532, %vm500
      %vm565 = vmand %vm533, %vm501
      %vm566 = vmand %vm534, %vm502
      %vm567 = vmand %vm535, %vm503
      %vm568 = vmand %vm536, %vm504
      %vm569 = vmand %vm537, %vm505
      %vm570 = vmand %vm538, %vm506
      %vm571 = vmand %vm539, %vm507
      %vm572 = vmand %vm540, %vm508
      %vm573 = vmand %vm541, %vm509
      %vm574 = vmand %vm542, %vm510
      %vm575 = vmand %vm543, %vm511
      %vm576 = vmand %vm544, %vm512
      %vm577 = vmand %vm545, %vm513
      %vm578 = vmand %vm546, %vm514
      %vm579 = vmand %vm547, %vm515
      %vm580 = vmand %vm548, %vm516
      %v581 = vadd.s32 %v267, 16
      %v582 = vadd.s32 %v274, 16
      %v583 = vadd.s32 %v281, 16
      %v584 = vadd.s32 %v288, 16
      %v585 = vadd.s32 %v295, 16
      %v586 = vadd.s32 %v302, 16
      %v587 = vadd.s32 %v309, 16
      %v588 = vadd.s32 %v316, 16
      %v589 = vadd.s32 %v323, 16
      %v590 = vadd.s32 %v330, 16
      %v591 = vadd.s32 %v337, 16
      %v592 = vadd.s32 %v344, 16
      %v593 = vadd.s32 %v351, 16
      %v594 = vadd.s32 %v358, 16
      %v595 = vadd.s32 %v365, 16
      %v596 = vadd.s32 %v372, 16
      %v597 = vadd.s32 %v379, 16
      %v598 = vadd.s32 %v386, 16
      %v599 = vadd.s32 %v393, 16
      %v600 = vadd.s32 %v400, 16
      %v601 = vadd.s32 %v407, 16
      %v602 = vadd.s32 %v414, 16
      %v603 = vadd.s32 %v421, 16
      %v604 = vadd.s32 %v428, 16
      %v605 = vadd.s32 %v435, 16
      %v606 = vadd.s32 %v442, 16
      %v607 = vadd.s32 %v449, 16
      %v608 = vadd.s32 %v456, 16
      %v609 = vadd.s32 %v463, 16
      %v610 = vadd.s32 %v470, 16
      %v611 = vadd.s32 %v477, 16
      %v612 = vadd.s32 %v484, 16
      %v613 = vsel %vm549, %v581, %v267
      %v614 = vsel %vm550, %v582, %v274
      %v615 = vsel %vm551, %v583, %v281
      %v616 = vsel %vm552, %v584, %v288
      %v617 = vsel %vm553, %v585, %v295
      %v618 = vsel %vm554, %v586, %v302
      %v619 = vsel %vm555, %v587, %v309
      %v620 = vsel %vm556, %v588, %v316
      %v621 = vsel %vm557, %v589, %v323
      %v622 = vsel %vm558, %v590, %v330
      %v623 = vsel %vm559, %v591, %v337
      %v624 = vsel %vm560, %v592, %v344
      %v625 = vsel %vm561, %v593, %v351
      %v626 = vsel %vm562, %v594, %v358
      %v627 = vsel %vm563, %v595, %v365
      %v628 = vsel %vm564, %v596, %v372
      %v629 = vsel %vm565, %v597, %v379
      %v630 = vsel %vm566, %v598, %v386
      %v631 = vsel %vm567, %v599, %v393
      %v632 = vsel %vm568, %v600, %v400
      %v633 = vsel %vm569, %v601, %v407
      %v634 = vsel %vm570, %v602, %v414
      %v635 = vsel %vm571, %v603, %v421
      %v636 = vsel %vm572, %v604, %v428
      %v637 = vsel %vm573, %v605, %v435
      %v638 = vsel %vm574, %v606, %v442
      %v639 = vsel %vm575, %v607, %v449
      %v640 = vsel %vm576, %v608, %v456
      %v641 = vsel %vm577, %v609, %v463
      %v642 = vsel %vm578, %v610, %v470
      %v643 = vsel %vm579, %v611, %v477
      %v644 = vsel %vm580, %v612, %v484
      %vm645 = vcmp.ne.s32.totalorder %v613, 0
      %vm646 = vcmp.ne.s32.totalorder %v614, 0
      %vm647 = vcmp.ne.s32.totalorder %v615, 0
      %vm648 = vcmp.ne.s32.totalorder %v616, 0
      %vm649 = vcmp.ne.s32.totalorder %v617, 0
      %vm650 = vcmp.ne.s32.totalorder %v618, 0
      %vm651 = vcmp.ne.s32.totalorder %v619, 0
      %vm652 = vcmp.ne.s32.totalorder %v620, 0
      %vm653 = vcmp.ne.s32.totalorder %v621, 0
      %vm654 = vcmp.ne.s32.totalorder %v622, 0
      %vm655 = vcmp.ne.s32.totalorder %v623, 0
      %vm656 = vcmp.ne.s32.totalorder %v624, 0
      %vm657 = vcmp.ne.s32.totalorder %v625, 0
      %vm658 = vcmp.ne.s32.totalorder %v626, 0
      %vm659 = vcmp.ne.s32.totalorder %v627, 0
      %vm660 = vcmp.ne.s32.totalorder %v628, 0
      %vm661 = vcmp.ne.s32.totalorder %v629, 0
      %vm662 = vcmp.ne.s32.totalorder %v630, 0
      %vm663 = vcmp.ne.s32.totalorder %v631, 0
      %vm664 = vcmp.ne.s32.totalorder %v632, 0
      %vm665 = vcmp.ne.s32.totalorder %v633, 0
      %vm666 = vcmp.ne.s32.totalorder %v634, 0
      %vm667 = vcmp.ne.s32.totalorder %v635, 0
      %vm668 = vcmp.ne.s32.totalorder %v636, 0
      %vm669 = vcmp.ne.s32.totalorder %v637, 0
      %vm670 = vcmp.ne.s32.totalorder %v638, 0
      %vm671 = vcmp.ne.s32.totalorder %v639, 0
      %vm672 = vcmp.ne.s32.totalorder %v640, 0
      %vm673 = vcmp.ne.s32.totalorder %v641, 0
      %vm674 = vcmp.ne.s32.totalorder %v642, 0
      %vm675 = vcmp.ne.s32.totalorder %v643, 0
      %vm676 = vcmp.ne.s32.totalorder %v644, 0
      %vm677 = vcmp.ne.s32.totalorder %v613, 15
      %vm678 = vcmp.ne.s32.totalorder %v614, 15
      %vm679 = vcmp.ne.s32.totalorder %v615, 15
      %vm680 = vcmp.ne.s32.totalorder %v616, 15
      %vm681 = vcmp.ne.s32.totalorder %v617, 15
      %vm682 = vcmp.ne.s32.totalorder %v618, 15
      %vm683 = vcmp.ne.s32.totalorder %v619, 15
      %vm684 = vcmp.ne.s32.totalorder %v620, 15
      %vm685 = vcmp.ne.s32.totalorder %v621, 15
      %vm686 = vcmp.ne.s32.totalorder %v622, 15
      %vm687 = vcmp.ne.s32.totalorder %v623, 15
      %vm688 = vcmp.ne.s32.totalorder %v624, 15
      %vm689 = vcmp.ne.s32.totalorder %v625, 15
      %vm690 = vcmp.ne.s32.totalorder %v626, 15
      %vm691 = vcmp.ne.s32.totalorder %v627, 15
      %vm692 = vcmp.ne.s32.totalorder %v628, 15
      %vm693 = vcmp.ne.s32.totalorder %v629, 15
      %vm694 = vcmp.ne.s32.totalorder %v630, 15
      %vm695 = vcmp.ne.s32.totalorder %v631, 15
      %vm696 = vcmp.ne.s32.totalorder %v632, 15
      %vm697 = vcmp.ne.s32.totalorder %v633, 15
      %vm698 = vcmp.ne.s32.totalorder %v634, 15
      %vm699 = vcmp.ne.s32.totalorder %v635, 15
      %vm700 = vcmp.ne.s32.totalorder %v636, 15
      %vm701 = vcmp.ne.s32.totalorder %v637, 15
      %vm702 = vcmp.ne.s32.totalorder %v638, 15
      %vm703 = vcmp.ne.s32.totalorder %v639, 15
      %vm704 = vcmp.ne.s32.totalorder %v640, 15
      %vm705 = vcmp.ne.s32.totalorder %v641, 15
      %vm706 = vcmp.ne.s32.totalorder %v642, 15
      %vm707 = vcmp.ne.s32.totalorder %v643, 15
      %vm708 = vcmp.ne.s32.totalorder %v644, 15
      %vm709 = vcmask 519168
      %710 = vst.msk [vmem:[#allocation2] sm:$0xf] %vm709, 0
      %711 = vst.msk [vmem:[#allocation2 + $0x4] sm:$0xf] %vm709, 0
      %712 = vst.msk [vmem:[#allocation2 + $0x8] sm:$0xf] %vm709, 0
      %713 = vst.msk [vmem:[#allocation2 + $0xc] sm:$0xf] %vm709, 0
      %714 = vst.msk [vmem:[#allocation2 + $0x90] sm:$0xf] %vm709, 0
      %715 = vst.msk [vmem:[#allocation2 + $0x94] sm:$0xf] %vm709, 0
      %716 = vst.msk [vmem:[#allocation2 + $0x98] sm:$0xf] %vm709, 0
      %717 = vst.msk [vmem:[#allocation2 + $0x9c] sm:$0xf] %vm709, 0
      %718 = vst.msk [vmem:[#allocation3] sm:$0xf] %vm709, 0
      %719 = vst.msk [vmem:[#allocation3 + $0x4] sm:$0xf] %vm709, 0
      %720 = vst.msk [vmem:[#allocation3 + $0x8] sm:$0xf] %vm709, 0
      %721 = vst.msk [vmem:[#allocation3 + $0xc] sm:$0xf] %vm709, 0
      %722 = vst.msk [vmem:[#allocation3 + $0x90] sm:$0xf] %vm709, 0
      %723 = vst.msk [vmem:[#allocation3 + $0x94] sm:$0xf] %vm709, 0
      %724 = vst.msk [vmem:[#allocation3 + $0x98] sm:$0xf] %vm709, 0
      %725 = vst.msk [vmem:[#allocation3 + $0x9c] sm:$0xf] %vm709, 0
      %v726 = vld [vmem:[%s219] sm:$0xf]
      %v727 = vld [vmem:[%s219 + $0x4] sm:$0xf]
      %v728 = vld [vmem:[%s219 + $0x8] sm:$0xf]
      %v729 = vld [vmem:[%s219 + $0xc] sm:$0xf]
      %v730 = vld [vmem:[%s219 + $0x10] sm:$0xf]
      %v731 = vld [vmem:[%s219 + $0x14] sm:$0xf]
      %v732 = vld [vmem:[%s219 + $0x18] sm:$0xf]
      %v733 = vld [vmem:[%s219 + $0x1c] sm:$0xf]
      %v734 = vld [vmem:[%s219 + $0x20] sm:$0xf]
      %v735 = vld [vmem:[%s219 + $0x24] sm:$0xf]
      %v736 = vld [vmem:[%s219 + $0x28] sm:$0xf]
      %v737 = vld [vmem:[%s219 + $0x2c] sm:$0xf]
      %v738 = vld [vmem:[%s219 + $0x30] sm:$0xf]
      %v739 = vld [vmem:[%s219 + $0x34] sm:$0xf]
      %v740 = vld [vmem:[%s219 + $0x38] sm:$0xf]
      %v741 = vld [vmem:[%s219 + $0x3c] sm:$0xf]
      %v742 = vld [vmem:[%s219 + $0x40] sm:$0xf]
      %v743 = vld [vmem:[%s219 + $0x44] sm:$0xf]
      %v744 = vld [vmem:[%s219 + $0x48] sm:$0xf]
      %v745 = vld [vmem:[%s219 + $0x4c] sm:$0xf]
      %v746 = vld [vmem:[%s219 + $0x50] sm:$0xf]
      %v747 = vld [vmem:[%s219 + $0x54] sm:$0xf]
      %v748 = vld [vmem:[%s219 + $0x58] sm:$0xf]
      %v749 = vld [vmem:[%s219 + $0x5c] sm:$0xf]
      %v750 = vld [vmem:[%s219 + $0x60] sm:$0xf]
      %v751 = vld [vmem:[%s219 + $0x64] sm:$0xf]
      %v752 = vld [vmem:[%s219 + $0x68] sm:$0xf]
      %v753 = vld [vmem:[%s219 + $0x6c] sm:$0xf]
      %v754 = vld [vmem:[%s219 + $0x70] sm:$0xf]
      %v755 = vld [vmem:[%s219 + $0x74] sm:$0xf]
      %v756 = vld [vmem:[%s219 + $0x78] sm:$0xf]
      %v757 = vld [vmem:[%s219 + $0x7c] sm:$0xf]
      %758 = vst.msk [vmem:[#allocation2 + $0x10] sm:$0xf] %vm709, %v726
      %759 = vst.msk [vmem:[#allocation2 + $0x14] sm:$0xf] %vm709, %v727
      %760 = vst.msk [vmem:[#allocation2 + $0x18] sm:$0xf] %vm709, %v728
      %761 = vst.msk [vmem:[#allocation2 + $0x1c] sm:$0xf] %vm709, %v729
      %762 = vst.msk [vmem:[#allocation2 + $0x20] sm:$0xf] %vm709, %v730
      %763 = vst.msk [vmem:[#allocation2 + $0x24] sm:$0xf] %vm709, %v731
      %764 = vst.msk [vmem:[#allocation2 + $0x28] sm:$0xf] %vm709, %v732
      %765 = vst.msk [vmem:[#allocation2 + $0x2c] sm:$0xf] %vm709, %v733
      %766 = vst.msk [vmem:[#allocation2 + $0x30] sm:$0xf] %vm709, %v734
      %767 = vst.msk [vmem:[#allocation2 + $0x34] sm:$0xf] %vm709, %v735
      %768 = vst.msk [vmem:[#allocation2 + $0x38] sm:$0xf] %vm709, %v736
      %769 = vst.msk [vmem:[#allocation2 + $0x3c] sm:$0xf] %vm709, %v737
      %770 = vst.msk [vmem:[#allocation2 + $0x40] sm:$0xf] %vm709, %v738
      %771 = vst.msk [vmem:[#allocation2 + $0x44] sm:$0xf] %vm709, %v739
      %772 = vst.msk [vmem:[#allocation2 + $0x48] sm:$0xf] %vm709, %v740
      %773 = vst.msk [vmem:[#allocation2 + $0x4c] sm:$0xf] %vm709, %v741
      %774 = vst.msk [vmem:[#allocation2 + $0x50] sm:$0xf] %vm709, %v742
      %775 = vst.msk [vmem:[#allocation2 + $0x54] sm:$0xf] %vm709, %v743
      %776 = vst.msk [vmem:[#allocation2 + $0x58] sm:$0xf] %vm709, %v744
      %777 = vst.msk [vmem:[#allocation2 + $0x5c] sm:$0xf] %vm709, %v745
      %778 = vst.msk [vmem:[#allocation2 + $0x60] sm:$0xf] %vm709, %v746
      %779 = vst.msk [vmem:[#allocation2 + $0x64] sm:$0xf] %vm709, %v747
      %780 = vst.msk [vmem:[#allocation2 + $0x68] sm:$0xf] %vm709, %v748
      %781 = vst.msk [vmem:[#allocation2 + $0x6c] sm:$0xf] %vm709, %v749
      %782 = vst.msk [vmem:[#allocation2 + $0x70] sm:$0xf] %vm709, %v750
      %783 = vst.msk [vmem:[#allocation2 + $0x74] sm:$0xf] %vm709, %v751
      %784 = vst.msk [vmem:[#allocation2 + $0x78] sm:$0xf] %vm709, %v752
      %785 = vst.msk [vmem:[#allocation2 + $0x7c] sm:$0xf] %vm709, %v753
      %786 = vst.msk [vmem:[#allocation2 + $0x80] sm:$0xf] %vm709, %v754
      %787 = vst.msk [vmem:[#allocation2 + $0x84] sm:$0xf] %vm709, %v755
      %788 = vst.msk [vmem:[#allocation2 + $0x88] sm:$0xf] %vm709, %v756
      %789 = vst.msk [vmem:[#allocation2 + $0x8c] sm:$0xf] %vm709, %v757
      %v790 = vld [vmem:[#allocation2 + $0x4] sm:$0x8]
      %v791 = vld [vmem:[#allocation2 + $0x8] sm:$0xf]
      %v792 = vld [vmem:[#allocation2 + $0xc] sm:$0xf]
      %v793 = vld [vmem:[#allocation2 + $0x10] sm:$0xf]
      %v794 = vld [vmem:[#allocation2 + $0x14] sm:$0xf]
      %v795 = vld [vmem:[#allocation2 + $0x18] sm:$0xf]
      %v796 = vld [vmem:[#allocation2 + $0x1c] sm:$0xf]
      %v797 = vld [vmem:[#allocation2 + $0x20] sm:$0xf]
      %v798 = vld [vmem:[#allocation2 + $0x24] sm:$0xf]
      %v799 = vld [vmem:[#allocation2 + $0x28] sm:$0xf]
      %v800 = vld [vmem:[#allocation2 + $0x2c] sm:$0xf]
      %v801 = vld [vmem:[#allocation2 + $0x30] sm:$0xf]
      %v802 = vld [vmem:[#allocation2 + $0x34] sm:$0xf]
      %v803 = vld [vmem:[#allocation2 + $0x38] sm:$0xf]
      %v804 = vld [vmem:[#allocation2 + $0x3c] sm:$0xf]
      %v805 = vld [vmem:[#allocation2 + $0x40] sm:$0xf]
      %v806 = vld [vmem:[#allocation2 + $0x44] sm:$0xf]
      %v807 = vld [vmem:[#allocation2 + $0x48] sm:$0xf]
      %v808 = vld [vmem:[#allocation2 + $0x4c] sm:$0xf]
      %v809 = vld [vmem:[#allocation2 + $0x50] sm:$0xf]
      %v810 = vld [vmem:[#allocation2 + $0x54] sm:$0xf]
      %v811 = vld [vmem:[#allocation2 + $0x58] sm:$0xf]
      %v812 = vld [vmem:[#allocation2 + $0x5c] sm:$0xf]
      %v813 = vld [vmem:[#allocation2 + $0x60] sm:$0xf]
      %v814 = vld [vmem:[#allocation2 + $0x64] sm:$0xf]
      %v815 = vld [vmem:[#allocation2 + $0x68] sm:$0xf]
      %v816 = vld [vmem:[#allocation2 + $0x6c] sm:$0xf]
      %v817 = vld [vmem:[#allocation2 + $0x70] sm:$0xf]
      %v818 = vld [vmem:[#allocation2 + $0x74] sm:$0xf]
      %v819 = vld [vmem:[#allocation2 + $0x78] sm:$0xf]
      %v820 = vld [vmem:[#allocation2 + $0x7c] sm:$0xf]
      %v821 = vld [vmem:[#allocation2 + $0x80] sm:$0xf]
      %v822 = vld [vmem:[#allocation2 + $0x84] sm:$0xf]
      %v823 = vsel %vm645, 1, 0
      %v824 = vsel %vm646, 1, 0
      %v825 = vsel %vm647, 1, 0
      %v826 = vsel %vm648, 1, 0
      %v827 = vsel %vm649, 1, 0
      %v828 = vsel %vm650, 1, 0
      %v829 = vsel %vm651, 1, 0
      %v830 = vsel %vm652, 1, 0
      %v831 = vsel %vm653, 1, 0
      %v832 = vsel %vm654, 1, 0
      %v833 = vsel %vm655, 1, 0
      %v834 = vsel %vm656, 1, 0
      %v835 = vsel %vm657, 1, 0
      %v836 = vsel %vm658, 1, 0
      %v837 = vsel %vm659, 1, 0
      %v838 = vsel %vm660, 1, 0
      %v839 = vsel %vm661, 1, 0
      %v840 = vsel %vm662, 1, 0
      %v841 = vsel %vm663, 1, 0
      %v842 = vsel %vm664, 1, 0
      %v843 = vsel %vm665, 1, 0
      %v844 = vsel %vm666, 1, 0
      %v845 = vsel %vm667, 1, 0
      %v846 = vsel %vm668, 1, 0
      %v847 = vsel %vm669, 1, 0
      %v848 = vsel %vm670, 1, 0
      %v849 = vsel %vm671, 1, 0
      %v850 = vsel %vm672, 1, 0
      %v851 = vsel %vm673, 1, 0
      %v852 = vsel %vm674, 1, 0
      %v853 = vsel %vm675, 1, 0
      %v854 = vsel %vm676, 1, 0
      %vm855 = vcmp.eq.s32.totalorder %v823, 1
      %vm856 = vcmp.eq.s32.totalorder %v824, 1
      %vm857 = vcmp.eq.s32.totalorder %v825, 1
      %vm858 = vcmp.eq.s32.totalorder %v826, 1
      %vm859 = vcmp.eq.s32.totalorder %v827, 1
      %vm860 = vcmp.eq.s32.totalorder %v828, 1
      %vm861 = vcmp.eq.s32.totalorder %v829, 1
      %vm862 = vcmp.eq.s32.totalorder %v830, 1
      %vm863 = vcmp.eq.s32.totalorder %v831, 1
      %vm864 = vcmp.eq.s32.totalorder %v832, 1
      %vm865 = vcmp.eq.s32.totalorder %v833, 1
      %vm866 = vcmp.eq.s32.totalorder %v834, 1
      %vm867 = vcmp.eq.s32.totalorder %v835, 1
      %vm868 = vcmp.eq.s32.totalorder %v836, 1
      %vm869 = vcmp.eq.s32.totalorder %v837, 1
      %vm870 = vcmp.eq.s32.totalorder %v838, 1
      %vm871 = vcmp.eq.s32.totalorder %v839, 1
      %vm872 = vcmp.eq.s32.totalorder %v840, 1
      %vm873 = vcmp.eq.s32.totalorder %v841, 1
      %vm874 = vcmp.eq.s32.totalorder %v842, 1
      %vm875 = vcmp.eq.s32.totalorder %v843, 1
      %vm876 = vcmp.eq.s32.totalorder %v844, 1
      %vm877 = vcmp.eq.s32.totalorder %v845, 1
      %vm878 = vcmp.eq.s32.totalorder %v846, 1
      %vm879 = vcmp.eq.s32.totalorder %v847, 1
      %vm880 = vcmp.eq.s32.totalorder %v848, 1
      %vm881 = vcmp.eq.s32.totalorder %v849, 1
      %vm882 = vcmp.eq.s32.totalorder %v850, 1
      %vm883 = vcmp.eq.s32.totalorder %v851, 1
      %vm884 = vcmp.eq.s32.totalorder %v852, 1
      %vm885 = vcmp.eq.s32.totalorder %v853, 1
      %vm886 = vcmp.eq.s32.totalorder %v854, 1
      %vm887 = vmpackc.low %vm855, %vm855
      %vm888 = vmpackc.low %vm856, %vm856
      %vm889 = vmpackc.low %vm857, %vm857
      %vm890 = vmpackc.low %vm858, %vm858
      %vm891 = vmpackc.low %vm859, %vm859
      %vm892 = vmpackc.low %vm860, %vm860
      %vm893 = vmpackc.low %vm861, %vm861
      %vm894 = vmpackc.low %vm862, %vm862
      %vm895 = vmpackc.low %vm863, %vm863
      %vm896 = vmpackc.low %vm864, %vm864
      %vm897 = vmpackc.low %vm865, %vm865
      %vm898 = vmpackc.low %vm866, %vm866
      %vm899 = vmpackc.low %vm867, %vm867
      %vm900 = vmpackc.low %vm868, %vm868
      %vm901 = vmpackc.low %vm869, %vm869
      %vm902 = vmpackc.low %vm870, %vm870
      %vm903 = vmpackc.low %vm871, %vm871
      %vm904 = vmpackc.low %vm872, %vm872
      %vm905 = vmpackc.low %vm873, %vm873
      %vm906 = vmpackc.low %vm874, %vm874
      %vm907 = vmpackc.low %vm875, %vm875
      %vm908 = vmpackc.low %vm876, %vm876
      %vm909 = vmpackc.low %vm877, %vm877
      %vm910 = vmpackc.low %vm878, %vm878
      %vm911 = vmpackc.low %vm879, %vm879
      %vm912 = vmpackc.low %vm880, %vm880
      %vm913 = vmpackc.low %vm881, %vm881
      %vm914 = vmpackc.low %vm882, %vm882
      %vm915 = vmpackc.low %vm883, %vm883
      %vm916 = vmpackc.low %vm884, %vm884
      %vm917 = vmpackc.low %vm885, %vm885
      %vm918 = vmpackc.low %vm886, %vm886
      %v919 = vsel %vm887, 65537, 0
      %v920 = vsel %vm888, 65537, 0
      %v921 = vsel %vm889, 65537, 0
      %v922 = vsel %vm890, 65537, 0
      %v923 = vsel %vm891, 65537, 0
      %v924 = vsel %vm892, 65537, 0
      %v925 = vsel %vm893, 65537, 0
      %v926 = vsel %vm894, 65537, 0
      %v927 = vsel %vm895, 65537, 0
      %v928 = vsel %vm896, 65537, 0
      %v929 = vsel %vm897, 65537, 0
      %v930 = vsel %vm898, 65537, 0
      %v931 = vsel %vm899, 65537, 0
      %v932 = vsel %vm900, 65537, 0
      %v933 = vsel %vm901, 65537, 0
      %v934 = vsel %vm902, 65537, 0
      %v935 = vsel %vm903, 65537, 0
      %v936 = vsel %vm904, 65537, 0
      %v937 = vsel %vm905, 65537, 0
      %v938 = vsel %vm906, 65537, 0
      %v939 = vsel %vm907, 65537, 0
      %v940 = vsel %vm908, 65537, 0
      %v941 = vsel %vm909, 65537, 0
      %v942 = vsel %vm910, 65537, 0
      %v943 = vsel %vm911, 65537, 0
      %v944 = vsel %vm912, 65537, 0
      %v945 = vsel %vm913, 65537, 0
      %v946 = vsel %vm914, 65537, 0
      %v947 = vsel %vm915, 65537, 0
      %v948 = vsel %vm916, 65537, 0
      %v949 = vsel %vm917, 65537, 0
      %v950 = vsel %vm918, 65537, 0
      %vm951 = vsmask.f32 3328
      %vm952 = vsmask.f32 7440
      %vm953 = vmor %vm951, %vm952
      %v955 = vshll.u32 %v919, 16
      %v957 = vrot.slane %v955, 5
      %v958 = vshrl.u32 %v919, 16
      %v960 = vrot.slane %v958, 4
      %v961 = vor.u32 %v960, %v957
      %v962 = vrot.slane %v961, 4
      %v964 = vshll.u32 %v920, 16
      %v966 = vrot.slane %v964, 5
      %v967 = vsel %vm953, %v962, %v966
      %v968 = vshrl.u32 %v920, 16
      %v970 = vrot.slane %v968, 4
      %v971 = vor.u32 %v970, %v966
      %v972 = vrot.slane %v971, 4
      %v974 = vshll.u32 %v921, 16
      %v976 = vrot.slane %v974, 5
      %v977 = vsel %vm953, %v972, %v976
      %v978 = vshrl.u32 %v921, 16
      %v980 = vrot.slane %v978, 4
      %v981 = vor.u32 %v980, %v976
      %v982 = vrot.slane %v981, 4
      %v984 = vshll.u32 %v922, 16
      %v986 = vrot.slane %v984, 5
      %v987 = vsel %vm953, %v982, %v986
      %v988 = vshrl.u32 %v922, 16
      %v990 = vrot.slane %v988, 4
      %v991 = vor.u32 %v990, %v986
      %v992 = vrot.slane %v991, 4
      %v994 = vshll.u32 %v923, 16
      %v996 = vrot.slane %v994, 5
      %v997 = vsel %vm953, %v992, %v996
      %v998 = vshrl.u32 %v923, 16
      %v1000 = vrot.slane %v998, 4
      %v1001 = vor.u32 %v1000, %v996
      %v1002 = vrot.slane %v1001, 4
      %v1004 = vshll.u32 %v924, 16
      %v1006 = vrot.slane %v1004, 5
      %v1007 = vsel %vm953, %v1002, %v1006
      %v1008 = vshrl.u32 %v924, 16
      %v1010 = vrot.slane %v1008, 4
      %v1011 = vor.u32 %v1010, %v1006
      %v1012 = vrot.slane %v1011, 4
      %v1014 = vshll.u32 %v925, 16
      %v1016 = vrot.slane %v1014, 5
      %v1017 = vsel %vm953, %v1012, %v1016
      %v1018 = vshrl.u32 %v925, 16
      %v1020 = vrot.slane %v1018, 4
      %v1021 = vor.u32 %v1020, %v1016
      %v1022 = vrot.slane %v1021, 4
      %v1024 = vshll.u32 %v926, 16
      %v1026 = vrot.slane %v1024, 5
      %v1027 = vsel %vm953, %v1022, %v1026
      %v1028 = vshrl.u32 %v926, 16
      %v1030 = vrot.slane %v1028, 4
      %v1031 = vor.u32 %v1030, %v1026
      %v1032 = vrot.slane %v1031, 4
      %v1034 = vshll.u32 %v927, 16
      %v1036 = vrot.slane %v1034, 5
      %v1037 = vsel %vm953, %v1032, %v1036
      %v1038 = vshrl.u32 %v927, 16
      %v1040 = vrot.slane %v1038, 4
      %v1041 = vor.u32 %v1040, %v1036
      %v1042 = vrot.slane %v1041, 4
      %v1044 = vshll.u32 %v928, 16
      %v1046 = vrot.slane %v1044, 5
      %v1047 = vsel %vm953, %v1042, %v1046
      %v1048 = vshrl.u32 %v928, 16
      %v1050 = vrot.slane %v1048, 4
      %v1051 = vor.u32 %v1050, %v1046
      %v1052 = vrot.slane %v1051, 4
      %v1054 = vshll.u32 %v929, 16
      %v1056 = vrot.slane %v1054, 5
      %v1057 = vsel %vm953, %v1052, %v1056
      %v1058 = vshrl.u32 %v929, 16
      %v1060 = vrot.slane %v1058, 4
      %v1061 = vor.u32 %v1060, %v1056
      %v1062 = vrot.slane %v1061, 4
      %v1064 = vshll.u32 %v930, 16
      %v1066 = vrot.slane %v1064, 5
      %v1067 = vsel %vm953, %v1062, %v1066
      %v1068 = vshrl.u32 %v930, 16
      %v1070 = vrot.slane %v1068, 4
      %v1071 = vor.u32 %v1070, %v1066
      %v1072 = vrot.slane %v1071, 4
      %v1074 = vshll.u32 %v931, 16
      %v1076 = vrot.slane %v1074, 5
      %v1077 = vsel %vm953, %v1072, %v1076
      %v1078 = vshrl.u32 %v931, 16
      %v1080 = vrot.slane %v1078, 4
      %v1081 = vor.u32 %v1080, %v1076
      %v1082 = vrot.slane %v1081, 4
      %v1084 = vshll.u32 %v932, 16
      %v1086 = vrot.slane %v1084, 5
      %v1087 = vsel %vm953, %v1082, %v1086
      %v1088 = vshrl.u32 %v932, 16
      %v1090 = vrot.slane %v1088, 4
      %v1091 = vor.u32 %v1090, %v1086
      %v1092 = vrot.slane %v1091, 4
      %v1094 = vshll.u32 %v933, 16
      %v1096 = vrot.slane %v1094, 5
      %v1097 = vsel %vm953, %v1092, %v1096
      %v1098 = vshrl.u32 %v933, 16
      %v1100 = vrot.slane %v1098, 4
      %v1101 = vor.u32 %v1100, %v1096
      %v1102 = vrot.slane %v1101, 4
      %v1104 = vshll.u32 %v934, 16
      %v1106 = vrot.slane %v1104, 5
      %v1107 = vsel %vm953, %v1102, %v1106
      %v1108 = vshrl.u32 %v934, 16
      %v1110 = vrot.slane %v1108, 4
      %v1111 = vor.u32 %v1110, %v1106
      %v1112 = vrot.slane %v1111, 4
      %v1114 = vshll.u32 %v935, 16
      %v1116 = vrot.slane %v1114, 5
      %v1117 = vsel %vm953, %v1112, %v1116
      %v1118 = vshrl.u32 %v935, 16
      %v1120 = vrot.slane %v1118, 4
      %v1121 = vor.u32 %v1120, %v1116
      %v1122 = vrot.slane %v1121, 4
      %v1124 = vshll.u32 %v936, 16
      %v1126 = vrot.slane %v1124, 5
      %v1127 = vsel %vm953, %v1122, %v1126
      %v1128 = vshrl.u32 %v936, 16
      %v1130 = vrot.slane %v1128, 4
      %v1131 = vor.u32 %v1130, %v1126
      %v1132 = vrot.slane %v1131, 4
      %v1134 = vshll.u32 %v937, 16
      %v1136 = vrot.slane %v1134, 5
      %v1137 = vsel %vm953, %v1132, %v1136
      %v1138 = vshrl.u32 %v937, 16
      %v1140 = vrot.slane %v1138, 4
      %v1141 = vor.u32 %v1140, %v1136
      %v1142 = vrot.slane %v1141, 4
      %v1144 = vshll.u32 %v938, 16
      %v1146 = vrot.slane %v1144, 5
      %v1147 = vsel %vm953, %v1142, %v1146
      %v1148 = vshrl.u32 %v938, 16
      %v1150 = vrot.slane %v1148, 4
      %v1151 = vor.u32 %v1150, %v1146
      %v1152 = vrot.slane %v1151, 4
      %v1154 = vshll.u32 %v939, 16
      %v1156 = vrot.slane %v1154, 5
      %v1157 = vsel %vm953, %v1152, %v1156
      %v1158 = vshrl.u32 %v939, 16
      %v1160 = vrot.slane %v1158, 4
      %v1161 = vor.u32 %v1160, %v1156
      %v1162 = vrot.slane %v1161, 4
      %v1164 = vshll.u32 %v940, 16
      %v1166 = vrot.slane %v1164, 5
      %v1167 = vsel %vm953, %v1162, %v1166
      %v1168 = vshrl.u32 %v940, 16
      %v1170 = vrot.slane %v1168, 4
      %v1171 = vor.u32 %v1170, %v1166
      %v1172 = vrot.slane %v1171, 4
      %v1174 = vshll.u32 %v941, 16
      %v1176 = vrot.slane %v1174, 5
      %v1177 = vsel %vm953, %v1172, %v1176
      %v1178 = vshrl.u32 %v941, 16
      %v1180 = vrot.slane %v1178, 4
      %v1181 = vor.u32 %v1180, %v1176
      %v1182 = vrot.slane %v1181, 4
      %v1184 = vshll.u32 %v942, 16
      %v1186 = vrot.slane %v1184, 5
      %v1187 = vsel %vm953, %v1182, %v1186
      %v1188 = vshrl.u32 %v942, 16
      %v1190 = vrot.slane %v1188, 4
      %v1191 = vor.u32 %v1190, %v1186
      %v1192 = vrot.slane %v1191, 4
      %v1194 = vshll.u32 %v943, 16
      %v1196 = vrot.slane %v1194, 5
      %v1197 = vsel %vm953, %v1192, %v1196
      %v1198 = vshrl.u32 %v943, 16
      %v1200 = vrot.slane %v1198, 4
      %v1201 = vor.u32 %v1200, %v1196
      %v1202 = vrot.slane %v1201, 4
      %v1204 = vshll.u32 %v944, 16
      %v1206 = vrot.slane %v1204, 5
      %v1207 = vsel %vm953, %v1202, %v1206
      %v1208 = vshrl.u32 %v944, 16
      %v1210 = vrot.slane %v1208, 4
      %v1211 = vor.u32 %v1210, %v1206
      %v1212 = vrot.slane %v1211, 4
      %v1214 = vshll.u32 %v945, 16
      %v1216 = vrot.slane %v1214, 5
      %v1217 = vsel %vm953, %v1212, %v1216
      %v1218 = vshrl.u32 %v945, 16
      %v1220 = vrot.slane %v1218, 4
      %v1221 = vor.u32 %v1220, %v1216
      %v1222 = vrot.slane %v1221, 4
      %v1224 = vshll.u32 %v946, 16
      %v1226 = vrot.slane %v1224, 5
      %v1227 = vsel %vm953, %v1222, %v1226
      %v1228 = vshrl.u32 %v946, 16
      %v1230 = vrot.slane %v1228, 4
      %v1231 = vor.u32 %v1230, %v1226
      %v1232 = vrot.slane %v1231, 4
      %v1234 = vshll.u32 %v947, 16
      %v1236 = vrot.slane %v1234, 5
      %v1237 = vsel %vm953, %v1232, %v1236
      %v1238 = vshrl.u32 %v947, 16
      %v1240 = vrot.slane %v1238, 4
      %v1241 = vor.u32 %v1240, %v1236
      %v1242 = vrot.slane %v1241, 4
      %v1244 = vshll.u32 %v948, 16
      %v1246 = vrot.slane %v1244, 5
      %v1247 = vsel %vm953, %v1242, %v1246
      %v1248 = vshrl.u32 %v948, 16
      %v1250 = vrot.slane %v1248, 4
      %v1251 = vor.u32 %v1250, %v1246
      %v1252 = vrot.slane %v1251, 4
      %v1254 = vshll.u32 %v949, 16
      %v1256 = vrot.slane %v1254, 5
      %v1257 = vsel %vm953, %v1252, %v1256
      %v1258 = vshrl.u32 %v949, 16
      %v1260 = vrot.slane %v1258, 4
      %v1261 = vor.u32 %v1260, %v1256
      %v1262 = vrot.slane %v1261, 4
      %v1264 = vshll.u32 %v950, 16
      %v1266 = vrot.slane %v1264, 5
      %v1267 = vsel %vm953, %v1262, %v1266
      %v1268 = vshrl.u32 %v950, 16
      %v1270 = vrot.slane %v1268, 4
      %v1271 = vor.u32 %v1270, %v1266
      %v1272 = vrot.slane %v1271, 4
      %v1273 = vunpack.c.l.b16 %v957
      %v1274 = vunpack.c.h.b16 %v957
      %v1275 = vunpack.c.l.b16 0
      %v1276 = vunpack.c.h.b16 0
      %vm1277 = vcmp.ne.s32.totalorder %v1273, %v1275
      %vm1278 = vcmp.ne.s32.totalorder %v1274, %v1276
      %vm1279 = vmpackc.low %vm1278, %vm1277
      %v1280 = vunpack.c.l.b16 %v967
      %v1281 = vunpack.c.h.b16 %v967
      %v1282 = vunpack.c.l.b16 0
      %v1283 = vunpack.c.h.b16 0
      %vm1284 = vcmp.ne.s32.totalorder %v1280, %v1282
      %vm1285 = vcmp.ne.s32.totalorder %v1281, %v1283
      %vm1286 = vmpackc.low %vm1285, %vm1284
      %v1287 = vunpack.c.l.b16 %v977
      %v1288 = vunpack.c.h.b16 %v977
      %v1289 = vunpack.c.l.b16 0
      %v1290 = vunpack.c.h.b16 0
      %vm1291 = vcmp.ne.s32.totalorder %v1287, %v1289
      %vm1292 = vcmp.ne.s32.totalorder %v1288, %v1290
      %vm1293 = vmpackc.low %vm1292, %vm1291
      %v1294 = vunpack.c.l.b16 %v987
      %v1295 = vunpack.c.h.b16 %v987
      %v1296 = vunpack.c.l.b16 0
      %v1297 = vunpack.c.h.b16 0
      %vm1298 = vcmp.ne.s32.totalorder %v1294, %v1296
      %vm1299 = vcmp.ne.s32.totalorder %v1295, %v1297
      %vm1300 = vmpackc.low %vm1299, %vm1298
      %v1301 = vunpack.c.l.b16 %v997
      %v1302 = vunpack.c.h.b16 %v997
      %v1303 = vunpack.c.l.b16 0
      %v1304 = vunpack.c.h.b16 0
      %vm1305 = vcmp.ne.s32.totalorder %v1301, %v1303
      %vm1306 = vcmp.ne.s32.totalorder %v1302, %v1304
      %vm1307 = vmpackc.low %vm1306, %vm1305
      %v1308 = vunpack.c.l.b16 %v1007
      %v1309 = vunpack.c.h.b16 %v1007
      %v1310 = vunpack.c.l.b16 0
      %v1311 = vunpack.c.h.b16 0
      %vm1312 = vcmp.ne.s32.totalorder %v1308, %v1310
      %vm1313 = vcmp.ne.s32.totalorder %v1309, %v1311
      %vm1314 = vmpackc.low %vm1313, %vm1312
      %v1315 = vunpack.c.l.b16 %v1017
      %v1316 = vunpack.c.h.b16 %v1017
      %v1317 = vunpack.c.l.b16 0
      %v1318 = vunpack.c.h.b16 0
      %vm1319 = vcmp.ne.s32.totalorder %v1315, %v1317
      %vm1320 = vcmp.ne.s32.totalorder %v1316, %v1318
      %vm1321 = vmpackc.low %vm1320, %vm1319
      %v1322 = vunpack.c.l.b16 %v1027
      %v1323 = vunpack.c.h.b16 %v1027
      %v1324 = vunpack.c.l.b16 0
      %v1325 = vunpack.c.h.b16 0
      %vm1326 = vcmp.ne.s32.totalorder %v1322, %v1324
      %vm1327 = vcmp.ne.s32.totalorder %v1323, %v1325
      %vm1328 = vmpackc.low %vm1327, %vm1326
      %v1329 = vunpack.c.l.b16 %v1037
      %v1330 = vunpack.c.h.b16 %v1037
      %v1331 = vunpack.c.l.b16 0
      %v1332 = vunpack.c.h.b16 0
      %vm1333 = vcmp.ne.s32.totalorder %v1329, %v1331
      %vm1334 = vcmp.ne.s32.totalorder %v1330, %v1332
      %vm1335 = vmpackc.low %vm1334, %vm1333
      %v1336 = vunpack.c.l.b16 %v1047
      %v1337 = vunpack.c.h.b16 %v1047
      %v1338 = vunpack.c.l.b16 0
      %v1339 = vunpack.c.h.b16 0
      %vm1340 = vcmp.ne.s32.totalorder %v1336, %v1338
      %vm1341 = vcmp.ne.s32.totalorder %v1337, %v1339
      %vm1342 = vmpackc.low %vm1341, %vm1340
      %v1343 = vunpack.c.l.b16 %v1057
      %v1344 = vunpack.c.h.b16 %v1057
      %v1345 = vunpack.c.l.b16 0
      %v1346 = vunpack.c.h.b16 0
      %vm1347 = vcmp.ne.s32.totalorder %v1343, %v1345
      %vm1348 = vcmp.ne.s32.totalorder %v1344, %v1346
      %vm1349 = vmpackc.low %vm1348, %vm1347
      %v1350 = vunpack.c.l.b16 %v1067
      %v1351 = vunpack.c.h.b16 %v1067
      %v1352 = vunpack.c.l.b16 0
      %v1353 = vunpack.c.h.b16 0
      %vm1354 = vcmp.ne.s32.totalorder %v1350, %v1352
      %vm1355 = vcmp.ne.s32.totalorder %v1351, %v1353
      %vm1356 = vmpackc.low %vm1355, %vm1354
      %v1357 = vunpack.c.l.b16 %v1077
      %v1358 = vunpack.c.h.b16 %v1077
      %v1359 = vunpack.c.l.b16 0
      %v1360 = vunpack.c.h.b16 0
      %vm1361 = vcmp.ne.s32.totalorder %v1357, %v1359
      %vm1362 = vcmp.ne.s32.totalorder %v1358, %v1360
      %vm1363 = vmpackc.low %vm1362, %vm1361
      %v1364 = vunpack.c.l.b16 %v1087
      %v1365 = vunpack.c.h.b16 %v1087
      %v1366 = vunpack.c.l.b16 0
      %v1367 = vunpack.c.h.b16 0
      %vm1368 = vcmp.ne.s32.totalorder %v1364, %v1366
      %vm1369 = vcmp.ne.s32.totalorder %v1365, %v1367
      %vm1370 = vmpackc.low %vm1369, %vm1368
      %v1371 = vunpack.c.l.b16 %v1097
      %v1372 = vunpack.c.h.b16 %v1097
      %v1373 = vunpack.c.l.b16 0
      %v1374 = vunpack.c.h.b16 0
      %vm1375 = vcmp.ne.s32.totalorder %v1371, %v1373
      %vm1376 = vcmp.ne.s32.totalorder %v1372, %v1374
      %vm1377 = vmpackc.low %vm1376, %vm1375
      %v1378 = vunpack.c.l.b16 %v1107
      %v1379 = vunpack.c.h.b16 %v1107
      %v1380 = vunpack.c.l.b16 0
      %v1381 = vunpack.c.h.b16 0
      %vm1382 = vcmp.ne.s32.totalorder %v1378, %v1380
      %vm1383 = vcmp.ne.s32.totalorder %v1379, %v1381
      %vm1384 = vmpackc.low %vm1383, %vm1382
      %v1385 = vunpack.c.l.b16 %v1117
      %v1386 = vunpack.c.h.b16 %v1117
      %v1387 = vunpack.c.l.b16 0
      %v1388 = vunpack.c.h.b16 0
      %vm1389 = vcmp.ne.s32.totalorder %v1385, %v1387
      %vm1390 = vcmp.ne.s32.totalorder %v1386, %v1388
      %vm1391 = vmpackc.low %vm1390, %vm1389
      %v1392 = vunpack.c.l.b16 %v1127
      %v1393 = vunpack.c.h.b16 %v1127
      %v1394 = vunpack.c.l.b16 0
      %v1395 = vunpack.c.h.b16 0
      %vm1396 = vcmp.ne.s32.totalorder %v1392, %v1394
      %vm1397 = vcmp.ne.s32.totalorder %v1393, %v1395
      %vm1398 = vmpackc.low %vm1397, %vm1396
      %v1399 = vunpack.c.l.b16 %v1137
      %v1400 = vunpack.c.h.b16 %v1137
      %v1401 = vunpack.c.l.b16 0
      %v1402 = vunpack.c.h.b16 0
      %vm1403 = vcmp.ne.s32.totalorder %v1399, %v1401
      %vm1404 = vcmp.ne.s32.totalorder %v1400, %v1402
      %vm1405 = vmpackc.low %vm1404, %vm1403
      %v1406 = vunpack.c.l.b16 %v1147
      %v1407 = vunpack.c.h.b16 %v1147
      %v1408 = vunpack.c.l.b16 0
      %v1409 = vunpack.c.h.b16 0
      %vm1410 = vcmp.ne.s32.totalorder %v1406, %v1408
      %vm1411 = vcmp.ne.s32.totalorder %v1407, %v1409
      %vm1412 = vmpackc.low %vm1411, %vm1410
      %v1413 = vunpack.c.l.b16 %v1157
      %v1414 = vunpack.c.h.b16 %v1157
      %v1415 = vunpack.c.l.b16 0
      %v1416 = vunpack.c.h.b16 0
      %vm1417 = vcmp.ne.s32.totalorder %v1413, %v1415
      %vm1418 = vcmp.ne.s32.totalorder %v1414, %v1416
      %vm1419 = vmpackc.low %vm1418, %vm1417
      %v1420 = vunpack.c.l.b16 %v1167
      %v1421 = vunpack.c.h.b16 %v1167
      %v1422 = vunpack.c.l.b16 0
      %v1423 = vunpack.c.h.b16 0
      %vm1424 = vcmp.ne.s32.totalorder %v1420, %v1422
      %vm1425 = vcmp.ne.s32.totalorder %v1421, %v1423
      %vm1426 = vmpackc.low %vm1425, %vm1424
      %v1427 = vunpack.c.l.b16 %v1177
      %v1428 = vunpack.c.h.b16 %v1177
      %v1429 = vunpack.c.l.b16 0
      %v1430 = vunpack.c.h.b16 0
      %vm1431 = vcmp.ne.s32.totalorder %v1427, %v1429
      %vm1432 = vcmp.ne.s32.totalorder %v1428, %v1430
      %vm1433 = vmpackc.low %vm1432, %vm1431
      %v1434 = vunpack.c.l.b16 %v1187
      %v1435 = vunpack.c.h.b16 %v1187
      %v1436 = vunpack.c.l.b16 0
      %v1437 = vunpack.c.h.b16 0
      %vm1438 = vcmp.ne.s32.totalorder %v1434, %v1436
      %vm1439 = vcmp.ne.s32.totalorder %v1435, %v1437
      %vm1440 = vmpackc.low %vm1439, %vm1438
      %v1441 = vunpack.c.l.b16 %v1197
      %v1442 = vunpack.c.h.b16 %v1197
      %v1443 = vunpack.c.l.b16 0
      %v1444 = vunpack.c.h.b16 0
      %vm1445 = vcmp.ne.s32.totalorder %v1441, %v1443
      %vm1446 = vcmp.ne.s32.totalorder %v1442, %v1444
      %vm1447 = vmpackc.low %vm1446, %vm1445
      %v1448 = vunpack.c.l.b16 %v1207
      %v1449 = vunpack.c.h.b16 %v1207
      %v1450 = vunpack.c.l.b16 0
      %v1451 = vunpack.c.h.b16 0
      %vm1452 = vcmp.ne.s32.totalorder %v1448, %v1450
      %vm1453 = vcmp.ne.s32.totalorder %v1449, %v1451
      %vm1454 = vmpackc.low %vm1453, %vm1452
      %v1455 = vunpack.c.l.b16 %v1217
      %v1456 = vunpack.c.h.b16 %v1217
      %v1457 = vunpack.c.l.b16 0
      %v1458 = vunpack.c.h.b16 0
      %vm1459 = vcmp.ne.s32.totalorder %v1455, %v1457
      %vm1460 = vcmp.ne.s32.totalorder %v1456, %v1458
      %vm1461 = vmpackc.low %vm1460, %vm1459
      %v1462 = vunpack.c.l.b16 %v1227
      %v1463 = vunpack.c.h.b16 %v1227
      %v1464 = vunpack.c.l.b16 0
      %v1465 = vunpack.c.h.b16 0
      %vm1466 = vcmp.ne.s32.totalorder %v1462, %v1464
      %vm1467 = vcmp.ne.s32.totalorder %v1463, %v1465
      %vm1468 = vmpackc.low %vm1467, %vm1466
      %v1469 = vunpack.c.l.b16 %v1237
      %v1470 = vunpack.c.h.b16 %v1237
      %v1471 = vunpack.c.l.b16 0
      %v1472 = vunpack.c.h.b16 0
      %vm1473 = vcmp.ne.s32.totalorder %v1469, %v1471
      %vm1474 = vcmp.ne.s32.totalorder %v1470, %v1472
      %vm1475 = vmpackc.low %vm1474, %vm1473
      %v1476 = vunpack.c.l.b16 %v1247
      %v1477 = vunpack.c.h.b16 %v1247
      %v1478 = vunpack.c.l.b16 0
      %v1479 = vunpack.c.h.b16 0
      %vm1480 = vcmp.ne.s32.totalorder %v1476, %v1478
      %vm1481 = vcmp.ne.s32.totalorder %v1477, %v1479
      %vm1482 = vmpackc.low %vm1481, %vm1480
      %v1483 = vunpack.c.l.b16 %v1257
      %v1484 = vunpack.c.h.b16 %v1257
      %v1485 = vunpack.c.l.b16 0
      %v1486 = vunpack.c.h.b16 0
      %vm1487 = vcmp.ne.s32.totalorder %v1483, %v1485
      %vm1488 = vcmp.ne.s32.totalorder %v1484, %v1486
      %vm1489 = vmpackc.low %vm1488, %vm1487
      %v1490 = vunpack.c.l.b16 %v1267
      %v1491 = vunpack.c.h.b16 %v1267
      %v1492 = vunpack.c.l.b16 0
      %v1493 = vunpack.c.h.b16 0
      %vm1494 = vcmp.ne.s32.totalorder %v1490, %v1492
      %vm1495 = vcmp.ne.s32.totalorder %v1491, %v1493
      %vm1496 = vmpackc.low %vm1495, %vm1494
      %v1497 = vunpack.c.l.b16 %v1272
      %v1498 = vunpack.c.h.b16 %v1272
      %v1499 = vunpack.c.l.b16 0
      %v1500 = vunpack.c.h.b16 0
      %vm1501 = vcmp.ne.s32.totalorder %v1497, %v1499
      %vm1502 = vcmp.ne.s32.totalorder %v1498, %v1500
      %vm1503 = vmpackc.low %vm1502, %vm1501
      %v1504 = vsel %vm1279, %v790, 0
      %v1505 = vsel %vm1286, %v791, 0
      %v1506 = vsel %vm1293, %v792, 0
      %v1507 = vsel %vm1300, %v793, 0
      %v1508 = vsel %vm1307, %v794, 0
      %v1509 = vsel %vm1314, %v795, 0
      %v1510 = vsel %vm1321, %v796, 0
      %v1511 = vsel %vm1328, %v797, 0
      %v1512 = vsel %vm1335, %v798, 0
      %v1513 = vsel %vm1342, %v799, 0
      %v1514 = vsel %vm1349, %v800, 0
      %v1515 = vsel %vm1356, %v801, 0
      %v1516 = vsel %vm1363, %v802, 0
      %v1517 = vsel %vm1370, %v803, 0
      %v1518 = vsel %vm1377, %v804, 0
      %v1519 = vsel %vm1384, %v805, 0
      %v1520 = vsel %vm1391, %v806, 0
      %v1521 = vsel %vm1398, %v807, 0
      %v1522 = vsel %vm1405, %v808, 0
      %v1523 = vsel %vm1412, %v809, 0
      %v1524 = vsel %vm1419, %v810, 0
      %v1525 = vsel %vm1426, %v811, 0
      %v1526 = vsel %vm1433, %v812, 0
      %v1527 = vsel %vm1440, %v813, 0
      %v1528 = vsel %vm1447, %v814, 0
      %v1529 = vsel %vm1454, %v815, 0
      %v1530 = vsel %vm1461, %v816, 0
      %v1531 = vsel %vm1468, %v817, 0
      %v1532 = vsel %vm1475, %v818, 0
      %v1533 = vsel %vm1482, %v819, 0
      %v1534 = vsel %vm1489, %v820, 0
      %v1535 = vsel %vm1496, %v821, 0
      %v1536 = vsel %vm1503, %v822, 0
      %vm1537 = vsmask.f32 256
      %vm1538 = vsmask.f32 4368
      %vm1539 = vmor %vm1537, %vm1538
      %v1541 = vshrl.u32 %v1504, 16
      %v1543 = vrot.slane %v1541, 7
      %v1544 = vrot.slane %v1543, 4
      %v1546 = vshrl.u32 %v1505, 16
      %v1548 = vrot.slane %v1546, 7
      %v1549 = vshll.u32 %v1505, 16
      %v1551 = vor.u32 %v1548, %v1549
      %v1552 = vsel %vm1539, %v1544, %v1551
      %v1553 = vrot.slane %v1548, 4
      %v1555 = vshrl.u32 %v1506, 16
      %v1557 = vrot.slane %v1555, 7
      %v1558 = vshll.u32 %v1506, 16
      %v1560 = vor.u32 %v1557, %v1558
      %v1561 = vsel %vm1539, %v1553, %v1560
      %v1562 = vrot.slane %v1557, 4
      %v1564 = vshrl.u32 %v1507, 16
      %v1566 = vrot.slane %v1564, 7
      %v1567 = vshll.u32 %v1507, 16
      %v1569 = vor.u32 %v1566, %v1567
      %v1570 = vsel %vm1539, %v1562, %v1569
      %v1571 = vrot.slane %v1566, 4
      %v1573 = vshrl.u32 %v1508, 16
      %v1575 = vrot.slane %v1573, 7
      %v1576 = vshll.u32 %v1508, 16
      %v1578 = vor.u32 %v1575, %v1576
      %v1579 = vsel %vm1539, %v1571, %v1578
      %v1580 = vrot.slane %v1575, 4
      %v1582 = vshrl.u32 %v1509, 16
      %v1584 = vrot.slane %v1582, 7
      %v1585 = vshll.u32 %v1509, 16
      %v1587 = vor.u32 %v1584, %v1585
      %v1588 = vsel %vm1539, %v1580, %v1587
      %v1589 = vrot.slane %v1584, 4
      %v1591 = vshrl.u32 %v1510, 16
      %v1593 = vrot.slane %v1591, 7
      %v1594 = vshll.u32 %v1510, 16
      %v1596 = vor.u32 %v1593, %v1594
      %v1597 = vsel %vm1539, %v1589, %v1596
      %v1598 = vrot.slane %v1593, 4
      %v1600 = vshrl.u32 %v1511, 16
      %v1602 = vrot.slane %v1600, 7
      %v1603 = vshll.u32 %v1511, 16
      %v1605 = vor.u32 %v1602, %v1603
      %v1606 = vsel %vm1539, %v1598, %v1605
      %v1607 = vrot.slane %v1602, 4
      %v1609 = vshrl.u32 %v1512, 16
      %v1611 = vrot.slane %v1609, 7
      %v1612 = vshll.u32 %v1512, 16
      %v1614 = vor.u32 %v1611, %v1612
      %v1615 = vsel %vm1539, %v1607, %v1614
      %v1616 = vrot.slane %v1611, 4
      %v1618 = vshrl.u32 %v1513, 16
      %v1620 = vrot.slane %v1618, 7
      %v1621 = vshll.u32 %v1513, 16
      %v1623 = vor.u32 %v1620, %v1621
      %v1624 = vsel %vm1539, %v1616, %v1623
      %v1625 = vrot.slane %v1620, 4
      %v1627 = vshrl.u32 %v1514, 16
      %v1629 = vrot.slane %v1627, 7
      %v1630 = vshll.u32 %v1514, 16
      %v1632 = vor.u32 %v1629, %v1630
      %v1633 = vsel %vm1539, %v1625, %v1632
      %v1634 = vrot.slane %v1629, 4
      %v1636 = vshrl.u32 %v1515, 16
      %v1638 = vrot.slane %v1636, 7
      %v1639 = vshll.u32 %v1515, 16
      %v1641 = vor.u32 %v1638, %v1639
      %v1642 = vsel %vm1539, %v1634, %v1641
      %v1643 = vrot.slane %v1638, 4
      %v1645 = vshrl.u32 %v1516, 16
      %v1647 = vrot.slane %v1645, 7
      %v1648 = vshll.u32 %v1516, 16
      %v1650 = vor.u32 %v1647, %v1648
      %v1651 = vsel %vm1539, %v1643, %v1650
      %v1652 = vrot.slane %v1647, 4
      %v1654 = vshrl.u32 %v1517, 16
      %v1656 = vrot.slane %v1654, 7
      %v1657 = vshll.u32 %v1517, 16
      %v1659 = vor.u32 %v1656, %v1657
      %v1660 = vsel %vm1539, %v1652, %v1659
      %v1661 = vrot.slane %v1656, 4
      %v1663 = vshrl.u32 %v1518, 16
      %v1665 = vrot.slane %v1663, 7
      %v1666 = vshll.u32 %v1518, 16
      %v1668 = vor.u32 %v1665, %v1666
      %v1669 = vsel %vm1539, %v1661, %v1668
      %v1670 = vrot.slane %v1665, 4
      %v1672 = vshrl.u32 %v1519, 16
      %v1674 = vrot.slane %v1672, 7
      %v1675 = vshll.u32 %v1519, 16
      %v1677 = vor.u32 %v1674, %v1675
      %v1678 = vsel %vm1539, %v1670, %v1677
      %v1679 = vrot.slane %v1674, 4
      %v1681 = vshrl.u32 %v1520, 16
      %v1683 = vrot.slane %v1681, 7
      %v1684 = vshll.u32 %v1520, 16
      %v1686 = vor.u32 %v1683, %v1684
      %v1687 = vsel %vm1539, %v1679, %v1686
      %v1688 = vrot.slane %v1683, 4
      %v1690 = vshrl.u32 %v1521, 16
      %v1692 = vrot.slane %v1690, 7
      %v1693 = vshll.u32 %v1521, 16
      %v1695 = vor.u32 %v1692, %v1693
      %v1696 = vsel %vm1539, %v1688, %v1695
      %v1697 = vrot.slane %v1692, 4
      %v1699 = vshrl.u32 %v1522, 16
      %v1701 = vrot.slane %v1699, 7
      %v1702 = vshll.u32 %v1522, 16
      %v1704 = vor.u32 %v1701, %v1702
      %v1705 = vsel %vm1539, %v1697, %v1704
      %v1706 = vrot.slane %v1701, 4
      %v1708 = vshrl.u32 %v1523, 16
      %v1710 = vrot.slane %v1708, 7
      %v1711 = vshll.u32 %v1523, 16
      %v1713 = vor.u32 %v1710, %v1711
      %v1714 = vsel %vm1539, %v1706, %v1713
      %v1715 = vrot.slane %v1710, 4
      %v1717 = vshrl.u32 %v1524, 16
      %v1719 = vrot.slane %v1717, 7
      %v1720 = vshll.u32 %v1524, 16
      %v1722 = vor.u32 %v1719, %v1720
      %v1723 = vsel %vm1539, %v1715, %v1722
      %v1724 = vrot.slane %v1719, 4
      %v1726 = vshrl.u32 %v1525, 16
      %v1728 = vrot.slane %v1726, 7
      %v1729 = vshll.u32 %v1525, 16
      %v1731 = vor.u32 %v1728, %v1729
      %v1732 = vsel %vm1539, %v1724, %v1731
      %v1733 = vrot.slane %v1728, 4
      %v1735 = vshrl.u32 %v1526, 16
      %v1737 = vrot.slane %v1735, 7
      %v1738 = vshll.u32 %v1526, 16
      %v1740 = vor.u32 %v1737, %v1738
      %v1741 = vsel %vm1539, %v1733, %v1740
      %v1742 = vrot.slane %v1737, 4
      %v1744 = vshrl.u32 %v1527, 16
      %v1746 = vrot.slane %v1744, 7
      %v1747 = vshll.u32 %v1527, 16
      %v1749 = vor.u32 %v1746, %v1747
      %v1750 = vsel %vm1539, %v1742, %v1749
      %v1751 = vrot.slane %v1746, 4
      %v1753 = vshrl.u32 %v1528, 16
      %v1755 = vrot.slane %v1753, 7
      %v1756 = vshll.u32 %v1528, 16
      %v1758 = vor.u32 %v1755, %v1756
      %v1759 = vsel %vm1539, %v1751, %v1758
      %v1760 = vrot.slane %v1755, 4
      %v1762 = vshrl.u32 %v1529, 16
      %v1764 = vrot.slane %v1762, 7
      %v1765 = vshll.u32 %v1529, 16
      %v1767 = vor.u32 %v1764, %v1765
      %v1768 = vsel %vm1539, %v1760, %v1767
      %v1769 = vrot.slane %v1764, 4
      %v1771 = vshrl.u32 %v1530, 16
      %v1773 = vrot.slane %v1771, 7
      %v1774 = vshll.u32 %v1530, 16
      %v1776 = vor.u32 %v1773, %v1774
      %v1777 = vsel %vm1539, %v1769, %v1776
      %v1778 = vrot.slane %v1773, 4
      %v1780 = vshrl.u32 %v1531, 16
      %v1782 = vrot.slane %v1780, 7
      %v1783 = vshll.u32 %v1531, 16
      %v1785 = vor.u32 %v1782, %v1783
      %v1786 = vsel %vm1539, %v1778, %v1785
      %v1787 = vrot.slane %v1782, 4
      %v1789 = vshrl.u32 %v1532, 16
      %v1791 = vrot.slane %v1789, 7
      %v1792 = vshll.u32 %v1532, 16
      %v1794 = vor.u32 %v1791, %v1792
      %v1795 = vsel %vm1539, %v1787, %v1794
      %v1796 = vrot.slane %v1791, 4
      %v1798 = vshrl.u32 %v1533, 16
      %v1800 = vrot.slane %v1798, 7
      %v1801 = vshll.u32 %v1533, 16
      %v1803 = vor.u32 %v1800, %v1801
      %v1804 = vsel %vm1539, %v1796, %v1803
      %v1805 = vrot.slane %v1800, 4
      %v1807 = vshrl.u32 %v1534, 16
      %v1809 = vrot.slane %v1807, 7
      %v1810 = vshll.u32 %v1534, 16
      %v1812 = vor.u32 %v1809, %v1810
      %v1813 = vsel %vm1539, %v1805, %v1812
      %v1814 = vrot.slane %v1809, 4
      %v1816 = vshrl.u32 %v1535, 16
      %v1818 = vrot.slane %v1816, 7
      %v1819 = vshll.u32 %v1535, 16
      %v1821 = vor.u32 %v1818, %v1819
      %v1822 = vsel %vm1539, %v1814, %v1821
      %v1823 = vrot.slane %v1818, 4
      %v1825 = vshrl.u32 %v1536, 16
      %v1827 = vrot.slane %v1825, 7
      %v1828 = vshll.u32 %v1536, 16
      %v1830 = vor.u32 %v1827, %v1828
      %v1831 = vsel %vm1539, %v1823, %v1830
      %1864 = vst.msk [vmem:[#allocation4] sm:$0xf] %vm709, %v1552
      %1865 = vst.msk [vmem:[#allocation4 + $0x14] sm:$0xf] %vm709, %v1561
      %1866 = vst.msk [vmem:[#allocation4 + $0x28] sm:$0xf] %vm709, %v1570
      %1867 = vst.msk [vmem:[#allocation4 + $0x3c] sm:$0xf] %vm709, %v1579
      %1868 = vst.msk [vmem:[#allocation4 + $0x50] sm:$0xf] %vm709, %v1588
      %1869 = vst.msk [vmem:[#allocation4 + $0x64] sm:$0xf] %vm709, %v1597
      %1870 = vst.msk [vmem:[#allocation4 + $0x78] sm:$0xf] %vm709, %v1606
      %1871 = vst.msk [vmem:[#allocation4 + $0x8c] sm:$0xf] %vm709, %v1615
      %1872 = vst.msk [vmem:[#allocation4 + $0xa0] sm:$0xf] %vm709, %v1624
      %1873 = vst.msk [vmem:[#allocation4 + $0xb4] sm:$0xf] %vm709, %v1633
      %1874 = vst.msk [vmem:[#allocation4 + $0xc8] sm:$0xf] %vm709, %v1642
      %1875 = vst.msk [vmem:[#allocation4 + $0xdc] sm:$0xf] %vm709, %v1651
      %1876 = vst.msk [vmem:[#allocation4 + $0xf0] sm:$0xf] %vm709, %v1660
      %1877 = vst.msk [vmem:[#allocation4 + $0x104] sm:$0xf] %vm709, %v1669
      %1878 = vst.msk [vmem:[#allocation4 + $0x118] sm:$0xf] %vm709, %v1678
      %1879 = vst.msk [vmem:[#allocation4 + $0x12c] sm:$0xf] %vm709, %v1687
      %1880 = vst.msk [vmem:[#allocation4 + $0x140] sm:$0xf] %vm709, %v1696
      %1881 = vst.msk [vmem:[#allocation4 + $0x154] sm:$0xf] %vm709, %v1705
      %1882 = vst.msk [vmem:[#allocation4 + $0x168] sm:$0xf] %vm709, %v1714
      %1883 = vst.msk [vmem:[#allocation4 + $0x17c] sm:$0xf] %vm709, %v1723
      %1884 = vst.msk [vmem:[#allocation4 + $0x190] sm:$0xf] %vm709, %v1732
      %1885 = vst.msk [vmem:[#allocation4 + $0x1a4] sm:$0xf] %vm709, %v1741
      %1886 = vst.msk [vmem:[#allocation4 + $0x1b8] sm:$0xf] %vm709, %v1750
      %1887 = vst.msk [vmem:[#allocation4 + $0x1cc] sm:$0xf] %vm709, %v1759
      %1888 = vst.msk [vmem:[#allocation4 + $0x1e0] sm:$0xf] %vm709, %v1768
      %1889 = vst.msk [vmem:[#allocation4 + $0x1f4] sm:$0xf] %vm709, %v1777
      %1890 = vst.msk [vmem:[#allocation4 + $0x208] sm:$0xf] %vm709, %v1786
      %1891 = vst.msk [vmem:[#allocation4 + $0x21c] sm:$0xf] %vm709, %v1795
      %1892 = vst.msk [vmem:[#allocation4 + $0x230] sm:$0xf] %vm709, %v1804
      %1893 = vst.msk [vmem:[#allocation4 + $0x244] sm:$0xf] %vm709, %v1813
      %1894 = vst.msk [vmem:[#allocation4 + $0x258] sm:$0xf] %vm709, %v1822
      %1895 = vst.msk [vmem:[#allocation4 + $0x26c] sm:$0xf] %vm709, %v1831
      %v1896 = vld [vmem:[#allocation2 + $0x8] sm:$0xf]
      %v1897 = vld [vmem:[#allocation2 + $0xc] sm:$0xf]
      %v1898 = vld [vmem:[#allocation2 + $0x10] sm:$0xf]
      %v1899 = vld [vmem:[#allocation2 + $0x14] sm:$0xf]
      %v1900 = vld [vmem:[#allocation2 + $0x18] sm:$0xf]
      %v1901 = vld [vmem:[#allocation2 + $0x1c] sm:$0xf]
      %v1902 = vld [vmem:[#allocation2 + $0x20] sm:$0xf]
      %v1903 = vld [vmem:[#allocation2 + $0x24] sm:$0xf]
      %v1904 = vld [vmem:[#allocation2 + $0x28] sm:$0xf]
      %v1905 = vld [vmem:[#allocation2 + $0x2c] sm:$0xf]
      %v1906 = vld [vmem:[#allocation2 + $0x30] sm:$0xf]
      %v1907 = vld [vmem:[#allocation2 + $0x34] sm:$0xf]
      %v1908 = vld [vmem:[#allocation2 + $0x38] sm:$0xf]
      %v1909 = vld [vmem:[#allocation2 + $0x3c] sm:$0xf]
      %v1910 = vld [vmem:[#allocation2 + $0x40] sm:$0xf]
      %v1911 = vld [vmem:[#allocation2 + $0x44] sm:$0xf]
      %v1912 = vld [vmem:[#allocation2 + $0x48] sm:$0xf]
      %v1913 = vld [vmem:[#allocation2 + $0x4c] sm:$0xf]
      %v1914 = vld [vmem:[#allocation2 + $0x50] sm:$0xf]
      %v1915 = vld [vmem:[#allocation2 + $0x54] sm:$0xf]
      %v1916 = vld [vmem:[#allocation2 + $0x58] sm:$0xf]
      %v1917 = vld [vmem:[#allocation2 + $0x5c] sm:$0xf]
      %v1918 = vld [vmem:[#allocation2 + $0x60] sm:$0xf]
      %v1919 = vld [vmem:[#allocation2 + $0x64] sm:$0xf]
      %v1920 = vld [vmem:[#allocation2 + $0x68] sm:$0xf]
      %v1921 = vld [vmem:[#allocation2 + $0x6c] sm:$0xf]
      %v1922 = vld [vmem:[#allocation2 + $0x70] sm:$0xf]
      %v1923 = vld [vmem:[#allocation2 + $0x74] sm:$0xf]
      %v1924 = vld [vmem:[#allocation2 + $0x78] sm:$0xf]
      %v1925 = vld [vmem:[#allocation2 + $0x7c] sm:$0xf]
      %v1926 = vld [vmem:[#allocation2 + $0x80] sm:$0xf]
      %v1927 = vld [vmem:[#allocation2 + $0x84] sm:$0xf]
      %1960 = vrot.lane.b32.xlu0 %v1896, 64
      %v1961 = vpop.permute.xlu0 %1960
      %1962 = vrot.lane.b32.xlu0 %v1897, 64
      %v1963 = vpop.permute.xlu0 %1962
      %1964 = vrot.lane.b32.xlu0 %v1898, 64
      %v1965 = vpop.permute.xlu0 %1964
      %1966 = vrot.lane.b32.xlu0 %v1899, 64
      %v1967 = vpop.permute.xlu0 %1966
      %1968 = vrot.lane.b32.xlu0 %v1900, 64
      %v1969 = vpop.permute.xlu0 %1968
      %1970 = vrot.lane.b32.xlu0 %v1901, 64
      %v1971 = vpop.permute.xlu0 %1970
      %1972 = vrot.lane.b32.xlu0 %v1902, 64
      %v1973 = vpop.permute.xlu0 %1972
      %1974 = vrot.lane.b32.xlu0 %v1903, 64
      %v1975 = vpop.permute.xlu0 %1974
      %1976 = vrot.lane.b32.xlu0 %v1904, 64
      %v1977 = vpop.permute.xlu0 %1976
      %1978 = vrot.lane.b32.xlu0 %v1905, 64
      %v1979 = vpop.permute.xlu0 %1978
      %1980 = vrot.lane.b32.xlu0 %v1906, 64
      %v1981 = vpop.permute.xlu0 %1980
      %1982 = vrot.lane.b32.xlu0 %v1907, 64
      %v1983 = vpop.permute.xlu0 %1982
      %1984 = vrot.lane.b32.xlu0 %v1908, 64
      %v1985 = vpop.permute.xlu0 %1984
      %1986 = vrot.lane.b32.xlu0 %v1909, 64
      %v1987 = vpop.permute.xlu0 %1986
      %1988 = vrot.lane.b32.xlu0 %v1910, 64
      %v1989 = vpop.permute.xlu0 %1988
      %1990 = vrot.lane.b32.xlu0 %v1911, 64
      %v1991 = vpop.permute.xlu0 %1990
      %1992 = vrot.lane.b32.xlu0 %v1912, 64
      %v1993 = vpop.permute.xlu0 %1992
      %1994 = vrot.lane.b32.xlu0 %v1913, 64
      %v1995 = vpop.permute.xlu0 %1994
      %1996 = vrot.lane.b32.xlu0 %v1914, 64
      %v1997 = vpop.permute.xlu0 %1996
      %1998 = vrot.lane.b32.xlu0 %v1915, 64
      %v1999 = vpop.permute.xlu0 %1998
      %2000 = vrot.lane.b32.xlu0 %v1916, 64
      %v2001 = vpop.permute.xlu0 %2000
      %2002 = vrot.lane.b32.xlu0 %v1917, 64
      %v2003 = vpop.permute.xlu0 %2002
      %2004 = vrot.lane.b32.xlu0 %v1918, 64
      %v2005 = vpop.permute.xlu0 %2004
      %2006 = vrot.lane.b32.xlu0 %v1919, 64
      %v2007 = vpop.permute.xlu0 %2006
      %2008 = vrot.lane.b32.xlu0 %v1920, 64
      %v2009 = vpop.permute.xlu0 %2008
      %2010 = vrot.lane.b32.xlu0 %v1921, 64
      %v2011 = vpop.permute.xlu0 %2010
      %2012 = vrot.lane.b32.xlu0 %v1922, 64
      %v2013 = vpop.permute.xlu0 %2012
      %2014 = vrot.lane.b32.xlu0 %v1923, 64
      %v2015 = vpop.permute.xlu0 %2014
      %2016 = vrot.lane.b32.xlu0 %v1924, 64
      %v2017 = vpop.permute.xlu0 %2016
      %2018 = vrot.lane.b32.xlu0 %v1925, 64
      %v2019 = vpop.permute.xlu0 %2018
      %2020 = vrot.lane.b32.xlu0 %v1926, 64
      %v2021 = vpop.permute.xlu0 %2020
      %2022 = vrot.lane.b32.xlu0 %v1927, 64
      %v2023 = vpop.permute.xlu0 %2022
      %vm2056 = vcmask 1043968
      %2057 = vst.msk [vmem:[#allocation4] sm:$0xf] %vm2056, %v1961
      %2058 = vst.msk [vmem:[#allocation4 + $0x14] sm:$0xf] %vm2056, %v1963
      %2059 = vst.msk [vmem:[#allocation4 + $0x28] sm:$0xf] %vm2056, %v1965
      %2060 = vst.msk [vmem:[#allocation4 + $0x3c] sm:$0xf] %vm2056, %v1967
      %2061 = vst.msk [vmem:[#allocation4 + $0x50] sm:$0xf] %vm2056, %v1969
      %2062 = vst.msk [vmem:[#allocation4 + $0x64] sm:$0xf] %vm2056, %v1971
      %2063 = vst.msk [vmem:[#allocation4 + $0x78] sm:$0xf] %vm2056, %v1973
      %2064 = vst.msk [vmem:[#allocation4 + $0x8c] sm:$0xf] %vm2056, %v1975
      %2065 = vst.msk [vmem:[#allocation4 + $0xa0] sm:$0xf] %vm2056, %v1977
      %2066 = vst.msk [vmem:[#allocation4 + $0xb4] sm:$0xf] %vm2056, %v1979
      %2067 = vst.msk [vmem:[#allocation4 + $0xc8] sm:$0xf] %vm2056, %v1981
      %2068 = vst.msk [vmem:[#allocation4 + $0xdc] sm:$0xf] %vm2056, %v1983
      %2069 = vst.msk [vmem:[#allocation4 + $0xf0] sm:$0xf] %vm2056, %v1985
      %2070 = vst.msk [vmem:[#allocation4 + $0x104] sm:$0xf] %vm2056, %v1987
      %2071 = vst.msk [vmem:[#allocation4 + $0x118] sm:$0xf] %vm2056, %v1989
      %2072 = vst.msk [vmem:[#allocation4 + $0x12c] sm:$0xf] %vm2056, %v1991
      %2073 = vst.msk [vmem:[#allocation4 + $0x140] sm:$0xf] %vm2056, %v1993
      %2074 = vst.msk [vmem:[#allocation4 + $0x154] sm:$0xf] %vm2056, %v1995
      %2075 = vst.msk [vmem:[#allocation4 + $0x168] sm:$0xf] %vm2056, %v1997
      %2076 = vst.msk [vmem:[#allocation4 + $0x17c] sm:$0xf] %vm2056, %v1999
      %2077 = vst.msk [vmem:[#allocation4 + $0x190] sm:$0xf] %vm2056, %v2001
      %2078 = vst.msk [vmem:[#allocation4 + $0x1a4] sm:$0xf] %vm2056, %v2003
      %2079 = vst.msk [vmem:[#allocation4 + $0x1b8] sm:$0xf] %vm2056, %v2005
      %2080 = vst.msk [vmem:[#allocation4 + $0x1cc] sm:$0xf] %vm2056, %v2007
      %2081 = vst.msk [vmem:[#allocation4 + $0x1e0] sm:$0xf] %vm2056, %v2009
      %2082 = vst.msk [vmem:[#allocation4 + $0x1f4] sm:$0xf] %vm2056, %v2011
      %2083 = vst.msk [vmem:[#allocation4 + $0x208] sm:$0xf] %vm2056, %v2013
      %2084 = vst.msk [vmem:[#allocation4 + $0x21c] sm:$0xf] %vm2056, %v2015
      %2085 = vst.msk [vmem:[#allocation4 + $0x230] sm:$0xf] %vm2056, %v2017
      %2086 = vst.msk [vmem:[#allocation4 + $0x244] sm:$0xf] %vm2056, %v2019
      %2087 = vst.msk [vmem:[#allocation4 + $0x258] sm:$0xf] %vm2056, %v2021
      %2088 = vst.msk [vmem:[#allocation4 + $0x26c] sm:$0xf] %vm2056, %v2023
      %v2089 = vld [vmem:[#allocation2 + $0x8] sm:$0xf]
      %v2090 = vld [vmem:[#allocation2 + $0xc] sm:$0xf]
      %v2091 = vld [vmem:[#allocation2 + $0x10] sm:$0xf]
      %v2092 = vld [vmem:[#allocation2 + $0x14] sm:$0xf]
      %v2093 = vld [vmem:[#allocation2 + $0x18] sm:$0xf]
      %v2094 = vld [vmem:[#allocation2 + $0x1c] sm:$0xf]
      %v2095 = vld [vmem:[#allocation2 + $0x20] sm:$0xf]
      %v2096 = vld [vmem:[#allocation2 + $0x24] sm:$0xf]
      %v2097 = vld [vmem:[#allocation2 + $0x28] sm:$0xf]
      %v2098 = vld [vmem:[#allocation2 + $0x2c] sm:$0xf]
      %v2099 = vld [vmem:[#allocation2 + $0x30] sm:$0xf]
      %v2100 = vld [vmem:[#allocation2 + $0x34] sm:$0xf]
      %v2101 = vld [vmem:[#allocation2 + $0x38] sm:$0xf]
      %v2102 = vld [vmem:[#allocation2 + $0x3c] sm:$0xf]
      %v2103 = vld [vmem:[#allocation2 + $0x40] sm:$0xf]
      %v2104 = vld [vmem:[#allocation2 + $0x44] sm:$0xf]
      %v2105 = vld [vmem:[#allocation2 + $0x48] sm:$0xf]
      %v2106 = vld [vmem:[#allocation2 + $0x4c] sm:$0xf]
      %v2107 = vld [vmem:[#allocation2 + $0x50] sm:$0xf]
      %v2108 = vld [vmem:[#allocation2 + $0x54] sm:$0xf]
      %v2109 = vld [vmem:[#allocation2 + $0x58] sm:$0xf]
      %v2110 = vld [vmem:[#allocation2 + $0x5c] sm:$0xf]
      %v2111 = vld [vmem:[#allocation2 + $0x60] sm:$0xf]
      %v2112 = vld [vmem:[#allocation2 + $0x64] sm:$0xf]
      %v2113 = vld [vmem:[#allocation2 + $0x68] sm:$0xf]
      %v2114 = vld [vmem:[#allocation2 + $0x6c] sm:$0xf]
      %v2115 = vld [vmem:[#allocation2 + $0x70] sm:$0xf]
      %v2116 = vld [vmem:[#allocation2 + $0x74] sm:$0xf]
      %v2117 = vld [vmem:[#allocation2 + $0x78] sm:$0xf]
      %v2118 = vld [vmem:[#allocation2 + $0x7c] sm:$0xf]
      %v2119 = vld [vmem:[#allocation2 + $0x80] sm:$0xf]
      %v2120 = vld [vmem:[#allocation2 + $0x84] sm:$0xf]
      %v2121 = vld [vmem:[#allocation2 + $0x88] sm:$0x1]
      %v2122 = vsel %vm677, 1, 0
      %v2123 = vsel %vm678, 1, 0
      %v2124 = vsel %vm679, 1, 0
      %v2125 = vsel %vm680, 1, 0
      %v2126 = vsel %vm681, 1, 0
      %v2127 = vsel %vm682, 1, 0
      %v2128 = vsel %vm683, 1, 0
      %v2129 = vsel %vm684, 1, 0
      %v2130 = vsel %vm685, 1, 0
      %v2131 = vsel %vm686, 1, 0
      %v2132 = vsel %vm687, 1, 0
      %v2133 = vsel %vm688, 1, 0
      %v2134 = vsel %vm689, 1, 0
      %v2135 = vsel %vm690, 1, 0
      %v2136 = vsel %vm691, 1, 0
      %v2137 = vsel %vm692, 1, 0
      %v2138 = vsel %vm693, 1, 0
      %v2139 = vsel %vm694, 1, 0
      %v2140 = vsel %vm695, 1, 0
      %v2141 = vsel %vm696, 1, 0
      %v2142 = vsel %vm697, 1, 0
      %v2143 = vsel %vm698, 1, 0
      %v2144 = vsel %vm699, 1, 0
      %v2145 = vsel %vm700, 1, 0
      %v2146 = vsel %vm701, 1, 0
      %v2147 = vsel %vm702, 1, 0
      %v2148 = vsel %vm703, 1, 0
      %v2149 = vsel %vm704, 1, 0
      %v2150 = vsel %vm705, 1, 0
      %v2151 = vsel %vm706, 1, 0
      %v2152 = vsel %vm707, 1, 0
      %v2153 = vsel %vm708, 1, 0
      %vm2154 = vcmp.eq.s32.totalorder %v2122, 1
      %vm2155 = vcmp.eq.s32.totalorder %v2123, 1
      %vm2156 = vcmp.eq.s32.totalorder %v2124, 1
      %vm2157 = vcmp.eq.s32.totalorder %v2125, 1
      %vm2158 = vcmp.eq.s32.totalorder %v2126, 1
      %vm2159 = vcmp.eq.s32.totalorder %v2127, 1
      %vm2160 = vcmp.eq.s32.totalorder %v2128, 1
      %vm2161 = vcmp.eq.s32.totalorder %v2129, 1
      %vm2162 = vcmp.eq.s32.totalorder %v2130, 1
      %vm2163 = vcmp.eq.s32.totalorder %v2131, 1
      %vm2164 = vcmp.eq.s32.totalorder %v2132, 1
      %vm2165 = vcmp.eq.s32.totalorder %v2133, 1
      %vm2166 = vcmp.eq.s32.totalorder %v2134, 1
      %vm2167 = vcmp.eq.s32.totalorder %v2135, 1
      %vm2168 = vcmp.eq.s32.totalorder %v2136, 1
      %vm2169 = vcmp.eq.s32.totalorder %v2137, 1
      %vm2170 = vcmp.eq.s32.totalorder %v2138, 1
      %vm2171 = vcmp.eq.s32.totalorder %v2139, 1
      %vm2172 = vcmp.eq.s32.totalorder %v2140, 1
      %vm2173 = vcmp.eq.s32.totalorder %v2141, 1
      %vm2174 = vcmp.eq.s32.totalorder %v2142, 1
      %vm2175 = vcmp.eq.s32.totalorder %v2143, 1
      %vm2176 = vcmp.eq.s32.totalorder %v2144, 1
      %vm2177 = vcmp.eq.s32.totalorder %v2145, 1
      %vm2178 = vcmp.eq.s32.totalorder %v2146, 1
      %vm2179 = vcmp.eq.s32.totalorder %v2147, 1
      %vm2180 = vcmp.eq.s32.totalorder %v2148, 1
      %vm2181 = vcmp.eq.s32.totalorder %v2149, 1
      %vm2182 = vcmp.eq.s32.totalorder %v2150, 1
      %vm2183 = vcmp.eq.s32.totalorder %v2151, 1
      %vm2184 = vcmp.eq.s32.totalorder %v2152, 1
      %vm2185 = vcmp.eq.s32.totalorder %v2153, 1
      %vm2186 = vmpackc.low %vm2154, %vm2154
      %vm2187 = vmpackc.low %vm2155, %vm2155
      %vm2188 = vmpackc.low %vm2156, %vm2156
      %vm2189 = vmpackc.low %vm2157, %vm2157
      %vm2190 = vmpackc.low %vm2158, %vm2158
      %vm2191 = vmpackc.low %vm2159, %vm2159
      %vm2192 = vmpackc.low %vm2160, %vm2160
      %vm2193 = vmpackc.low %vm2161, %vm2161
      %vm2194 = vmpackc.low %vm2162, %vm2162
      %vm2195 = vmpackc.low %vm2163, %vm2163
      %vm2196 = vmpackc.low %vm2164, %vm2164
      %vm2197 = vmpackc.low %vm2165, %vm2165
      %vm2198 = vmpackc.low %vm2166, %vm2166
      %vm2199 = vmpackc.low %vm2167, %vm2167
      %vm2200 = vmpackc.low %vm2168, %vm2168
      %vm2201 = vmpackc.low %vm2169, %vm2169
      %vm2202 = vmpackc.low %vm2170, %vm2170
      %vm2203 = vmpackc.low %vm2171, %vm2171
      %vm2204 = vmpackc.low %vm2172, %vm2172
      %vm2205 = vmpackc.low %vm2173, %vm2173
      %vm2206 = vmpackc.low %vm2174, %vm2174
      %vm2207 = vmpackc.low %vm2175, %vm2175
      %vm2208 = vmpackc.low %vm2176, %vm2176
      %vm2209 = vmpackc.low %vm2177, %vm2177
      %vm2210 = vmpackc.low %vm2178, %vm2178
      %vm2211 = vmpackc.low %vm2179, %vm2179
      %vm2212 = vmpackc.low %vm2180, %vm2180
      %vm2213 = vmpackc.low %vm2181, %vm2181
      %vm2214 = vmpackc.low %vm2182, %vm2182
      %vm2215 = vmpackc.low %vm2183, %vm2183
      %vm2216 = vmpackc.low %vm2184, %vm2184
      %vm2217 = vmpackc.low %vm2185, %vm2185
      %v2218 = vsel %vm2186, 65537, 0
      %v2219 = vsel %vm2187, 65537, 0
      %v2220 = vsel %vm2188, 65537, 0
      %v2221 = vsel %vm2189, 65537, 0
      %v2222 = vsel %vm2190, 65537, 0
      %v2223 = vsel %vm2191, 65537, 0
      %v2224 = vsel %vm2192, 65537, 0
      %v2225 = vsel %vm2193, 65537, 0
      %v2226 = vsel %vm2194, 65537, 0
      %v2227 = vsel %vm2195, 65537, 0
      %v2228 = vsel %vm2196, 65537, 0
      %v2229 = vsel %vm2197, 65537, 0
      %v2230 = vsel %vm2198, 65537, 0
      %v2231 = vsel %vm2199, 65537, 0
      %v2232 = vsel %vm2200, 65537, 0
      %v2233 = vsel %vm2201, 65537, 0
      %v2234 = vsel %vm2202, 65537, 0
      %v2235 = vsel %vm2203, 65537, 0
      %v2236 = vsel %vm2204, 65537, 0
      %v2237 = vsel %vm2205, 65537, 0
      %v2238 = vsel %vm2206, 65537, 0
      %v2239 = vsel %vm2207, 65537, 0
      %v2240 = vsel %vm2208, 65537, 0
      %v2241 = vsel %vm2209, 65537, 0
      %v2242 = vsel %vm2210, 65537, 0
      %v2243 = vsel %vm2211, 65537, 0
      %v2244 = vsel %vm2212, 65537, 0
      %v2245 = vsel %vm2213, 65537, 0
      %v2246 = vsel %vm2214, 65537, 0
      %v2247 = vsel %vm2215, 65537, 0
      %v2248 = vsel %vm2216, 65537, 0
      %v2249 = vsel %vm2217, 65537, 0
      %v2251 = vshrl.u32 %v2218, 16
      %v2253 = vrot.slane %v2251, 7
      %v2254 = vshll.u32 %v2218, 16
      %v2256 = vor.u32 %v2253, %v2254
      %v2257 = vrot.slane %v2253, 4
      %v2259 = vshrl.u32 %v2219, 16
      %v2261 = vrot.slane %v2259, 7
      %v2262 = vshll.u32 %v2219, 16
      %v2264 = vor.u32 %v2261, %v2262
      %v2265 = vsel %vm1539, %v2257, %v2264
      %v2266 = vrot.slane %v2261, 4
      %v2268 = vshrl.u32 %v2220, 16
      %v2270 = vrot.slane %v2268, 7
      %v2271 = vshll.u32 %v2220, 16
      %v2273 = vor.u32 %v2270, %v2271
      %v2274 = vsel %vm1539, %v2266, %v2273
      %v2275 = vrot.slane %v2270, 4
      %v2277 = vshrl.u32 %v2221, 16
      %v2279 = vrot.slane %v2277, 7
      %v2280 = vshll.u32 %v2221, 16
      %v2282 = vor.u32 %v2279, %v2280
      %v2283 = vsel %vm1539, %v2275, %v2282
      %v2284 = vrot.slane %v2279, 4
      %v2286 = vshrl.u32 %v2222, 16
      %v2288 = vrot.slane %v2286, 7
      %v2289 = vshll.u32 %v2222, 16
      %v2291 = vor.u32 %v2288, %v2289
      %v2292 = vsel %vm1539, %v2284, %v2291
      %v2293 = vrot.slane %v2288, 4
      %v2295 = vshrl.u32 %v2223, 16
      %v2297 = vrot.slane %v2295, 7
      %v2298 = vshll.u32 %v2223, 16
      %v2300 = vor.u32 %v2297, %v2298
      %v2301 = vsel %vm1539, %v2293, %v2300
      %v2302 = vrot.slane %v2297, 4
      %v2304 = vshrl.u32 %v2224, 16
      %v2306 = vrot.slane %v2304, 7
      %v2307 = vshll.u32 %v2224, 16
      %v2309 = vor.u32 %v2306, %v2307
      %v2310 = vsel %vm1539, %v2302, %v2309
      %v2311 = vrot.slane %v2306, 4
      %v2313 = vshrl.u32 %v2225, 16
      %v2315 = vrot.slane %v2313, 7
      %v2316 = vshll.u32 %v2225, 16
      %v2318 = vor.u32 %v2315, %v2316
      %v2319 = vsel %vm1539, %v2311, %v2318
      %v2320 = vrot.slane %v2315, 4
      %v2322 = vshrl.u32 %v2226, 16
      %v2324 = vrot.slane %v2322, 7
      %v2325 = vshll.u32 %v2226, 16
      %v2327 = vor.u32 %v2324, %v2325
      %v2328 = vsel %vm1539, %v2320, %v2327
      %v2329 = vrot.slane %v2324, 4
      %v2331 = vshrl.u32 %v2227, 16
      %v2333 = vrot.slane %v2331, 7
      %v2334 = vshll.u32 %v2227, 16
      %v2336 = vor.u32 %v2333, %v2334
      %v2337 = vsel %vm1539, %v2329, %v2336
      %v2338 = vrot.slane %v2333, 4
      %v2340 = vshrl.u32 %v2228, 16
      %v2342 = vrot.slane %v2340, 7
      %v2343 = vshll.u32 %v2228, 16
      %v2345 = vor.u32 %v2342, %v2343
      %v2346 = vsel %vm1539, %v2338, %v2345
      %v2347 = vrot.slane %v2342, 4
      %v2349 = vshrl.u32 %v2229, 16
      %v2351 = vrot.slane %v2349, 7
      %v2352 = vshll.u32 %v2229, 16
      %v2354 = vor.u32 %v2351, %v2352
      %v2355 = vsel %vm1539, %v2347, %v2354
      %v2356 = vrot.slane %v2351, 4
      %v2358 = vshrl.u32 %v2230, 16
      %v2360 = vrot.slane %v2358, 7
      %v2361 = vshll.u32 %v2230, 16
      %v2363 = vor.u32 %v2360, %v2361
      %v2364 = vsel %vm1539, %v2356, %v2363
      %v2365 = vrot.slane %v2360, 4
      %v2367 = vshrl.u32 %v2231, 16
      %v2369 = vrot.slane %v2367, 7
      %v2370 = vshll.u32 %v2231, 16
      %v2372 = vor.u32 %v2369, %v2370
      %v2373 = vsel %vm1539, %v2365, %v2372
      %v2374 = vrot.slane %v2369, 4
      %v2376 = vshrl.u32 %v2232, 16
      %v2378 = vrot.slane %v2376, 7
      %v2379 = vshll.u32 %v2232, 16
      %v2381 = vor.u32 %v2378, %v2379
      %v2382 = vsel %vm1539, %v2374, %v2381
      %v2383 = vrot.slane %v2378, 4
      %v2385 = vshrl.u32 %v2233, 16
      %v2387 = vrot.slane %v2385, 7
      %v2388 = vshll.u32 %v2233, 16
      %v2390 = vor.u32 %v2387, %v2388
      %v2391 = vsel %vm1539, %v2383, %v2390
      %v2392 = vrot.slane %v2387, 4
      %v2394 = vshrl.u32 %v2234, 16
      %v2396 = vrot.slane %v2394, 7
      %v2397 = vshll.u32 %v2234, 16
      %v2399 = vor.u32 %v2396, %v2397
      %v2400 = vsel %vm1539, %v2392, %v2399
      %v2401 = vrot.slane %v2396, 4
      %v2403 = vshrl.u32 %v2235, 16
      %v2405 = vrot.slane %v2403, 7
      %v2406 = vshll.u32 %v2235, 16
      %v2408 = vor.u32 %v2405, %v2406
      %v2409 = vsel %vm1539, %v2401, %v2408
      %v2410 = vrot.slane %v2405, 4
      %v2412 = vshrl.u32 %v2236, 16
      %v2414 = vrot.slane %v2412, 7
      %v2415 = vshll.u32 %v2236, 16
      %v2417 = vor.u32 %v2414, %v2415
      %v2418 = vsel %vm1539, %v2410, %v2417
      %v2419 = vrot.slane %v2414, 4
      %v2421 = vshrl.u32 %v2237, 16
      %v2423 = vrot.slane %v2421, 7
      %v2424 = vshll.u32 %v2237, 16
      %v2426 = vor.u32 %v2423, %v2424
      %v2427 = vsel %vm1539, %v2419, %v2426
      %v2428 = vrot.slane %v2423, 4
      %v2430 = vshrl.u32 %v2238, 16
      %v2432 = vrot.slane %v2430, 7
      %v2433 = vshll.u32 %v2238, 16
      %v2435 = vor.u32 %v2432, %v2433
      %v2436 = vsel %vm1539, %v2428, %v2435
      %v2437 = vrot.slane %v2432, 4
      %v2439 = vshrl.u32 %v2239, 16
      %v2441 = vrot.slane %v2439, 7
      %v2442 = vshll.u32 %v2239, 16
      %v2444 = vor.u32 %v2441, %v2442
      %v2445 = vsel %vm1539, %v2437, %v2444
      %v2446 = vrot.slane %v2441, 4
      %v2448 = vshrl.u32 %v2240, 16
      %v2450 = vrot.slane %v2448, 7
      %v2451 = vshll.u32 %v2240, 16
      %v2453 = vor.u32 %v2450, %v2451
      %v2454 = vsel %vm1539, %v2446, %v2453
      %v2455 = vrot.slane %v2450, 4
      %v2457 = vshrl.u32 %v2241, 16
      %v2459 = vrot.slane %v2457, 7
      %v2460 = vshll.u32 %v2241, 16
      %v2462 = vor.u32 %v2459, %v2460
      %v2463 = vsel %vm1539, %v2455, %v2462
      %v2464 = vrot.slane %v2459, 4
      %v2466 = vshrl.u32 %v2242, 16
      %v2468 = vrot.slane %v2466, 7
      %v2469 = vshll.u32 %v2242, 16
      %v2471 = vor.u32 %v2468, %v2469
      %v2472 = vsel %vm1539, %v2464, %v2471
      %v2473 = vrot.slane %v2468, 4
      %v2475 = vshrl.u32 %v2243, 16
      %v2477 = vrot.slane %v2475, 7
      %v2478 = vshll.u32 %v2243, 16
      %v2480 = vor.u32 %v2477, %v2478
      %v2481 = vsel %vm1539, %v2473, %v2480
      %v2482 = vrot.slane %v2477, 4
      %v2484 = vshrl.u32 %v2244, 16
      %v2486 = vrot.slane %v2484, 7
      %v2487 = vshll.u32 %v2244, 16
      %v2489 = vor.u32 %v2486, %v2487
      %v2490 = vsel %vm1539, %v2482, %v2489
      %v2491 = vrot.slane %v2486, 4
      %v2493 = vshrl.u32 %v2245, 16
      %v2495 = vrot.slane %v2493, 7
      %v2496 = vshll.u32 %v2245, 16
      %v2498 = vor.u32 %v2495, %v2496
      %v2499 = vsel %vm1539, %v2491, %v2498
      %v2500 = vrot.slane %v2495, 4
      %v2502 = vshrl.u32 %v2246, 16
      %v2504 = vrot.slane %v2502, 7
      %v2505 = vshll.u32 %v2246, 16
      %v2507 = vor.u32 %v2504, %v2505
      %v2508 = vsel %vm1539, %v2500, %v2507
      %v2509 = vrot.slane %v2504, 4
      %v2511 = vshrl.u32 %v2247, 16
      %v2513 = vrot.slane %v2511, 7
      %v2514 = vshll.u32 %v2247, 16
      %v2516 = vor.u32 %v2513, %v2514
      %v2517 = vsel %vm1539, %v2509, %v2516
      %v2518 = vrot.slane %v2513, 4
      %v2520 = vshrl.u32 %v2248, 16
      %v2522 = vrot.slane %v2520, 7
      %v2523 = vshll.u32 %v2248, 16
      %v2525 = vor.u32 %v2522, %v2523
      %v2526 = vsel %vm1539, %v2518, %v2525
      %v2527 = vrot.slane %v2522, 4
      %v2529 = vshrl.u32 %v2249, 16
      %v2531 = vrot.slane %v2529, 7
      %v2532 = vshll.u32 %v2249, 16
      %v2534 = vor.u32 %v2531, %v2532
      %v2535 = vsel %vm1539, %v2527, %v2534
      %v2536 = vrot.slane %v2531, 4
      %v2537 = vunpack.c.l.b16 %v2256
      %v2538 = vunpack.c.h.b16 %v2256
      %v2539 = vunpack.c.l.b16 0
      %v2540 = vunpack.c.h.b16 0
      %vm2541 = vcmp.ne.s32.totalorder %v2537, %v2539
      %vm2542 = vcmp.ne.s32.totalorder %v2538, %v2540
      %vm2543 = vmpackc.low %vm2542, %vm2541
      %v2544 = vunpack.c.l.b16 %v2265
      %v2545 = vunpack.c.h.b16 %v2265
      %v2546 = vunpack.c.l.b16 0
      %v2547 = vunpack.c.h.b16 0
      %vm2548 = vcmp.ne.s32.totalorder %v2544, %v2546
      %vm2549 = vcmp.ne.s32.totalorder %v2545, %v2547
      %vm2550 = vmpackc.low %vm2549, %vm2548
      %v2551 = vunpack.c.l.b16 %v2274
      %v2552 = vunpack.c.h.b16 %v2274
      %v2553 = vunpack.c.l.b16 0
      %v2554 = vunpack.c.h.b16 0
      %vm2555 = vcmp.ne.s32.totalorder %v2551, %v2553
      %vm2556 = vcmp.ne.s32.totalorder %v2552, %v2554
      %vm2557 = vmpackc.low %vm2556, %vm2555
      %v2558 = vunpack.c.l.b16 %v2283
      %v2559 = vunpack.c.h.b16 %v2283
      %v2560 = vunpack.c.l.b16 0
      %v2561 = vunpack.c.h.b16 0
      %vm2562 = vcmp.ne.s32.totalorder %v2558, %v2560
      %vm2563 = vcmp.ne.s32.totalorder %v2559, %v2561
      %vm2564 = vmpackc.low %vm2563, %vm2562
      %v2565 = vunpack.c.l.b16 %v2292
      %v2566 = vunpack.c.h.b16 %v2292
      %v2567 = vunpack.c.l.b16 0
      %v2568 = vunpack.c.h.b16 0
      %vm2569 = vcmp.ne.s32.totalorder %v2565, %v2567
      %vm2570 = vcmp.ne.s32.totalorder %v2566, %v2568
      %vm2571 = vmpackc.low %vm2570, %vm2569
      %v2572 = vunpack.c.l.b16 %v2301
      %v2573 = vunpack.c.h.b16 %v2301
      %v2574 = vunpack.c.l.b16 0
      %v2575 = vunpack.c.h.b16 0
      %vm2576 = vcmp.ne.s32.totalorder %v2572, %v2574
      %vm2577 = vcmp.ne.s32.totalorder %v2573, %v2575
      %vm2578 = vmpackc.low %vm2577, %vm2576
      %v2579 = vunpack.c.l.b16 %v2310
      %v2580 = vunpack.c.h.b16 %v2310
      %v2581 = vunpack.c.l.b16 0
      %v2582 = vunpack.c.h.b16 0
      %vm2583 = vcmp.ne.s32.totalorder %v2579, %v2581
      %vm2584 = vcmp.ne.s32.totalorder %v2580, %v2582
      %vm2585 = vmpackc.low %vm2584, %vm2583
      %v2586 = vunpack.c.l.b16 %v2319
      %v2587 = vunpack.c.h.b16 %v2319
      %v2588 = vunpack.c.l.b16 0
      %v2589 = vunpack.c.h.b16 0
      %vm2590 = vcmp.ne.s32.totalorder %v2586, %v2588
      %vm2591 = vcmp.ne.s32.totalorder %v2587, %v2589
      %vm2592 = vmpackc.low %vm2591, %vm2590
      %v2593 = vunpack.c.l.b16 %v2328
      %v2594 = vunpack.c.h.b16 %v2328
      %v2595 = vunpack.c.l.b16 0
      %v2596 = vunpack.c.h.b16 0
      %vm2597 = vcmp.ne.s32.totalorder %v2593, %v2595
      %vm2598 = vcmp.ne.s32.totalorder %v2594, %v2596
      %vm2599 = vmpackc.low %vm2598, %vm2597
      %v2600 = vunpack.c.l.b16 %v2337
      %v2601 = vunpack.c.h.b16 %v2337
      %v2602 = vunpack.c.l.b16 0
      %v2603 = vunpack.c.h.b16 0
      %vm2604 = vcmp.ne.s32.totalorder %v2600, %v2602
      %vm2605 = vcmp.ne.s32.totalorder %v2601, %v2603
      %vm2606 = vmpackc.low %vm2605, %vm2604
      %v2607 = vunpack.c.l.b16 %v2346
      %v2608 = vunpack.c.h.b16 %v2346
      %v2609 = vunpack.c.l.b16 0
      %v2610 = vunpack.c.h.b16 0
      %vm2611 = vcmp.ne.s32.totalorder %v2607, %v2609
      %vm2612 = vcmp.ne.s32.totalorder %v2608, %v2610
      %vm2613 = vmpackc.low %vm2612, %vm2611
      %v2614 = vunpack.c.l.b16 %v2355
      %v2615 = vunpack.c.h.b16 %v2355
      %v2616 = vunpack.c.l.b16 0
      %v2617 = vunpack.c.h.b16 0
      %vm2618 = vcmp.ne.s32.totalorder %v2614, %v2616
      %vm2619 = vcmp.ne.s32.totalorder %v2615, %v2617
      %vm2620 = vmpackc.low %vm2619, %vm2618
      %v2621 = vunpack.c.l.b16 %v2364
      %v2622 = vunpack.c.h.b16 %v2364
      %v2623 = vunpack.c.l.b16 0
      %v2624 = vunpack.c.h.b16 0
      %vm2625 = vcmp.ne.s32.totalorder %v2621, %v2623
      %vm2626 = vcmp.ne.s32.totalorder %v2622, %v2624
      %vm2627 = vmpackc.low %vm2626, %vm2625
      %v2628 = vunpack.c.l.b16 %v2373
      %v2629 = vunpack.c.h.b16 %v2373
      %v2630 = vunpack.c.l.b16 0
      %v2631 = vunpack.c.h.b16 0
      %vm2632 = vcmp.ne.s32.totalorder %v2628, %v2630
      %vm2633 = vcmp.ne.s32.totalorder %v2629, %v2631
      %vm2634 = vmpackc.low %vm2633, %vm2632
      %v2635 = vunpack.c.l.b16 %v2382
      %v2636 = vunpack.c.h.b16 %v2382
      %v2637 = vunpack.c.l.b16 0
      %v2638 = vunpack.c.h.b16 0
      %vm2639 = vcmp.ne.s32.totalorder %v2635, %v2637
      %vm2640 = vcmp.ne.s32.totalorder %v2636, %v2638
      %vm2641 = vmpackc.low %vm2640, %vm2639
      %v2642 = vunpack.c.l.b16 %v2391
      %v2643 = vunpack.c.h.b16 %v2391
      %v2644 = vunpack.c.l.b16 0
      %v2645 = vunpack.c.h.b16 0
      %vm2646 = vcmp.ne.s32.totalorder %v2642, %v2644
      %vm2647 = vcmp.ne.s32.totalorder %v2643, %v2645
      %vm2648 = vmpackc.low %vm2647, %vm2646
      %v2649 = vunpack.c.l.b16 %v2400
      %v2650 = vunpack.c.h.b16 %v2400
      %v2651 = vunpack.c.l.b16 0
      %v2652 = vunpack.c.h.b16 0
      %vm2653 = vcmp.ne.s32.totalorder %v2649, %v2651
      %vm2654 = vcmp.ne.s32.totalorder %v2650, %v2652
      %vm2655 = vmpackc.low %vm2654, %vm2653
      %v2656 = vunpack.c.l.b16 %v2409
      %v2657 = vunpack.c.h.b16 %v2409
      %v2658 = vunpack.c.l.b16 0
      %v2659 = vunpack.c.h.b16 0
      %vm2660 = vcmp.ne.s32.totalorder %v2656, %v2658
      %vm2661 = vcmp.ne.s32.totalorder %v2657, %v2659
      %vm2662 = vmpackc.low %vm2661, %vm2660
      %v2663 = vunpack.c.l.b16 %v2418
      %v2664 = vunpack.c.h.b16 %v2418
      %v2665 = vunpack.c.l.b16 0
      %v2666 = vunpack.c.h.b16 0
      %vm2667 = vcmp.ne.s32.totalorder %v2663, %v2665
      %vm2668 = vcmp.ne.s32.totalorder %v2664, %v2666
      %vm2669 = vmpackc.low %vm2668, %vm2667
      %v2670 = vunpack.c.l.b16 %v2427
      %v2671 = vunpack.c.h.b16 %v2427
      %v2672 = vunpack.c.l.b16 0
      %v2673 = vunpack.c.h.b16 0
      %vm2674 = vcmp.ne.s32.totalorder %v2670, %v2672
      %vm2675 = vcmp.ne.s32.totalorder %v2671, %v2673
      %vm2676 = vmpackc.low %vm2675, %vm2674
      %v2677 = vunpack.c.l.b16 %v2436
      %v2678 = vunpack.c.h.b16 %v2436
      %v2679 = vunpack.c.l.b16 0
      %v2680 = vunpack.c.h.b16 0
      %vm2681 = vcmp.ne.s32.totalorder %v2677, %v2679
      %vm2682 = vcmp.ne.s32.totalorder %v2678, %v2680
      %vm2683 = vmpackc.low %vm2682, %vm2681
      %v2684 = vunpack.c.l.b16 %v2445
      %v2685 = vunpack.c.h.b16 %v2445
      %v2686 = vunpack.c.l.b16 0
      %v2687 = vunpack.c.h.b16 0
      %vm2688 = vcmp.ne.s32.totalorder %v2684, %v2686
      %vm2689 = vcmp.ne.s32.totalorder %v2685, %v2687
      %vm2690 = vmpackc.low %vm2689, %vm2688
      %v2691 = vunpack.c.l.b16 %v2454
      %v2692 = vunpack.c.h.b16 %v2454
      %v2693 = vunpack.c.l.b16 0
      %v2694 = vunpack.c.h.b16 0
      %vm2695 = vcmp.ne.s32.totalorder %v2691, %v2693
      %vm2696 = vcmp.ne.s32.totalorder %v2692, %v2694
      %vm2697 = vmpackc.low %vm2696, %vm2695
      %v2698 = vunpack.c.l.b16 %v2463
      %v2699 = vunpack.c.h.b16 %v2463
      %v2700 = vunpack.c.l.b16 0
      %v2701 = vunpack.c.h.b16 0
      %vm2702 = vcmp.ne.s32.totalorder %v2698, %v2700
      %vm2703 = vcmp.ne.s32.totalorder %v2699, %v2701
      %vm2704 = vmpackc.low %vm2703, %vm2702
      %v2705 = vunpack.c.l.b16 %v2472
      %v2706 = vunpack.c.h.b16 %v2472
      %v2707 = vunpack.c.l.b16 0
      %v2708 = vunpack.c.h.b16 0
      %vm2709 = vcmp.ne.s32.totalorder %v2705, %v2707
      %vm2710 = vcmp.ne.s32.totalorder %v2706, %v2708
      %vm2711 = vmpackc.low %vm2710, %vm2709
      %v2712 = vunpack.c.l.b16 %v2481
      %v2713 = vunpack.c.h.b16 %v2481
      %v2714 = vunpack.c.l.b16 0
      %v2715 = vunpack.c.h.b16 0
      %vm2716 = vcmp.ne.s32.totalorder %v2712, %v2714
      %vm2717 = vcmp.ne.s32.totalorder %v2713, %v2715
      %vm2718 = vmpackc.low %vm2717, %vm2716
      %v2719 = vunpack.c.l.b16 %v2490
      %v2720 = vunpack.c.h.b16 %v2490
      %v2721 = vunpack.c.l.b16 0
      %v2722 = vunpack.c.h.b16 0
      %vm2723 = vcmp.ne.s32.totalorder %v2719, %v2721
      %vm2724 = vcmp.ne.s32.totalorder %v2720, %v2722
      %vm2725 = vmpackc.low %vm2724, %vm2723
      %v2726 = vunpack.c.l.b16 %v2499
      %v2727 = vunpack.c.h.b16 %v2499
      %v2728 = vunpack.c.l.b16 0
      %v2729 = vunpack.c.h.b16 0
      %vm2730 = vcmp.ne.s32.totalorder %v2726, %v2728
      %vm2731 = vcmp.ne.s32.totalorder %v2727, %v2729
      %vm2732 = vmpackc.low %vm2731, %vm2730
      %v2733 = vunpack.c.l.b16 %v2508
      %v2734 = vunpack.c.h.b16 %v2508
      %v2735 = vunpack.c.l.b16 0
      %v2736 = vunpack.c.h.b16 0
      %vm2737 = vcmp.ne.s32.totalorder %v2733, %v2735
      %vm2738 = vcmp.ne.s32.totalorder %v2734, %v2736
      %vm2739 = vmpackc.low %vm2738, %vm2737
      %v2740 = vunpack.c.l.b16 %v2517
      %v2741 = vunpack.c.h.b16 %v2517
      %v2742 = vunpack.c.l.b16 0
      %v2743 = vunpack.c.h.b16 0
      %vm2744 = vcmp.ne.s32.totalorder %v2740, %v2742
      %vm2745 = vcmp.ne.s32.totalorder %v2741, %v2743
      %vm2746 = vmpackc.low %vm2745, %vm2744
      %v2747 = vunpack.c.l.b16 %v2526
      %v2748 = vunpack.c.h.b16 %v2526
      %v2749 = vunpack.c.l.b16 0
      %v2750 = vunpack.c.h.b16 0
      %vm2751 = vcmp.ne.s32.totalorder %v2747, %v2749
      %vm2752 = vcmp.ne.s32.totalorder %v2748, %v2750
      %vm2753 = vmpackc.low %vm2752, %vm2751
      %v2754 = vunpack.c.l.b16 %v2535
      %v2755 = vunpack.c.h.b16 %v2535
      %v2756 = vunpack.c.l.b16 0
      %v2757 = vunpack.c.h.b16 0
      %vm2758 = vcmp.ne.s32.totalorder %v2754, %v2756
      %vm2759 = vcmp.ne.s32.totalorder %v2755, %v2757
      %vm2760 = vmpackc.low %vm2759, %vm2758
      %v2761 = vunpack.c.l.b16 %v2536
      %v2762 = vunpack.c.h.b16 %v2536
      %v2763 = vunpack.c.l.b16 0
      %v2764 = vunpack.c.h.b16 0
      %vm2765 = vcmp.ne.s32.totalorder %v2761, %v2763
      %vm2766 = vcmp.ne.s32.totalorder %v2762, %v2764
      %vm2767 = vmpackc.low %vm2766, %vm2765
      %v2768 = vsel %vm2543, %v2089, 0
      %v2769 = vsel %vm2550, %v2090, 0
      %v2770 = vsel %vm2557, %v2091, 0
      %v2771 = vsel %vm2564, %v2092, 0
      %v2772 = vsel %vm2571, %v2093, 0
      %v2773 = vsel %vm2578, %v2094, 0
      %v2774 = vsel %vm2585, %v2095, 0
      %v2775 = vsel %vm2592, %v2096, 0
      %v2776 = vsel %vm2599, %v2097, 0
      %v2777 = vsel %vm2606, %v2098, 0
      %v2778 = vsel %vm2613, %v2099, 0
      %v2779 = vsel %vm2620, %v2100, 0
      %v2780 = vsel %vm2627, %v2101, 0
      %v2781 = vsel %vm2634, %v2102, 0
      %v2782 = vsel %vm2641, %v2103, 0
      %v2783 = vsel %vm2648, %v2104, 0
      %v2784 = vsel %vm2655, %v2105, 0
      %v2785 = vsel %vm2662, %v2106, 0
      %v2786 = vsel %vm2669, %v2107, 0
      %v2787 = vsel %vm2676, %v2108, 0
      %v2788 = vsel %vm2683, %v2109, 0
      %v2789 = vsel %vm2690, %v2110, 0
      %v2790 = vsel %vm2697, %v2111, 0
      %v2791 = vsel %vm2704, %v2112, 0
      %v2792 = vsel %vm2711, %v2113, 0
      %v2793 = vsel %vm2718, %v2114, 0
      %v2794 = vsel %vm2725, %v2115, 0
      %v2795 = vsel %vm2732, %v2116, 0
      %v2796 = vsel %vm2739, %v2117, 0
      %v2797 = vsel %vm2746, %v2118, 0
      %v2798 = vsel %vm2753, %v2119, 0
      %v2799 = vsel %vm2760, %v2120, 0
      %v2800 = vsel %vm2767, %v2121, 0
      %v2802 = vshrl.u32 %v2768, 16
      %v2804 = vrot.slane %v2802, 4
      %v2805 = vshll.u32 %v2768, 16
      %v2807 = vrot.slane %v2805, 5
      %v2808 = vor.u32 %v2804, %v2807
      %v2809 = vrot.slane %v2808, 4
      %v2811 = vshll.u32 %v2769, 16
      %v2813 = vrot.slane %v2811, 5
      %v2814 = vsel %vm953, %v2809, %v2813
      %v2815 = vshrl.u32 %v2769, 16
      %v2817 = vrot.slane %v2815, 4
      %v2818 = vor.u32 %v2817, %v2813
      %v2819 = vrot.slane %v2818, 4
      %v2821 = vshll.u32 %v2770, 16
      %v2823 = vrot.slane %v2821, 5
      %v2824 = vsel %vm953, %v2819, %v2823
      %v2825 = vshrl.u32 %v2770, 16
      %v2827 = vrot.slane %v2825, 4
      %v2828 = vor.u32 %v2827, %v2823
      %v2829 = vrot.slane %v2828, 4
      %v2831 = vshll.u32 %v2771, 16
      %v2833 = vrot.slane %v2831, 5
      %v2834 = vsel %vm953, %v2829, %v2833
      %v2835 = vshrl.u32 %v2771, 16
      %v2837 = vrot.slane %v2835, 4
      %v2838 = vor.u32 %v2837, %v2833
      %v2839 = vrot.slane %v2838, 4
      %v2841 = vshll.u32 %v2772, 16
      %v2843 = vrot.slane %v2841, 5
      %v2844 = vsel %vm953, %v2839, %v2843
      %v2845 = vshrl.u32 %v2772, 16
      %v2847 = vrot.slane %v2845, 4
      %v2848 = vor.u32 %v2847, %v2843
      %v2849 = vrot.slane %v2848, 4
      %v2851 = vshll.u32 %v2773, 16
      %v2853 = vrot.slane %v2851, 5
      %v2854 = vsel %vm953, %v2849, %v2853
      %v2855 = vshrl.u32 %v2773, 16
      %v2857 = vrot.slane %v2855, 4
      %v2858 = vor.u32 %v2857, %v2853
      %v2859 = vrot.slane %v2858, 4
      %v2861 = vshll.u32 %v2774, 16
      %v2863 = vrot.slane %v2861, 5
      %v2864 = vsel %vm953, %v2859, %v2863
      %v2865 = vshrl.u32 %v2774, 16
      %v2867 = vrot.slane %v2865, 4
      %v2868 = vor.u32 %v2867, %v2863
      %v2869 = vrot.slane %v2868, 4
      %v2871 = vshll.u32 %v2775, 16
      %v2873 = vrot.slane %v2871, 5
      %v2874 = vsel %vm953, %v2869, %v2873
      %v2875 = vshrl.u32 %v2775, 16
      %v2877 = vrot.slane %v2875, 4
      %v2878 = vor.u32 %v2877, %v2873
      %v2879 = vrot.slane %v2878, 4
      %v2881 = vshll.u32 %v2776, 16
      %v2883 = vrot.slane %v2881, 5
      %v2884 = vsel %vm953, %v2879, %v2883
      %v2885 = vshrl.u32 %v2776, 16
      %v2887 = vrot.slane %v2885, 4
      %v2888 = vor.u32 %v2887, %v2883
      %v2889 = vrot.slane %v2888, 4
      %v2891 = vshll.u32 %v2777, 16
      %v2893 = vrot.slane %v2891, 5
      %v2894 = vsel %vm953, %v2889, %v2893
      %v2895 = vshrl.u32 %v2777, 16
      %v2897 = vrot.slane %v2895, 4
      %v2898 = vor.u32 %v2897, %v2893
      %v2899 = vrot.slane %v2898, 4
      %v2901 = vshll.u32 %v2778, 16
      %v2903 = vrot.slane %v2901, 5
      %v2904 = vsel %vm953, %v2899, %v2903
      %v2905 = vshrl.u32 %v2778, 16
      %v2907 = vrot.slane %v2905, 4
      %v2908 = vor.u32 %v2907, %v2903
      %v2909 = vrot.slane %v2908, 4
      %v2911 = vshll.u32 %v2779, 16
      %v2913 = vrot.slane %v2911, 5
      %v2914 = vsel %vm953, %v2909, %v2913
      %v2915 = vshrl.u32 %v2779, 16
      %v2917 = vrot.slane %v2915, 4
      %v2918 = vor.u32 %v2917, %v2913
      %v2919 = vrot.slane %v2918, 4
      %v2921 = vshll.u32 %v2780, 16
      %v2923 = vrot.slane %v2921, 5
      %v2924 = vsel %vm953, %v2919, %v2923
      %v2925 = vshrl.u32 %v2780, 16
      %v2927 = vrot.slane %v2925, 4
      %v2928 = vor.u32 %v2927, %v2923
      %v2929 = vrot.slane %v2928, 4
      %v2931 = vshll.u32 %v2781, 16
      %v2933 = vrot.slane %v2931, 5
      %v2934 = vsel %vm953, %v2929, %v2933
      %v2935 = vshrl.u32 %v2781, 16
      %v2937 = vrot.slane %v2935, 4
      %v2938 = vor.u32 %v2937, %v2933
      %v2939 = vrot.slane %v2938, 4
      %v2941 = vshll.u32 %v2782, 16
      %v2943 = vrot.slane %v2941, 5
      %v2944 = vsel %vm953, %v2939, %v2943
      %v2945 = vshrl.u32 %v2782, 16
      %v2947 = vrot.slane %v2945, 4
      %v2948 = vor.u32 %v2947, %v2943
      %v2949 = vrot.slane %v2948, 4
      %v2951 = vshll.u32 %v2783, 16
      %v2953 = vrot.slane %v2951, 5
      %v2954 = vsel %vm953, %v2949, %v2953
      %v2955 = vshrl.u32 %v2783, 16
      %v2957 = vrot.slane %v2955, 4
      %v2958 = vor.u32 %v2957, %v2953
      %v2959 = vrot.slane %v2958, 4
      %v2961 = vshll.u32 %v2784, 16
      %v2963 = vrot.slane %v2961, 5
      %v2964 = vsel %vm953, %v2959, %v2963
      %v2965 = vshrl.u32 %v2784, 16
      %v2967 = vrot.slane %v2965, 4
      %v2968 = vor.u32 %v2967, %v2963
      %v2969 = vrot.slane %v2968, 4
      %v2971 = vshll.u32 %v2785, 16
      %v2973 = vrot.slane %v2971, 5
      %v2974 = vsel %vm953, %v2969, %v2973
      %v2975 = vshrl.u32 %v2785, 16
      %v2977 = vrot.slane %v2975, 4
      %v2978 = vor.u32 %v2977, %v2973
      %v2979 = vrot.slane %v2978, 4
      %v2981 = vshll.u32 %v2786, 16
      %v2983 = vrot.slane %v2981, 5
      %v2984 = vsel %vm953, %v2979, %v2983
      %v2985 = vshrl.u32 %v2786, 16
      %v2987 = vrot.slane %v2985, 4
      %v2988 = vor.u32 %v2987, %v2983
      %v2989 = vrot.slane %v2988, 4
      %v2991 = vshll.u32 %v2787, 16
      %v2993 = vrot.slane %v2991, 5
      %v2994 = vsel %vm953, %v2989, %v2993
      %v2995 = vshrl.u32 %v2787, 16
      %v2997 = vrot.slane %v2995, 4
      %v2998 = vor.u32 %v2997, %v2993
      %v2999 = vrot.slane %v2998, 4
      %v3001 = vshll.u32 %v2788, 16
      %v3003 = vrot.slane %v3001, 5
      %v3004 = vsel %vm953, %v2999, %v3003
      %v3005 = vshrl.u32 %v2788, 16
      %v3007 = vrot.slane %v3005, 4
      %v3008 = vor.u32 %v3007, %v3003
      %v3009 = vrot.slane %v3008, 4
      %v3011 = vshll.u32 %v2789, 16
      %v3013 = vrot.slane %v3011, 5
      %v3014 = vsel %vm953, %v3009, %v3013
      %v3015 = vshrl.u32 %v2789, 16
      %v3017 = vrot.slane %v3015, 4
      %v3018 = vor.u32 %v3017, %v3013
      %v3019 = vrot.slane %v3018, 4
      %v3021 = vshll.u32 %v2790, 16
      %v3023 = vrot.slane %v3021, 5
      %v3024 = vsel %vm953, %v3019, %v3023
      %v3025 = vshrl.u32 %v2790, 16
      %v3027 = vrot.slane %v3025, 4
      %v3028 = vor.u32 %v3027, %v3023
      %v3029 = vrot.slane %v3028, 4
      %v3031 = vshll.u32 %v2791, 16
      %v3033 = vrot.slane %v3031, 5
      %v3034 = vsel %vm953, %v3029, %v3033
      %v3035 = vshrl.u32 %v2791, 16
      %v3037 = vrot.slane %v3035, 4
      %v3038 = vor.u32 %v3037, %v3033
      %v3039 = vrot.slane %v3038, 4
      %v3041 = vshll.u32 %v2792, 16
      %v3043 = vrot.slane %v3041, 5
      %v3044 = vsel %vm953, %v3039, %v3043
      %v3045 = vshrl.u32 %v2792, 16
      %v3047 = vrot.slane %v3045, 4
      %v3048 = vor.u32 %v3047, %v3043
      %v3049 = vrot.slane %v3048, 4
      %v3051 = vshll.u32 %v2793, 16
      %v3053 = vrot.slane %v3051, 5
      %v3054 = vsel %vm953, %v3049, %v3053
      %v3055 = vshrl.u32 %v2793, 16
      %v3057 = vrot.slane %v3055, 4
      %v3058 = vor.u32 %v3057, %v3053
      %v3059 = vrot.slane %v3058, 4
      %v3061 = vshll.u32 %v2794, 16
      %v3063 = vrot.slane %v3061, 5
      %v3064 = vsel %vm953, %v3059, %v3063
      %v3065 = vshrl.u32 %v2794, 16
      %v3067 = vrot.slane %v3065, 4
      %v3068 = vor.u32 %v3067, %v3063
      %v3069 = vrot.slane %v3068, 4
      %v3071 = vshll.u32 %v2795, 16
      %v3073 = vrot.slane %v3071, 5
      %v3074 = vsel %vm953, %v3069, %v3073
      %v3075 = vshrl.u32 %v2795, 16
      %v3077 = vrot.slane %v3075, 4
      %v3078 = vor.u32 %v3077, %v3073
      %v3079 = vrot.slane %v3078, 4
      %v3081 = vshll.u32 %v2796, 16
      %v3083 = vrot.slane %v3081, 5
      %v3084 = vsel %vm953, %v3079, %v3083
      %v3085 = vshrl.u32 %v2796, 16
      %v3087 = vrot.slane %v3085, 4
      %v3088 = vor.u32 %v3087, %v3083
      %v3089 = vrot.slane %v3088, 4
      %v3091 = vshll.u32 %v2797, 16
      %v3093 = vrot.slane %v3091, 5
      %v3094 = vsel %vm953, %v3089, %v3093
      %v3095 = vshrl.u32 %v2797, 16
      %v3097 = vrot.slane %v3095, 4
      %v3098 = vor.u32 %v3097, %v3093
      %v3099 = vrot.slane %v3098, 4
      %v3101 = vshll.u32 %v2798, 16
      %v3103 = vrot.slane %v3101, 5
      %v3104 = vsel %vm953, %v3099, %v3103
      %v3105 = vshrl.u32 %v2798, 16
      %v3107 = vrot.slane %v3105, 4
      %v3108 = vor.u32 %v3107, %v3103
      %v3109 = vrot.slane %v3108, 4
      %v3111 = vshll.u32 %v2799, 16
      %v3113 = vrot.slane %v3111, 5
      %v3114 = vsel %vm953, %v3109, %v3113
      %v3115 = vshrl.u32 %v2799, 16
      %v3117 = vrot.slane %v3115, 4
      %v3118 = vor.u32 %v3117, %v3113
      %v3119 = vrot.slane %v3118, 4
      %v3121 = vshll.u32 %v2800, 16
      %v3123 = vrot.slane %v3121, 5
      %v3124 = vsel %vm953, %v3119, %v3123
      %3157 = vst.msk [vmem:[#allocation4 + $0x4] sm:$0xf] %vm709, %v2814
      %3158 = vst.msk [vmem:[#allocation4 + $0x18] sm:$0xf] %vm709, %v2824
      %3159 = vst.msk [vmem:[#allocation4 + $0x2c] sm:$0xf] %vm709, %v2834
      %3160 = vst.msk [vmem:[#allocation4 + $0x40] sm:$0xf] %vm709, %v2844
      %3161 = vst.msk [vmem:[#allocation4 + $0x54] sm:$0xf] %vm709, %v2854
      %3162 = vst.msk [vmem:[#allocation4 + $0x68] sm:$0xf] %vm709, %v2864
      %3163 = vst.msk [vmem:[#allocation4 + $0x7c] sm:$0xf] %vm709, %v2874
      %3164 = vst.msk [vmem:[#allocation4 + $0x90] sm:$0xf] %vm709, %v2884
      %3165 = vst.msk [vmem:[#allocation4 + $0xa4] sm:$0xf] %vm709, %v2894
      %3166 = vst.msk [vmem:[#allocation4 + $0xb8] sm:$0xf] %vm709, %v2904
      %3167 = vst.msk [vmem:[#allocation4 + $0xcc] sm:$0xf] %vm709, %v2914
      %3168 = vst.msk [vmem:[#allocation4 + $0xe0] sm:$0xf] %vm709, %v2924
      %3169 = vst.msk [vmem:[#allocation4 + $0xf4] sm:$0xf] %vm709, %v2934
      %3170 = vst.msk [vmem:[#allocation4 + $0x108] sm:$0xf] %vm709, %v2944
      %3171 = vst.msk [vmem:[#allocation4 + $0x11c] sm:$0xf] %vm709, %v2954
      %3172 = vst.msk [vmem:[#allocation4 + $0x130] sm:$0xf] %vm709, %v2964
      %3173 = vst.msk [vmem:[#allocation4 + $0x144] sm:$0xf] %vm709, %v2974
      %3174 = vst.msk [vmem:[#allocation4 + $0x158] sm:$0xf] %vm709, %v2984
      %3175 = vst.msk [vmem:[#allocation4 + $0x16c] sm:$0xf] %vm709, %v2994
      %3176 = vst.msk [vmem:[#allocation4 + $0x180] sm:$0xf] %vm709, %v3004
      %3177 = vst.msk [vmem:[#allocation4 + $0x194] sm:$0xf] %vm709, %v3014
      %3178 = vst.msk [vmem:[#allocation4 + $0x1a8] sm:$0xf] %vm709, %v3024
      %3179 = vst.msk [vmem:[#allocation4 + $0x1bc] sm:$0xf] %vm709, %v3034
      %3180 = vst.msk [vmem:[#allocation4 + $0x1d0] sm:$0xf] %vm709, %v3044
      %3181 = vst.msk [vmem:[#allocation4 + $0x1e4] sm:$0xf] %vm709, %v3054
      %3182 = vst.msk [vmem:[#allocation4 + $0x1f8] sm:$0xf] %vm709, %v3064
      %3183 = vst.msk [vmem:[#allocation4 + $0x20c] sm:$0xf] %vm709, %v3074
      %3184 = vst.msk [vmem:[#allocation4 + $0x220] sm:$0xf] %vm709, %v3084
      %3185 = vst.msk [vmem:[#allocation4 + $0x234] sm:$0xf] %vm709, %v3094
      %3186 = vst.msk [vmem:[#allocation4 + $0x248] sm:$0xf] %vm709, %v3104
      %3187 = vst.msk [vmem:[#allocation4 + $0x25c] sm:$0xf] %vm709, %v3114
      %3188 = vst.msk [vmem:[#allocation4 + $0x270] sm:$0xf] %vm709, %v3124
      %v3189 = vld [vmem:[#allocation2 + $0xc] sm:$0x8]
      %v3190 = vld [vmem:[#allocation2 + $0x10] sm:$0xf]
      %v3191 = vld [vmem:[#allocation2 + $0x14] sm:$0xf]
      %v3192 = vld [vmem:[#allocation2 + $0x18] sm:$0xf]
      %v3193 = vld [vmem:[#allocation2 + $0x1c] sm:$0xf]
      %v3194 = vld [vmem:[#allocation2 + $0x20] sm:$0xf]
      %v3195 = vld [vmem:[#allocation2 + $0x24] sm:$0xf]
      %v3196 = vld [vmem:[#allocation2 + $0x28] sm:$0xf]
      %v3197 = vld [vmem:[#allocation2 + $0x2c] sm:$0xf]
      %v3198 = vld [vmem:[#allocation2 + $0x30] sm:$0xf]
      %v3199 = vld [vmem:[#allocation2 + $0x34] sm:$0xf]
      %v3200 = vld [vmem:[#allocation2 + $0x38] sm:$0xf]
      %v3201 = vld [vmem:[#allocation2 + $0x3c] sm:$0xf]
      %v3202 = vld [vmem:[#allocation2 + $0x40] sm:$0xf]
      %v3203 = vld [vmem:[#allocation2 + $0x44] sm:$0xf]
      %v3204 = vld [vmem:[#allocation2 + $0x48] sm:$0xf]
      %v3205 = vld [vmem:[#allocation2 + $0x4c] sm:$0xf]
      %v3206 = vld [vmem:[#allocation2 + $0x50] sm:$0xf]
      %v3207 = vld [vmem:[#allocation2 + $0x54] sm:$0xf]
      %v3208 = vld [vmem:[#allocation2 + $0x58] sm:$0xf]
      %v3209 = vld [vmem:[#allocation2 + $0x5c] sm:$0xf]
      %v3210 = vld [vmem:[#allocation2 + $0x60] sm:$0xf]
      %v3211 = vld [vmem:[#allocation2 + $0x64] sm:$0xf]
      %v3212 = vld [vmem:[#allocation2 + $0x68] sm:$0xf]
      %v3213 = vld [vmem:[#allocation2 + $0x6c] sm:$0xf]
      %v3214 = vld [vmem:[#allocation2 + $0x70] sm:$0xf]
      %v3215 = vld [vmem:[#allocation2 + $0x74] sm:$0xf]
      %v3216 = vld [vmem:[#allocation2 + $0x78] sm:$0xf]
      %v3217 = vld [vmem:[#allocation2 + $0x7c] sm:$0xf]
      %v3218 = vld [vmem:[#allocation2 + $0x80] sm:$0xf]
      %v3219 = vld [vmem:[#allocation2 + $0x84] sm:$0xf]
      %v3220 = vld [vmem:[#allocation2 + $0x88] sm:$0xf]
      %v3221 = vld [vmem:[#allocation2 + $0x8c] sm:$0xf]
      %v3222 = vsel %vm1279, %v3189, 0
      %v3223 = vsel %vm1286, %v3190, 0
      %v3224 = vsel %vm1293, %v3191, 0
      %v3225 = vsel %vm1300, %v3192, 0
      %v3226 = vsel %vm1307, %v3193, 0
      %v3227 = vsel %vm1314, %v3194, 0
      %v3228 = vsel %vm1321, %v3195, 0
      %v3229 = vsel %vm1328, %v3196, 0
      %v3230 = vsel %vm1335, %v3197, 0
      %v3231 = vsel %vm1342, %v3198, 0
      %v3232 = vsel %vm1349, %v3199, 0
      %v3233 = vsel %vm1356, %v3200, 0
      %v3234 = vsel %vm1363, %v3201, 0
      %v3235 = vsel %vm1370, %v3202, 0
      %v3236 = vsel %vm1377, %v3203, 0
      %v3237 = vsel %vm1384, %v3204, 0
      %v3238 = vsel %vm1391, %v3205, 0
      %v3239 = vsel %vm1398, %v3206, 0
      %v3240 = vsel %vm1405, %v3207, 0
      %v3241 = vsel %vm1412, %v3208, 0
      %v3242 = vsel %vm1419, %v3209, 0
      %v3243 = vsel %vm1426, %v3210, 0
      %v3244 = vsel %vm1433, %v3211, 0
      %v3245 = vsel %vm1440, %v3212, 0
      %v3246 = vsel %vm1447, %v3213, 0
      %v3247 = vsel %vm1454, %v3214, 0
      %v3248 = vsel %vm1461, %v3215, 0
      %v3249 = vsel %vm1468, %v3216, 0
      %v3250 = vsel %vm1475, %v3217, 0
      %v3251 = vsel %vm1482, %v3218, 0
      %v3252 = vsel %vm1489, %v3219, 0
      %v3253 = vsel %vm1496, %v3220, 0
      %v3254 = vsel %vm1503, %v3221, 0
      %v3256 = vshrl.u32 %v3222, 16
      %v3258 = vrot.slane %v3256, 7
      %v3259 = vrot.slane %v3258, 4
      %v3261 = vshrl.u32 %v3223, 16
      %v3263 = vrot.slane %v3261, 7
      %v3264 = vshll.u32 %v3223, 16
      %v3266 = vor.u32 %v3263, %v3264
      %v3267 = vsel %vm1539, %v3259, %v3266
      %v3268 = vrot.slane %v3263, 4
      %v3270 = vshrl.u32 %v3224, 16
      %v3272 = vrot.slane %v3270, 7
      %v3273 = vshll.u32 %v3224, 16
      %v3275 = vor.u32 %v3272, %v3273
      %v3276 = vsel %vm1539, %v3268, %v3275
      %v3277 = vrot.slane %v3272, 4
      %v3279 = vshrl.u32 %v3225, 16
      %v3281 = vrot.slane %v3279, 7
      %v3282 = vshll.u32 %v3225, 16
      %v3284 = vor.u32 %v3281, %v3282
      %v3285 = vsel %vm1539, %v3277, %v3284
      %v3286 = vrot.slane %v3281, 4
      %v3288 = vshrl.u32 %v3226, 16
      %v3290 = vrot.slane %v3288, 7
      %v3291 = vshll.u32 %v3226, 16
      %v3293 = vor.u32 %v3290, %v3291
      %v3294 = vsel %vm1539, %v3286, %v3293
      %v3295 = vrot.slane %v3290, 4
      %v3297 = vshrl.u32 %v3227, 16
      %v3299 = vrot.slane %v3297, 7
      %v3300 = vshll.u32 %v3227, 16
      %v3302 = vor.u32 %v3299, %v3300
      %v3303 = vsel %vm1539, %v3295, %v3302
      %v3304 = vrot.slane %v3299, 4
      %v3306 = vshrl.u32 %v3228, 16
      %v3308 = vrot.slane %v3306, 7
      %v3309 = vshll.u32 %v3228, 16
      %v3311 = vor.u32 %v3308, %v3309
      %v3312 = vsel %vm1539, %v3304, %v3311
      %v3313 = vrot.slane %v3308, 4
      %v3315 = vshrl.u32 %v3229, 16
      %v3317 = vrot.slane %v3315, 7
      %v3318 = vshll.u32 %v3229, 16
      %v3320 = vor.u32 %v3317, %v3318
      %v3321 = vsel %vm1539, %v3313, %v3320
      %v3322 = vrot.slane %v3317, 4
      %v3324 = vshrl.u32 %v3230, 16
      %v3326 = vrot.slane %v3324, 7
      %v3327 = vshll.u32 %v3230, 16
      %v3329 = vor.u32 %v3326, %v3327
      %v3330 = vsel %vm1539, %v3322, %v3329
      %v3331 = vrot.slane %v3326, 4
      %v3333 = vshrl.u32 %v3231, 16
      %v3335 = vrot.slane %v3333, 7
      %v3336 = vshll.u32 %v3231, 16
      %v3338 = vor.u32 %v3335, %v3336
      %v3339 = vsel %vm1539, %v3331, %v3338
      %v3340 = vrot.slane %v3335, 4
      %v3342 = vshrl.u32 %v3232, 16
      %v3344 = vrot.slane %v3342, 7
      %v3345 = vshll.u32 %v3232, 16
      %v3347 = vor.u32 %v3344, %v3345
      %v3348 = vsel %vm1539, %v3340, %v3347
      %v3349 = vrot.slane %v3344, 4
      %v3351 = vshrl.u32 %v3233, 16
      %v3353 = vrot.slane %v3351, 7
      %v3354 = vshll.u32 %v3233, 16
      %v3356 = vor.u32 %v3353, %v3354
      %v3357 = vsel %vm1539, %v3349, %v3356
      %v3358 = vrot.slane %v3353, 4
      %v3360 = vshrl.u32 %v3234, 16
      %v3362 = vrot.slane %v3360, 7
      %v3363 = vshll.u32 %v3234, 16
      %v3365 = vor.u32 %v3362, %v3363
      %v3366 = vsel %vm1539, %v3358, %v3365
      %v3367 = vrot.slane %v3362, 4
      %v3369 = vshrl.u32 %v3235, 16
      %v3371 = vrot.slane %v3369, 7
      %v3372 = vshll.u32 %v3235, 16
      %v3374 = vor.u32 %v3371, %v3372
      %v3375 = vsel %vm1539, %v3367, %v3374
      %v3376 = vrot.slane %v3371, 4
      %v3378 = vshrl.u32 %v3236, 16
      %v3380 = vrot.slane %v3378, 7
      %v3381 = vshll.u32 %v3236, 16
      %v3383 = vor.u32 %v3380, %v3381
      %v3384 = vsel %vm1539, %v3376, %v3383
      %v3385 = vrot.slane %v3380, 4
      %v3387 = vshrl.u32 %v3237, 16
      %v3389 = vrot.slane %v3387, 7
      %v3390 = vshll.u32 %v3237, 16
      %v3392 = vor.u32 %v3389, %v3390
      %v3393 = vsel %vm1539, %v3385, %v3392
      %v3394 = vrot.slane %v3389, 4
      %v3396 = vshrl.u32 %v3238, 16
      %v3398 = vrot.slane %v3396, 7
      %v3399 = vshll.u32 %v3238, 16
      %v3401 = vor.u32 %v3398, %v3399
      %v3402 = vsel %vm1539, %v3394, %v3401
      %v3403 = vrot.slane %v3398, 4
      %v3405 = vshrl.u32 %v3239, 16
      %v3407 = vrot.slane %v3405, 7
      %v3408 = vshll.u32 %v3239, 16
      %v3410 = vor.u32 %v3407, %v3408
      %v3411 = vsel %vm1539, %v3403, %v3410
      %v3412 = vrot.slane %v3407, 4
      %v3414 = vshrl.u32 %v3240, 16
      %v3416 = vrot.slane %v3414, 7
      %v3417 = vshll.u32 %v3240, 16
      %v3419 = vor.u32 %v3416, %v3417
      %v3420 = vsel %vm1539, %v3412, %v3419
      %v3421 = vrot.slane %v3416, 4
      %v3423 = vshrl.u32 %v3241, 16
      %v3425 = vrot.slane %v3423, 7
      %v3426 = vshll.u32 %v3241, 16
      %v3428 = vor.u32 %v3425, %v3426
      %v3429 = vsel %vm1539, %v3421, %v3428
      %v3430 = vrot.slane %v3425, 4
      %v3432 = vshrl.u32 %v3242, 16
      %v3434 = vrot.slane %v3432, 7
      %v3435 = vshll.u32 %v3242, 16
      %v3437 = vor.u32 %v3434, %v3435
      %v3438 = vsel %vm1539, %v3430, %v3437
      %v3439 = vrot.slane %v3434, 4
      %v3441 = vshrl.u32 %v3243, 16
      %v3443 = vrot.slane %v3441, 7
      %v3444 = vshll.u32 %v3243, 16
      %v3446 = vor.u32 %v3443, %v3444
      %v3447 = vsel %vm1539, %v3439, %v3446
      %v3448 = vrot.slane %v3443, 4
      %v3450 = vshrl.u32 %v3244, 16
      %v3452 = vrot.slane %v3450, 7
      %v3453 = vshll.u32 %v3244, 16
      %v3455 = vor.u32 %v3452, %v3453
      %v3456 = vsel %vm1539, %v3448, %v3455
      %v3457 = vrot.slane %v3452, 4
      %v3459 = vshrl.u32 %v3245, 16
      %v3461 = vrot.slane %v3459, 7
      %v3462 = vshll.u32 %v3245, 16
      %v3464 = vor.u32 %v3461, %v3462
      %v3465 = vsel %vm1539, %v3457, %v3464
      %v3466 = vrot.slane %v3461, 4
      %v3468 = vshrl.u32 %v3246, 16
      %v3470 = vrot.slane %v3468, 7
      %v3471 = vshll.u32 %v3246, 16
      %v3473 = vor.u32 %v3470, %v3471
      %v3474 = vsel %vm1539, %v3466, %v3473
      %v3475 = vrot.slane %v3470, 4
      %v3477 = vshrl.u32 %v3247, 16
      %v3479 = vrot.slane %v3477, 7
      %v3480 = vshll.u32 %v3247, 16
      %v3482 = vor.u32 %v3479, %v3480
      %v3483 = vsel %vm1539, %v3475, %v3482
      %v3484 = vrot.slane %v3479, 4
      %v3486 = vshrl.u32 %v3248, 16
      %v3488 = vrot.slane %v3486, 7
      %v3489 = vshll.u32 %v3248, 16
      %v3491 = vor.u32 %v3488, %v3489
      %v3492 = vsel %vm1539, %v3484, %v3491
      %v3493 = vrot.slane %v3488, 4
      %v3495 = vshrl.u32 %v3249, 16
      %v3497 = vrot.slane %v3495, 7
      %v3498 = vshll.u32 %v3249, 16
      %v3500 = vor.u32 %v3497, %v3498
      %v3501 = vsel %vm1539, %v3493, %v3500
      %v3502 = vrot.slane %v3497, 4
      %v3504 = vshrl.u32 %v3250, 16
      %v3506 = vrot.slane %v3504, 7
      %v3507 = vshll.u32 %v3250, 16
      %v3509 = vor.u32 %v3506, %v3507
      %v3510 = vsel %vm1539, %v3502, %v3509
      %v3511 = vrot.slane %v3506, 4
      %v3513 = vshrl.u32 %v3251, 16
      %v3515 = vrot.slane %v3513, 7
      %v3516 = vshll.u32 %v3251, 16
      %v3518 = vor.u32 %v3515, %v3516
      %v3519 = vsel %vm1539, %v3511, %v3518
      %v3520 = vrot.slane %v3515, 4
      %v3522 = vshrl.u32 %v3252, 16
      %v3524 = vrot.slane %v3522, 7
      %v3525 = vshll.u32 %v3252, 16
      %v3527 = vor.u32 %v3524, %v3525
      %v3528 = vsel %vm1539, %v3520, %v3527
      %v3529 = vrot.slane %v3524, 4
      %v3531 = vshrl.u32 %v3253, 16
      %v3533 = vrot.slane %v3531, 7
      %v3534 = vshll.u32 %v3253, 16
      %v3536 = vor.u32 %v3533, %v3534
      %v3537 = vsel %vm1539, %v3529, %v3536
      %v3538 = vrot.slane %v3533, 4
      %v3540 = vshrl.u32 %v3254, 16
      %v3542 = vrot.slane %v3540, 7
      %v3543 = vshll.u32 %v3254, 16
      %v3545 = vor.u32 %v3542, %v3543
      %v3546 = vsel %vm1539, %v3538, %v3545
      %3547 = vrot.lane.b32.xlu0 %v3267, 64
      %v3548 = vpop.permute.xlu0 %3547
      %3549 = vrot.lane.b32.xlu0 %v3276, 64
      %v3550 = vpop.permute.xlu0 %3549
      %3551 = vrot.lane.b32.xlu0 %v3285, 64
      %v3552 = vpop.permute.xlu0 %3551
      %3553 = vrot.lane.b32.xlu0 %v3294, 64
      %v3554 = vpop.permute.xlu0 %3553
      %3555 = vrot.lane.b32.xlu0 %v3303, 64
      %v3556 = vpop.permute.xlu0 %3555
      %3557 = vrot.lane.b32.xlu0 %v3312, 64
      %v3558 = vpop.permute.xlu0 %3557
      %3559 = vrot.lane.b32.xlu0 %v3321, 64
      %v3560 = vpop.permute.xlu0 %3559
      %3561 = vrot.lane.b32.xlu0 %v3330, 64
      %v3562 = vpop.permute.xlu0 %3561
      %3563 = vrot.lane.b32.xlu0 %v3339, 64
      %v3564 = vpop.permute.xlu0 %3563
      %3565 = vrot.lane.b32.xlu0 %v3348, 64
      %v3566 = vpop.permute.xlu0 %3565
      %3567 = vrot.lane.b32.xlu0 %v3357, 64
      %v3568 = vpop.permute.xlu0 %3567
      %3569 = vrot.lane.b32.xlu0 %v3366, 64
      %v3570 = vpop.permute.xlu0 %3569
      %3571 = vrot.lane.b32.xlu0 %v3375, 64
      %v3572 = vpop.permute.xlu0 %3571
      %3573 = vrot.lane.b32.xlu0 %v3384, 64
      %v3574 = vpop.permute.xlu0 %3573
      %3575 = vrot.lane.b32.xlu0 %v3393, 64
      %v3576 = vpop.permute.xlu0 %3575
      %3577 = vrot.lane.b32.xlu0 %v3402, 64
      %v3578 = vpop.permute.xlu0 %3577
      %3579 = vrot.lane.b32.xlu0 %v3411, 64
      %v3580 = vpop.permute.xlu0 %3579
      %3581 = vrot.lane.b32.xlu0 %v3420, 64
      %v3582 = vpop.permute.xlu0 %3581
      %3583 = vrot.lane.b32.xlu0 %v3429, 64
      %v3584 = vpop.permute.xlu0 %3583
      %3585 = vrot.lane.b32.xlu0 %v3438, 64
      %v3586 = vpop.permute.xlu0 %3585
      %3587 = vrot.lane.b32.xlu0 %v3447, 64
      %v3588 = vpop.permute.xlu0 %3587
      %3589 = vrot.lane.b32.xlu0 %v3456, 64
      %v3590 = vpop.permute.xlu0 %3589
      %3591 = vrot.lane.b32.xlu0 %v3465, 64
      %v3592 = vpop.permute.xlu0 %3591
      %3593 = vrot.lane.b32.xlu0 %v3474, 64
      %v3594 = vpop.permute.xlu0 %3593
      %3595 = vrot.lane.b32.xlu0 %v3483, 64
      %v3596 = vpop.permute.xlu0 %3595
      %3597 = vrot.lane.b32.xlu0 %v3492, 64
      %v3598 = vpop.permute.xlu0 %3597
      %3599 = vrot.lane.b32.xlu0 %v3501, 64
      %v3600 = vpop.permute.xlu0 %3599
      %3601 = vrot.lane.b32.xlu0 %v3510, 64
      %v3602 = vpop.permute.xlu0 %3601
      %3603 = vrot.lane.b32.xlu0 %v3519, 64
      %v3604 = vpop.permute.xlu0 %3603
      %3605 = vrot.lane.b32.xlu0 %v3528, 64
      %v3606 = vpop.permute.xlu0 %3605
      %3607 = vrot.lane.b32.xlu0 %v3537, 64
      %v3608 = vpop.permute.xlu0 %3607
      %3609 = vrot.lane.b32.xlu0 %v3546, 64
      %v3610 = vpop.permute.xlu0 %3609
      %3643 = vst.msk [vmem:[#allocation4 + $0x4] sm:$0xf] %vm2056, %v3548
      %3644 = vst.msk [vmem:[#allocation4 + $0x18] sm:$0xf] %vm2056, %v3550
      %3645 = vst.msk [vmem:[#allocation4 + $0x2c] sm:$0xf] %vm2056, %v3552
      %3646 = vst.msk [vmem:[#allocation4 + $0x40] sm:$0xf] %vm2056, %v3554
      %3647 = vst.msk [vmem:[#allocation4 + $0x54] sm:$0xf] %vm2056, %v3556
      %3648 = vst.msk [vmem:[#allocation4 + $0x68] sm:$0xf] %vm2056, %v3558
      %3649 = vst.msk [vmem:[#allocation4 + $0x7c] sm:$0xf] %vm2056, %v3560
      %3650 = vst.msk [vmem:[#allocation4 + $0x90] sm:$0xf] %vm2056, %v3562
      %3651 = vst.msk [vmem:[#allocation4 + $0xa4] sm:$0xf] %vm2056, %v3564
      %3652 = vst.msk [vmem:[#allocation4 + $0xb8] sm:$0xf] %vm2056, %v3566
      %3653 = vst.msk [vmem:[#allocation4 + $0xcc] sm:$0xf] %vm2056, %v3568
      %3654 = vst.msk [vmem:[#allocation4 + $0xe0] sm:$0xf] %vm2056, %v3570
      %3655 = vst.msk [vmem:[#allocation4 + $0xf4] sm:$0xf] %vm2056, %v3572
      %3656 = vst.msk [vmem:[#allocation4 + $0x108] sm:$0xf] %vm2056, %v3574
      %3657 = vst.msk [vmem:[#allocation4 + $0x11c] sm:$0xf] %vm2056, %v3576
      %3658 = vst.msk [vmem:[#allocation4 + $0x130] sm:$0xf] %vm2056, %v3578
      %3659 = vst.msk [vmem:[#allocation4 + $0x144] sm:$0xf] %vm2056, %v3580
      %3660 = vst.msk [vmem:[#allocation4 + $0x158] sm:$0xf] %vm2056, %v3582
      %3661 = vst.msk [vmem:[#allocation4 + $0x16c] sm:$0xf] %vm2056, %v3584
      %3662 = vst.msk [vmem:[#allocation4 + $0x180] sm:$0xf] %vm2056, %v3586
      %3663 = vst.msk [vmem:[#allocation4 + $0x194] sm:$0xf] %vm2056, %v3588
      %3664 = vst.msk [vmem:[#allocation4 + $0x1a8] sm:$0xf] %vm2056, %v3590
      %3665 = vst.msk [vmem:[#allocation4 + $0x1bc] sm:$0xf] %vm2056, %v3592
      %3666 = vst.msk [vmem:[#allocation4 + $0x1d0] sm:$0xf] %vm2056, %v3594
      %3667 = vst.msk [vmem:[#allocation4 + $0x1e4] sm:$0xf] %vm2056, %v3596
      %3668 = vst.msk [vmem:[#allocation4 + $0x1f8] sm:$0xf] %vm2056, %v3598
      %3669 = vst.msk [vmem:[#allocation4 + $0x20c] sm:$0xf] %vm2056, %v3600
      %3670 = vst.msk [vmem:[#allocation4 + $0x220] sm:$0xf] %vm2056, %v3602
      %3671 = vst.msk [vmem:[#allocation4 + $0x234] sm:$0xf] %vm2056, %v3604
      %3672 = vst.msk [vmem:[#allocation4 + $0x248] sm:$0xf] %vm2056, %v3606
      %3673 = vst.msk [vmem:[#allocation4 + $0x25c] sm:$0xf] %vm2056, %v3608
      %3674 = vst.msk [vmem:[#allocation4 + $0x270] sm:$0xf] %vm2056, %v3610
      %v3675 = vld [vmem:[#allocation2 + $0x10] sm:$0xf]
      %v3676 = vld [vmem:[#allocation2 + $0x14] sm:$0xf]
      %v3677 = vld [vmem:[#allocation2 + $0x18] sm:$0xf]
      %v3678 = vld [vmem:[#allocation2 + $0x1c] sm:$0xf]
      %v3679 = vld [vmem:[#allocation2 + $0x20] sm:$0xf]
      %v3680 = vld [vmem:[#allocation2 + $0x24] sm:$0xf]
      %v3681 = vld [vmem:[#allocation2 + $0x28] sm:$0xf]
      %v3682 = vld [vmem:[#allocation2 + $0x2c] sm:$0xf]
      %v3683 = vld [vmem:[#allocation2 + $0x30] sm:$0xf]
      %v3684 = vld [vmem:[#allocation2 + $0x34] sm:$0xf]
      %v3685 = vld [vmem:[#allocation2 + $0x38] sm:$0xf]
      %v3686 = vld [vmem:[#allocation2 + $0x3c] sm:$0xf]
      %v3687 = vld [vmem:[#allocation2 + $0x40] sm:$0xf]
      %v3688 = vld [vmem:[#allocation2 + $0x44] sm:$0xf]
      %v3689 = vld [vmem:[#allocation2 + $0x48] sm:$0xf]
      %v3690 = vld [vmem:[#allocation2 + $0x4c] sm:$0xf]
      %v3691 = vld [vmem:[#allocation2 + $0x50] sm:$0xf]
      %v3692 = vld [vmem:[#allocation2 + $0x54] sm:$0xf]
      %v3693 = vld [vmem:[#allocation2 + $0x58] sm:$0xf]
      %v3694 = vld [vmem:[#allocation2 + $0x5c] sm:$0xf]
      %v3695 = vld [vmem:[#allocation2 + $0x60] sm:$0xf]
      %v3696 = vld [vmem:[#allocation2 + $0x64] sm:$0xf]
      %v3697 = vld [vmem:[#allocation2 + $0x68] sm:$0xf]
      %v3698 = vld [vmem:[#allocation2 + $0x6c] sm:$0xf]
      %v3699 = vld [vmem:[#allocation2 + $0x70] sm:$0xf]
      %v3700 = vld [vmem:[#allocation2 + $0x74] sm:$0xf]
      %v3701 = vld [vmem:[#allocation2 + $0x78] sm:$0xf]
      %v3702 = vld [vmem:[#allocation2 + $0x7c] sm:$0xf]
      %v3703 = vld [vmem:[#allocation2 + $0x80] sm:$0xf]
      %v3704 = vld [vmem:[#allocation2 + $0x84] sm:$0xf]
      %v3705 = vld [vmem:[#allocation2 + $0x88] sm:$0xf]
      %v3706 = vld [vmem:[#allocation2 + $0x8c] sm:$0xf]
      %3707 = vst.msk [vmem:[#allocation4 + $0x8] sm:$0xf] %vm709, %v3675
      %3708 = vst.msk [vmem:[#allocation4 + $0x1c] sm:$0xf] %vm709, %v3676
      %3709 = vst.msk [vmem:[#allocation4 + $0x30] sm:$0xf] %vm709, %v3677
      %3710 = vst.msk [vmem:[#allocation4 + $0x44] sm:$0xf] %vm709, %v3678
      %3711 = vst.msk [vmem:[#allocation4 + $0x58] sm:$0xf] %vm709, %v3679
      %3712 = vst.msk [vmem:[#allocation4 + $0x6c] sm:$0xf] %vm709, %v3680
      %3713 = vst.msk [vmem:[#allocation4 + $0x80] sm:$0xf] %vm709, %v3681
      %3714 = vst.msk [vmem:[#allocation4 + $0x94] sm:$0xf] %vm709, %v3682
      %3715 = vst.msk [vmem:[#allocation4 + $0xa8] sm:$0xf] %vm709, %v3683
      %3716 = vst.msk [vmem:[#allocation4 + $0xbc] sm:$0xf] %vm709, %v3684
      %3717 = vst.msk [vmem:[#allocation4 + $0xd0] sm:$0xf] %vm709, %v3685
      %3718 = vst.msk [vmem:[#allocation4 + $0xe4] sm:$0xf] %vm709, %v3686
      %3719 = vst.msk [vmem:[#allocation4 + $0xf8] sm:$0xf] %vm709, %v3687
      %3720 = vst.msk [vmem:[#allocation4 + $0x10c] sm:$0xf] %vm709, %v3688
      %3721 = vst.msk [vmem:[#allocation4 + $0x120] sm:$0xf] %vm709, %v3689
      %3722 = vst.msk [vmem:[#allocation4 + $0x134] sm:$0xf] %vm709, %v3690
      %3723 = vst.msk [vmem:[#allocation4 + $0x148] sm:$0xf] %vm709, %v3691
      %3724 = vst.msk [vmem:[#allocation4 + $0x15c] sm:$0xf] %vm709, %v3692
      %3725 = vst.msk [vmem:[#allocation4 + $0x170] sm:$0xf] %vm709, %v3693
      %3726 = vst.msk [vmem:[#allocation4 + $0x184] sm:$0xf] %vm709, %v3694
      %3727 = vst.msk [vmem:[#allocation4 + $0x198] sm:$0xf] %vm709, %v3695
      %3728 = vst.msk [vmem:[#allocation4 + $0x1ac] sm:$0xf] %vm709, %v3696
      %3729 = vst.msk [vmem:[#allocation4 + $0x1c0] sm:$0xf] %vm709, %v3697
      %3730 = vst.msk [vmem:[#allocation4 + $0x1d4] sm:$0xf] %vm709, %v3698
      %3731 = vst.msk [vmem:[#allocation4 + $0x1e8] sm:$0xf] %vm709, %v3699
      %3732 = vst.msk [vmem:[#allocation4 + $0x1fc] sm:$0xf] %vm709, %v3700
      %3733 = vst.msk [vmem:[#allocation4 + $0x210] sm:$0xf] %vm709, %v3701
      %3734 = vst.msk [vmem:[#allocation4 + $0x224] sm:$0xf] %vm709, %v3702
      %3735 = vst.msk [vmem:[#allocation4 + $0x238] sm:$0xf] %vm709, %v3703
      %3736 = vst.msk [vmem:[#allocation4 + $0x24c] sm:$0xf] %vm709, %v3704
      %3737 = vst.msk [vmem:[#allocation4 + $0x260] sm:$0xf] %vm709, %v3705
      %3738 = vst.msk [vmem:[#allocation4 + $0x274] sm:$0xf] %vm709, %v3706
      %v3739 = vld [vmem:[#allocation2 + $0x10] sm:$0xf]
      %v3740 = vld [vmem:[#allocation2 + $0x14] sm:$0xf]
      %v3741 = vld [vmem:[#allocation2 + $0x18] sm:$0xf]
      %v3742 = vld [vmem:[#allocation2 + $0x1c] sm:$0xf]
      %v3743 = vld [vmem:[#allocation2 + $0x20] sm:$0xf]
      %v3744 = vld [vmem:[#allocation2 + $0x24] sm:$0xf]
      %v3745 = vld [vmem:[#allocation2 + $0x28] sm:$0xf]
      %v3746 = vld [vmem:[#allocation2 + $0x2c] sm:$0xf]
      %v3747 = vld [vmem:[#allocation2 + $0x30] sm:$0xf]
      %v3748 = vld [vmem:[#allocation2 + $0x34] sm:$0xf]
      %v3749 = vld [vmem:[#allocation2 + $0x38] sm:$0xf]
      %v3750 = vld [vmem:[#allocation2 + $0x3c] sm:$0xf]
      %v3751 = vld [vmem:[#allocation2 + $0x40] sm:$0xf]
      %v3752 = vld [vmem:[#allocation2 + $0x44] sm:$0xf]
      %v3753 = vld [vmem:[#allocation2 + $0x48] sm:$0xf]
      %v3754 = vld [vmem:[#allocation2 + $0x4c] sm:$0xf]
      %v3755 = vld [vmem:[#allocation2 + $0x50] sm:$0xf]
      %v3756 = vld [vmem:[#allocation2 + $0x54] sm:$0xf]
      %v3757 = vld [vmem:[#allocation2 + $0x58] sm:$0xf]
      %v3758 = vld [vmem:[#allocation2 + $0x5c] sm:$0xf]
      %v3759 = vld [vmem:[#allocation2 + $0x60] sm:$0xf]
      %v3760 = vld [vmem:[#allocation2 + $0x64] sm:$0xf]
      %v3761 = vld [vmem:[#allocation2 + $0x68] sm:$0xf]
      %v3762 = vld [vmem:[#allocation2 + $0x6c] sm:$0xf]
      %v3763 = vld [vmem:[#allocation2 + $0x70] sm:$0xf]
      %v3764 = vld [vmem:[#allocation2 + $0x74] sm:$0xf]
      %v3765 = vld [vmem:[#allocation2 + $0x78] sm:$0xf]
      %v3766 = vld [vmem:[#allocation2 + $0x7c] sm:$0xf]
      %v3767 = vld [vmem:[#allocation2 + $0x80] sm:$0xf]
      %v3768 = vld [vmem:[#allocation2 + $0x84] sm:$0xf]
      %v3769 = vld [vmem:[#allocation2 + $0x88] sm:$0xf]
      %v3770 = vld [vmem:[#allocation2 + $0x8c] sm:$0xf]
      %v3771 = vld [vmem:[#allocation2 + $0x90] sm:$0x1]
      %v3772 = vsel %vm2543, %v3739, 0
      %v3773 = vsel %vm2550, %v3740, 0
      %v3774 = vsel %vm2557, %v3741, 0
      %v3775 = vsel %vm2564, %v3742, 0
      %v3776 = vsel %vm2571, %v3743, 0
      %v3777 = vsel %vm2578, %v3744, 0
      %v3778 = vsel %vm2585, %v3745, 0
      %v3779 = vsel %vm2592, %v3746, 0
      %v3780 = vsel %vm2599, %v3747, 0
      %v3781 = vsel %vm2606, %v3748, 0
      %v3782 = vsel %vm2613, %v3749, 0
      %v3783 = vsel %vm2620, %v3750, 0
      %v3784 = vsel %vm2627, %v3751, 0
      %v3785 = vsel %vm2634, %v3752, 0
      %v3786 = vsel %vm2641, %v3753, 0
      %v3787 = vsel %vm2648, %v3754, 0
      %v3788 = vsel %vm2655, %v3755, 0
      %v3789 = vsel %vm2662, %v3756, 0
      %v3790 = vsel %vm2669, %v3757, 0
      %v3791 = vsel %vm2676, %v3758, 0
      %v3792 = vsel %vm2683, %v3759, 0
      %v3793 = vsel %vm2690, %v3760, 0
      %v3794 = vsel %vm2697, %v3761, 0
      %v3795 = vsel %vm2704, %v3762, 0
      %v3796 = vsel %vm2711, %v3763, 0
      %v3797 = vsel %vm2718, %v3764, 0
      %v3798 = vsel %vm2725, %v3765, 0
      %v3799 = vsel %vm2732, %v3766, 0
      %v3800 = vsel %vm2739, %v3767, 0
      %v3801 = vsel %vm2746, %v3768, 0
      %v3802 = vsel %vm2753, %v3769, 0
      %v3803 = vsel %vm2760, %v3770, 0
      %v3804 = vsel %vm2767, %v3771, 0
      %v3806 = vshrl.u32 %v3772, 16
      %v3808 = vrot.slane %v3806, 4
      %v3809 = vshll.u32 %v3772, 16
      %v3811 = vrot.slane %v3809, 5
      %v3812 = vor.u32 %v3808, %v3811
      %v3813 = vrot.slane %v3812, 4
      %v3815 = vshll.u32 %v3773, 16
      %v3817 = vrot.slane %v3815, 5
      %v3818 = vsel %vm953, %v3813, %v3817
      %v3819 = vshrl.u32 %v3773, 16
      %v3821 = vrot.slane %v3819, 4
      %v3822 = vor.u32 %v3821, %v3817
      %v3823 = vrot.slane %v3822, 4
      %v3825 = vshll.u32 %v3774, 16
      %v3827 = vrot.slane %v3825, 5
      %v3828 = vsel %vm953, %v3823, %v3827
      %v3829 = vshrl.u32 %v3774, 16
      %v3831 = vrot.slane %v3829, 4
      %v3832 = vor.u32 %v3831, %v3827
      %v3833 = vrot.slane %v3832, 4
      %v3835 = vshll.u32 %v3775, 16
      %v3837 = vrot.slane %v3835, 5
      %v3838 = vsel %vm953, %v3833, %v3837
      %v3839 = vshrl.u32 %v3775, 16
      %v3841 = vrot.slane %v3839, 4
      %v3842 = vor.u32 %v3841, %v3837
      %v3843 = vrot.slane %v3842, 4
      %v3845 = vshll.u32 %v3776, 16
      %v3847 = vrot.slane %v3845, 5
      %v3848 = vsel %vm953, %v3843, %v3847
      %v3849 = vshrl.u32 %v3776, 16
      %v3851 = vrot.slane %v3849, 4
      %v3852 = vor.u32 %v3851, %v3847
      %v3853 = vrot.slane %v3852, 4
      %v3855 = vshll.u32 %v3777, 16
      %v3857 = vrot.slane %v3855, 5
      %v3858 = vsel %vm953, %v3853, %v3857
      %v3859 = vshrl.u32 %v3777, 16
      %v3861 = vrot.slane %v3859, 4
      %v3862 = vor.u32 %v3861, %v3857
      %v3863 = vrot.slane %v3862, 4
      %v3865 = vshll.u32 %v3778, 16
      %v3867 = vrot.slane %v3865, 5
      %v3868 = vsel %vm953, %v3863, %v3867
      %v3869 = vshrl.u32 %v3778, 16
      %v3871 = vrot.slane %v3869, 4
      %v3872 = vor.u32 %v3871, %v3867
      %v3873 = vrot.slane %v3872, 4
      %v3875 = vshll.u32 %v3779, 16
      %v3877 = vrot.slane %v3875, 5
      %v3878 = vsel %vm953, %v3873, %v3877
      %v3879 = vshrl.u32 %v3779, 16
      %v3881 = vrot.slane %v3879, 4
      %v3882 = vor.u32 %v3881, %v3877
      %v3883 = vrot.slane %v3882, 4
      %v3885 = vshll.u32 %v3780, 16
      %v3887 = vrot.slane %v3885, 5
      %v3888 = vsel %vm953, %v3883, %v3887
      %v3889 = vshrl.u32 %v3780, 16
      %v3891 = vrot.slane %v3889, 4
      %v3892 = vor.u32 %v3891, %v3887
      %v3893 = vrot.slane %v3892, 4
      %v3895 = vshll.u32 %v3781, 16
      %v3897 = vrot.slane %v3895, 5
      %v3898 = vsel %vm953, %v3893, %v3897
      %v3899 = vshrl.u32 %v3781, 16
      %v3901 = vrot.slane %v3899, 4
      %v3902 = vor.u32 %v3901, %v3897
      %v3903 = vrot.slane %v3902, 4
      %v3905 = vshll.u32 %v3782, 16
      %v3907 = vrot.slane %v3905, 5
      %v3908 = vsel %vm953, %v3903, %v3907
      %v3909 = vshrl.u32 %v3782, 16
      %v3911 = vrot.slane %v3909, 4
      %v3912 = vor.u32 %v3911, %v3907
      %v3913 = vrot.slane %v3912, 4
      %v3915 = vshll.u32 %v3783, 16
      %v3917 = vrot.slane %v3915, 5
      %v3918 = vsel %vm953, %v3913, %v3917
      %v3919 = vshrl.u32 %v3783, 16
      %v3921 = vrot.slane %v3919, 4
      %v3922 = vor.u32 %v3921, %v3917
      %v3923 = vrot.slane %v3922, 4
      %v3925 = vshll.u32 %v3784, 16
      %v3927 = vrot.slane %v3925, 5
      %v3928 = vsel %vm953, %v3923, %v3927
      %v3929 = vshrl.u32 %v3784, 16
      %v3931 = vrot.slane %v3929, 4
      %v3932 = vor.u32 %v3931, %v3927
      %v3933 = vrot.slane %v3932, 4
      %v3935 = vshll.u32 %v3785, 16
      %v3937 = vrot.slane %v3935, 5
      %v3938 = vsel %vm953, %v3933, %v3937
      %v3939 = vshrl.u32 %v3785, 16
      %v3941 = vrot.slane %v3939, 4
      %v3942 = vor.u32 %v3941, %v3937
      %v3943 = vrot.slane %v3942, 4
      %v3945 = vshll.u32 %v3786, 16
      %v3947 = vrot.slane %v3945, 5
      %v3948 = vsel %vm953, %v3943, %v3947
      %v3949 = vshrl.u32 %v3786, 16
      %v3951 = vrot.slane %v3949, 4
      %v3952 = vor.u32 %v3951, %v3947
      %v3953 = vrot.slane %v3952, 4
      %v3955 = vshll.u32 %v3787, 16
      %v3957 = vrot.slane %v3955, 5
      %v3958 = vsel %vm953, %v3953, %v3957
      %v3959 = vshrl.u32 %v3787, 16
      %v3961 = vrot.slane %v3959, 4
      %v3962 = vor.u32 %v3961, %v3957
      %v3963 = vrot.slane %v3962, 4
      %v3965 = vshll.u32 %v3788, 16
      %v3967 = vrot.slane %v3965, 5
      %v3968 = vsel %vm953, %v3963, %v3967
      %v3969 = vshrl.u32 %v3788, 16
      %v3971 = vrot.slane %v3969, 4
      %v3972 = vor.u32 %v3971, %v3967
      %v3973 = vrot.slane %v3972, 4
      %v3975 = vshll.u32 %v3789, 16
      %v3977 = vrot.slane %v3975, 5
      %v3978 = vsel %vm953, %v3973, %v3977
      %v3979 = vshrl.u32 %v3789, 16
      %v3981 = vrot.slane %v3979, 4
      %v3982 = vor.u32 %v3981, %v3977
      %v3983 = vrot.slane %v3982, 4
      %v3985 = vshll.u32 %v3790, 16
      %v3987 = vrot.slane %v3985, 5
      %v3988 = vsel %vm953, %v3983, %v3987
      %v3989 = vshrl.u32 %v3790, 16
      %v3991 = vrot.slane %v3989, 4
      %v3992 = vor.u32 %v3991, %v3987
      %v3993 = vrot.slane %v3992, 4
      %v3995 = vshll.u32 %v3791, 16
      %v3997 = vrot.slane %v3995, 5
      %v3998 = vsel %vm953, %v3993, %v3997
      %v3999 = vshrl.u32 %v3791, 16
      %v4001 = vrot.slane %v3999, 4
      %v4002 = vor.u32 %v4001, %v3997
      %v4003 = vrot.slane %v4002, 4
      %v4005 = vshll.u32 %v3792, 16
      %v4007 = vrot.slane %v4005, 5
      %v4008 = vsel %vm953, %v4003, %v4007
      %v4009 = vshrl.u32 %v3792, 16
      %v4011 = vrot.slane %v4009, 4
      %v4012 = vor.u32 %v4011, %v4007
      %v4013 = vrot.slane %v4012, 4
      %v4015 = vshll.u32 %v3793, 16
      %v4017 = vrot.slane %v4015, 5
      %v4018 = vsel %vm953, %v4013, %v4017
      %v4019 = vshrl.u32 %v3793, 16
      %v4021 = vrot.slane %v4019, 4
      %v4022 = vor.u32 %v4021, %v4017
      %v4023 = vrot.slane %v4022, 4
      %v4025 = vshll.u32 %v3794, 16
      %v4027 = vrot.slane %v4025, 5
      %v4028 = vsel %vm953, %v4023, %v4027
      %v4029 = vshrl.u32 %v3794, 16
      %v4031 = vrot.slane %v4029, 4
      %v4032 = vor.u32 %v4031, %v4027
      %v4033 = vrot.slane %v4032, 4
      %v4035 = vshll.u32 %v3795, 16
      %v4037 = vrot.slane %v4035, 5
      %v4038 = vsel %vm953, %v4033, %v4037
      %v4039 = vshrl.u32 %v3795, 16
      %v4041 = vrot.slane %v4039, 4
      %v4042 = vor.u32 %v4041, %v4037
      %v4043 = vrot.slane %v4042, 4
      %v4045 = vshll.u32 %v3796, 16
      %v4047 = vrot.slane %v4045, 5
      %v4048 = vsel %vm953, %v4043, %v4047
      %v4049 = vshrl.u32 %v3796, 16
      %v4051 = vrot.slane %v4049, 4
      %v4052 = vor.u32 %v4051, %v4047
      %v4053 = vrot.slane %v4052, 4
      %v4055 = vshll.u32 %v3797, 16
      %v4057 = vrot.slane %v4055, 5
      %v4058 = vsel %vm953, %v4053, %v4057
      %v4059 = vshrl.u32 %v3797, 16
      %v4061 = vrot.slane %v4059, 4
      %v4062 = vor.u32 %v4061, %v4057
      %v4063 = vrot.slane %v4062, 4
      %v4065 = vshll.u32 %v3798, 16
      %v4067 = vrot.slane %v4065, 5
      %v4068 = vsel %vm953, %v4063, %v4067
      %v4069 = vshrl.u32 %v3798, 16
      %v4071 = vrot.slane %v4069, 4
      %v4072 = vor.u32 %v4071, %v4067
      %v4073 = vrot.slane %v4072, 4
      %v4075 = vshll.u32 %v3799, 16
      %v4077 = vrot.slane %v4075, 5
      %v4078 = vsel %vm953, %v4073, %v4077
      %v4079 = vshrl.u32 %v3799, 16
      %v4081 = vrot.slane %v4079, 4
      %v4082 = vor.u32 %v4081, %v4077
      %v4083 = vrot.slane %v4082, 4
      %v4085 = vshll.u32 %v3800, 16
      %v4087 = vrot.slane %v4085, 5
      %v4088 = vsel %vm953, %v4083, %v4087
      %v4089 = vshrl.u32 %v3800, 16
      %v4091 = vrot.slane %v4089, 4
      %v4092 = vor.u32 %v4091, %v4087
      %v4093 = vrot.slane %v4092, 4
      %v4095 = vshll.u32 %v3801, 16
      %v4097 = vrot.slane %v4095, 5
      %v4098 = vsel %vm953, %v4093, %v4097
      %v4099 = vshrl.u32 %v3801, 16
      %v4101 = vrot.slane %v4099, 4
      %v4102 = vor.u32 %v4101, %v4097
      %v4103 = vrot.slane %v4102, 4
      %v4105 = vshll.u32 %v3802, 16
      %v4107 = vrot.slane %v4105, 5
      %v4108 = vsel %vm953, %v4103, %v4107
      %v4109 = vshrl.u32 %v3802, 16
      %v4111 = vrot.slane %v4109, 4
      %v4112 = vor.u32 %v4111, %v4107
      %v4113 = vrot.slane %v4112, 4
      %v4115 = vshll.u32 %v3803, 16
      %v4117 = vrot.slane %v4115, 5
      %v4118 = vsel %vm953, %v4113, %v4117
      %v4119 = vshrl.u32 %v3803, 16
      %v4121 = vrot.slane %v4119, 4
      %v4122 = vor.u32 %v4121, %v4117
      %v4123 = vrot.slane %v4122, 4
      %v4125 = vshll.u32 %v3804, 16
      %v4127 = vrot.slane %v4125, 5
      %v4128 = vsel %vm953, %v4123, %v4127
      %4129 = vrot.lane.b32.xlu0 %v3818, 64
      %v4130 = vpop.permute.xlu0 %4129
      %4131 = vrot.lane.b32.xlu0 %v3828, 64
      %v4132 = vpop.permute.xlu0 %4131
      %4133 = vrot.lane.b32.xlu0 %v3838, 64
      %v4134 = vpop.permute.xlu0 %4133
      %4135 = vrot.lane.b32.xlu0 %v3848, 64
      %v4136 = vpop.permute.xlu0 %4135
      %4137 = vrot.lane.b32.xlu0 %v3858, 64
      %v4138 = vpop.permute.xlu0 %4137
      %4139 = vrot.lane.b32.xlu0 %v3868, 64
      %v4140 = vpop.permute.xlu0 %4139
      %4141 = vrot.lane.b32.xlu0 %v3878, 64
      %v4142 = vpop.permute.xlu0 %4141
      %4143 = vrot.lane.b32.xlu0 %v3888, 64
      %v4144 = vpop.permute.xlu0 %4143
      %4145 = vrot.lane.b32.xlu0 %v3898, 64
      %v4146 = vpop.permute.xlu0 %4145
      %4147 = vrot.lane.b32.xlu0 %v3908, 64
      %v4148 = vpop.permute.xlu0 %4147
      %4149 = vrot.lane.b32.xlu0 %v3918, 64
      %v4150 = vpop.permute.xlu0 %4149
      %4151 = vrot.lane.b32.xlu0 %v3928, 64
      %v4152 = vpop.permute.xlu0 %4151
      %4153 = vrot.lane.b32.xlu0 %v3938, 64
      %v4154 = vpop.permute.xlu0 %4153
      %4155 = vrot.lane.b32.xlu0 %v3948, 64
      %v4156 = vpop.permute.xlu0 %4155
      %4157 = vrot.lane.b32.xlu0 %v3958, 64
      %v4158 = vpop.permute.xlu0 %4157
      %4159 = vrot.lane.b32.xlu0 %v3968, 64
      %v4160 = vpop.permute.xlu0 %4159
      %4161 = vrot.lane.b32.xlu0 %v3978, 64
      %v4162 = vpop.permute.xlu0 %4161
      %4163 = vrot.lane.b32.xlu0 %v3988, 64
      %v4164 = vpop.permute.xlu0 %4163
      %4165 = vrot.lane.b32.xlu0 %v3998, 64
      %v4166 = vpop.permute.xlu0 %4165
      %4167 = vrot.lane.b32.xlu0 %v4008, 64
      %v4168 = vpop.permute.xlu0 %4167
      %4169 = vrot.lane.b32.xlu0 %v4018, 64
      %v4170 = vpop.permute.xlu0 %4169
      %4171 = vrot.lane.b32.xlu0 %v4028, 64
      %v4172 = vpop.permute.xlu0 %4171
      %4173 = vrot.lane.b32.xlu0 %v4038, 64
      %v4174 = vpop.permute.xlu0 %4173
      %4175 = vrot.lane.b32.xlu0 %v4048, 64
      %v4176 = vpop.permute.xlu0 %4175
      %4177 = vrot.lane.b32.xlu0 %v4058, 64
      %v4178 = vpop.permute.xlu0 %4177
      %4179 = vrot.lane.b32.xlu0 %v4068, 64
      %v4180 = vpop.permute.xlu0 %4179
      %4181 = vrot.lane.b32.xlu0 %v4078, 64
      %v4182 = vpop.permute.xlu0 %4181
      %4183 = vrot.lane.b32.xlu0 %v4088, 64
      %v4184 = vpop.permute.xlu0 %4183
      %4185 = vrot.lane.b32.xlu0 %v4098, 64
      %v4186 = vpop.permute.xlu0 %4185
      %4187 = vrot.lane.b32.xlu0 %v4108, 64
      %v4188 = vpop.permute.xlu0 %4187
      %4189 = vrot.lane.b32.xlu0 %v4118, 64
      %v4190 = vpop.permute.xlu0 %4189
      %4191 = vrot.lane.b32.xlu0 %v4128, 64
      %v4192 = vpop.permute.xlu0 %4191
      %4225 = vst.msk [vmem:[#allocation4 + $0x8] sm:$0xf] %vm2056, %v4130
      %4226 = vst.msk [vmem:[#allocation4 + $0x1c] sm:$0xf] %vm2056, %v4132
      %4227 = vst.msk [vmem:[#allocation4 + $0x30] sm:$0xf] %vm2056, %v4134
      %4228 = vst.msk [vmem:[#allocation4 + $0x44] sm:$0xf] %vm2056, %v4136
      %4229 = vst.msk [vmem:[#allocation4 + $0x58] sm:$0xf] %vm2056, %v4138
      %4230 = vst.msk [vmem:[#allocation4 + $0x6c] sm:$0xf] %vm2056, %v4140
      %4231 = vst.msk [vmem:[#allocation4 + $0x80] sm:$0xf] %vm2056, %v4142
      %4232 = vst.msk [vmem:[#allocation4 + $0x94] sm:$0xf] %vm2056, %v4144
      %4233 = vst.msk [vmem:[#allocation4 + $0xa8] sm:$0xf] %vm2056, %v4146
      %4234 = vst.msk [vmem:[#allocation4 + $0xbc] sm:$0xf] %vm2056, %v4148
      %4235 = vst.msk [vmem:[#allocation4 + $0xd0] sm:$0xf] %vm2056, %v4150
      %4236 = vst.msk [vmem:[#allocation4 + $0xe4] sm:$0xf] %vm2056, %v4152
      %4237 = vst.msk [vmem:[#allocation4 + $0xf8] sm:$0xf] %vm2056, %v4154
      %4238 = vst.msk [vmem:[#allocation4 + $0x10c] sm:$0xf] %vm2056, %v4156
      %4239 = vst.msk [vmem:[#allocation4 + $0x120] sm:$0xf] %vm2056, %v4158
      %4240 = vst.msk [vmem:[#allocation4 + $0x134] sm:$0xf] %vm2056, %v4160
      %4241 = vst.msk [vmem:[#allocation4 + $0x148] sm:$0xf] %vm2056, %v4162
      %4242 = vst.msk [vmem:[#allocation4 + $0x15c] sm:$0xf] %vm2056, %v4164
      %4243 = vst.msk [vmem:[#allocation4 + $0x170] sm:$0xf] %vm2056, %v4166
      %4244 = vst.msk [vmem:[#allocation4 + $0x184] sm:$0xf] %vm2056, %v4168
      %4245 = vst.msk [vmem:[#allocation4 + $0x198] sm:$0xf] %vm2056, %v4170
      %4246 = vst.msk [vmem:[#allocation4 + $0x1ac] sm:$0xf] %vm2056, %v4172
      %4247 = vst.msk [vmem:[#allocation4 + $0x1c0] sm:$0xf] %vm2056, %v4174
      %4248 = vst.msk [vmem:[#allocation4 + $0x1d4] sm:$0xf] %vm2056, %v4176
      %4249 = vst.msk [vmem:[#allocation4 + $0x1e8] sm:$0xf] %vm2056, %v4178
      %4250 = vst.msk [vmem:[#allocation4 + $0x1fc] sm:$0xf] %vm2056, %v4180
      %4251 = vst.msk [vmem:[#allocation4 + $0x210] sm:$0xf] %vm2056, %v4182
      %4252 = vst.msk [vmem:[#allocation4 + $0x224] sm:$0xf] %vm2056, %v4184
      %4253 = vst.msk [vmem:[#allocation4 + $0x238] sm:$0xf] %vm2056, %v4186
      %4254 = vst.msk [vmem:[#allocation4 + $0x24c] sm:$0xf] %vm2056, %v4188
      %4255 = vst.msk [vmem:[#allocation4 + $0x260] sm:$0xf] %vm2056, %v4190
      %4256 = vst.msk [vmem:[#allocation4 + $0x274] sm:$0xf] %vm2056, %v4192
      %v4257 = vld [vmem:[#allocation2 + $0x14] sm:$0x8]
      %v4258 = vld [vmem:[#allocation2 + $0x18] sm:$0xf]
      %v4259 = vld [vmem:[#allocation2 + $0x1c] sm:$0xf]
      %v4260 = vld [vmem:[#allocation2 + $0x20] sm:$0xf]
      %v4261 = vld [vmem:[#allocation2 + $0x24] sm:$0xf]
      %v4262 = vld [vmem:[#allocation2 + $0x28] sm:$0xf]
      %v4263 = vld [vmem:[#allocation2 + $0x2c] sm:$0xf]
      %v4264 = vld [vmem:[#allocation2 + $0x30] sm:$0xf]
      %v4265 = vld [vmem:[#allocation2 + $0x34] sm:$0xf]
      %v4266 = vld [vmem:[#allocation2 + $0x38] sm:$0xf]
      %v4267 = vld [vmem:[#allocation2 + $0x3c] sm:$0xf]
      %v4268 = vld [vmem:[#allocation2 + $0x40] sm:$0xf]
      %v4269 = vld [vmem:[#allocation2 + $0x44] sm:$0xf]
      %v4270 = vld [vmem:[#allocation2 + $0x48] sm:$0xf]
      %v4271 = vld [vmem:[#allocation2 + $0x4c] sm:$0xf]
      %v4272 = vld [vmem:[#allocation2 + $0x50] sm:$0xf]
      %v4273 = vld [vmem:[#allocation2 + $0x54] sm:$0xf]
      %v4274 = vld [vmem:[#allocation2 + $0x58] sm:$0xf]
      %v4275 = vld [vmem:[#allocation2 + $0x5c] sm:$0xf]
      %v4276 = vld [vmem:[#allocation2 + $0x60] sm:$0xf]
      %v4277 = vld [vmem:[#allocation2 + $0x64] sm:$0xf]
      %v4278 = vld [vmem:[#allocation2 + $0x68] sm:$0xf]
      %v4279 = vld [vmem:[#allocation2 + $0x6c] sm:$0xf]
      %v4280 = vld [vmem:[#allocation2 + $0x70] sm:$0xf]
      %v4281 = vld [vmem:[#allocation2 + $0x74] sm:$0xf]
      %v4282 = vld [vmem:[#allocation2 + $0x78] sm:$0xf]
      %v4283 = vld [vmem:[#allocation2 + $0x7c] sm:$0xf]
      %v4284 = vld [vmem:[#allocation2 + $0x80] sm:$0xf]
      %v4285 = vld [vmem:[#allocation2 + $0x84] sm:$0xf]
      %v4286 = vld [vmem:[#allocation2 + $0x88] sm:$0xf]
      %v4287 = vld [vmem:[#allocation2 + $0x8c] sm:$0xf]
      %v4288 = vld [vmem:[#allocation2 + $0x90] sm:$0xf]
      %v4289 = vld [vmem:[#allocation2 + $0x94] sm:$0xf]
      %v4290 = vsel %vm1279, %v4257, 0
      %v4291 = vsel %vm1286, %v4258, 0
      %v4292 = vsel %vm1293, %v4259, 0
      %v4293 = vsel %vm1300, %v4260, 0
      %v4294 = vsel %vm1307, %v4261, 0
      %v4295 = vsel %vm1314, %v4262, 0
      %v4296 = vsel %vm1321, %v4263, 0
      %v4297 = vsel %vm1328, %v4264, 0
      %v4298 = vsel %vm1335, %v4265, 0
      %v4299 = vsel %vm1342, %v4266, 0
      %v4300 = vsel %vm1349, %v4267, 0
      %v4301 = vsel %vm1356, %v4268, 0
      %v4302 = vsel %vm1363, %v4269, 0
      %v4303 = vsel %vm1370, %v4270, 0
      %v4304 = vsel %vm1377, %v4271, 0
      %v4305 = vsel %vm1384, %v4272, 0
      %v4306 = vsel %vm1391, %v4273, 0
      %v4307 = vsel %vm1398, %v4274, 0
      %v4308 = vsel %vm1405, %v4275, 0
      %v4309 = vsel %vm1412, %v4276, 0
      %v4310 = vsel %vm1419, %v4277, 0
      %v4311 = vsel %vm1426, %v4278, 0
      %v4312 = vsel %vm1433, %v4279, 0
      %v4313 = vsel %vm1440, %v4280, 0
      %v4314 = vsel %vm1447, %v4281, 0
      %v4315 = vsel %vm1454, %v4282, 0
      %v4316 = vsel %vm1461, %v4283, 0
      %v4317 = vsel %vm1468, %v4284, 0
      %v4318 = vsel %vm1475, %v4285, 0
      %v4319 = vsel %vm1482, %v4286, 0
      %v4320 = vsel %vm1489, %v4287, 0
      %v4321 = vsel %vm1496, %v4288, 0
      %v4322 = vsel %vm1503, %v4289, 0
      %v4324 = vshrl.u32 %v4290, 16
      %v4326 = vrot.slane %v4324, 7
      %v4327 = vrot.slane %v4326, 4
      %v4329 = vshrl.u32 %v4291, 16
      %v4331 = vrot.slane %v4329, 7
      %v4332 = vshll.u32 %v4291, 16
      %v4334 = vor.u32 %v4331, %v4332
      %v4335 = vsel %vm1539, %v4327, %v4334
      %v4336 = vrot.slane %v4331, 4
      %v4338 = vshrl.u32 %v4292, 16
      %v4340 = vrot.slane %v4338, 7
      %v4341 = vshll.u32 %v4292, 16
      %v4343 = vor.u32 %v4340, %v4341
      %v4344 = vsel %vm1539, %v4336, %v4343
      %v4345 = vrot.slane %v4340, 4
      %v4347 = vshrl.u32 %v4293, 16
      %v4349 = vrot.slane %v4347, 7
      %v4350 = vshll.u32 %v4293, 16
      %v4352 = vor.u32 %v4349, %v4350
      %v4353 = vsel %vm1539, %v4345, %v4352
      %v4354 = vrot.slane %v4349, 4
      %v4356 = vshrl.u32 %v4294, 16
      %v4358 = vrot.slane %v4356, 7
      %v4359 = vshll.u32 %v4294, 16
      %v4361 = vor.u32 %v4358, %v4359
      %v4362 = vsel %vm1539, %v4354, %v4361
      %v4363 = vrot.slane %v4358, 4
      %v4365 = vshrl.u32 %v4295, 16
      %v4367 = vrot.slane %v4365, 7
      %v4368 = vshll.u32 %v4295, 16
      %v4370 = vor.u32 %v4367, %v4368
      %v4371 = vsel %vm1539, %v4363, %v4370
      %v4372 = vrot.slane %v4367, 4
      %v4374 = vshrl.u32 %v4296, 16
      %v4376 = vrot.slane %v4374, 7
      %v4377 = vshll.u32 %v4296, 16
      %v4379 = vor.u32 %v4376, %v4377
      %v4380 = vsel %vm1539, %v4372, %v4379
      %v4381 = vrot.slane %v4376, 4
      %v4383 = vshrl.u32 %v4297, 16
      %v4385 = vrot.slane %v4383, 7
      %v4386 = vshll.u32 %v4297, 16
      %v4388 = vor.u32 %v4385, %v4386
      %v4389 = vsel %vm1539, %v4381, %v4388
      %v4390 = vrot.slane %v4385, 4
      %v4392 = vshrl.u32 %v4298, 16
      %v4394 = vrot.slane %v4392, 7
      %v4395 = vshll.u32 %v4298, 16
      %v4397 = vor.u32 %v4394, %v4395
      %v4398 = vsel %vm1539, %v4390, %v4397
      %v4399 = vrot.slane %v4394, 4
      %v4401 = vshrl.u32 %v4299, 16
      %v4403 = vrot.slane %v4401, 7
      %v4404 = vshll.u32 %v4299, 16
      %v4406 = vor.u32 %v4403, %v4404
      %v4407 = vsel %vm1539, %v4399, %v4406
      %v4408 = vrot.slane %v4403, 4
      %v4410 = vshrl.u32 %v4300, 16
      %v4412 = vrot.slane %v4410, 7
      %v4413 = vshll.u32 %v4300, 16
      %v4415 = vor.u32 %v4412, %v4413
      %v4416 = vsel %vm1539, %v4408, %v4415
      %v4417 = vrot.slane %v4412, 4
      %v4419 = vshrl.u32 %v4301, 16
      %v4421 = vrot.slane %v4419, 7
      %v4422 = vshll.u32 %v4301, 16
      %v4424 = vor.u32 %v4421, %v4422
      %v4425 = vsel %vm1539, %v4417, %v4424
      %v4426 = vrot.slane %v4421, 4
      %v4428 = vshrl.u32 %v4302, 16
      %v4430 = vrot.slane %v4428, 7
      %v4431 = vshll.u32 %v4302, 16
      %v4433 = vor.u32 %v4430, %v4431
      %v4434 = vsel %vm1539, %v4426, %v4433
      %v4435 = vrot.slane %v4430, 4
      %v4437 = vshrl.u32 %v4303, 16
      %v4439 = vrot.slane %v4437, 7
      %v4440 = vshll.u32 %v4303, 16
      %v4442 = vor.u32 %v4439, %v4440
      %v4443 = vsel %vm1539, %v4435, %v4442
      %v4444 = vrot.slane %v4439, 4
      %v4446 = vshrl.u32 %v4304, 16
      %v4448 = vrot.slane %v4446, 7
      %v4449 = vshll.u32 %v4304, 16
      %v4451 = vor.u32 %v4448, %v4449
      %v4452 = vsel %vm1539, %v4444, %v4451
      %v4453 = vrot.slane %v4448, 4
      %v4455 = vshrl.u32 %v4305, 16
      %v4457 = vrot.slane %v4455, 7
      %v4458 = vshll.u32 %v4305, 16
      %v4460 = vor.u32 %v4457, %v4458
      %v4461 = vsel %vm1539, %v4453, %v4460
      %v4462 = vrot.slane %v4457, 4
      %v4464 = vshrl.u32 %v4306, 16
      %v4466 = vrot.slane %v4464, 7
      %v4467 = vshll.u32 %v4306, 16
      %v4469 = vor.u32 %v4466, %v4467
      %v4470 = vsel %vm1539, %v4462, %v4469
      %v4471 = vrot.slane %v4466, 4
      %v4473 = vshrl.u32 %v4307, 16
      %v4475 = vrot.slane %v4473, 7
      %v4476 = vshll.u32 %v4307, 16
      %v4478 = vor.u32 %v4475, %v4476
      %v4479 = vsel %vm1539, %v4471, %v4478
      %v4480 = vrot.slane %v4475, 4
      %v4482 = vshrl.u32 %v4308, 16
      %v4484 = vrot.slane %v4482, 7
      %v4485 = vshll.u32 %v4308, 16
      %v4487 = vor.u32 %v4484, %v4485
      %v4488 = vsel %vm1539, %v4480, %v4487
      %v4489 = vrot.slane %v4484, 4
      %v4491 = vshrl.u32 %v4309, 16
      %v4493 = vrot.slane %v4491, 7
      %v4494 = vshll.u32 %v4309, 16
      %v4496 = vor.u32 %v4493, %v4494
      %v4497 = vsel %vm1539, %v4489, %v4496
      %v4498 = vrot.slane %v4493, 4
      %v4500 = vshrl.u32 %v4310, 16
      %v4502 = vrot.slane %v4500, 7
      %v4503 = vshll.u32 %v4310, 16
      %v4505 = vor.u32 %v4502, %v4503
      %v4506 = vsel %vm1539, %v4498, %v4505
      %v4507 = vrot.slane %v4502, 4
      %v4509 = vshrl.u32 %v4311, 16
      %v4511 = vrot.slane %v4509, 7
      %v4512 = vshll.u32 %v4311, 16
      %v4514 = vor.u32 %v4511, %v4512
      %v4515 = vsel %vm1539, %v4507, %v4514
      %v4516 = vrot.slane %v4511, 4
      %v4518 = vshrl.u32 %v4312, 16
      %v4520 = vrot.slane %v4518, 7
      %v4521 = vshll.u32 %v4312, 16
      %v4523 = vor.u32 %v4520, %v4521
      %v4524 = vsel %vm1539, %v4516, %v4523
      %v4525 = vrot.slane %v4520, 4
      %v4527 = vshrl.u32 %v4313, 16
      %v4529 = vrot.slane %v4527, 7
      %v4530 = vshll.u32 %v4313, 16
      %v4532 = vor.u32 %v4529, %v4530
      %v4533 = vsel %vm1539, %v4525, %v4532
      %v4534 = vrot.slane %v4529, 4
      %v4536 = vshrl.u32 %v4314, 16
      %v4538 = vrot.slane %v4536, 7
      %v4539 = vshll.u32 %v4314, 16
      %v4541 = vor.u32 %v4538, %v4539
      %v4542 = vsel %vm1539, %v4534, %v4541
      %v4543 = vrot.slane %v4538, 4
      %v4545 = vshrl.u32 %v4315, 16
      %v4547 = vrot.slane %v4545, 7
      %v4548 = vshll.u32 %v4315, 16
      %v4550 = vor.u32 %v4547, %v4548
      %v4551 = vsel %vm1539, %v4543, %v4550
      %v4552 = vrot.slane %v4547, 4
      %v4554 = vshrl.u32 %v4316, 16
      %v4556 = vrot.slane %v4554, 7
      %v4557 = vshll.u32 %v4316, 16
      %v4559 = vor.u32 %v4556, %v4557
      %v4560 = vsel %vm1539, %v4552, %v4559
      %v4561 = vrot.slane %v4556, 4
      %v4563 = vshrl.u32 %v4317, 16
      %v4565 = vrot.slane %v4563, 7
      %v4566 = vshll.u32 %v4317, 16
      %v4568 = vor.u32 %v4565, %v4566
      %v4569 = vsel %vm1539, %v4561, %v4568
      %v4570 = vrot.slane %v4565, 4
      %v4572 = vshrl.u32 %v4318, 16
      %v4574 = vrot.slane %v4572, 7
      %v4575 = vshll.u32 %v4318, 16
      %v4577 = vor.u32 %v4574, %v4575
      %v4578 = vsel %vm1539, %v4570, %v4577
      %v4579 = vrot.slane %v4574, 4
      %v4581 = vshrl.u32 %v4319, 16
      %v4583 = vrot.slane %v4581, 7
      %v4584 = vshll.u32 %v4319, 16
      %v4586 = vor.u32 %v4583, %v4584
      %v4587 = vsel %vm1539, %v4579, %v4586
      %v4588 = vrot.slane %v4583, 4
      %v4590 = vshrl.u32 %v4320, 16
      %v4592 = vrot.slane %v4590, 7
      %v4593 = vshll.u32 %v4320, 16
      %v4595 = vor.u32 %v4592, %v4593
      %v4596 = vsel %vm1539, %v4588, %v4595
      %v4597 = vrot.slane %v4592, 4
      %v4599 = vshrl.u32 %v4321, 16
      %v4601 = vrot.slane %v4599, 7
      %v4602 = vshll.u32 %v4321, 16
      %v4604 = vor.u32 %v4601, %v4602
      %v4605 = vsel %vm1539, %v4597, %v4604
      %v4606 = vrot.slane %v4601, 4
      %v4608 = vshrl.u32 %v4322, 16
      %v4610 = vrot.slane %v4608, 7
      %v4611 = vshll.u32 %v4322, 16
      %v4613 = vor.u32 %v4610, %v4611
      %v4614 = vsel %vm1539, %v4606, %v4613
      %4647 = vst.msk [vmem:[#allocation4 + $0xc] sm:$0xf] %vm709, %v4335
      %4648 = vst.msk [vmem:[#allocation4 + $0x20] sm:$0xf] %vm709, %v4344
      %4649 = vst.msk [vmem:[#allocation4 + $0x34] sm:$0xf] %vm709, %v4353
      %4650 = vst.msk [vmem:[#allocation4 + $0x48] sm:$0xf] %vm709, %v4362
      %4651 = vst.msk [vmem:[#allocation4 + $0x5c] sm:$0xf] %vm709, %v4371
      %4652 = vst.msk [vmem:[#allocation4 + $0x70] sm:$0xf] %vm709, %v4380
      %4653 = vst.msk [vmem:[#allocation4 + $0x84] sm:$0xf] %vm709, %v4389
      %4654 = vst.msk [vmem:[#allocation4 + $0x98] sm:$0xf] %vm709, %v4398
      %4655 = vst.msk [vmem:[#allocation4 + $0xac] sm:$0xf] %vm709, %v4407
      %4656 = vst.msk [vmem:[#allocation4 + $0xc0] sm:$0xf] %vm709, %v4416
      %4657 = vst.msk [vmem:[#allocation4 + $0xd4] sm:$0xf] %vm709, %v4425
      %4658 = vst.msk [vmem:[#allocation4 + $0xe8] sm:$0xf] %vm709, %v4434
      %4659 = vst.msk [vmem:[#allocation4 + $0xfc] sm:$0xf] %vm709, %v4443
      %4660 = vst.msk [vmem:[#allocation4 + $0x110] sm:$0xf] %vm709, %v4452
      %4661 = vst.msk [vmem:[#allocation4 + $0x124] sm:$0xf] %vm709, %v4461
      %4662 = vst.msk [vmem:[#allocation4 + $0x138] sm:$0xf] %vm709, %v4470
      %4663 = vst.msk [vmem:[#allocation4 + $0x14c] sm:$0xf] %vm709, %v4479
      %4664 = vst.msk [vmem:[#allocation4 + $0x160] sm:$0xf] %vm709, %v4488
      %4665 = vst.msk [vmem:[#allocation4 + $0x174] sm:$0xf] %vm709, %v4497
      %4666 = vst.msk [vmem:[#allocation4 + $0x188] sm:$0xf] %vm709, %v4506
      %4667 = vst.msk [vmem:[#allocation4 + $0x19c] sm:$0xf] %vm709, %v4515
      %4668 = vst.msk [vmem:[#allocation4 + $0x1b0] sm:$0xf] %vm709, %v4524
      %4669 = vst.msk [vmem:[#allocation4 + $0x1c4] sm:$0xf] %vm709, %v4533
      %4670 = vst.msk [vmem:[#allocation4 + $0x1d8] sm:$0xf] %vm709, %v4542
      %4671 = vst.msk [vmem:[#allocation4 + $0x1ec] sm:$0xf] %vm709, %v4551
      %4672 = vst.msk [vmem:[#allocation4 + $0x200] sm:$0xf] %vm709, %v4560
      %4673 = vst.msk [vmem:[#allocation4 + $0x214] sm:$0xf] %vm709, %v4569
      %4674 = vst.msk [vmem:[#allocation4 + $0x228] sm:$0xf] %vm709, %v4578
      %4675 = vst.msk [vmem:[#allocation4 + $0x23c] sm:$0xf] %vm709, %v4587
      %4676 = vst.msk [vmem:[#allocation4 + $0x250] sm:$0xf] %vm709, %v4596
      %4677 = vst.msk [vmem:[#allocation4 + $0x264] sm:$0xf] %vm709, %v4605
      %4678 = vst.msk [vmem:[#allocation4 + $0x278] sm:$0xf] %vm709, %v4614
      %v4679 = vld [vmem:[#allocation2 + $0x18] sm:$0xf]
      %v4680 = vld [vmem:[#allocation2 + $0x1c] sm:$0xf]
      %v4681 = vld [vmem:[#allocation2 + $0x20] sm:$0xf]
      %v4682 = vld [vmem:[#allocation2 + $0x24] sm:$0xf]
      %v4683 = vld [vmem:[#allocation2 + $0x28] sm:$0xf]
      %v4684 = vld [vmem:[#allocation2 + $0x2c] sm:$0xf]
      %v4685 = vld [vmem:[#allocation2 + $0x30] sm:$0xf]
      %v4686 = vld [vmem:[#allocation2 + $0x34] sm:$0xf]
      %v4687 = vld [vmem:[#allocation2 + $0x38] sm:$0xf]
      %v4688 = vld [vmem:[#allocation2 + $0x3c] sm:$0xf]
      %v4689 = vld [vmem:[#allocation2 + $0x40] sm:$0xf]
      %v4690 = vld [vmem:[#allocation2 + $0x44] sm:$0xf]
      %v4691 = vld [vmem:[#allocation2 + $0x48] sm:$0xf]
      %v4692 = vld [vmem:[#allocation2 + $0x4c] sm:$0xf]
      %v4693 = vld [vmem:[#allocation2 + $0x50] sm:$0xf]
      %v4694 = vld [vmem:[#allocation2 + $0x54] sm:$0xf]
      %v4695 = vld [vmem:[#allocation2 + $0x58] sm:$0xf]
      %v4696 = vld [vmem:[#allocation2 + $0x5c] sm:$0xf]
      %v4697 = vld [vmem:[#allocation2 + $0x60] sm:$0xf]
      %v4698 = vld [vmem:[#allocation2 + $0x64] sm:$0xf]
      %v4699 = vld [vmem:[#allocation2 + $0x68] sm:$0xf]
      %v4700 = vld [vmem:[#allocation2 + $0x6c] sm:$0xf]
      %v4701 = vld [vmem:[#allocation2 + $0x70] sm:$0xf]
      %v4702 = vld [vmem:[#allocation2 + $0x74] sm:$0xf]
      %v4703 = vld [vmem:[#allocation2 + $0x78] sm:$0xf]
      %v4704 = vld [vmem:[#allocation2 + $0x7c] sm:$0xf]
      %v4705 = vld [vmem:[#allocation2 + $0x80] sm:$0xf]
      %v4706 = vld [vmem:[#allocation2 + $0x84] sm:$0xf]
      %v4707 = vld [vmem:[#allocation2 + $0x88] sm:$0xf]
      %v4708 = vld [vmem:[#allocation2 + $0x8c] sm:$0xf]
      %v4709 = vld [vmem:[#allocation2 + $0x90] sm:$0xf]
      %v4710 = vld [vmem:[#allocation2 + $0x94] sm:$0xf]
      %4743 = vrot.lane.b32.xlu0 %v4679, 64
      %v4744 = vpop.permute.xlu0 %4743
      %4745 = vrot.lane.b32.xlu0 %v4680, 64
      %v4746 = vpop.permute.xlu0 %4745
      %4747 = vrot.lane.b32.xlu0 %v4681, 64
      %v4748 = vpop.permute.xlu0 %4747
      %4749 = vrot.lane.b32.xlu0 %v4682, 64
      %v4750 = vpop.permute.xlu0 %4749
      %4751 = vrot.lane.b32.xlu0 %v4683, 64
      %v4752 = vpop.permute.xlu0 %4751
      %4753 = vrot.lane.b32.xlu0 %v4684, 64
      %v4754 = vpop.permute.xlu0 %4753
      %4755 = vrot.lane.b32.xlu0 %v4685, 64
      %v4756 = vpop.permute.xlu0 %4755
      %4757 = vrot.lane.b32.xlu0 %v4686, 64
      %v4758 = vpop.permute.xlu0 %4757
      %4759 = vrot.lane.b32.xlu0 %v4687, 64
      %v4760 = vpop.permute.xlu0 %4759
      %4761 = vrot.lane.b32.xlu0 %v4688, 64
      %v4762 = vpop.permute.xlu0 %4761
      %4763 = vrot.lane.b32.xlu0 %v4689, 64
      %v4764 = vpop.permute.xlu0 %4763
      %4765 = vrot.lane.b32.xlu0 %v4690, 64
      %v4766 = vpop.permute.xlu0 %4765
      %4767 = vrot.lane.b32.xlu0 %v4691, 64
      %v4768 = vpop.permute.xlu0 %4767
      %4769 = vrot.lane.b32.xlu0 %v4692, 64
      %v4770 = vpop.permute.xlu0 %4769
      %4771 = vrot.lane.b32.xlu0 %v4693, 64
      %v4772 = vpop.permute.xlu0 %4771
      %4773 = vrot.lane.b32.xlu0 %v4694, 64
      %v4774 = vpop.permute.xlu0 %4773
      %4775 = vrot.lane.b32.xlu0 %v4695, 64
      %v4776 = vpop.permute.xlu0 %4775
      %4777 = vrot.lane.b32.xlu0 %v4696, 64
      %v4778 = vpop.permute.xlu0 %4777
      %4779 = vrot.lane.b32.xlu0 %v4697, 64
      %v4780 = vpop.permute.xlu0 %4779
      %4781 = vrot.lane.b32.xlu0 %v4698, 64
      %v4782 = vpop.permute.xlu0 %4781
      %4783 = vrot.lane.b32.xlu0 %v4699, 64
      %v4784 = vpop.permute.xlu0 %4783
      %4785 = vrot.lane.b32.xlu0 %v4700, 64
      %v4786 = vpop.permute.xlu0 %4785
      %4787 = vrot.lane.b32.xlu0 %v4701, 64
      %v4788 = vpop.permute.xlu0 %4787
      %4789 = vrot.lane.b32.xlu0 %v4702, 64
      %v4790 = vpop.permute.xlu0 %4789
      %4791 = vrot.lane.b32.xlu0 %v4703, 64
      %v4792 = vpop.permute.xlu0 %4791
      %4793 = vrot.lane.b32.xlu0 %v4704, 64
      %v4794 = vpop.permute.xlu0 %4793
      %4795 = vrot.lane.b32.xlu0 %v4705, 64
      %v4796 = vpop.permute.xlu0 %4795
      %4797 = vrot.lane.b32.xlu0 %v4706, 64
      %v4798 = vpop.permute.xlu0 %4797
      %4799 = vrot.lane.b32.xlu0 %v4707, 64
      %v4800 = vpop.permute.xlu0 %4799
      %4801 = vrot.lane.b32.xlu0 %v4708, 64
      %v4802 = vpop.permute.xlu0 %4801
      %4803 = vrot.lane.b32.xlu0 %v4709, 64
      %v4804 = vpop.permute.xlu0 %4803
      %4805 = vrot.lane.b32.xlu0 %v4710, 64
      %v4806 = vpop.permute.xlu0 %4805
      %4839 = vst.msk [vmem:[#allocation4 + $0xc] sm:$0xf] %vm2056, %v4744
      %4840 = vst.msk [vmem:[#allocation4 + $0x20] sm:$0xf] %vm2056, %v4746
      %4841 = vst.msk [vmem:[#allocation4 + $0x34] sm:$0xf] %vm2056, %v4748
      %4842 = vst.msk [vmem:[#allocation4 + $0x48] sm:$0xf] %vm2056, %v4750
      %4843 = vst.msk [vmem:[#allocation4 + $0x5c] sm:$0xf] %vm2056, %v4752
      %4844 = vst.msk [vmem:[#allocation4 + $0x70] sm:$0xf] %vm2056, %v4754
      %4845 = vst.msk [vmem:[#allocation4 + $0x84] sm:$0xf] %vm2056, %v4756
      %4846 = vst.msk [vmem:[#allocation4 + $0x98] sm:$0xf] %vm2056, %v4758
      %4847 = vst.msk [vmem:[#allocation4 + $0xac] sm:$0xf] %vm2056, %v4760
      %4848 = vst.msk [vmem:[#allocation4 + $0xc0] sm:$0xf] %vm2056, %v4762
      %4849 = vst.msk [vmem:[#allocation4 + $0xd4] sm:$0xf] %vm2056, %v4764
      %4850 = vst.msk [vmem:[#allocation4 + $0xe8] sm:$0xf] %vm2056, %v4766
      %4851 = vst.msk [vmem:[#allocation4 + $0xfc] sm:$0xf] %vm2056, %v4768
      %4852 = vst.msk [vmem:[#allocation4 + $0x110] sm:$0xf] %vm2056, %v4770
      %4853 = vst.msk [vmem:[#allocation4 + $0x124] sm:$0xf] %vm2056, %v4772
      %4854 = vst.msk [vmem:[#allocation4 + $0x138] sm:$0xf] %vm2056, %v4774
      %4855 = vst.msk [vmem:[#allocation4 + $0x14c] sm:$0xf] %vm2056, %v4776
      %4856 = vst.msk [vmem:[#allocation4 + $0x160] sm:$0xf] %vm2056, %v4778
      %4857 = vst.msk [vmem:[#allocation4 + $0x174] sm:$0xf] %vm2056, %v4780
      %4858 = vst.msk [vmem:[#allocation4 + $0x188] sm:$0xf] %vm2056, %v4782
      %4859 = vst.msk [vmem:[#allocation4 + $0x19c] sm:$0xf] %vm2056, %v4784
      %4860 = vst.msk [vmem:[#allocation4 + $0x1b0] sm:$0xf] %vm2056, %v4786
      %4861 = vst.msk [vmem:[#allocation4 + $0x1c4] sm:$0xf] %vm2056, %v4788
      %4862 = vst.msk [vmem:[#allocation4 + $0x1d8] sm:$0xf] %vm2056, %v4790
      %4863 = vst.msk [vmem:[#allocation4 + $0x1ec] sm:$0xf] %vm2056, %v4792
      %4864 = vst.msk [vmem:[#allocation4 + $0x200] sm:$0xf] %vm2056, %v4794
      %4865 = vst.msk [vmem:[#allocation4 + $0x214] sm:$0xf] %vm2056, %v4796
      %4866 = vst.msk [vmem:[#allocation4 + $0x228] sm:$0xf] %vm2056, %v4798
      %4867 = vst.msk [vmem:[#allocation4 + $0x23c] sm:$0xf] %vm2056, %v4800
      %4868 = vst.msk [vmem:[#allocation4 + $0x250] sm:$0xf] %vm2056, %v4802
      %4869 = vst.msk [vmem:[#allocation4 + $0x264] sm:$0xf] %vm2056, %v4804
      %4870 = vst.msk [vmem:[#allocation4 + $0x278] sm:$0xf] %vm2056, %v4806
      %v4871 = vld [vmem:[#allocation2 + $0x18] sm:$0xf]
      %v4872 = vld [vmem:[#allocation2 + $0x1c] sm:$0xf]
      %v4873 = vld [vmem:[#allocation2 + $0x20] sm:$0xf]
      %v4874 = vld [vmem:[#allocation2 + $0x24] sm:$0xf]
      %v4875 = vld [vmem:[#allocation2 + $0x28] sm:$0xf]
      %v4876 = vld [vmem:[#allocation2 + $0x2c] sm:$0xf]
      %v4877 = vld [vmem:[#allocation2 + $0x30] sm:$0xf]
      %v4878 = vld [vmem:[#allocation2 + $0x34] sm:$0xf]
      %v4879 = vld [vmem:[#allocation2 + $0x38] sm:$0xf]
      %v4880 = vld [vmem:[#allocation2 + $0x3c] sm:$0xf]
      %v4881 = vld [vmem:[#allocation2 + $0x40] sm:$0xf]
      %v4882 = vld [vmem:[#allocation2 + $0x44] sm:$0xf]
      %v4883 = vld [vmem:[#allocation2 + $0x48] sm:$0xf]
      %v4884 = vld [vmem:[#allocation2 + $0x4c] sm:$0xf]
      %v4885 = vld [vmem:[#allocation2 + $0x50] sm:$0xf]
      %v4886 = vld [vmem:[#allocation2 + $0x54] sm:$0xf]
      %v4887 = vld [vmem:[#allocation2 + $0x58] sm:$0xf]
      %v4888 = vld [vmem:[#allocation2 + $0x5c] sm:$0xf]
      %v4889 = vld [vmem:[#allocation2 + $0x60] sm:$0xf]
      %v4890 = vld [vmem:[#allocation2 + $0x64] sm:$0xf]
      %v4891 = vld [vmem:[#allocation2 + $0x68] sm:$0xf]
      %v4892 = vld [vmem:[#allocation2 + $0x6c] sm:$0xf]
      %v4893 = vld [vmem:[#allocation2 + $0x70] sm:$0xf]
      %v4894 = vld [vmem:[#allocation2 + $0x74] sm:$0xf]
      %v4895 = vld [vmem:[#allocation2 + $0x78] sm:$0xf]
      %v4896 = vld [vmem:[#allocation2 + $0x7c] sm:$0xf]
      %v4897 = vld [vmem:[#allocation2 + $0x80] sm:$0xf]
      %v4898 = vld [vmem:[#allocation2 + $0x84] sm:$0xf]
      %v4899 = vld [vmem:[#allocation2 + $0x88] sm:$0xf]
      %v4900 = vld [vmem:[#allocation2 + $0x8c] sm:$0xf]
      %v4901 = vld [vmem:[#allocation2 + $0x90] sm:$0xf]
      %v4902 = vld [vmem:[#allocation2 + $0x94] sm:$0xf]
      %v4903 = vld [vmem:[#allocation2 + $0x98] sm:$0x1]
      %v4904 = vsel %vm2543, %v4871, 0
      %v4905 = vsel %vm2550, %v4872, 0
      %v4906 = vsel %vm2557, %v4873, 0
      %v4907 = vsel %vm2564, %v4874, 0
      %v4908 = vsel %vm2571, %v4875, 0
      %v4909 = vsel %vm2578, %v4876, 0
      %v4910 = vsel %vm2585, %v4877, 0
      %v4911 = vsel %vm2592, %v4878, 0
      %v4912 = vsel %vm2599, %v4879, 0
      %v4913 = vsel %vm2606, %v4880, 0
      %v4914 = vsel %vm2613, %v4881, 0
      %v4915 = vsel %vm2620, %v4882, 0
      %v4916 = vsel %vm2627, %v4883, 0
      %v4917 = vsel %vm2634, %v4884, 0
      %v4918 = vsel %vm2641, %v4885, 0
      %v4919 = vsel %vm2648, %v4886, 0
      %v4920 = vsel %vm2655, %v4887, 0
      %v4921 = vsel %vm2662, %v4888, 0
      %v4922 = vsel %vm2669, %v4889, 0
      %v4923 = vsel %vm2676, %v4890, 0
      %v4924 = vsel %vm2683, %v4891, 0
      %v4925 = vsel %vm2690, %v4892, 0
      %v4926 = vsel %vm2697, %v4893, 0
      %v4927 = vsel %vm2704, %v4894, 0
      %v4928 = vsel %vm2711, %v4895, 0
      %v4929 = vsel %vm2718, %v4896, 0
      %v4930 = vsel %vm2725, %v4897, 0
      %v4931 = vsel %vm2732, %v4898, 0
      %v4932 = vsel %vm2739, %v4899, 0
      %v4933 = vsel %vm2746, %v4900, 0
      %v4934 = vsel %vm2753, %v4901, 0
      %v4935 = vsel %vm2760, %v4902, 0
      %v4936 = vsel %vm2767, %v4903, 0
      %v4938 = vshrl.u32 %v4904, 16
      %v4940 = vrot.slane %v4938, 4
      %v4941 = vshll.u32 %v4904, 16
      %v4943 = vrot.slane %v4941, 5
      %v4944 = vor.u32 %v4940, %v4943
      %v4945 = vrot.slane %v4944, 4
      %v4947 = vshll.u32 %v4905, 16
      %v4949 = vrot.slane %v4947, 5
      %v4950 = vsel %vm953, %v4945, %v4949
      %v4951 = vshrl.u32 %v4905, 16
      %v4953 = vrot.slane %v4951, 4
      %v4954 = vor.u32 %v4953, %v4949
      %v4955 = vrot.slane %v4954, 4
      %v4957 = vshll.u32 %v4906, 16
      %v4959 = vrot.slane %v4957, 5
      %v4960 = vsel %vm953, %v4955, %v4959
      %v4961 = vshrl.u32 %v4906, 16
      %v4963 = vrot.slane %v4961, 4
      %v4964 = vor.u32 %v4963, %v4959
      %v4965 = vrot.slane %v4964, 4
      %v4967 = vshll.u32 %v4907, 16
      %v4969 = vrot.slane %v4967, 5
      %v4970 = vsel %vm953, %v4965, %v4969
      %v4971 = vshrl.u32 %v4907, 16
      %v4973 = vrot.slane %v4971, 4
      %v4974 = vor.u32 %v4973, %v4969
      %v4975 = vrot.slane %v4974, 4
      %v4977 = vshll.u32 %v4908, 16
      %v4979 = vrot.slane %v4977, 5
      %v4980 = vsel %vm953, %v4975, %v4979
      %v4981 = vshrl.u32 %v4908, 16
      %v4983 = vrot.slane %v4981, 4
      %v4984 = vor.u32 %v4983, %v4979
      %v4985 = vrot.slane %v4984, 4
      %v4987 = vshll.u32 %v4909, 16
      %v4989 = vrot.slane %v4987, 5
      %v4990 = vsel %vm953, %v4985, %v4989
      %v4991 = vshrl.u32 %v4909, 16
      %v4993 = vrot.slane %v4991, 4
      %v4994 = vor.u32 %v4993, %v4989
      %v4995 = vrot.slane %v4994, 4
      %v4997 = vshll.u32 %v4910, 16
      %v4999 = vrot.slane %v4997, 5
      %v5000 = vsel %vm953, %v4995, %v4999
      %v5001 = vshrl.u32 %v4910, 16
      %v5003 = vrot.slane %v5001, 4
      %v5004 = vor.u32 %v5003, %v4999
      %v5005 = vrot.slane %v5004, 4
      %v5007 = vshll.u32 %v4911, 16
      %v5009 = vrot.slane %v5007, 5
      %v5010 = vsel %vm953, %v5005, %v5009
      %v5011 = vshrl.u32 %v4911, 16
      %v5013 = vrot.slane %v5011, 4
      %v5014 = vor.u32 %v5013, %v5009
      %v5015 = vrot.slane %v5014, 4
      %v5017 = vshll.u32 %v4912, 16
      %v5019 = vrot.slane %v5017, 5
      %v5020 = vsel %vm953, %v5015, %v5019
      %v5021 = vshrl.u32 %v4912, 16
      %v5023 = vrot.slane %v5021, 4
      %v5024 = vor.u32 %v5023, %v5019
      %v5025 = vrot.slane %v5024, 4
      %v5027 = vshll.u32 %v4913, 16
      %v5029 = vrot.slane %v5027, 5
      %v5030 = vsel %vm953, %v5025, %v5029
      %v5031 = vshrl.u32 %v4913, 16
      %v5033 = vrot.slane %v5031, 4
      %v5034 = vor.u32 %v5033, %v5029
      %v5035 = vrot.slane %v5034, 4
      %v5037 = vshll.u32 %v4914, 16
      %v5039 = vrot.slane %v5037, 5
      %v5040 = vsel %vm953, %v5035, %v5039
      %v5041 = vshrl.u32 %v4914, 16
      %v5043 = vrot.slane %v5041, 4
      %v5044 = vor.u32 %v5043, %v5039
      %v5045 = vrot.slane %v5044, 4
      %v5047 = vshll.u32 %v4915, 16
      %v5049 = vrot.slane %v5047, 5
      %v5050 = vsel %vm953, %v5045, %v5049
      %v5051 = vshrl.u32 %v4915, 16
      %v5053 = vrot.slane %v5051, 4
      %v5054 = vor.u32 %v5053, %v5049
      %v5055 = vrot.slane %v5054, 4
      %v5057 = vshll.u32 %v4916, 16
      %v5059 = vrot.slane %v5057, 5
      %v5060 = vsel %vm953, %v5055, %v5059
      %v5061 = vshrl.u32 %v4916, 16
      %v5063 = vrot.slane %v5061, 4
      %v5064 = vor.u32 %v5063, %v5059
      %v5065 = vrot.slane %v5064, 4
      %v5067 = vshll.u32 %v4917, 16
      %v5069 = vrot.slane %v5067, 5
      %v5070 = vsel %vm953, %v5065, %v5069
      %v5071 = vshrl.u32 %v4917, 16
      %v5073 = vrot.slane %v5071, 4
      %v5074 = vor.u32 %v5073, %v5069
      %v5075 = vrot.slane %v5074, 4
      %v5077 = vshll.u32 %v4918, 16
      %v5079 = vrot.slane %v5077, 5
      %v5080 = vsel %vm953, %v5075, %v5079
      %v5081 = vshrl.u32 %v4918, 16
      %v5083 = vrot.slane %v5081, 4
      %v5084 = vor.u32 %v5083, %v5079
      %v5085 = vrot.slane %v5084, 4
      %v5087 = vshll.u32 %v4919, 16
      %v5089 = vrot.slane %v5087, 5
      %v5090 = vsel %vm953, %v5085, %v5089
      %v5091 = vshrl.u32 %v4919, 16
      %v5093 = vrot.slane %v5091, 4
      %v5094 = vor.u32 %v5093, %v5089
      %v5095 = vrot.slane %v5094, 4
      %v5097 = vshll.u32 %v4920, 16
      %v5099 = vrot.slane %v5097, 5
      %v5100 = vsel %vm953, %v5095, %v5099
      %v5101 = vshrl.u32 %v4920, 16
      %v5103 = vrot.slane %v5101, 4
      %v5104 = vor.u32 %v5103, %v5099
      %v5105 = vrot.slane %v5104, 4
      %v5107 = vshll.u32 %v4921, 16
      %v5109 = vrot.slane %v5107, 5
      %v5110 = vsel %vm953, %v5105, %v5109
      %v5111 = vshrl.u32 %v4921, 16
      %v5113 = vrot.slane %v5111, 4
      %v5114 = vor.u32 %v5113, %v5109
      %v5115 = vrot.slane %v5114, 4
      %v5117 = vshll.u32 %v4922, 16
      %v5119 = vrot.slane %v5117, 5
      %v5120 = vsel %vm953, %v5115, %v5119
      %v5121 = vshrl.u32 %v4922, 16
      %v5123 = vrot.slane %v5121, 4
      %v5124 = vor.u32 %v5123, %v5119
      %v5125 = vrot.slane %v5124, 4
      %v5127 = vshll.u32 %v4923, 16
      %v5129 = vrot.slane %v5127, 5
      %v5130 = vsel %vm953, %v5125, %v5129
      %v5131 = vshrl.u32 %v4923, 16
      %v5133 = vrot.slane %v5131, 4
      %v5134 = vor.u32 %v5133, %v5129
      %v5135 = vrot.slane %v5134, 4
      %v5137 = vshll.u32 %v4924, 16
      %v5139 = vrot.slane %v5137, 5
      %v5140 = vsel %vm953, %v5135, %v5139
      %v5141 = vshrl.u32 %v4924, 16
      %v5143 = vrot.slane %v5141, 4
      %v5144 = vor.u32 %v5143, %v5139
      %v5145 = vrot.slane %v5144, 4
      %v5147 = vshll.u32 %v4925, 16
      %v5149 = vrot.slane %v5147, 5
      %v5150 = vsel %vm953, %v5145, %v5149
      %v5151 = vshrl.u32 %v4925, 16
      %v5153 = vrot.slane %v5151, 4
      %v5154 = vor.u32 %v5153, %v5149
      %v5155 = vrot.slane %v5154, 4
      %v5157 = vshll.u32 %v4926, 16
      %v5159 = vrot.slane %v5157, 5
      %v5160 = vsel %vm953, %v5155, %v5159
      %v5161 = vshrl.u32 %v4926, 16
      %v5163 = vrot.slane %v5161, 4
      %v5164 = vor.u32 %v5163, %v5159
      %v5165 = vrot.slane %v5164, 4
      %v5167 = vshll.u32 %v4927, 16
      %v5169 = vrot.slane %v5167, 5
      %v5170 = vsel %vm953, %v5165, %v5169
      %v5171 = vshrl.u32 %v4927, 16
      %v5173 = vrot.slane %v5171, 4
      %v5174 = vor.u32 %v5173, %v5169
      %v5175 = vrot.slane %v5174, 4
      %v5177 = vshll.u32 %v4928, 16
      %v5179 = vrot.slane %v5177, 5
      %v5180 = vsel %vm953, %v5175, %v5179
      %v5181 = vshrl.u32 %v4928, 16
      %v5183 = vrot.slane %v5181, 4
      %v5184 = vor.u32 %v5183, %v5179
      %v5185 = vrot.slane %v5184, 4
      %v5187 = vshll.u32 %v4929, 16
      %v5189 = vrot.slane %v5187, 5
      %v5190 = vsel %vm953, %v5185, %v5189
      %v5191 = vshrl.u32 %v4929, 16
      %v5193 = vrot.slane %v5191, 4
      %v5194 = vor.u32 %v5193, %v5189
      %v5195 = vrot.slane %v5194, 4
      %v5197 = vshll.u32 %v4930, 16
      %v5199 = vrot.slane %v5197, 5
      %v5200 = vsel %vm953, %v5195, %v5199
      %v5201 = vshrl.u32 %v4930, 16
      %v5203 = vrot.slane %v5201, 4
      %v5204 = vor.u32 %v5203, %v5199
      %v5205 = vrot.slane %v5204, 4
      %v5207 = vshll.u32 %v4931, 16
      %v5209 = vrot.slane %v5207, 5
      %v5210 = vsel %vm953, %v5205, %v5209
      %v5211 = vshrl.u32 %v4931, 16
      %v5213 = vrot.slane %v5211, 4
      %v5214 = vor.u32 %v5213, %v5209
      %v5215 = vrot.slane %v5214, 4
      %v5217 = vshll.u32 %v4932, 16
      %v5219 = vrot.slane %v5217, 5
      %v5220 = vsel %vm953, %v5215, %v5219
      %v5221 = vshrl.u32 %v4932, 16
      %v5223 = vrot.slane %v5221, 4
      %v5224 = vor.u32 %v5223, %v5219
      %v5225 = vrot.slane %v5224, 4
      %v5227 = vshll.u32 %v4933, 16
      %v5229 = vrot.slane %v5227, 5
      %v5230 = vsel %vm953, %v5225, %v5229
      %v5231 = vshrl.u32 %v4933, 16
      %v5233 = vrot.slane %v5231, 4
      %v5234 = vor.u32 %v5233, %v5229
      %v5235 = vrot.slane %v5234, 4
      %v5237 = vshll.u32 %v4934, 16
      %v5239 = vrot.slane %v5237, 5
      %v5240 = vsel %vm953, %v5235, %v5239
      %v5241 = vshrl.u32 %v4934, 16
      %v5243 = vrot.slane %v5241, 4
      %v5244 = vor.u32 %v5243, %v5239
      %v5245 = vrot.slane %v5244, 4
      %v5247 = vshll.u32 %v4935, 16
      %v5249 = vrot.slane %v5247, 5
      %v5250 = vsel %vm953, %v5245, %v5249
      %v5251 = vshrl.u32 %v4935, 16
      %v5253 = vrot.slane %v5251, 4
      %v5254 = vor.u32 %v5253, %v5249
      %v5255 = vrot.slane %v5254, 4
      %v5257 = vshll.u32 %v4936, 16
      %v5259 = vrot.slane %v5257, 5
      %v5260 = vsel %vm953, %v5255, %v5259
      %5293 = vst.msk [vmem:[#allocation4 + $0x10] sm:$0xf] %vm709, %v4950
      %5294 = vst.msk [vmem:[#allocation4 + $0x24] sm:$0xf] %vm709, %v4960
      %5295 = vst.msk [vmem:[#allocation4 + $0x38] sm:$0xf] %vm709, %v4970
      %5296 = vst.msk [vmem:[#allocation4 + $0x4c] sm:$0xf] %vm709, %v4980
      %5297 = vst.msk [vmem:[#allocation4 + $0x60] sm:$0xf] %vm709, %v4990
      %5298 = vst.msk [vmem:[#allocation4 + $0x74] sm:$0xf] %vm709, %v5000
      %5299 = vst.msk [vmem:[#allocation4 + $0x88] sm:$0xf] %vm709, %v5010
      %5300 = vst.msk [vmem:[#allocation4 + $0x9c] sm:$0xf] %vm709, %v5020
      %5301 = vst.msk [vmem:[#allocation4 + $0xb0] sm:$0xf] %vm709, %v5030
      %5302 = vst.msk [vmem:[#allocation4 + $0xc4] sm:$0xf] %vm709, %v5040
      %5303 = vst.msk [vmem:[#allocation4 + $0xd8] sm:$0xf] %vm709, %v5050
      %5304 = vst.msk [vmem:[#allocation4 + $0xec] sm:$0xf] %vm709, %v5060
      %5305 = vst.msk [vmem:[#allocation4 + $0x100] sm:$0xf] %vm709, %v5070
      %5306 = vst.msk [vmem:[#allocation4 + $0x114] sm:$0xf] %vm709, %v5080
      %5307 = vst.msk [vmem:[#allocation4 + $0x128] sm:$0xf] %vm709, %v5090
      %5308 = vst.msk [vmem:[#allocation4 + $0x13c] sm:$0xf] %vm709, %v5100
      %5309 = vst.msk [vmem:[#allocation4 + $0x150] sm:$0xf] %vm709, %v5110
      %5310 = vst.msk [vmem:[#allocation4 + $0x164] sm:$0xf] %vm709, %v5120
      %5311 = vst.msk [vmem:[#allocation4 + $0x178] sm:$0xf] %vm709, %v5130
      %5312 = vst.msk [vmem:[#allocation4 + $0x18c] sm:$0xf] %vm709, %v5140
      %5313 = vst.msk [vmem:[#allocation4 + $0x1a0] sm:$0xf] %vm709, %v5150
      %5314 = vst.msk [vmem:[#allocation4 + $0x1b4] sm:$0xf] %vm709, %v5160
      %5315 = vst.msk [vmem:[#allocation4 + $0x1c8] sm:$0xf] %vm709, %v5170
      %5316 = vst.msk [vmem:[#allocation4 + $0x1dc] sm:$0xf] %vm709, %v5180
      %5317 = vst.msk [vmem:[#allocation4 + $0x1f0] sm:$0xf] %vm709, %v5190
      %5318 = vst.msk [vmem:[#allocation4 + $0x204] sm:$0xf] %vm709, %v5200
      %5319 = vst.msk [vmem:[#allocation4 + $0x218] sm:$0xf] %vm709, %v5210
      %5320 = vst.msk [vmem:[#allocation4 + $0x22c] sm:$0xf] %vm709, %v5220
      %5321 = vst.msk [vmem:[#allocation4 + $0x240] sm:$0xf] %vm709, %v5230
      %5322 = vst.msk [vmem:[#allocation4 + $0x254] sm:$0xf] %vm709, %v5240
      %5323 = vst.msk [vmem:[#allocation4 + $0x268] sm:$0xf] %vm709, %v5250
      %5324 = vst.msk [vmem:[#allocation4 + $0x27c] sm:$0xf] %vm709, %v5260
      %v5325 = vld [vmem:[#allocation4] sm:$0xff]
      %v5326 = vld [vmem:[#allocation4 + $0x8] sm:$0xff]
      %v5327 = vld [vmem:[#allocation4 + $0x10] sm:$0xf]
      %v5328 = vld [vmem:[#allocation4 + $0x14] sm:$0xff]
      %v5329 = vld [vmem:[#allocation4 + $0x1c] sm:$0xff]
      %v5330 = vld [vmem:[#allocation4 + $0x24] sm:$0xf]
      %v5331 = vld [vmem:[#allocation4 + $0x28] sm:$0xff]
      %v5332 = vld [vmem:[#allocation4 + $0x30] sm:$0xff]
      %v5333 = vld [vmem:[#allocation4 + $0x38] sm:$0xf]
      %v5334 = vld [vmem:[#allocation4 + $0x3c] sm:$0xff]
      %v5335 = vld [vmem:[#allocation4 + $0x44] sm:$0xff]
      %v5336 = vld [vmem:[#allocation4 + $0x4c] sm:$0xf]
      %v5337 = vld [vmem:[#allocation4 + $0x50] sm:$0xff]
      %v5338 = vld [vmem:[#allocation4 + $0x58] sm:$0xff]
      %v5339 = vld [vmem:[#allocation4 + $0x60] sm:$0xf]
      %v5340 = vld [vmem:[#allocation4 + $0x64] sm:$0xff]
      %v5341 = vld [vmem:[#allocation4 + $0x6c] sm:$0xff]
      %v5342 = vld [vmem:[#allocation4 + $0x74] sm:$0xf]
      %v5343 = vld [vmem:[#allocation4 + $0x78] sm:$0xff]
      %v5344 = vld [vmem:[#allocation4 + $0x80] sm:$0xff]
      %v5345 = vld [vmem:[#allocation4 + $0x88] sm:$0xf]
      %v5346 = vld [vmem:[#allocation4 + $0x8c] sm:$0xff]
      %v5347 = vld [vmem:[#allocation4 + $0x94] sm:$0xff]
      %v5348 = vld [vmem:[#allocation4 + $0x9c] sm:$0xf]
      %v5349 = vld [vmem:[#allocation4 + $0xa0] sm:$0xff]
      %v5350 = vld [vmem:[#allocation4 + $0xa8] sm:$0xff]
      %v5351 = vld [vmem:[#allocation4 + $0xb0] sm:$0xf]
      %v5352 = vld [vmem:[#allocation4 + $0xb4] sm:$0xff]
      %v5353 = vld [vmem:[#allocation4 + $0xbc] sm:$0xff]
      %v5354 = vld [vmem:[#allocation4 + $0xc4] sm:$0xf]
      %v5355 = vld [vmem:[#allocation4 + $0xc8] sm:$0xff]
      %v5356 = vld [vmem:[#allocation4 + $0xd0] sm:$0xff]
      %v5357 = vld [vmem:[#allocation4 + $0xd8] sm:$0xf]
      %v5358 = vld [vmem:[#allocation4 + $0xdc] sm:$0xff]
      %v5359 = vld [vmem:[#allocation4 + $0xe4] sm:$0xff]
      %v5360 = vld [vmem:[#allocation4 + $0xec] sm:$0xf]
      %v5361 = vld [vmem:[#allocation4 + $0xf0] sm:$0xff]
      %v5362 = vld [vmem:[#allocation4 + $0xf8] sm:$0xff]
      %v5363 = vld [vmem:[#allocation4 + $0x100] sm:$0xf]
      %v5364 = vld [vmem:[#allocation4 + $0x104] sm:$0xff]
      %v5365 = vld [vmem:[#allocation4 + $0x10c] sm:$0xff]
      %v5366 = vld [vmem:[#allocation4 + $0x114] sm:$0xf]
      %v5367 = vld [vmem:[#allocation4 + $0x118] sm:$0xff]
      %v5368 = vld [vmem:[#allocation4 + $0x120] sm:$0xff]
      %v5369 = vld [vmem:[#allocation4 + $0x128] sm:$0xf]
      %v5370 = vld [vmem:[#allocation4 + $0x12c] sm:$0xff]
      %v5371 = vld [vmem:[#allocation4 + $0x134] sm:$0xff]
      %v5372 = vld [vmem:[#allocation4 + $0x13c] sm:$0xf]
      %v5373 = vld [vmem:[%s1] sm:$0xf]
      %v5374 = vld [vmem:[%s1 + $0x4] sm:$0xf]
      %v5375 = vld [vmem:[%s1 + $0x8] sm:$0xf]
      %v5376 = vld [vmem:[%s1 + $0xc] sm:$0xf]
      %v5377 = vld [vmem:[%s1 + $0x10] sm:$0xf]
      %v5378 = vld [vmem:[%s1 + $0x14] sm:$0xf]
      %v5379 = vld [vmem:[%s1 + $0x18] sm:$0xf]
      %v5380 = vld [vmem:[%s1 + $0x1c] sm:$0xf]
      %v5381 = vld [vmem:[%s1 + $0x20] sm:$0xf]
      %v5382 = vld [vmem:[%s1 + $0x24] sm:$0xf]
      %v5383 = vld [vmem:[%s1 + $0x28] sm:$0xf]
      %v5384 = vld [vmem:[%s1 + $0x2c] sm:$0xf]
      %v5385 = vld [vmem:[%s1 + $0x30] sm:$0xf]
      %v5386 = vld [vmem:[%s1 + $0x34] sm:$0xf]
      %v5387 = vld [vmem:[%s1 + $0x38] sm:$0xf]
      %v5388 = vld [vmem:[%s1 + $0x3c] sm:$0xf]
      %v5389 = vld [vmem:[%s1 + $0x40] sm:$0xf]
      %v5390 = vld [vmem:[%s1 + $0x44] sm:$0xf]
      %v5391 = vld [vmem:[%s1 + $0x48] sm:$0xf]
      %v5392 = vld [vmem:[%s1 + $0x4c] sm:$0xf]
      %v5393 = vld [vmem:[%s1 + $0x50] sm:$0xf]
      %v5394 = vld [vmem:[%s1 + $0x54] sm:$0xf]
      %v5395 = vld [vmem:[%s1 + $0x58] sm:$0xf]
      %v5396 = vld [vmem:[%s1 + $0x5c] sm:$0xf]
      %v5397 = vld [vmem:[%s1 + $0x60] sm:$0xf]
      %v5398 = vld [vmem:[%s1 + $0x64] sm:$0xf]
      %v5399 = vld [vmem:[%s1 + $0x68] sm:$0xf]
      %v5400 = vld [vmem:[%s1 + $0x6c] sm:$0xf]
      %v5401 = vld [vmem:[%s1 + $0x70] sm:$0xf]
      %v5402 = vld [vmem:[%s1 + $0x74] sm:$0xf]
      %v5403 = vld [vmem:[%s1 + $0x78] sm:$0xf]
      %v5404 = vld [vmem:[%s1 + $0x7c] sm:$0xf]
      %v5405 = vld [vmem:[%s1 + $0x80] sm:$0xf]
      %v5406 = vld [vmem:[%s1 + $0x84] sm:$0xf]
      %v5407 = vld [vmem:[%s1 + $0x88] sm:$0xf]
      %v5408 = vld [vmem:[%s1 + $0x8c] sm:$0xf]
      %v5409 = vld [vmem:[%s1 + $0x90] sm:$0xf]
      %v5410 = vld [vmem:[%s1 + $0x94] sm:$0xf]
      %v5411 = vld [vmem:[%s1 + $0x98] sm:$0xf]
      %v5412 = vld [vmem:[%s1 + $0x9c] sm:$0xf]
      %v5413 = vld [vmem:[%s1 + $0xa0] sm:$0xf]
      %v5414 = vld [vmem:[%s1 + $0xa4] sm:$0xf]
      %v5415 = vld [vmem:[%s1 + $0xa8] sm:$0xf]
      %v5416 = vld [vmem:[%s1 + $0xac] sm:$0xf]
      %v5417 = vld [vmem:[%s1 + $0xb0] sm:$0xf]
      %v5418 = vld [vmem:[%s1 + $0xb4] sm:$0xf]
      %v5419 = vld [vmem:[%s1 + $0xb8] sm:$0xf]
      %v5420 = vld [vmem:[%s1 + $0xbc] sm:$0xf]
      %v5421 = vld [vmem:[%s1 + $0xc0] sm:$0xf]
      %v5422 = vld [vmem:[%s1 + $0xc4] sm:$0xf]
      %v5423 = vld [vmem:[%s1 + $0xc8] sm:$0xf]
      %v5424 = vld [vmem:[%s1 + $0xcc] sm:$0xf]
      %v5425 = vld [vmem:[%s1 + $0xd0] sm:$0xf]
      %v5426 = vld [vmem:[%s1 + $0xd4] sm:$0xf]
      %v5427 = vld [vmem:[%s1 + $0xd8] sm:$0xf]
      %v5428 = vld [vmem:[%s1 + $0xdc] sm:$0xf]
      %v5429 = vld [vmem:[%s1 + $0xe0] sm:$0xf]
      %v5430 = vld [vmem:[%s1 + $0xe4] sm:$0xf]
      %v5431 = vld [vmem:[%s1 + $0xe8] sm:$0xf]
      %v5432 = vld [vmem:[%s1 + $0xec] sm:$0xf]
      %v5433 = vld [vmem:[%s1 + $0xf0] sm:$0xf]
      %v5434 = vld [vmem:[%s1 + $0xf4] sm:$0xf]
      %v5435 = vld [vmem:[%s1 + $0xf8] sm:$0xf]
      %v5436 = vld [vmem:[%s1 + $0xfc] sm:$0xf]
      %v5437 = vld [vmem:[%s1 + $0x100] sm:$0xf]
      %v5438 = vld [vmem:[%s1 + $0x104] sm:$0xf]
      %v5439 = vld [vmem:[%s1 + $0x108] sm:$0xf]
      %v5440 = vld [vmem:[%s1 + $0x10c] sm:$0xf]
      %v5441 = vld [vmem:[%s1 + $0x110] sm:$0xf]
      %v5442 = vld [vmem:[%s1 + $0x114] sm:$0xf]
      %v5443 = vld [vmem:[%s1 + $0x118] sm:$0xf]
      %v5444 = vld [vmem:[%s1 + $0x11c] sm:$0xf]
      %v5445 = vld [vmem:[%s2] sm:$0x1]
      %v5447 = vperm.slane %v5445, 0
      %v5497 = vunpack.c.l.b16 %v5325
      %v5498 = vunpack.c.h.b16 %v5325
      %v5499 = vunpack.c.l.b16 %v5326
      %v5500 = vunpack.c.h.b16 %v5326
      %v5501 = vunpack.c.l.b16 %v5327
      %v5502 = vunpack.c.l.b16 %v5328
      %v5503 = vunpack.c.h.b16 %v5328
      %v5504 = vunpack.c.l.b16 %v5329
      %v5505 = vunpack.c.h.b16 %v5329
      %v5506 = vunpack.c.l.b16 %v5330
      %v5507 = vunpack.c.l.b16 %v5331
      %v5508 = vunpack.c.h.b16 %v5331
      %v5509 = vunpack.c.l.b16 %v5332
      %v5510 = vunpack.c.h.b16 %v5332
      %v5511 = vunpack.c.l.b16 %v5333
      %v5512 = vunpack.c.l.b16 %v5334
      %v5513 = vunpack.c.h.b16 %v5334
      %v5514 = vunpack.c.l.b16 %v5335
      %v5515 = vunpack.c.h.b16 %v5335
      %v5516 = vunpack.c.l.b16 %v5336
      %v5517 = vunpack.c.l.b16 %v5337
      %v5518 = vunpack.c.h.b16 %v5337
      %v5519 = vunpack.c.l.b16 %v5338
      %v5520 = vunpack.c.h.b16 %v5338
      %v5521 = vunpack.c.l.b16 %v5339
      %v5522 = vunpack.c.l.b16 %v5340
      %v5523 = vunpack.c.h.b16 %v5340
      %v5524 = vunpack.c.l.b16 %v5341
      %v5525 = vunpack.c.h.b16 %v5341
      %v5526 = vunpack.c.l.b16 %v5342
      %v5527 = vunpack.c.l.b16 %v5343
      %v5528 = vunpack.c.h.b16 %v5343
      %v5529 = vunpack.c.l.b16 %v5344
      %v5530 = vunpack.c.h.b16 %v5344
      %v5531 = vunpack.c.l.b16 %v5345
      %v5532 = vunpack.c.l.b16 %v5346
      %v5533 = vunpack.c.h.b16 %v5346
      %v5534 = vunpack.c.l.b16 %v5347
      %v5535 = vunpack.c.h.b16 %v5347
      %v5536 = vunpack.c.l.b16 %v5348
      %v5537 = vunpack.c.l.b16 %v5349
      %v5538 = vunpack.c.h.b16 %v5349
      %v5539 = vunpack.c.l.b16 %v5350
      %v5540 = vunpack.c.h.b16 %v5350
      %v5541 = vunpack.c.l.b16 %v5351
      %v5542 = vunpack.c.l.b16 %v5352
      %v5543 = vunpack.c.h.b16 %v5352
      %v5544 = vunpack.c.l.b16 %v5353
      %v5545 = vunpack.c.h.b16 %v5353
      %v5546 = vunpack.c.l.b16 %v5354
      %v5547 = vunpack.c.l.b16 %v5355
      %v5548 = vunpack.c.h.b16 %v5355
      %v5549 = vunpack.c.l.b16 %v5356
      %v5550 = vunpack.c.h.b16 %v5356
      %v5551 = vunpack.c.l.b16 %v5357
      %v5552 = vunpack.c.l.b16 %v5358
      %v5553 = vunpack.c.h.b16 %v5358
      %v5554 = vunpack.c.l.b16 %v5359
      %v5555 = vunpack.c.h.b16 %v5359
      %v5556 = vunpack.c.l.b16 %v5360
      %v5557 = vunpack.c.l.b16 %v5361
      %v5558 = vunpack.c.h.b16 %v5361
      %v5559 = vunpack.c.l.b16 %v5362
      %v5560 = vunpack.c.h.b16 %v5362
      %v5561 = vunpack.c.l.b16 %v5363
      %v5562 = vunpack.c.l.b16 %v5364
      %v5563 = vunpack.c.h.b16 %v5364
      %v5564 = vunpack.c.l.b16 %v5365
      %v5565 = vunpack.c.h.b16 %v5365
      %v5566 = vunpack.c.l.b16 %v5366
      %v5567 = vunpack.c.l.b16 %v5367
      %v5568 = vunpack.c.h.b16 %v5367
      %v5569 = vunpack.c.l.b16 %v5368
      %v5570 = vunpack.c.h.b16 %v5368
      %v5571 = vunpack.c.l.b16 %v5369
      %v5572 = vunpack.c.l.b16 %v5370
      %v5573 = vunpack.c.h.b16 %v5370
      %v5574 = vunpack.c.l.b16 %v5371
      %v5575 = vunpack.c.h.b16 %v5371
      %v5576 = vunpack.c.l.b16 %v5372
      %v5577 = vpack.c.b16 %v5502, %v5497
      %v5578 = vpack.c.b16 %v5503, %v5498
      %v5579 = vpack.c.b16 %v5504, %v5499
      %v5580 = vpack.c.b16 %v5505, %v5500
      %v5581 = vpack.c.b16 %v5506, %v5501
      %v5582 = vpack.c.b16 %v5512, %v5507
      %v5583 = vpack.c.b16 %v5513, %v5508
      %v5584 = vpack.c.b16 %v5514, %v5509
      %v5585 = vpack.c.b16 %v5515, %v5510
      %v5586 = vpack.c.b16 %v5516, %v5511
      %v5587 = vpack.c.b16 %v5522, %v5517
      %v5588 = vpack.c.b16 %v5523, %v5518
      %v5589 = vpack.c.b16 %v5524, %v5519
      %v5590 = vpack.c.b16 %v5525, %v5520
      %v5591 = vpack.c.b16 %v5526, %v5521
      %v5592 = vpack.c.b16 %v5532, %v5527
      %v5593 = vpack.c.b16 %v5533, %v5528
      %v5594 = vpack.c.b16 %v5534, %v5529
      %v5595 = vpack.c.b16 %v5535, %v5530
      %v5596 = vpack.c.b16 %v5536, %v5531
      %v5597 = vpack.c.b16 %v5542, %v5537
      %v5598 = vpack.c.b16 %v5543, %v5538
      %v5599 = vpack.c.b16 %v5544, %v5539
      %v5600 = vpack.c.b16 %v5545, %v5540
      %v5601 = vpack.c.b16 %v5546, %v5541
      %v5602 = vpack.c.b16 %v5552, %v5547
      %v5603 = vpack.c.b16 %v5553, %v5548
      %v5604 = vpack.c.b16 %v5554, %v5549
      %v5605 = vpack.c.b16 %v5555, %v5550
      %v5606 = vpack.c.b16 %v5556, %v5551
      %v5607 = vpack.c.b16 %v5562, %v5557
      %v5608 = vpack.c.b16 %v5563, %v5558
      %v5609 = vpack.c.b16 %v5564, %v5559
      %v5610 = vpack.c.b16 %v5565, %v5560
      %v5611 = vpack.c.b16 %v5566, %v5561
      %v5612 = vpack.c.b16 %v5572, %v5567
      %v5613 = vpack.c.b16 %v5573, %v5568
      %v5614 = vpack.c.b16 %v5574, %v5569
      %v5615 = vpack.c.b16 %v5575, %v5570
      %v5616 = vpack.c.b16 %v5576, %v5571
      %v5721 = vunpack.c.l.b16 %v5373
      %v5722 = vunpack.c.l.b16 %v5374
      %v5723 = vunpack.c.l.b16 %v5375
      %v5724 = vunpack.c.l.b16 %v5376
      %v5725 = vunpack.c.l.b16 %v5377
      %v5726 = vunpack.c.l.b16 %v5378
      %v5727 = vunpack.c.l.b16 %v5379
      %v5728 = vunpack.c.l.b16 %v5380
      %v5729 = vunpack.c.l.b16 %v5381
      %v5730 = vunpack.c.l.b16 %v5382
      %v5731 = vunpack.c.l.b16 %v5383
      %v5732 = vunpack.c.l.b16 %v5384
      %v5733 = vunpack.c.l.b16 %v5385
      %v5734 = vunpack.c.l.b16 %v5386
      %v5735 = vunpack.c.l.b16 %v5387
      %v5736 = vunpack.c.l.b16 %v5388
      %v5737 = vunpack.c.l.b16 %v5389
      %v5738 = vunpack.c.l.b16 %v5390
      %v5739 = vunpack.c.l.b16 %v5391
      %v5740 = vunpack.c.l.b16 %v5392
      %v5741 = vunpack.c.l.b16 %v5393
      %v5742 = vunpack.c.l.b16 %v5394
      %v5743 = vunpack.c.l.b16 %v5395
      %v5744 = vunpack.c.l.b16 %v5396
      %v5745 = vunpack.c.l.b16 %v5397
      %v5746 = vunpack.c.l.b16 %v5398
      %v5747 = vunpack.c.l.b16 %v5399
      %v5748 = vunpack.c.l.b16 %v5400
      %v5749 = vunpack.c.l.b16 %v5401
      %v5750 = vunpack.c.l.b16 %v5402
      %v5751 = vunpack.c.l.b16 %v5403
      %v5752 = vunpack.c.l.b16 %v5404
      %v5753 = vunpack.c.l.b16 %v5405
      %v5754 = vunpack.c.l.b16 %v5406
      %v5755 = vunpack.c.l.b16 %v5407
      %v5756 = vunpack.c.l.b16 %v5408
      %v5757 = vunpack.c.l.b16 %v5409
      %v5758 = vunpack.c.l.b16 %v5410
      %v5759 = vunpack.c.l.b16 %v5411
      %v5760 = vunpack.c.l.b16 %v5412
      %v5761 = vunpack.c.l.b16 %v5413
      %v5762 = vunpack.c.l.b16 %v5414
      %v5763 = vunpack.c.l.b16 %v5415
      %v5764 = vunpack.c.l.b16 %v5416
      %v5765 = vunpack.c.l.b16 %v5417
      %v5766 = vunpack.c.l.b16 %v5418
      %v5767 = vunpack.c.l.b16 %v5419
      %v5768 = vunpack.c.l.b16 %v5420
      %v5769 = vunpack.c.l.b16 %v5421
      %v5770 = vunpack.c.l.b16 %v5422
      %v5771 = vunpack.c.l.b16 %v5423
      %v5772 = vunpack.c.l.b16 %v5424
      %v5773 = vunpack.c.l.b16 %v5425
      %v5774 = vunpack.c.l.b16 %v5426
      %v5775 = vunpack.c.l.b16 %v5427
      %v5776 = vunpack.c.l.b16 %v5428
      %v5777 = vunpack.c.l.b16 %v5429
      %v5778 = vunpack.c.l.b16 %v5430
      %v5779 = vunpack.c.l.b16 %v5431
      %v5780 = vunpack.c.l.b16 %v5432
      %v5781 = vunpack.c.l.b16 %v5433
      %v5782 = vunpack.c.l.b16 %v5434
      %v5783 = vunpack.c.l.b16 %v5435
      %v5784 = vunpack.c.l.b16 %v5436
      %v5785 = vunpack.c.l.b16 %v5437
      %v5786 = vunpack.c.l.b16 %v5438
      %v5787 = vunpack.c.l.b16 %v5439
      %v5788 = vunpack.c.l.b16 %v5440
      %v5789 = vunpack.c.l.b16 %v5441
      %v5790 = vunpack.c.l.b16 %v5442
      %v5791 = vunpack.c.l.b16 %v5443
      %v5792 = vunpack.c.l.b16 %v5444
      %v5793 = vpack.c.b16 %v5722, %v5721
      %v5794 = vpack.c.b16 %v5724, %v5723
      %v5795 = vpack.c.b16 %v5726, %v5725
      %v5796 = vpack.c.b16 %v5728, %v5727
      %v5797 = vpack.c.b16 %v5730, %v5729
      %v5798 = vpack.c.b16 %v5732, %v5731
      %v5799 = vpack.c.b16 %v5734, %v5733
      %v5800 = vpack.c.b16 %v5736, %v5735
      %v5801 = vpack.c.b16 %v5738, %v5737
      %v5802 = vpack.c.b16 %v5740, %v5739
      %v5803 = vpack.c.b16 %v5742, %v5741
      %v5804 = vpack.c.b16 %v5744, %v5743
      %v5805 = vpack.c.b16 %v5746, %v5745
      %v5806 = vpack.c.b16 %v5748, %v5747
      %v5807 = vpack.c.b16 %v5750, %v5749
      %v5808 = vpack.c.b16 %v5752, %v5751
      %v5809 = vpack.c.b16 %v5754, %v5753
      %v5810 = vpack.c.b16 %v5756, %v5755
      %v5811 = vpack.c.b16 %v5758, %v5757
      %v5812 = vpack.c.b16 %v5760, %v5759
      %v5813 = vpack.c.b16 %v5762, %v5761
      %v5814 = vpack.c.b16 %v5764, %v5763
      %v5815 = vpack.c.b16 %v5766, %v5765
      %v5816 = vpack.c.b16 %v5768, %v5767
      %v5817 = vpack.c.b16 %v5770, %v5769
      %v5818 = vpack.c.b16 %v5772, %v5771
      %v5819 = vpack.c.b16 %v5774, %v5773
      %v5820 = vpack.c.b16 %v5776, %v5775
      %v5821 = vpack.c.b16 %v5778, %v5777
      %v5822 = vpack.c.b16 %v5780, %v5779
      %v5823 = vpack.c.b16 %v5782, %v5781
      %v5824 = vpack.c.b16 %v5784, %v5783
      %v5825 = vpack.c.b16 %v5786, %v5785
      %v5826 = vpack.c.b16 %v5788, %v5787
      %v5827 = vpack.c.b16 %v5790, %v5789
      %v5828 = vpack.c.b16 %v5792, %v5791
      %vm5865 = vcmask 523264
      %v5867 = vsel %vm5865, %v5581, 0
      %v5870 = vsel %vm5865, %v5586, 0
      %v5873 = vsel %vm5865, %v5591, 0
      %v5876 = vsel %vm5865, %v5596, 0
      %v5879 = vsel %vm5865, %v5601, 0
      %v5882 = vsel %vm5865, %v5606, 0
      %v5885 = vsel %vm5865, %v5611, 0
      %v5888 = vsel %vm5865, %v5616, 0
      %5890 = vmatpush.bf16.msra.mxu0 %v5800
      %5891 = vmatpush.bf16.msra.mxu0 %v5799
      %5892 = vmatpush.bf16.msra.mxu0 %v5798
      %5893 = vmatpush.bf16.msra.mxu0 %v5797
      %5894 = vmatpush.bf16.msra.mxu0 %v5796
      %5895 = vmatpush.bf16.msra.mxu0 %v5795
      %5896 = vmatpush.bf16.msra.mxu0 %v5794
      %5897 = vmatpush.bf16.msra.mxu0 %v5793
      %5898 = vmatmul.bf16.gmra.mxu0 %v5577
      %v5899 = vpop.f32.mrf.mxu0
      %v5900 = vadd.f32 %v5447, %v5899
      %v5901 = vpop.f32.mrf.mxu0
      %v5902 = vadd.f32 %v5447, %v5901
      %5903 = vmatmul.bf16.gmra.mxu0 %v5582
      %v5904 = vpop.f32.mrf.mxu0
      %v5905 = vadd.f32 %v5447, %v5904
      %v5906 = vpop.f32.mrf.mxu0
      %v5907 = vadd.f32 %v5447, %v5906
      %5908 = vmatmul.bf16.gmra.mxu0 %v5587
      %v5909 = vpop.f32.mrf.mxu0
      %v5910 = vadd.f32 %v5447, %v5909
      %v5911 = vpop.f32.mrf.mxu0
      %v5912 = vadd.f32 %v5447, %v5911
      %5913 = vmatmul.bf16.gmra.mxu0 %v5592
      %v5914 = vpop.f32.mrf.mxu0
      %v5915 = vadd.f32 %v5447, %v5914
      %v5916 = vpop.f32.mrf.mxu0
      %v5917 = vadd.f32 %v5447, %v5916
      %5918 = vmatmul.bf16.gmra.mxu0 %v5597
      %v5919 = vpop.f32.mrf.mxu0
      %v5920 = vadd.f32 %v5447, %v5919
      %v5921 = vpop.f32.mrf.mxu0
      %v5922 = vadd.f32 %v5447, %v5921
      %5923 = vmatmul.bf16.gmra.mxu0 %v5602
      %v5924 = vpop.f32.mrf.mxu0
      %v5925 = vadd.f32 %v5447, %v5924
      %v5926 = vpop.f32.mrf.mxu0
      %v5927 = vadd.f32 %v5447, %v5926
      %5928 = vmatmul.bf16.gmra.mxu0 %v5607
      %v5929 = vpop.f32.mrf.mxu0
      %v5930 = vadd.f32 %v5447, %v5929
      %v5931 = vpop.f32.mrf.mxu0
      %v5932 = vadd.f32 %v5447, %v5931
      %5933 = vmatmul.bf16.gmra.mxu0 %v5612
      %v5934 = vpop.f32.mrf.mxu0
      %v5935 = vadd.f32 %v5447, %v5934
      %v5936 = vpop.f32.mrf.mxu0
      %v5937 = vadd.f32 %v5447, %v5936
      %5938 = vdwg.mxu0
      %5939 = vmatpush.bf16.msra.mxu0 %v5808
      %5940 = vmatpush.bf16.msra.mxu0 %v5807
      %5941 = vmatpush.bf16.msra.mxu0 %v5806
      %5942 = vmatpush.bf16.msra.mxu0 %v5805
      %5943 = vmatpush.bf16.msra.mxu0 %v5804
      %5944 = vmatpush.bf16.msra.mxu0 %v5803
      %5945 = vmatpush.bf16.msra.mxu0 %v5802
      %5946 = vmatpush.bf16.msra.mxu0 %v5801
      %5947 = vmatmul.bf16.gmra.mxu0 %v5578
      %v5948 = vpop.f32.mrf.mxu0
      %v5949 = vadd.f32 %v5900, %v5948
      %v5950 = vpop.f32.mrf.mxu0
      %v5951 = vadd.f32 %v5902, %v5950
      %5952 = vmatmul.bf16.gmra.mxu0 %v5583
      %v5953 = vpop.f32.mrf.mxu0
      %v5954 = vadd.f32 %v5905, %v5953
      %v5955 = vpop.f32.mrf.mxu0
      %v5956 = vadd.f32 %v5907, %v5955
      %5957 = vmatmul.bf16.gmra.mxu0 %v5588
      %v5958 = vpop.f32.mrf.mxu0
      %v5959 = vadd.f32 %v5910, %v5958
      %v5960 = vpop.f32.mrf.mxu0
      %v5961 = vadd.f32 %v5912, %v5960
      %5962 = vmatmul.bf16.gmra.mxu0 %v5593
      %v5963 = vpop.f32.mrf.mxu0
      %v5964 = vadd.f32 %v5915, %v5963
      %v5965 = vpop.f32.mrf.mxu0
      %v5966 = vadd.f32 %v5917, %v5965
      %5967 = vmatmul.bf16.gmra.mxu0 %v5598
      %v5968 = vpop.f32.mrf.mxu0
      %v5969 = vadd.f32 %v5920, %v5968
      %v5970 = vpop.f32.mrf.mxu0
      %v5971 = vadd.f32 %v5922, %v5970
      %5972 = vmatmul.bf16.gmra.mxu0 %v5603
      %v5973 = vpop.f32.mrf.mxu0
      %v5974 = vadd.f32 %v5925, %v5973
      %v5975 = vpop.f32.mrf.mxu0
      %v5976 = vadd.f32 %v5927, %v5975
      %5977 = vmatmul.bf16.gmra.mxu0 %v5608
      %v5978 = vpop.f32.mrf.mxu0
      %v5979 = vadd.f32 %v5930, %v5978
      %v5980 = vpop.f32.mrf.mxu0
      %v5981 = vadd.f32 %v5932, %v5980
      %5982 = vmatmul.bf16.gmra.mxu0 %v5613
      %v5983 = vpop.f32.mrf.mxu0
      %v5984 = vadd.f32 %v5935, %v5983
      %v5985 = vpop.f32.mrf.mxu0
      %v5986 = vadd.f32 %v5937, %v5985
      %5987 = vdwg.mxu0
      %5988 = vmatpush.bf16.msra.mxu0 %v5816
      %5989 = vmatpush.bf16.msra.mxu0 %v5815
      %5990 = vmatpush.bf16.msra.mxu0 %v5814
      %5991 = vmatpush.bf16.msra.mxu0 %v5813
      %5992 = vmatpush.bf16.msra.mxu0 %v5812
      %5993 = vmatpush.bf16.msra.mxu0 %v5811
      %5994 = vmatpush.bf16.msra.mxu0 %v5810
      %5995 = vmatpush.bf16.msra.mxu0 %v5809
      %5996 = vmatmul.bf16.gmra.mxu0 %v5579
      %v5997 = vpop.f32.mrf.mxu0
      %v5998 = vadd.f32 %v5949, %v5997
      %v5999 = vpop.f32.mrf.mxu0
      %v6000 = vadd.f32 %v5951, %v5999
      %6001 = vmatmul.bf16.gmra.mxu0 %v5584
      %v6002 = vpop.f32.mrf.mxu0
      %v6003 = vadd.f32 %v5954, %v6002
      %v6004 = vpop.f32.mrf.mxu0
      %v6005 = vadd.f32 %v5956, %v6004
      %6006 = vmatmul.bf16.gmra.mxu0 %v5589
      %v6007 = vpop.f32.mrf.mxu0
      %v6008 = vadd.f32 %v5959, %v6007
      %v6009 = vpop.f32.mrf.mxu0
      %v6010 = vadd.f32 %v5961, %v6009
      %6011 = vmatmul.bf16.gmra.mxu0 %v5594
      %v6012 = vpop.f32.mrf.mxu0
      %v6013 = vadd.f32 %v5964, %v6012
      %v6014 = vpop.f32.mrf.mxu0
      %v6015 = vadd.f32 %v5966, %v6014
      %6016 = vmatmul.bf16.gmra.mxu0 %v5599
      %v6017 = vpop.f32.mrf.mxu0
      %v6018 = vadd.f32 %v5969, %v6017
      %v6019 = vpop.f32.mrf.mxu0
      %v6020 = vadd.f32 %v5971, %v6019
      %6021 = vmatmul.bf16.gmra.mxu0 %v5604
      %v6022 = vpop.f32.mrf.mxu0
      %v6023 = vadd.f32 %v5974, %v6022
      %v6024 = vpop.f32.mrf.mxu0
      %v6025 = vadd.f32 %v5976, %v6024
      %6026 = vmatmul.bf16.gmra.mxu0 %v5609
      %v6027 = vpop.f32.mrf.mxu0
      %v6028 = vadd.f32 %v5979, %v6027
      %v6029 = vpop.f32.mrf.mxu0
      %v6030 = vadd.f32 %v5981, %v6029
      %6031 = vmatmul.bf16.gmra.mxu0 %v5614
      %v6032 = vpop.f32.mrf.mxu0
      %v6033 = vadd.f32 %v5984, %v6032
      %v6034 = vpop.f32.mrf.mxu0
      %v6035 = vadd.f32 %v5986, %v6034
      %6036 = vdwg.mxu0
      %6037 = vmatpush.bf16.msra.mxu0 %v5824
      %6038 = vmatpush.bf16.msra.mxu0 %v5823
      %6039 = vmatpush.bf16.msra.mxu0 %v5822
      %6040 = vmatpush.bf16.msra.mxu0 %v5821
      %6041 = vmatpush.bf16.msra.mxu0 %v5820
      %6042 = vmatpush.bf16.msra.mxu0 %v5819
      %6043 = vmatpush.bf16.msra.mxu0 %v5818
      %6044 = vmatpush.bf16.msra.mxu0 %v5817
      %6045 = vmatmul.bf16.gmra.mxu0 %v5580
      %v6046 = vpop.f32.mrf.mxu0
      %v6047 = vadd.f32 %v5998, %v6046
      %v6048 = vpop.f32.mrf.mxu0
      %v6049 = vadd.f32 %v6000, %v6048
      %6050 = vmatmul.bf16.gmra.mxu0 %v5585
      %v6051 = vpop.f32.mrf.mxu0
      %v6052 = vadd.f32 %v6003, %v6051
      %v6053 = vpop.f32.mrf.mxu0
      %v6054 = vadd.f32 %v6005, %v6053
      %6055 = vmatmul.bf16.gmra.mxu0 %v5590
      %v6056 = vpop.f32.mrf.mxu0
      %v6057 = vadd.f32 %v6008, %v6056
      %v6058 = vpop.f32.mrf.mxu0
      %v6059 = vadd.f32 %v6010, %v6058
      %6060 = vmatmul.bf16.gmra.mxu0 %v5595
      %v6061 = vpop.f32.mrf.mxu0
      %v6062 = vadd.f32 %v6013, %v6061
      %v6063 = vpop.f32.mrf.mxu0
      %v6064 = vadd.f32 %v6015, %v6063
      %6065 = vmatmul.bf16.gmra.mxu0 %v5600
      %v6066 = vpop.f32.mrf.mxu0
      %v6067 = vadd.f32 %v6018, %v6066
      %v6068 = vpop.f32.mrf.mxu0
      %v6069 = vadd.f32 %v6020, %v6068
      %6070 = vmatmul.bf16.gmra.mxu0 %v5605
      %v6071 = vpop.f32.mrf.mxu0
      %v6072 = vadd.f32 %v6023, %v6071
      %v6073 = vpop.f32.mrf.mxu0
      %v6074 = vadd.f32 %v6025, %v6073
      %6075 = vmatmul.bf16.gmra.mxu0 %v5610
      %v6076 = vpop.f32.mrf.mxu0
      %v6077 = vadd.f32 %v6028, %v6076
      %v6078 = vpop.f32.mrf.mxu0
      %v6079 = vadd.f32 %v6030, %v6078
      %6080 = vmatmul.bf16.gmra.mxu0 %v5615
      %v6081 = vpop.f32.mrf.mxu0
      %v6082 = vadd.f32 %v6033, %v6081
      %v6083 = vpop.f32.mrf.mxu0
      %v6084 = vadd.f32 %v6035, %v6083
      %6085 = vdwg.mxu0
      %6086 = vmatpush.bf16.msra.mxu0 0
      %6087 = vmatpush.bf16.msra.mxu0 0
      %6088 = vmatpush.bf16.msra.mxu0 0
      %6089 = vmatpush.bf16.msra.mxu0 0
      %6090 = vmatpush.bf16.msra.mxu0 %v5828
      %6091 = vmatpush.bf16.msra.mxu0 %v5827
      %6092 = vmatpush.bf16.msra.mxu0 %v5826
      %6093 = vmatpush.bf16.msra.mxu0 %v5825
      %6094 = vmatmul.bf16.gmra.mxu0 %v5867
      %v6095 = vpop.f32.mrf.mxu0
      %v6096 = vadd.f32 %v6047, %v6095
      %v6097 = vpop.f32.mrf.mxu0
      %v6098 = vadd.f32 %v6049, %v6097
      %6099 = vmatmul.bf16.gmra.mxu0 %v5870
      %v6100 = vpop.f32.mrf.mxu0
      %v6101 = vadd.f32 %v6052, %v6100
      %v6102 = vpop.f32.mrf.mxu0
      %v6103 = vadd.f32 %v6054, %v6102
      %6104 = vmatmul.bf16.gmra.mxu0 %v5873
      %v6105 = vpop.f32.mrf.mxu0
      %v6106 = vadd.f32 %v6057, %v6105
      %v6107 = vpop.f32.mrf.mxu0
      %v6108 = vadd.f32 %v6059, %v6107
      %6109 = vmatmul.bf16.gmra.mxu0 %v5876
      %v6110 = vpop.f32.mrf.mxu0
      %v6111 = vadd.f32 %v6062, %v6110
      %v6112 = vpop.f32.mrf.mxu0
      %v6113 = vadd.f32 %v6064, %v6112
      %6114 = vmatmul.bf16.gmra.mxu0 %v5879
      %v6115 = vpop.f32.mrf.mxu0
      %v6116 = vadd.f32 %v6067, %v6115
      %v6117 = vpop.f32.mrf.mxu0
      %v6118 = vadd.f32 %v6069, %v6117
      %6119 = vmatmul.bf16.gmra.mxu0 %v5882
      %v6120 = vpop.f32.mrf.mxu0
      %v6121 = vadd.f32 %v6072, %v6120
      %v6122 = vpop.f32.mrf.mxu0
      %v6123 = vadd.f32 %v6074, %v6122
      %6124 = vmatmul.bf16.gmra.mxu0 %v5885
      %v6125 = vpop.f32.mrf.mxu0
      %v6126 = vadd.f32 %v6077, %v6125
      %v6127 = vpop.f32.mrf.mxu0
      %v6128 = vadd.f32 %v6079, %v6127
      %6129 = vmatmul.bf16.gmra.mxu0 %v5888
      %v6130 = vpop.f32.mrf.mxu0
      %v6131 = vadd.f32 %v6082, %v6130
      %v6132 = vpop.f32.mrf.mxu0
      %v6133 = vadd.f32 %v6084, %v6132
      %6134 = vdwg.mxu0
      %v6135 = vmax.f32 %v6096, 0.0
      %v6136 = vmax.f32 %v6098, 0.0
      %v6137 = vmax.f32 %v6101, 0.0
      %v6138 = vmax.f32 %v6103, 0.0
      %v6139 = vmax.f32 %v6106, 0.0
      %v6140 = vmax.f32 %v6108, 0.0
      %v6141 = vmax.f32 %v6111, 0.0
      %v6142 = vmax.f32 %v6113, 0.0
      %v6143 = vmax.f32 %v6116, 0.0
      %v6144 = vmax.f32 %v6118, 0.0
      %v6145 = vmax.f32 %v6121, 0.0
      %v6146 = vmax.f32 %v6123, 0.0
      %v6147 = vmax.f32 %v6126, 0.0
      %v6148 = vmax.f32 %v6128, 0.0
      %v6149 = vmax.f32 %v6131, 0.0
      %v6150 = vmax.f32 %v6133, 0.0
      %v6151 = vpack.c.bf16 %v6135, %v6135
      %v6152 = vpack.c.bf16 %v6136, %v6136
      %v6153 = vpack.c.bf16 %v6137, %v6137
      %v6154 = vpack.c.bf16 %v6138, %v6138
      %v6155 = vpack.c.bf16 %v6139, %v6139
      %v6156 = vpack.c.bf16 %v6140, %v6140
      %v6157 = vpack.c.bf16 %v6141, %v6141
      %v6158 = vpack.c.bf16 %v6142, %v6142
      %v6159 = vpack.c.bf16 %v6143, %v6143
      %v6160 = vpack.c.bf16 %v6144, %v6144
      %v6161 = vpack.c.bf16 %v6145, %v6145
      %v6162 = vpack.c.bf16 %v6146, %v6146
      %v6163 = vpack.c.bf16 %v6147, %v6147
      %v6164 = vpack.c.bf16 %v6148, %v6148
      %v6165 = vpack.c.bf16 %v6149, %v6149
      %v6166 = vpack.c.bf16 %v6150, %v6150
      %6167 = vst.msk [vmem:[#allocation3 + $0x10] sm:$0xf] %vm709, %v6151
      %6168 = vst.msk [vmem:[#allocation3 + $0x14] sm:$0xf] %vm709, %v6152
      %6169 = vst.msk [vmem:[#allocation3 + $0x18] sm:$0xf] %vm709, %v6153
      %6170 = vst.msk [vmem:[#allocation3 + $0x1c] sm:$0xf] %vm709, %v6154
      %6171 = vst.msk [vmem:[#allocation3 + $0x20] sm:$0xf] %vm709, %v6155
      %6172 = vst.msk [vmem:[#allocation3 + $0x24] sm:$0xf] %vm709, %v6156
      %6173 = vst.msk [vmem:[#allocation3 + $0x28] sm:$0xf] %vm709, %v6157
      %6174 = vst.msk [vmem:[#allocation3 + $0x2c] sm:$0xf] %vm709, %v6158
      %6175 = vst.msk [vmem:[#allocation3 + $0x30] sm:$0xf] %vm709, %v6159
      %6176 = vst.msk [vmem:[#allocation3 + $0x34] sm:$0xf] %vm709, %v6160
      %6177 = vst.msk [vmem:[#allocation3 + $0x38] sm:$0xf] %vm709, %v6161
      %6178 = vst.msk [vmem:[#allocation3 + $0x3c] sm:$0xf] %vm709, %v6162
      %6179 = vst.msk [vmem:[#allocation3 + $0x40] sm:$0xf] %vm709, %v6163
      %6180 = vst.msk [vmem:[#allocation3 + $0x44] sm:$0xf] %vm709, %v6164
      %6181 = vst.msk [vmem:[#allocation3 + $0x48] sm:$0xf] %vm709, %v6165
      %6182 = vst.msk [vmem:[#allocation3 + $0x4c] sm:$0xf] %vm709, %v6166
      %v6183 = vld [vmem:[#allocation4 + $0x140] sm:$0xff]
      %v6184 = vld [vmem:[#allocation4 + $0x148] sm:$0xff]
      %v6185 = vld [vmem:[#allocation4 + $0x150] sm:$0xf]
      %v6186 = vld [vmem:[#allocation4 + $0x154] sm:$0xff]
      %v6187 = vld [vmem:[#allocation4 + $0x15c] sm:$0xff]
      %v6188 = vld [vmem:[#allocation4 + $0x164] sm:$0xf]
      %v6189 = vld [vmem:[#allocation4 + $0x168] sm:$0xff]
      %v6190 = vld [vmem:[#allocation4 + $0x170] sm:$0xff]
      %v6191 = vld [vmem:[#allocation4 + $0x178] sm:$0xf]
      %v6192 = vld [vmem:[#allocation4 + $0x17c] sm:$0xff]
      %v6193 = vld [vmem:[#allocation4 + $0x184] sm:$0xff]
      %v6194 = vld [vmem:[#allocation4 + $0x18c] sm:$0xf]
      %v6195 = vld [vmem:[#allocation4 + $0x190] sm:$0xff]
      %v6196 = vld [vmem:[#allocation4 + $0x198] sm:$0xff]
      %v6197 = vld [vmem:[#allocation4 + $0x1a0] sm:$0xf]
      %v6198 = vld [vmem:[#allocation4 + $0x1a4] sm:$0xff]
      %v6199 = vld [vmem:[#allocation4 + $0x1ac] sm:$0xff]
      %v6200 = vld [vmem:[#allocation4 + $0x1b4] sm:$0xf]
      %v6201 = vld [vmem:[#allocation4 + $0x1b8] sm:$0xff]
      %v6202 = vld [vmem:[#allocation4 + $0x1c0] sm:$0xff]
      %v6203 = vld [vmem:[#allocation4 + $0x1c8] sm:$0xf]
      %v6204 = vld [vmem:[#allocation4 + $0x1cc] sm:$0xff]
      %v6205 = vld [vmem:[#allocation4 + $0x1d4] sm:$0xff]
      %v6206 = vld [vmem:[#allocation4 + $0x1dc] sm:$0xf]
      %v6207 = vld [vmem:[#allocation4 + $0x1e0] sm:$0xff]
      %v6208 = vld [vmem:[#allocation4 + $0x1e8] sm:$0xff]
      %v6209 = vld [vmem:[#allocation4 + $0x1f0] sm:$0xf]
      %v6210 = vld [vmem:[#allocation4 + $0x1f4] sm:$0xff]
      %v6211 = vld [vmem:[#allocation4 + $0x1fc] sm:$0xff]
      %v6212 = vld [vmem:[#allocation4 + $0x204] sm:$0xf]
      %v6213 = vld [vmem:[#allocation4 + $0x208] sm:$0xff]
      %v6214 = vld [vmem:[#allocation4 + $0x210] sm:$0xff]
      %v6215 = vld [vmem:[#allocation4 + $0x218] sm:$0xf]
      %v6216 = vld [vmem:[#allocation4 + $0x21c] sm:$0xff]
      %v6217 = vld [vmem:[#allocation4 + $0x224] sm:$0xff]
      %v6218 = vld [vmem:[#allocation4 + $0x22c] sm:$0xf]
      %v6219 = vld [vmem:[#allocation4 + $0x230] sm:$0xff]
      %v6220 = vld [vmem:[#allocation4 + $0x238] sm:$0xff]
      %v6221 = vld [vmem:[#allocation4 + $0x240] sm:$0xf]
      %v6222 = vld [vmem:[#allocation4 + $0x244] sm:$0xff]
      %v6223 = vld [vmem:[#allocation4 + $0x24c] sm:$0xff]
      %v6224 = vld [vmem:[#allocation4 + $0x254] sm:$0xf]
      %v6225 = vld [vmem:[#allocation4 + $0x258] sm:$0xff]
      %v6226 = vld [vmem:[#allocation4 + $0x260] sm:$0xff]
      %v6227 = vld [vmem:[#allocation4 + $0x268] sm:$0xf]
      %v6228 = vld [vmem:[#allocation4 + $0x26c] sm:$0xff]
      %v6229 = vld [vmem:[#allocation4 + $0x274] sm:$0xff]
      %v6230 = vld [vmem:[#allocation4 + $0x27c] sm:$0xf]
      %v6231 = vld [vmem:[%s1] sm:$0xf]
      %v6232 = vld [vmem:[%s1 + $0x4] sm:$0xf]
      %v6233 = vld [vmem:[%s1 + $0x8] sm:$0xf]
      %v6234 = vld [vmem:[%s1 + $0xc] sm:$0xf]
      %v6235 = vld [vmem:[%s1 + $0x10] sm:$0xf]
      %v6236 = vld [vmem:[%s1 + $0x14] sm:$0xf]
      %v6237 = vld [vmem:[%s1 + $0x18] sm:$0xf]
      %v6238 = vld [vmem:[%s1 + $0x1c] sm:$0xf]
      %v6239 = vld [vmem:[%s1 + $0x20] sm:$0xf]
      %v6240 = vld [vmem:[%s1 + $0x24] sm:$0xf]
      %v6241 = vld [vmem:[%s1 + $0x28] sm:$0xf]
      %v6242 = vld [vmem:[%s1 + $0x2c] sm:$0xf]
      %v6243 = vld [vmem:[%s1 + $0x30] sm:$0xf]
      %v6244 = vld [vmem:[%s1 + $0x34] sm:$0xf]
      %v6245 = vld [vmem:[%s1 + $0x38] sm:$0xf]
      %v6246 = vld [vmem:[%s1 + $0x3c] sm:$0xf]
      %v6247 = vld [vmem:[%s1 + $0x40] sm:$0xf]
      %v6248 = vld [vmem:[%s1 + $0x44] sm:$0xf]
      %v6249 = vld [vmem:[%s1 + $0x48] sm:$0xf]
      %v6250 = vld [vmem:[%s1 + $0x4c] sm:$0xf]
      %v6251 = vld [vmem:[%s1 + $0x50] sm:$0xf]
      %v6252 = vld [vmem:[%s1 + $0x54] sm:$0xf]
      %v6253 = vld [vmem:[%s1 + $0x58] sm:$0xf]
      %v6254 = vld [vmem:[%s1 + $0x5c] sm:$0xf]
      %v6255 = vld [vmem:[%s1 + $0x60] sm:$0xf]
      %v6256 = vld [vmem:[%s1 + $0x64] sm:$0xf]
      %v6257 = vld [vmem:[%s1 + $0x68] sm:$0xf]
      %v6258 = vld [vmem:[%s1 + $0x6c] sm:$0xf]
      %v6259 = vld [vmem:[%s1 + $0x70] sm:$0xf]
      %v6260 = vld [vmem:[%s1 + $0x74] sm:$0xf]
      %v6261 = vld [vmem:[%s1 + $0x78] sm:$0xf]
      %v6262 = vld [vmem:[%s1 + $0x7c] sm:$0xf]
      %v6263 = vld [vmem:[%s1 + $0x80] sm:$0xf]
      %v6264 = vld [vmem:[%s1 + $0x84] sm:$0xf]
      %v6265 = vld [vmem:[%s1 + $0x88] sm:$0xf]
      %v6266 = vld [vmem:[%s1 + $0x8c] sm:$0xf]
      %v6267 = vld [vmem:[%s1 + $0x90] sm:$0xf]
      %v6268 = vld [vmem:[%s1 + $0x94] sm:$0xf]
      %v6269 = vld [vmem:[%s1 + $0x98] sm:$0xf]
      %v6270 = vld [vmem:[%s1 + $0x9c] sm:$0xf]
      %v6271 = vld [vmem:[%s1 + $0xa0] sm:$0xf]
      %v6272 = vld [vmem:[%s1 + $0xa4] sm:$0xf]
      %v6273 = vld [vmem:[%s1 + $0xa8] sm:$0xf]
      %v6274 = vld [vmem:[%s1 + $0xac] sm:$0xf]
      %v6275 = vld [vmem:[%s1 + $0xb0] sm:$0xf]
      %v6276 = vld [vmem:[%s1 + $0xb4] sm:$0xf]
      %v6277 = vld [vmem:[%s1 + $0xb8] sm:$0xf]
      %v6278 = vld [vmem:[%s1 + $0xbc] sm:$0xf]
      %v6279 = vld [vmem:[%s1 + $0xc0] sm:$0xf]
      %v6280 = vld [vmem:[%s1 + $0xc4] sm:$0xf]
      %v6281 = vld [vmem:[%s1 + $0xc8] sm:$0xf]
      %v6282 = vld [vmem:[%s1 + $0xcc] sm:$0xf]
      %v6283 = vld [vmem:[%s1 + $0xd0] sm:$0xf]
      %v6284 = vld [vmem:[%s1 + $0xd4] sm:$0xf]
      %v6285 = vld [vmem:[%s1 + $0xd8] sm:$0xf]
      %v6286 = vld [vmem:[%s1 + $0xdc] sm:$0xf]
      %v6287 = vld [vmem:[%s1 + $0xe0] sm:$0xf]
      %v6288 = vld [vmem:[%s1 + $0xe4] sm:$0xf]
      %v6289 = vld [vmem:[%s1 + $0xe8] sm:$0xf]
      %v6290 = vld [vmem:[%s1 + $0xec] sm:$0xf]
      %v6291 = vld [vmem:[%s1 + $0xf0] sm:$0xf]
      %v6292 = vld [vmem:[%s1 + $0xf4] sm:$0xf]
      %v6293 = vld [vmem:[%s1 + $0xf8] sm:$0xf]
      %v6294 = vld [vmem:[%s1 + $0xfc] sm:$0xf]
      %v6295 = vld [vmem:[%s1 + $0x100] sm:$0xf]
      %v6296 = vld [vmem:[%s1 + $0x104] sm:$0xf]
      %v6297 = vld [vmem:[%s1 + $0x108] sm:$0xf]
      %v6298 = vld [vmem:[%s1 + $0x10c] sm:$0xf]
      %v6299 = vld [vmem:[%s1 + $0x110] sm:$0xf]
      %v6300 = vld [vmem:[%s1 + $0x114] sm:$0xf]
      %v6301 = vld [vmem:[%s1 + $0x118] sm:$0xf]
      %v6302 = vld [vmem:[%s1 + $0x11c] sm:$0xf]
      %v6303 = vld [vmem:[%s2] sm:$0x1]
      %v6305 = vperm.slane %v6303, 0
      %v6355 = vunpack.c.l.b16 %v6183
      %v6356 = vunpack.c.h.b16 %v6183
      %v6357 = vunpack.c.l.b16 %v6184
      %v6358 = vunpack.c.h.b16 %v6184
      %v6359 = vunpack.c.l.b16 %v6185
      %v6360 = vunpack.c.l.b16 %v6186
      %v6361 = vunpack.c.h.b16 %v6186
      %v6362 = vunpack.c.l.b16 %v6187
      %v6363 = vunpack.c.h.b16 %v6187
      %v6364 = vunpack.c.l.b16 %v6188
      %v6365 = vunpack.c.l.b16 %v6189
      %v6366 = vunpack.c.h.b16 %v6189
      %v6367 = vunpack.c.l.b16 %v6190
      %v6368 = vunpack.c.h.b16 %v6190
      %v6369 = vunpack.c.l.b16 %v6191
      %v6370 = vunpack.c.l.b16 %v6192
      %v6371 = vunpack.c.h.b16 %v6192
      %v6372 = vunpack.c.l.b16 %v6193
      %v6373 = vunpack.c.h.b16 %v6193
      %v6374 = vunpack.c.l.b16 %v6194
      %v6375 = vunpack.c.l.b16 %v6195
      %v6376 = vunpack.c.h.b16 %v6195
      %v6377 = vunpack.c.l.b16 %v6196
      %v6378 = vunpack.c.h.b16 %v6196
      %v6379 = vunpack.c.l.b16 %v6197
      %v6380 = vunpack.c.l.b16 %v6198
      %v6381 = vunpack.c.h.b16 %v6198
      %v6382 = vunpack.c.l.b16 %v6199
      %v6383 = vunpack.c.h.b16 %v6199
      %v6384 = vunpack.c.l.b16 %v6200
      %v6385 = vunpack.c.l.b16 %v6201
      %v6386 = vunpack.c.h.b16 %v6201
      %v6387 = vunpack.c.l.b16 %v6202
      %v6388 = vunpack.c.h.b16 %v6202
      %v6389 = vunpack.c.l.b16 %v6203
      %v6390 = vunpack.c.l.b16 %v6204
      %v6391 = vunpack.c.h.b16 %v6204
      %v6392 = vunpack.c.l.b16 %v6205
      %v6393 = vunpack.c.h.b16 %v6205
      %v6394 = vunpack.c.l.b16 %v6206
      %v6395 = vunpack.c.l.b16 %v6207
      %v6396 = vunpack.c.h.b16 %v6207
      %v6397 = vunpack.c.l.b16 %v6208
      %v6398 = vunpack.c.h.b16 %v6208
      %v6399 = vunpack.c.l.b16 %v6209
      %v6400 = vunpack.c.l.b16 %v6210
      %v6401 = vunpack.c.h.b16 %v6210
      %v6402 = vunpack.c.l.b16 %v6211
      %v6403 = vunpack.c.h.b16 %v6211
      %v6404 = vunpack.c.l.b16 %v6212
      %v6405 = vunpack.c.l.b16 %v6213
      %v6406 = vunpack.c.h.b16 %v6213
      %v6407 = vunpack.c.l.b16 %v6214
      %v6408 = vunpack.c.h.b16 %v6214
      %v6409 = vunpack.c.l.b16 %v6215
      %v6410 = vunpack.c.l.b16 %v6216
      %v6411 = vunpack.c.h.b16 %v6216
      %v6412 = vunpack.c.l.b16 %v6217
      %v6413 = vunpack.c.h.b16 %v6217
      %v6414 = vunpack.c.l.b16 %v6218
      %v6415 = vunpack.c.l.b16 %v6219
      %v6416 = vunpack.c.h.b16 %v6219
      %v6417 = vunpack.c.l.b16 %v6220
      %v6418 = vunpack.c.h.b16 %v6220
      %v6419 = vunpack.c.l.b16 %v6221
      %v6420 = vunpack.c.l.b16 %v6222
      %v6421 = vunpack.c.h.b16 %v6222
      %v6422 = vunpack.c.l.b16 %v6223
      %v6423 = vunpack.c.h.b16 %v6223
      %v6424 = vunpack.c.l.b16 %v6224
      %v6425 = vunpack.c.l.b16 %v6225
      %v6426 = vunpack.c.h.b16 %v6225
      %v6427 = vunpack.c.l.b16 %v6226
      %v6428 = vunpack.c.h.b16 %v6226
      %v6429 = vunpack.c.l.b16 %v6227
      %v6430 = vunpack.c.l.b16 %v6228
      %v6431 = vunpack.c.h.b16 %v6228
      %v6432 = vunpack.c.l.b16 %v6229
      %v6433 = vunpack.c.h.b16 %v6229
      %v6434 = vunpack.c.l.b16 %v6230
      %v6435 = vpack.c.b16 %v6360, %v6355
      %v6436 = vpack.c.b16 %v6361, %v6356
      %v6437 = vpack.c.b16 %v6362, %v6357
      %v6438 = vpack.c.b16 %v6363, %v6358
      %v6439 = vpack.c.b16 %v6364, %v6359
      %v6440 = vpack.c.b16 %v6370, %v6365
      %v6441 = vpack.c.b16 %v6371, %v6366
      %v6442 = vpack.c.b16 %v6372, %v6367
      %v6443 = vpack.c.b16 %v6373, %v6368
      %v6444 = vpack.c.b16 %v6374, %v6369
      %v6445 = vpack.c.b16 %v6380, %v6375
      %v6446 = vpack.c.b16 %v6381, %v6376
      %v6447 = vpack.c.b16 %v6382, %v6377
      %v6448 = vpack.c.b16 %v6383, %v6378
      %v6449 = vpack.c.b16 %v6384, %v6379
      %v6450 = vpack.c.b16 %v6390, %v6385
      %v6451 = vpack.c.b16 %v6391, %v6386
      %v6452 = vpack.c.b16 %v6392, %v6387
      %v6453 = vpack.c.b16 %v6393, %v6388
      %v6454 = vpack.c.b16 %v6394, %v6389
      %v6455 = vpack.c.b16 %v6400, %v6395
      %v6456 = vpack.c.b16 %v6401, %v6396
      %v6457 = vpack.c.b16 %v6402, %v6397
      %v6458 = vpack.c.b16 %v6403, %v6398
      %v6459 = vpack.c.b16 %v6404, %v6399
      %v6460 = vpack.c.b16 %v6410, %v6405
      %v6461 = vpack.c.b16 %v6411, %v6406
      %v6462 = vpack.c.b16 %v6412, %v6407
      %v6463 = vpack.c.b16 %v6413, %v6408
      %v6464 = vpack.c.b16 %v6414, %v6409
      %v6465 = vpack.c.b16 %v6420, %v6415
      %v6466 = vpack.c.b16 %v6421, %v6416
      %v6467 = vpack.c.b16 %v6422, %v6417
      %v6468 = vpack.c.b16 %v6423, %v6418
      %v6469 = vpack.c.b16 %v6424, %v6419
      %v6470 = vpack.c.b16 %v6430, %v6425
      %v6471 = vpack.c.b16 %v6431, %v6426
      %v6472 = vpack.c.b16 %v6432, %v6427
      %v6473 = vpack.c.b16 %v6433, %v6428
      %v6474 = vpack.c.b16 %v6434, %v6429
      %v6579 = vunpack.c.l.b16 %v6231
      %v6580 = vunpack.c.l.b16 %v6232
      %v6581 = vunpack.c.l.b16 %v6233
      %v6582 = vunpack.c.l.b16 %v6234
      %v6583 = vunpack.c.l.b16 %v6235
      %v6584 = vunpack.c.l.b16 %v6236
      %v6585 = vunpack.c.l.b16 %v6237
      %v6586 = vunpack.c.l.b16 %v6238
      %v6587 = vunpack.c.l.b16 %v6239
      %v6588 = vunpack.c.l.b16 %v6240
      %v6589 = vunpack.c.l.b16 %v6241
      %v6590 = vunpack.c.l.b16 %v6242
      %v6591 = vunpack.c.l.b16 %v6243
      %v6592 = vunpack.c.l.b16 %v6244
      %v6593 = vunpack.c.l.b16 %v6245
      %v6594 = vunpack.c.l.b16 %v6246
      %v6595 = vunpack.c.l.b16 %v6247
      %v6596 = vunpack.c.l.b16 %v6248
      %v6597 = vunpack.c.l.b16 %v6249
      %v6598 = vunpack.c.l.b16 %v6250
      %v6599 = vunpack.c.l.b16 %v6251
      %v6600 = vunpack.c.l.b16 %v6252
      %v6601 = vunpack.c.l.b16 %v6253
      %v6602 = vunpack.c.l.b16 %v6254
      %v6603 = vunpack.c.l.b16 %v6255
      %v6604 = vunpack.c.l.b16 %v6256
      %v6605 = vunpack.c.l.b16 %v6257
      %v6606 = vunpack.c.l.b16 %v6258
      %v6607 = vunpack.c.l.b16 %v6259
      %v6608 = vunpack.c.l.b16 %v6260
      %v6609 = vunpack.c.l.b16 %v6261
      %v6610 = vunpack.c.l.b16 %v6262
      %v6611 = vunpack.c.l.b16 %v6263
      %v6612 = vunpack.c.l.b16 %v6264
      %v6613 = vunpack.c.l.b16 %v6265
      %v6614 = vunpack.c.l.b16 %v6266
      %v6615 = vunpack.c.l.b16 %v6267
      %v6616 = vunpack.c.l.b16 %v6268
      %v6617 = vunpack.c.l.b16 %v6269
      %v6618 = vunpack.c.l.b16 %v6270
      %v6619 = vunpack.c.l.b16 %v6271
      %v6620 = vunpack.c.l.b16 %v6272
      %v6621 = vunpack.c.l.b16 %v6273
      %v6622 = vunpack.c.l.b16 %v6274
      %v6623 = vunpack.c.l.b16 %v6275
      %v6624 = vunpack.c.l.b16 %v6276
      %v6625 = vunpack.c.l.b16 %v6277
      %v6626 = vunpack.c.l.b16 %v6278
      %v6627 = vunpack.c.l.b16 %v6279
      %v6628 = vunpack.c.l.b16 %v6280
      %v6629 = vunpack.c.l.b16 %v6281
      %v6630 = vunpack.c.l.b16 %v6282
      %v6631 = vunpack.c.l.b16 %v6283
      %v6632 = vunpack.c.l.b16 %v6284
      %v6633 = vunpack.c.l.b16 %v6285
      %v6634 = vunpack.c.l.b16 %v6286
      %v6635 = vunpack.c.l.b16 %v6287
      %v6636 = vunpack.c.l.b16 %v6288
      %v6637 = vunpack.c.l.b16 %v6289
      %v6638 = vunpack.c.l.b16 %v6290
      %v6639 = vunpack.c.l.b16 %v6291
      %v6640 = vunpack.c.l.b16 %v6292
      %v6641 = vunpack.c.l.b16 %v6293
      %v6642 = vunpack.c.l.b16 %v6294
      %v6643 = vunpack.c.l.b16 %v6295
      %v6644 = vunpack.c.l.b16 %v6296
      %v6645 = vunpack.c.l.b16 %v6297
      %v6646 = vunpack.c.l.b16 %v6298
      %v6647 = vunpack.c.l.b16 %v6299
      %v6648 = vunpack.c.l.b16 %v6300
      %v6649 = vunpack.c.l.b16 %v6301
      %v6650 = vunpack.c.l.b16 %v6302
      %v6651 = vpack.c.b16 %v6580, %v6579
      %v6652 = vpack.c.b16 %v6582, %v6581
      %v6653 = vpack.c.b16 %v6584, %v6583
      %v6654 = vpack.c.b16 %v6586, %v6585
      %v6655 = vpack.c.b16 %v6588, %v6587
      %v6656 = vpack.c.b16 %v6590, %v6589
      %v6657 = vpack.c.b16 %v6592, %v6591
      %v6658 = vpack.c.b16 %v6594, %v6593
      %v6659 = vpack.c.b16 %v6596, %v6595
      %v6660 = vpack.c.b16 %v6598, %v6597
      %v6661 = vpack.c.b16 %v6600, %v6599
      %v6662 = vpack.c.b16 %v6602, %v6601
      %v6663 = vpack.c.b16 %v6604, %v6603
      %v6664 = vpack.c.b16 %v6606, %v6605
      %v6665 = vpack.c.b16 %v6608, %v6607
      %v6666 = vpack.c.b16 %v6610, %v6609
      %v6667 = vpack.c.b16 %v6612, %v6611
      %v6668 = vpack.c.b16 %v6614, %v6613
      %v6669 = vpack.c.b16 %v6616, %v6615
      %v6670 = vpack.c.b16 %v6618, %v6617
      %v6671 = vpack.c.b16 %v6620, %v6619
      %v6672 = vpack.c.b16 %v6622, %v6621
      %v6673 = vpack.c.b16 %v6624, %v6623
      %v6674 = vpack.c.b16 %v6626, %v6625
      %v6675 = vpack.c.b16 %v6628, %v6627
      %v6676 = vpack.c.b16 %v6630, %v6629
      %v6677 = vpack.c.b16 %v6632, %v6631
      %v6678 = vpack.c.b16 %v6634, %v6633
      %v6679 = vpack.c.b16 %v6636, %v6635
      %v6680 = vpack.c.b16 %v6638, %v6637
      %v6681 = vpack.c.b16 %v6640, %v6639
      %v6682 = vpack.c.b16 %v6642, %v6641
      %v6683 = vpack.c.b16 %v6644, %v6643
      %v6684 = vpack.c.b16 %v6646, %v6645
      %v6685 = vpack.c.b16 %v6648, %v6647
      %v6686 = vpack.c.b16 %v6650, %v6649
      %v6724 = vsel %vm5865, %v6439, 0
      %v6727 = vsel %vm5865, %v6444, 0
      %v6730 = vsel %vm5865, %v6449, 0
      %v6733 = vsel %vm5865, %v6454, 0
      %v6736 = vsel %vm5865, %v6459, 0
      %v6739 = vsel %vm5865, %v6464, 0
      %v6742 = vsel %vm5865, %v6469, 0
      %v6745 = vsel %vm5865, %v6474, 0
      %6747 = vmatpush.bf16.msra.mxu0 %v6658
      %6748 = vmatpush.bf16.msra.mxu0 %v6657
      %6749 = vmatpush.bf16.msra.mxu0 %v6656
      %6750 = vmatpush.bf16.msra.mxu0 %v6655
      %6751 = vmatpush.bf16.msra.mxu0 %v6654
      %6752 = vmatpush.bf16.msra.mxu0 %v6653
      %6753 = vmatpush.bf16.msra.mxu0 %v6652
      %6754 = vmatpush.bf16.msra.mxu0 %v6651
      %6755 = vmatmul.bf16.gmra.mxu0 %v6435
      %v6756 = vpop.f32.mrf.mxu0
      %v6757 = vadd.f32 %v6305, %v6756
      %v6758 = vpop.f32.mrf.mxu0
      %v6759 = vadd.f32 %v6305, %v6758
      %6760 = vmatmul.bf16.gmra.mxu0 %v6440
      %v6761 = vpop.f32.mrf.mxu0
      %v6762 = vadd.f32 %v6305, %v6761
      %v6763 = vpop.f32.mrf.mxu0
      %v6764 = vadd.f32 %v6305, %v6763
      %6765 = vmatmul.bf16.gmra.mxu0 %v6445
      %v6766 = vpop.f32.mrf.mxu0
      %v6767 = vadd.f32 %v6305, %v6766
      %v6768 = vpop.f32.mrf.mxu0
      %v6769 = vadd.f32 %v6305, %v6768
      %6770 = vmatmul.bf16.gmra.mxu0 %v6450
      %v6771 = vpop.f32.mrf.mxu0
      %v6772 = vadd.f32 %v6305, %v6771
      %v6773 = vpop.f32.mrf.mxu0
      %v6774 = vadd.f32 %v6305, %v6773
      %6775 = vmatmul.bf16.gmra.mxu0 %v6455
      %v6776 = vpop.f32.mrf.mxu0
      %v6777 = vadd.f32 %v6305, %v6776
      %v6778 = vpop.f32.mrf.mxu0
      %v6779 = vadd.f32 %v6305, %v6778
      %6780 = vmatmul.bf16.gmra.mxu0 %v6460
      %v6781 = vpop.f32.mrf.mxu0
      %v6782 = vadd.f32 %v6305, %v6781
      %v6783 = vpop.f32.mrf.mxu0
      %v6784 = vadd.f32 %v6305, %v6783
      %6785 = vmatmul.bf16.gmra.mxu0 %v6465
      %v6786 = vpop.f32.mrf.mxu0
      %v6787 = vadd.f32 %v6305, %v6786
      %v6788 = vpop.f32.mrf.mxu0
      %v6789 = vadd.f32 %v6305, %v6788
      %6790 = vmatmul.bf16.gmra.mxu0 %v6470
      %v6791 = vpop.f32.mrf.mxu0
      %v6792 = vadd.f32 %v6305, %v6791
      %v6793 = vpop.f32.mrf.mxu0
      %v6794 = vadd.f32 %v6305, %v6793
      %6795 = vdwg.mxu0
      %6796 = vmatpush.bf16.msra.mxu0 %v6666
      %6797 = vmatpush.bf16.msra.mxu0 %v6665
      %6798 = vmatpush.bf16.msra.mxu0 %v6664
      %6799 = vmatpush.bf16.msra.mxu0 %v6663
      %6800 = vmatpush.bf16.msra.mxu0 %v6662
      %6801 = vmatpush.bf16.msra.mxu0 %v6661
      %6802 = vmatpush.bf16.msra.mxu0 %v6660
      %6803 = vmatpush.bf16.msra.mxu0 %v6659
      %6804 = vmatmul.bf16.gmra.mxu0 %v6436
      %v6805 = vpop.f32.mrf.mxu0
      %v6806 = vadd.f32 %v6757, %v6805
      %v6807 = vpop.f32.mrf.mxu0
      %v6808 = vadd.f32 %v6759, %v6807
      %6809 = vmatmul.bf16.gmra.mxu0 %v6441
      %v6810 = vpop.f32.mrf.mxu0
      %v6811 = vadd.f32 %v6762, %v6810
      %v6812 = vpop.f32.mrf.mxu0
      %v6813 = vadd.f32 %v6764, %v6812
      %6814 = vmatmul.bf16.gmra.mxu0 %v6446
      %v6815 = vpop.f32.mrf.mxu0
      %v6816 = vadd.f32 %v6767, %v6815
      %v6817 = vpop.f32.mrf.mxu0
      %v6818 = vadd.f32 %v6769, %v6817
      %6819 = vmatmul.bf16.gmra.mxu0 %v6451
      %v6820 = vpop.f32.mrf.mxu0
      %v6821 = vadd.f32 %v6772, %v6820
      %v6822 = vpop.f32.mrf.mxu0
      %v6823 = vadd.f32 %v6774, %v6822
      %6824 = vmatmul.bf16.gmra.mxu0 %v6456
      %v6825 = vpop.f32.mrf.mxu0
      %v6826 = vadd.f32 %v6777, %v6825
      %v6827 = vpop.f32.mrf.mxu0
      %v6828 = vadd.f32 %v6779, %v6827
      %6829 = vmatmul.bf16.gmra.mxu0 %v6461
      %v6830 = vpop.f32.mrf.mxu0
      %v6831 = vadd.f32 %v6782, %v6830
      %v6832 = vpop.f32.mrf.mxu0
      %v6833 = vadd.f32 %v6784, %v6832
      %6834 = vmatmul.bf16.gmra.mxu0 %v6466
      %v6835 = vpop.f32.mrf.mxu0
      %v6836 = vadd.f32 %v6787, %v6835
      %v6837 = vpop.f32.mrf.mxu0
      %v6838 = vadd.f32 %v6789, %v6837
      %6839 = vmatmul.bf16.gmra.mxu0 %v6471
      %v6840 = vpop.f32.mrf.mxu0
      %v6841 = vadd.f32 %v6792, %v6840
      %v6842 = vpop.f32.mrf.mxu0
      %v6843 = vadd.f32 %v6794, %v6842
      %6844 = vdwg.mxu0
      %6845 = vmatpush.bf16.msra.mxu0 %v6674
      %6846 = vmatpush.bf16.msra.mxu0 %v6673
      %6847 = vmatpush.bf16.msra.mxu0 %v6672
      %6848 = vmatpush.bf16.msra.mxu0 %v6671
      %6849 = vmatpush.bf16.msra.mxu0 %v6670
      %6850 = vmatpush.bf16.msra.mxu0 %v6669
      %6851 = vmatpush.bf16.msra.mxu0 %v6668
      %6852 = vmatpush.bf16.msra.mxu0 %v6667
      %6853 = vmatmul.bf16.gmra.mxu0 %v6437
      %v6854 = vpop.f32.mrf.mxu0
      %v6855 = vadd.f32 %v6806, %v6854
      %v6856 = vpop.f32.mrf.mxu0
      %v6857 = vadd.f32 %v6808, %v6856
      %6858 = vmatmul.bf16.gmra.mxu0 %v6442
      %v6859 = vpop.f32.mrf.mxu0
      %v6860 = vadd.f32 %v6811, %v6859
      %v6861 = vpop.f32.mrf.mxu0
      %v6862 = vadd.f32 %v6813, %v6861
      %6863 = vmatmul.bf16.gmra.mxu0 %v6447
      %v6864 = vpop.f32.mrf.mxu0
      %v6865 = vadd.f32 %v6816, %v6864
      %v6866 = vpop.f32.mrf.mxu0
      %v6867 = vadd.f32 %v6818, %v6866
      %6868 = vmatmul.bf16.gmra.mxu0 %v6452
      %v6869 = vpop.f32.mrf.mxu0
      %v6870 = vadd.f32 %v6821, %v6869
      %v6871 = vpop.f32.mrf.mxu0
      %v6872 = vadd.f32 %v6823, %v6871
      %6873 = vmatmul.bf16.gmra.mxu0 %v6457
      %v6874 = vpop.f32.mrf.mxu0
      %v6875 = vadd.f32 %v6826, %v6874
      %v6876 = vpop.f32.mrf.mxu0
      %v6877 = vadd.f32 %v6828, %v6876
      %6878 = vmatmul.bf16.gmra.mxu0 %v6462
      %v6879 = vpop.f32.mrf.mxu0
      %v6880 = vadd.f32 %v6831, %v6879
      %v6881 = vpop.f32.mrf.mxu0
      %v6882 = vadd.f32 %v6833, %v6881
      %6883 = vmatmul.bf16.gmra.mxu0 %v6467
      %v6884 = vpop.f32.mrf.mxu0
      %v6885 = vadd.f32 %v6836, %v6884
      %v6886 = vpop.f32.mrf.mxu0
      %v6887 = vadd.f32 %v6838, %v6886
      %6888 = vmatmul.bf16.gmra.mxu0 %v6472
      %v6889 = vpop.f32.mrf.mxu0
      %v6890 = vadd.f32 %v6841, %v6889
      %v6891 = vpop.f32.mrf.mxu0
      %v6892 = vadd.f32 %v6843, %v6891
      %6893 = vdwg.mxu0
      %6894 = vmatpush.bf16.msra.mxu0 %v6682
      %6895 = vmatpush.bf16.msra.mxu0 %v6681
      %6896 = vmatpush.bf16.msra.mxu0 %v6680
      %6897 = vmatpush.bf16.msra.mxu0 %v6679
      %6898 = vmatpush.bf16.msra.mxu0 %v6678
      %6899 = vmatpush.bf16.msra.mxu0 %v6677
      %6900 = vmatpush.bf16.msra.mxu0 %v6676
      %6901 = vmatpush.bf16.msra.mxu0 %v6675
      %6902 = vmatmul.bf16.gmra.mxu0 %v6438
      %v6903 = vpop.f32.mrf.mxu0
      %v6904 = vadd.f32 %v6855, %v6903
      %v6905 = vpop.f32.mrf.mxu0
      %v6906 = vadd.f32 %v6857, %v6905
      %6907 = vmatmul.bf16.gmra.mxu0 %v6443
      %v6908 = vpop.f32.mrf.mxu0
      %v6909 = vadd.f32 %v6860, %v6908
      %v6910 = vpop.f32.mrf.mxu0
      %v6911 = vadd.f32 %v6862, %v6910
      %6912 = vmatmul.bf16.gmra.mxu0 %v6448
      %v6913 = vpop.f32.mrf.mxu0
      %v6914 = vadd.f32 %v6865, %v6913
      %v6915 = vpop.f32.mrf.mxu0
      %v6916 = vadd.f32 %v6867, %v6915
      %6917 = vmatmul.bf16.gmra.mxu0 %v6453
      %v6918 = vpop.f32.mrf.mxu0
      %v6919 = vadd.f32 %v6870, %v6918
      %v6920 = vpop.f32.mrf.mxu0
      %v6921 = vadd.f32 %v6872, %v6920
      %6922 = vmatmul.bf16.gmra.mxu0 %v6458
      %v6923 = vpop.f32.mrf.mxu0
      %v6924 = vadd.f32 %v6875, %v6923
      %v6925 = vpop.f32.mrf.mxu0
      %v6926 = vadd.f32 %v6877, %v6925
      %6927 = vmatmul.bf16.gmra.mxu0 %v6463
      %v6928 = vpop.f32.mrf.mxu0
      %v6929 = vadd.f32 %v6880, %v6928
      %v6930 = vpop.f32.mrf.mxu0
      %v6931 = vadd.f32 %v6882, %v6930
      %6932 = vmatmul.bf16.gmra.mxu0 %v6468
      %v6933 = vpop.f32.mrf.mxu0
      %v6934 = vadd.f32 %v6885, %v6933
      %v6935 = vpop.f32.mrf.mxu0
      %v6936 = vadd.f32 %v6887, %v6935
      %6937 = vmatmul.bf16.gmra.mxu0 %v6473
      %v6938 = vpop.f32.mrf.mxu0
      %v6939 = vadd.f32 %v6890, %v6938
      %v6940 = vpop.f32.mrf.mxu0
      %v6941 = vadd.f32 %v6892, %v6940
      %6942 = vdwg.mxu0
      %6943 = vmatpush.bf16.msra.mxu0 0
      %6944 = vmatpush.bf16.msra.mxu0 0
      %6945 = vmatpush.bf16.msra.mxu0 0
      %6946 = vmatpush.bf16.msra.mxu0 0
      %6947 = vmatpush.bf16.msra.mxu0 %v6686
      %6948 = vmatpush.bf16.msra.mxu0 %v6685
      %6949 = vmatpush.bf16.msra.mxu0 %v6684
      %6950 = vmatpush.bf16.msra.mxu0 %v6683
      %6951 = vmatmul.bf16.gmra.mxu0 %v6724
      %v6952 = vpop.f32.mrf.mxu0
      %v6953 = vadd.f32 %v6904, %v6952
      %v6954 = vpop.f32.mrf.mxu0
      %v6955 = vadd.f32 %v6906, %v6954
      %6956 = vmatmul.bf16.gmra.mxu0 %v6727
      %v6957 = vpop.f32.mrf.mxu0
      %v6958 = vadd.f32 %v6909, %v6957
      %v6959 = vpop.f32.mrf.mxu0
      %v6960 = vadd.f32 %v6911, %v6959
      %6961 = vmatmul.bf16.gmra.mxu0 %v6730
      %v6962 = vpop.f32.mrf.mxu0
      %v6963 = vadd.f32 %v6914, %v6962
      %v6964 = vpop.f32.mrf.mxu0
      %v6965 = vadd.f32 %v6916, %v6964
      %6966 = vmatmul.bf16.gmra.mxu0 %v6733
      %v6967 = vpop.f32.mrf.mxu0
      %v6968 = vadd.f32 %v6919, %v6967
      %v6969 = vpop.f32.mrf.mxu0
      %v6970 = vadd.f32 %v6921, %v6969
      %6971 = vmatmul.bf16.gmra.mxu0 %v6736
      %v6972 = vpop.f32.mrf.mxu0
      %v6973 = vadd.f32 %v6924, %v6972
      %v6974 = vpop.f32.mrf.mxu0
      %v6975 = vadd.f32 %v6926, %v6974
      %6976 = vmatmul.bf16.gmra.mxu0 %v6739
      %v6977 = vpop.f32.mrf.mxu0
      %v6978 = vadd.f32 %v6929, %v6977
      %v6979 = vpop.f32.mrf.mxu0
      %v6980 = vadd.f32 %v6931, %v6979
      %6981 = vmatmul.bf16.gmra.mxu0 %v6742
      %v6982 = vpop.f32.mrf.mxu0
      %v6983 = vadd.f32 %v6934, %v6982
      %v6984 = vpop.f32.mrf.mxu0
      %v6985 = vadd.f32 %v6936, %v6984
      %6986 = vmatmul.bf16.gmra.mxu0 %v6745
      %v6987 = vpop.f32.mrf.mxu0
      %v6988 = vadd.f32 %v6939, %v6987
      %v6989 = vpop.f32.mrf.mxu0
      %v6990 = vadd.f32 %v6941, %v6989
      %6991 = vdwg.mxu0
      %v6992 = vmax.f32 %v6953, 0.0
      %v6993 = vmax.f32 %v6955, 0.0
      %v6994 = vmax.f32 %v6958, 0.0
      %v6995 = vmax.f32 %v6960, 0.0
      %v6996 = vmax.f32 %v6963, 0.0
      %v6997 = vmax.f32 %v6965, 0.0
      %v6998 = vmax.f32 %v6968, 0.0
      %v6999 = vmax.f32 %v6970, 0.0
      %v7000 = vmax.f32 %v6973, 0.0
      %v7001 = vmax.f32 %v6975, 0.0
      %v7002 = vmax.f32 %v6978, 0.0
      %v7003 = vmax.f32 %v6980, 0.0
      %v7004 = vmax.f32 %v6983, 0.0
      %v7005 = vmax.f32 %v6985, 0.0
      %v7006 = vmax.f32 %v6988, 0.0
      %v7007 = vmax.f32 %v6990, 0.0
      %v7008 = vpack.c.bf16 %v6992, %v6992
      %v7009 = vpack.c.bf16 %v6993, %v6993
      %v7010 = vpack.c.bf16 %v6994, %v6994
      %v7011 = vpack.c.bf16 %v6995, %v6995
      %v7012 = vpack.c.bf16 %v6996, %v6996
      %v7013 = vpack.c.bf16 %v6997, %v6997
      %v7014 = vpack.c.bf16 %v6998, %v6998
      %v7015 = vpack.c.bf16 %v6999, %v6999
      %v7016 = vpack.c.bf16 %v7000, %v7000
      %v7017 = vpack.c.bf16 %v7001, %v7001
      %v7018 = vpack.c.bf16 %v7002, %v7002
      %v7019 = vpack.c.bf16 %v7003, %v7003
      %v7020 = vpack.c.bf16 %v7004, %v7004
      %v7021 = vpack.c.bf16 %v7005, %v7005
      %v7022 = vpack.c.bf16 %v7006, %v7006
      %v7023 = vpack.c.bf16 %v7007, %v7007
      %7024 = vst.msk [vmem:[#allocation3 + $0x50] sm:$0xf] %vm709, %v7008
      %7025 = vst.msk [vmem:[#allocation3 + $0x54] sm:$0xf] %vm709, %v7009
      %7026 = vst.msk [vmem:[#allocation3 + $0x58] sm:$0xf] %vm709, %v7010
      %7027 = vst.msk [vmem:[#allocation3 + $0x5c] sm:$0xf] %vm709, %v7011
      %7028 = vst.msk [vmem:[#allocation3 + $0x60] sm:$0xf] %vm709, %v7012
      %7029 = vst.msk [vmem:[#allocation3 + $0x64] sm:$0xf] %vm709, %v7013
      %7030 = vst.msk [vmem:[#allocation3 + $0x68] sm:$0xf] %vm709, %v7014
      %7031 = vst.msk [vmem:[#allocation3 + $0x6c] sm:$0xf] %vm709, %v7015
      %7032 = vst.msk [vmem:[#allocation3 + $0x70] sm:$0xf] %vm709, %v7016
      %7033 = vst.msk [vmem:[#allocation3 + $0x74] sm:$0xf] %vm709, %v7017
      %7034 = vst.msk [vmem:[#allocation3 + $0x78] sm:$0xf] %vm709, %v7018
      %7035 = vst.msk [vmem:[#allocation3 + $0x7c] sm:$0xf] %vm709, %v7019
      %7036 = vst.msk [vmem:[#allocation3 + $0x80] sm:$0xf] %vm709, %v7020
      %7037 = vst.msk [vmem:[#allocation3 + $0x84] sm:$0xf] %vm709, %v7021
      %7038 = vst.msk [vmem:[#allocation3 + $0x88] sm:$0xf] %vm709, %v7022
      %7039 = vst.msk [vmem:[#allocation3 + $0x8c] sm:$0xf] %vm709, %v7023
      %v7040 = vld [vmem:[#allocation3 + $0x4] sm:$0x8]
      %v7041 = vld [vmem:[#allocation3 + $0x8] sm:$0xf]
      %v7042 = vld [vmem:[#allocation3 + $0xc] sm:$0xf]
      %v7043 = vld [vmem:[#allocation3 + $0x10] sm:$0xf]
      %v7044 = vld [vmem:[#allocation3 + $0x14] sm:$0xf]
      %v7045 = vld [vmem:[#allocation3 + $0x18] sm:$0xf]
      %v7046 = vld [vmem:[#allocation3 + $0x1c] sm:$0xf]
      %v7047 = vld [vmem:[#allocation3 + $0x20] sm:$0xf]
      %v7048 = vld [vmem:[#allocation3 + $0x24] sm:$0xf]
      %v7049 = vld [vmem:[#allocation3 + $0x28] sm:$0xf]
      %v7050 = vld [vmem:[#allocation3 + $0x2c] sm:$0xf]
      %v7051 = vld [vmem:[#allocation3 + $0x30] sm:$0xf]
      %v7052 = vld [vmem:[#allocation3 + $0x34] sm:$0xf]
      %v7053 = vld [vmem:[#allocation3 + $0x38] sm:$0xf]
      %v7054 = vld [vmem:[#allocation3 + $0x3c] sm:$0xf]
      %v7055 = vld [vmem:[#allocation3 + $0x40] sm:$0xf]
      %v7056 = vld [vmem:[#allocation3 + $0x44] sm:$0xf]
      %v7057 = vld [vmem:[#allocation3 + $0x48] sm:$0xf]
      %v7058 = vld [vmem:[#allocation3 + $0x4c] sm:$0xf]
      %v7059 = vld [vmem:[#allocation3 + $0x50] sm:$0xf]
      %v7060 = vld [vmem:[#allocation3 + $0x54] sm:$0xf]
      %v7061 = vld [vmem:[#allocation3 + $0x58] sm:$0xf]
      %v7062 = vld [vmem:[#allocation3 + $0x5c] sm:$0xf]
      %v7063 = vld [vmem:[#allocation3 + $0x60] sm:$0xf]
      %v7064 = vld [vmem:[#allocation3 + $0x64] sm:$0xf]
      %v7065 = vld [vmem:[#allocation3 + $0x68] sm:$0xf]
      %v7066 = vld [vmem:[#allocation3 + $0x6c] sm:$0xf]
      %v7067 = vld [vmem:[#allocation3 + $0x70] sm:$0xf]
      %v7068 = vld [vmem:[#allocation3 + $0x74] sm:$0xf]
      %v7069 = vld [vmem:[#allocation3 + $0x78] sm:$0xf]
      %v7070 = vld [vmem:[#allocation3 + $0x7c] sm:$0xf]
      %v7071 = vld [vmem:[#allocation3 + $0x80] sm:$0xf]
      %v7072 = vld [vmem:[#allocation3 + $0x84] sm:$0xf]
      %v7073 = vsel %vm1279, %v7040, 0
      %v7074 = vsel %vm1286, %v7041, 0
      %v7075 = vsel %vm1293, %v7042, 0
      %v7076 = vsel %vm1300, %v7043, 0
      %v7077 = vsel %vm1307, %v7044, 0
      %v7078 = vsel %vm1314, %v7045, 0
      %v7079 = vsel %vm1321, %v7046, 0
      %v7080 = vsel %vm1328, %v7047, 0
      %v7081 = vsel %vm1335, %v7048, 0
      %v7082 = vsel %vm1342, %v7049, 0
      %v7083 = vsel %vm1349, %v7050, 0
      %v7084 = vsel %vm1356, %v7051, 0
      %v7085 = vsel %vm1363, %v7052, 0
      %v7086 = vsel %vm1370, %v7053, 0
      %v7087 = vsel %vm1377, %v7054, 0
      %v7088 = vsel %vm1384, %v7055, 0
      %v7089 = vsel %vm1391, %v7056, 0
      %v7090 = vsel %vm1398, %v7057, 0
      %v7091 = vsel %vm1405, %v7058, 0
      %v7092 = vsel %vm1412, %v7059, 0
      %v7093 = vsel %vm1419, %v7060, 0
      %v7094 = vsel %vm1426, %v7061, 0
      %v7095 = vsel %vm1433, %v7062, 0
      %v7096 = vsel %vm1440, %v7063, 0
      %v7097 = vsel %vm1447, %v7064, 0
      %v7098 = vsel %vm1454, %v7065, 0
      %v7099 = vsel %vm1461, %v7066, 0
      %v7100 = vsel %vm1468, %v7067, 0
      %v7101 = vsel %vm1475, %v7068, 0
      %v7102 = vsel %vm1482, %v7069, 0
      %v7103 = vsel %vm1489, %v7070, 0
      %v7104 = vsel %vm1496, %v7071, 0
      %v7105 = vsel %vm1503, %v7072, 0
      %v7107 = vshrl.u32 %v7073, 16
      %v7109 = vrot.slane %v7107, 7
      %v7110 = vrot.slane %v7109, 4
      %v7112 = vshrl.u32 %v7074, 16
      %v7114 = vrot.slane %v7112, 7
      %v7115 = vshll.u32 %v7074, 16
      %v7117 = vor.u32 %v7114, %v7115
      %v7118 = vsel %vm1539, %v7110, %v7117
      %v7119 = vrot.slane %v7114, 4
      %v7121 = vshrl.u32 %v7075, 16
      %v7123 = vrot.slane %v7121, 7
      %v7124 = vshll.u32 %v7075, 16
      %v7126 = vor.u32 %v7123, %v7124
      %v7127 = vsel %vm1539, %v7119, %v7126
      %v7128 = vrot.slane %v7123, 4
      %v7130 = vshrl.u32 %v7076, 16
      %v7132 = vrot.slane %v7130, 7
      %v7133 = vshll.u32 %v7076, 16
      %v7135 = vor.u32 %v7132, %v7133
      %v7136 = vsel %vm1539, %v7128, %v7135
      %v7137 = vrot.slane %v7132, 4
      %v7139 = vshrl.u32 %v7077, 16
      %v7141 = vrot.slane %v7139, 7
      %v7142 = vshll.u32 %v7077, 16
      %v7144 = vor.u32 %v7141, %v7142
      %v7145 = vsel %vm1539, %v7137, %v7144
      %v7146 = vrot.slane %v7141, 4
      %v7148 = vshrl.u32 %v7078, 16
      %v7150 = vrot.slane %v7148, 7
      %v7151 = vshll.u32 %v7078, 16
      %v7153 = vor.u32 %v7150, %v7151
      %v7154 = vsel %vm1539, %v7146, %v7153
      %v7155 = vrot.slane %v7150, 4
      %v7157 = vshrl.u32 %v7079, 16
      %v7159 = vrot.slane %v7157, 7
      %v7160 = vshll.u32 %v7079, 16
      %v7162 = vor.u32 %v7159, %v7160
      %v7163 = vsel %vm1539, %v7155, %v7162
      %v7164 = vrot.slane %v7159, 4
      %v7166 = vshrl.u32 %v7080, 16
      %v7168 = vrot.slane %v7166, 7
      %v7169 = vshll.u32 %v7080, 16
      %v7171 = vor.u32 %v7168, %v7169
      %v7172 = vsel %vm1539, %v7164, %v7171
      %v7173 = vrot.slane %v7168, 4
      %v7175 = vshrl.u32 %v7081, 16
      %v7177 = vrot.slane %v7175, 7
      %v7178 = vshll.u32 %v7081, 16
      %v7180 = vor.u32 %v7177, %v7178
      %v7181 = vsel %vm1539, %v7173, %v7180
      %v7182 = vrot.slane %v7177, 4
      %v7184 = vshrl.u32 %v7082, 16
      %v7186 = vrot.slane %v7184, 7
      %v7187 = vshll.u32 %v7082, 16
      %v7189 = vor.u32 %v7186, %v7187
      %v7190 = vsel %vm1539, %v7182, %v7189
      %v7191 = vrot.slane %v7186, 4
      %v7193 = vshrl.u32 %v7083, 16
      %v7195 = vrot.slane %v7193, 7
      %v7196 = vshll.u32 %v7083, 16
      %v7198 = vor.u32 %v7195, %v7196
      %v7199 = vsel %vm1539, %v7191, %v7198
      %v7200 = vrot.slane %v7195, 4
      %v7202 = vshrl.u32 %v7084, 16
      %v7204 = vrot.slane %v7202, 7
      %v7205 = vshll.u32 %v7084, 16
      %v7207 = vor.u32 %v7204, %v7205
      %v7208 = vsel %vm1539, %v7200, %v7207
      %v7209 = vrot.slane %v7204, 4
      %v7211 = vshrl.u32 %v7085, 16
      %v7213 = vrot.slane %v7211, 7
      %v7214 = vshll.u32 %v7085, 16
      %v7216 = vor.u32 %v7213, %v7214
      %v7217 = vsel %vm1539, %v7209, %v7216
      %v7218 = vrot.slane %v7213, 4
      %v7220 = vshrl.u32 %v7086, 16
      %v7222 = vrot.slane %v7220, 7
      %v7223 = vshll.u32 %v7086, 16
      %v7225 = vor.u32 %v7222, %v7223
      %v7226 = vsel %vm1539, %v7218, %v7225
      %v7227 = vrot.slane %v7222, 4
      %v7229 = vshrl.u32 %v7087, 16
      %v7231 = vrot.slane %v7229, 7
      %v7232 = vshll.u32 %v7087, 16
      %v7234 = vor.u32 %v7231, %v7232
      %v7235 = vsel %vm1539, %v7227, %v7234
      %v7236 = vrot.slane %v7231, 4
      %v7238 = vshrl.u32 %v7088, 16
      %v7240 = vrot.slane %v7238, 7
      %v7241 = vshll.u32 %v7088, 16
      %v7243 = vor.u32 %v7240, %v7241
      %v7244 = vsel %vm1539, %v7236, %v7243
      %v7245 = vrot.slane %v7240, 4
      %v7247 = vshrl.u32 %v7089, 16
      %v7249 = vrot.slane %v7247, 7
      %v7250 = vshll.u32 %v7089, 16
      %v7252 = vor.u32 %v7249, %v7250
      %v7253 = vsel %vm1539, %v7245, %v7252
      %v7254 = vrot.slane %v7249, 4
      %v7256 = vshrl.u32 %v7090, 16
      %v7258 = vrot.slane %v7256, 7
      %v7259 = vshll.u32 %v7090, 16
      %v7261 = vor.u32 %v7258, %v7259
      %v7262 = vsel %vm1539, %v7254, %v7261
      %v7263 = vrot.slane %v7258, 4
      %v7265 = vshrl.u32 %v7091, 16
      %v7267 = vrot.slane %v7265, 7
      %v7268 = vshll.u32 %v7091, 16
      %v7270 = vor.u32 %v7267, %v7268
      %v7271 = vsel %vm1539, %v7263, %v7270
      %v7272 = vrot.slane %v7267, 4
      %v7274 = vshrl.u32 %v7092, 16
      %v7276 = vrot.slane %v7274, 7
      %v7277 = vshll.u32 %v7092, 16
      %v7279 = vor.u32 %v7276, %v7277
      %v7280 = vsel %vm1539, %v7272, %v7279
      %v7281 = vrot.slane %v7276, 4
      %v7283 = vshrl.u32 %v7093, 16
      %v7285 = vrot.slane %v7283, 7
      %v7286 = vshll.u32 %v7093, 16
      %v7288 = vor.u32 %v7285, %v7286
      %v7289 = vsel %vm1539, %v7281, %v7288
      %v7290 = vrot.slane %v7285, 4
      %v7292 = vshrl.u32 %v7094, 16
      %v7294 = vrot.slane %v7292, 7
      %v7295 = vshll.u32 %v7094, 16
      %v7297 = vor.u32 %v7294, %v7295
      %v7298 = vsel %vm1539, %v7290, %v7297
      %v7299 = vrot.slane %v7294, 4
      %v7301 = vshrl.u32 %v7095, 16
      %v7303 = vrot.slane %v7301, 7
      %v7304 = vshll.u32 %v7095, 16
      %v7306 = vor.u32 %v7303, %v7304
      %v7307 = vsel %vm1539, %v7299, %v7306
      %v7308 = vrot.slane %v7303, 4
      %v7310 = vshrl.u32 %v7096, 16
      %v7312 = vrot.slane %v7310, 7
      %v7313 = vshll.u32 %v7096, 16
      %v7315 = vor.u32 %v7312, %v7313
      %v7316 = vsel %vm1539, %v7308, %v7315
      %v7317 = vrot.slane %v7312, 4
      %v7319 = vshrl.u32 %v7097, 16
      %v7321 = vrot.slane %v7319, 7
      %v7322 = vshll.u32 %v7097, 16
      %v7324 = vor.u32 %v7321, %v7322
      %v7325 = vsel %vm1539, %v7317, %v7324
      %v7326 = vrot.slane %v7321, 4
      %v7328 = vshrl.u32 %v7098, 16
      %v7330 = vrot.slane %v7328, 7
      %v7331 = vshll.u32 %v7098, 16
      %v7333 = vor.u32 %v7330, %v7331
      %v7334 = vsel %vm1539, %v7326, %v7333
      %v7335 = vrot.slane %v7330, 4
      %v7337 = vshrl.u32 %v7099, 16
      %v7339 = vrot.slane %v7337, 7
      %v7340 = vshll.u32 %v7099, 16
      %v7342 = vor.u32 %v7339, %v7340
      %v7343 = vsel %vm1539, %v7335, %v7342
      %v7344 = vrot.slane %v7339, 4
      %v7346 = vshrl.u32 %v7100, 16
      %v7348 = vrot.slane %v7346, 7
      %v7349 = vshll.u32 %v7100, 16
      %v7351 = vor.u32 %v7348, %v7349
      %v7352 = vsel %vm1539, %v7344, %v7351
      %v7353 = vrot.slane %v7348, 4
      %v7355 = vshrl.u32 %v7101, 16
      %v7357 = vrot.slane %v7355, 7
      %v7358 = vshll.u32 %v7101, 16
      %v7360 = vor.u32 %v7357, %v7358
      %v7361 = vsel %vm1539, %v7353, %v7360
      %v7362 = vrot.slane %v7357, 4
      %v7364 = vshrl.u32 %v7102, 16
      %v7366 = vrot.slane %v7364, 7
      %v7367 = vshll.u32 %v7102, 16
      %v7369 = vor.u32 %v7366, %v7367
      %v7370 = vsel %vm1539, %v7362, %v7369
      %v7371 = vrot.slane %v7366, 4
      %v7373 = vshrl.u32 %v7103, 16
      %v7375 = vrot.slane %v7373, 7
      %v7376 = vshll.u32 %v7103, 16
      %v7378 = vor.u32 %v7375, %v7376
      %v7379 = vsel %vm1539, %v7371, %v7378
      %v7380 = vrot.slane %v7375, 4
      %v7382 = vshrl.u32 %v7104, 16
      %v7384 = vrot.slane %v7382, 7
      %v7385 = vshll.u32 %v7104, 16
      %v7387 = vor.u32 %v7384, %v7385
      %v7388 = vsel %vm1539, %v7380, %v7387
      %v7389 = vrot.slane %v7384, 4
      %v7391 = vshrl.u32 %v7105, 16
      %v7393 = vrot.slane %v7391, 7
      %v7394 = vshll.u32 %v7105, 16
      %v7396 = vor.u32 %v7393, %v7394
      %v7397 = vsel %vm1539, %v7389, %v7396
      %7430 = vst.msk [vmem:[#allocation5] sm:$0xf] %vm709, %v7118
      %7431 = vst.msk [vmem:[#allocation5 + $0x14] sm:$0xf] %vm709, %v7127
      %7432 = vst.msk [vmem:[#allocation5 + $0x28] sm:$0xf] %vm709, %v7136
      %7433 = vst.msk [vmem:[#allocation5 + $0x3c] sm:$0xf] %vm709, %v7145
      %7434 = vst.msk [vmem:[#allocation5 + $0x50] sm:$0xf] %vm709, %v7154
      %7435 = vst.msk [vmem:[#allocation5 + $0x64] sm:$0xf] %vm709, %v7163
      %7436 = vst.msk [vmem:[#allocation5 + $0x78] sm:$0xf] %vm709, %v7172
      %7437 = vst.msk [vmem:[#allocation5 + $0x8c] sm:$0xf] %vm709, %v7181
      %7438 = vst.msk [vmem:[#allocation5 + $0xa0] sm:$0xf] %vm709, %v7190
      %7439 = vst.msk [vmem:[#allocation5 + $0xb4] sm:$0xf] %vm709, %v7199
      %7440 = vst.msk [vmem:[#allocation5 + $0xc8] sm:$0xf] %vm709, %v7208
      %7441 = vst.msk [vmem:[#allocation5 + $0xdc] sm:$0xf] %vm709, %v7217
      %7442 = vst.msk [vmem:[#allocation5 + $0xf0] sm:$0xf] %vm709, %v7226
      %7443 = vst.msk [vmem:[#allocation5 + $0x104] sm:$0xf] %vm709, %v7235
      %7444 = vst.msk [vmem:[#allocation5 + $0x118] sm:$0xf] %vm709, %v7244
      %7445 = vst.msk [vmem:[#allocation5 + $0x12c] sm:$0xf] %vm709, %v7253
      %7446 = vst.msk [vmem:[#allocation5 + $0x140] sm:$0xf] %vm709, %v7262
      %7447 = vst.msk [vmem:[#allocation5 + $0x154] sm:$0xf] %vm709, %v7271
      %7448 = vst.msk [vmem:[#allocation5 + $0x168] sm:$0xf] %vm709, %v7280
      %7449 = vst.msk [vmem:[#allocation5 + $0x17c] sm:$0xf] %vm709, %v7289
      %7450 = vst.msk [vmem:[#allocation5 + $0x190] sm:$0xf] %vm709, %v7298
      %7451 = vst.msk [vmem:[#allocation5 + $0x1a4] sm:$0xf] %vm709, %v7307
      %7452 = vst.msk [vmem:[#allocation5 + $0x1b8] sm:$0xf] %vm709, %v7316
      %7453 = vst.msk [vmem:[#allocation5 + $0x1cc] sm:$0xf] %vm709, %v7325
      %7454 = vst.msk [vmem:[#allocation5 + $0x1e0] sm:$0xf] %vm709, %v7334
      %7455 = vst.msk [vmem:[#allocation5 + $0x1f4] sm:$0xf] %vm709, %v7343
      %7456 = vst.msk [vmem:[#allocation5 + $0x208] sm:$0xf] %vm709, %v7352
      %7457 = vst.msk [vmem:[#allocation5 + $0x21c] sm:$0xf] %vm709, %v7361
      %7458 = vst.msk [vmem:[#allocation5 + $0x230] sm:$0xf] %vm709, %v7370
      %7459 = vst.msk [vmem:[#allocation5 + $0x244] sm:$0xf] %vm709, %v7379
      %7460 = vst.msk [vmem:[#allocation5 + $0x258] sm:$0xf] %vm709, %v7388
      %7461 = vst.msk [vmem:[#allocation5 + $0x26c] sm:$0xf] %vm709, %v7397
      %v7462 = vld [vmem:[#allocation3 + $0x8] sm:$0xf]
      %v7463 = vld [vmem:[#allocation3 + $0xc] sm:$0xf]
      %v7464 = vld [vmem:[#allocation3 + $0x10] sm:$0xf]
      %v7465 = vld [vmem:[#allocation3 + $0x14] sm:$0xf]
      %v7466 = vld [vmem:[#allocation3 + $0x18] sm:$0xf]
      %v7467 = vld [vmem:[#allocation3 + $0x1c] sm:$0xf]
      %v7468 = vld [vmem:[#allocation3 + $0x20] sm:$0xf]
      %v7469 = vld [vmem:[#allocation3 + $0x24] sm:$0xf]
      %v7470 = vld [vmem:[#allocation3 + $0x28] sm:$0xf]
      %v7471 = vld [vmem:[#allocation3 + $0x2c] sm:$0xf]
      %v7472 = vld [vmem:[#allocation3 + $0x30] sm:$0xf]
      %v7473 = vld [vmem:[#allocation3 + $0x34] sm:$0xf]
      %v7474 = vld [vmem:[#allocation3 + $0x38] sm:$0xf]
      %v7475 = vld [vmem:[#allocation3 + $0x3c] sm:$0xf]
      %v7476 = vld [vmem:[#allocation3 + $0x40] sm:$0xf]
      %v7477 = vld [vmem:[#allocation3 + $0x44] sm:$0xf]
      %v7478 = vld [vmem:[#allocation3 + $0x48] sm:$0xf]
      %v7479 = vld [vmem:[#allocation3 + $0x4c] sm:$0xf]
      %v7480 = vld [vmem:[#allocation3 + $0x50] sm:$0xf]
      %v7481 = vld [vmem:[#allocation3 + $0x54] sm:$0xf]
      %v7482 = vld [vmem:[#allocation3 + $0x58] sm:$0xf]
      %v7483 = vld [vmem:[#allocation3 + $0x5c] sm:$0xf]
      %v7484 = vld [vmem:[#allocation3 + $0x60] sm:$0xf]
      %v7485 = vld [vmem:[#allocation3 + $0x64] sm:$0xf]
      %v7486 = vld [vmem:[#allocation3 + $0x68] sm:$0xf]
      %v7487 = vld [vmem:[#allocation3 + $0x6c] sm:$0xf]
      %v7488 = vld [vmem:[#allocation3 + $0x70] sm:$0xf]
      %v7489 = vld [vmem:[#allocation3 + $0x74] sm:$0xf]
      %v7490 = vld [vmem:[#allocation3 + $0x78] sm:$0xf]
      %v7491 = vld [vmem:[#allocation3 + $0x7c] sm:$0xf]
      %v7492 = vld [vmem:[#allocation3 + $0x80] sm:$0xf]
      %v7493 = vld [vmem:[#allocation3 + $0x84] sm:$0xf]
      %7526 = vrot.lane.b32.xlu0 %v7462, 64
      %v7527 = vpop.permute.xlu0 %7526
      %7528 = vrot.lane.b32.xlu0 %v7463, 64
      %v7529 = vpop.permute.xlu0 %7528
      %7530 = vrot.lane.b32.xlu0 %v7464, 64
      %v7531 = vpop.permute.xlu0 %7530
      %7532 = vrot.lane.b32.xlu0 %v7465, 64
      %v7533 = vpop.permute.xlu0 %7532
      %7534 = vrot.lane.b32.xlu0 %v7466, 64
      %v7535 = vpop.permute.xlu0 %7534
      %7536 = vrot.lane.b32.xlu0 %v7467, 64
      %v7537 = vpop.permute.xlu0 %7536
      %7538 = vrot.lane.b32.xlu0 %v7468, 64
      %v7539 = vpop.permute.xlu0 %7538
      %7540 = vrot.lane.b32.xlu0 %v7469, 64
      %v7541 = vpop.permute.xlu0 %7540
      %7542 = vrot.lane.b32.xlu0 %v7470, 64
      %v7543 = vpop.permute.xlu0 %7542
      %7544 = vrot.lane.b32.xlu0 %v7471, 64
      %v7545 = vpop.permute.xlu0 %7544
      %7546 = vrot.lane.b32.xlu0 %v7472, 64
      %v7547 = vpop.permute.xlu0 %7546
      %7548 = vrot.lane.b32.xlu0 %v7473, 64
      %v7549 = vpop.permute.xlu0 %7548
      %7550 = vrot.lane.b32.xlu0 %v7474, 64
      %v7551 = vpop.permute.xlu0 %7550
      %7552 = vrot.lane.b32.xlu0 %v7475, 64
      %v7553 = vpop.permute.xlu0 %7552
      %7554 = vrot.lane.b32.xlu0 %v7476, 64
      %v7555 = vpop.permute.xlu0 %7554
      %7556 = vrot.lane.b32.xlu0 %v7477, 64
      %v7557 = vpop.permute.xlu0 %7556
      %7558 = vrot.lane.b32.xlu0 %v7478, 64
      %v7559 = vpop.permute.xlu0 %7558
      %7560 = vrot.lane.b32.xlu0 %v7479, 64
      %v7561 = vpop.permute.xlu0 %7560
      %7562 = vrot.lane.b32.xlu0 %v7480, 64
      %v7563 = vpop.permute.xlu0 %7562
      %7564 = vrot.lane.b32.xlu0 %v7481, 64
      %v7565 = vpop.permute.xlu0 %7564
      %7566 = vrot.lane.b32.xlu0 %v7482, 64
      %v7567 = vpop.permute.xlu0 %7566
      %7568 = vrot.lane.b32.xlu0 %v7483, 64
      %v7569 = vpop.permute.xlu0 %7568
      %7570 = vrot.lane.b32.xlu0 %v7484, 64
      %v7571 = vpop.permute.xlu0 %7570
      %7572 = vrot.lane.b32.xlu0 %v7485, 64
      %v7573 = vpop.permute.xlu0 %7572
      %7574 = vrot.lane.b32.xlu0 %v7486, 64
      %v7575 = vpop.permute.xlu0 %7574
      %7576 = vrot.lane.b32.xlu0 %v7487, 64
      %v7577 = vpop.permute.xlu0 %7576
      %7578 = vrot.lane.b32.xlu0 %v7488, 64
      %v7579 = vpop.permute.xlu0 %7578
      %7580 = vrot.lane.b32.xlu0 %v7489, 64
      %v7581 = vpop.permute.xlu0 %7580
      %7582 = vrot.lane.b32.xlu0 %v7490, 64
      %v7583 = vpop.permute.xlu0 %7582
      %7584 = vrot.lane.b32.xlu0 %v7491, 64
      %v7585 = vpop.permute.xlu0 %7584
      %7586 = vrot.lane.b32.xlu0 %v7492, 64
      %v7587 = vpop.permute.xlu0 %7586
      %7588 = vrot.lane.b32.xlu0 %v7493, 64
      %v7589 = vpop.permute.xlu0 %7588
      %7622 = vst.msk [vmem:[#allocation5] sm:$0xf] %vm2056, %v7527
      %7623 = vst.msk [vmem:[#allocation5 + $0x14] sm:$0xf] %vm2056, %v7529
      %7624 = vst.msk [vmem:[#allocation5 + $0x28] sm:$0xf] %vm2056, %v7531
      %7625 = vst.msk [vmem:[#allocation5 + $0x3c] sm:$0xf] %vm2056, %v7533
      %7626 = vst.msk [vmem:[#allocation5 + $0x50] sm:$0xf] %vm2056, %v7535
      %7627 = vst.msk [vmem:[#allocation5 + $0x64] sm:$0xf] %vm2056, %v7537
      %7628 = vst.msk [vmem:[#allocation5 + $0x78] sm:$0xf] %vm2056, %v7539
      %7629 = vst.msk [vmem:[#allocation5 + $0x8c] sm:$0xf] %vm2056, %v7541
      %7630 = vst.msk [vmem:[#allocation5 + $0xa0] sm:$0xf] %vm2056, %v7543
      %7631 = vst.msk [vmem:[#allocation5 + $0xb4] sm:$0xf] %vm2056, %v7545
      %7632 = vst.msk [vmem:[#allocation5 + $0xc8] sm:$0xf] %vm2056, %v7547
      %7633 = vst.msk [vmem:[#allocation5 + $0xdc] sm:$0xf] %vm2056, %v7549
      %7634 = vst.msk [vmem:[#allocation5 + $0xf0] sm:$0xf] %vm2056, %v7551
      %7635 = vst.msk [vmem:[#allocation5 + $0x104] sm:$0xf] %vm2056, %v7553
      %7636 = vst.msk [vmem:[#allocation5 + $0x118] sm:$0xf] %vm2056, %v7555
      %7637 = vst.msk [vmem:[#allocation5 + $0x12c] sm:$0xf] %vm2056, %v7557
      %7638 = vst.msk [vmem:[#allocation5 + $0x140] sm:$0xf] %vm2056, %v7559
      %7639 = vst.msk [vmem:[#allocation5 + $0x154] sm:$0xf] %vm2056, %v7561
      %7640 = vst.msk [vmem:[#allocation5 + $0x168] sm:$0xf] %vm2056, %v7563
      %7641 = vst.msk [vmem:[#allocation5 + $0x17c] sm:$0xf] %vm2056, %v7565
      %7642 = vst.msk [vmem:[#allocation5 + $0x190] sm:$0xf] %vm2056, %v7567
      %7643 = vst.msk [vmem:[#allocation5 + $0x1a4] sm:$0xf] %vm2056, %v7569
      %7644 = vst.msk [vmem:[#allocation5 + $0x1b8] sm:$0xf] %vm2056, %v7571
      %7645 = vst.msk [vmem:[#allocation5 + $0x1cc] sm:$0xf] %vm2056, %v7573
      %7646 = vst.msk [vmem:[#allocation5 + $0x1e0] sm:$0xf] %vm2056, %v7575
      %7647 = vst.msk [vmem:[#allocation5 + $0x1f4] sm:$0xf] %vm2056, %v7577
      %7648 = vst.msk [vmem:[#allocation5 + $0x208] sm:$0xf] %vm2056, %v7579
      %7649 = vst.msk [vmem:[#allocation5 + $0x21c] sm:$0xf] %vm2056, %v7581
      %7650 = vst.msk [vmem:[#allocation5 + $0x230] sm:$0xf] %vm2056, %v7583
      %7651 = vst.msk [vmem:[#allocation5 + $0x244] sm:$0xf] %vm2056, %v7585
      %7652 = vst.msk [vmem:[#allocation5 + $0x258] sm:$0xf] %vm2056, %v7587
      %7653 = vst.msk [vmem:[#allocation5 + $0x26c] sm:$0xf] %vm2056, %v7589
      %v7654 = vld [vmem:[#allocation3 + $0x8] sm:$0xf]
      %v7655 = vld [vmem:[#allocation3 + $0xc] sm:$0xf]
      %v7656 = vld [vmem:[#allocation3 + $0x10] sm:$0xf]
      %v7657 = vld [vmem:[#allocation3 + $0x14] sm:$0xf]
      %v7658 = vld [vmem:[#allocation3 + $0x18] sm:$0xf]
      %v7659 = vld [vmem:[#allocation3 + $0x1c] sm:$0xf]
      %v7660 = vld [vmem:[#allocation3 + $0x20] sm:$0xf]
      %v7661 = vld [vmem:[#allocation3 + $0x24] sm:$0xf]
      %v7662 = vld [vmem:[#allocation3 + $0x28] sm:$0xf]
      %v7663 = vld [vmem:[#allocation3 + $0x2c] sm:$0xf]
      %v7664 = vld [vmem:[#allocation3 + $0x30] sm:$0xf]
      %v7665 = vld [vmem:[#allocation3 + $0x34] sm:$0xf]
      %v7666 = vld [vmem:[#allocation3 + $0x38] sm:$0xf]
      %v7667 = vld [vmem:[#allocation3 + $0x3c] sm:$0xf]
      %v7668 = vld [vmem:[#allocation3 + $0x40] sm:$0xf]
      %v7669 = vld [vmem:[#allocation3 + $0x44] sm:$0xf]
      %v7670 = vld [vmem:[#allocation3 + $0x48] sm:$0xf]
      %v7671 = vld [vmem:[#allocation3 + $0x4c] sm:$0xf]
      %v7672 = vld [vmem:[#allocation3 + $0x50] sm:$0xf]
      %v7673 = vld [vmem:[#allocation3 + $0x54] sm:$0xf]
      %v7674 = vld [vmem:[#allocation3 + $0x58] sm:$0xf]
      %v7675 = vld [vmem:[#allocation3 + $0x5c] sm:$0xf]
      %v7676 = vld [vmem:[#allocation3 + $0x60] sm:$0xf]
      %v7677 = vld [vmem:[#allocation3 + $0x64] sm:$0xf]
      %v7678 = vld [vmem:[#allocation3 + $0x68] sm:$0xf]
      %v7679 = vld [vmem:[#allocation3 + $0x6c] sm:$0xf]
      %v7680 = vld [vmem:[#allocation3 + $0x70] sm:$0xf]
      %v7681 = vld [vmem:[#allocation3 + $0x74] sm:$0xf]
      %v7682 = vld [vmem:[#allocation3 + $0x78] sm:$0xf]
      %v7683 = vld [vmem:[#allocation3 + $0x7c] sm:$0xf]
      %v7684 = vld [vmem:[#allocation3 + $0x80] sm:$0xf]
      %v7685 = vld [vmem:[#allocation3 + $0x84] sm:$0xf]
      %v7686 = vld [vmem:[#allocation3 + $0x88] sm:$0x1]
      %v7687 = vsel %vm2543, %v7654, 0
      %v7688 = vsel %vm2550, %v7655, 0
      %v7689 = vsel %vm2557, %v7656, 0
      %v7690 = vsel %vm2564, %v7657, 0
      %v7691 = vsel %vm2571, %v7658, 0
      %v7692 = vsel %vm2578, %v7659, 0
      %v7693 = vsel %vm2585, %v7660, 0
      %v7694 = vsel %vm2592, %v7661, 0
      %v7695 = vsel %vm2599, %v7662, 0
      %v7696 = vsel %vm2606, %v7663, 0
      %v7697 = vsel %vm2613, %v7664, 0
      %v7698 = vsel %vm2620, %v7665, 0
      %v7699 = vsel %vm2627, %v7666, 0
      %v7700 = vsel %vm2634, %v7667, 0
      %v7701 = vsel %vm2641, %v7668, 0
      %v7702 = vsel %vm2648, %v7669, 0
      %v7703 = vsel %vm2655, %v7670, 0
      %v7704 = vsel %vm2662, %v7671, 0
      %v7705 = vsel %vm2669, %v7672, 0
      %v7706 = vsel %vm2676, %v7673, 0
      %v7707 = vsel %vm2683, %v7674, 0
      %v7708 = vsel %vm2690, %v7675, 0
      %v7709 = vsel %vm2697, %v7676, 0
      %v7710 = vsel %vm2704, %v7677, 0
      %v7711 = vsel %vm2711, %v7678, 0
      %v7712 = vsel %vm2718, %v7679, 0
      %v7713 = vsel %vm2725, %v7680, 0
      %v7714 = vsel %vm2732, %v7681, 0
      %v7715 = vsel %vm2739, %v7682, 0
      %v7716 = vsel %vm2746, %v7683, 0
      %v7717 = vsel %vm2753, %v7684, 0
      %v7718 = vsel %vm2760, %v7685, 0
      %v7719 = vsel %vm2767, %v7686, 0
      %v7721 = vshrl.u32 %v7687, 16
      %v7723 = vrot.slane %v7721, 4
      %v7724 = vshll.u32 %v7687, 16
      %v7726 = vrot.slane %v7724, 5
      %v7727 = vor.u32 %v7723, %v7726
      %v7728 = vrot.slane %v7727, 4
      %v7730 = vshll.u32 %v7688, 16
      %v7732 = vrot.slane %v7730, 5
      %v7733 = vsel %vm953, %v7728, %v7732
      %v7734 = vshrl.u32 %v7688, 16
      %v7736 = vrot.slane %v7734, 4
      %v7737 = vor.u32 %v7736, %v7732
      %v7738 = vrot.slane %v7737, 4
      %v7740 = vshll.u32 %v7689, 16
      %v7742 = vrot.slane %v7740, 5
      %v7743 = vsel %vm953, %v7738, %v7742
      %v7744 = vshrl.u32 %v7689, 16
      %v7746 = vrot.slane %v7744, 4
      %v7747 = vor.u32 %v7746, %v7742
      %v7748 = vrot.slane %v7747, 4
      %v7750 = vshll.u32 %v7690, 16
      %v7752 = vrot.slane %v7750, 5
      %v7753 = vsel %vm953, %v7748, %v7752
      %v7754 = vshrl.u32 %v7690, 16
      %v7756 = vrot.slane %v7754, 4
      %v7757 = vor.u32 %v7756, %v7752
      %v7758 = vrot.slane %v7757, 4
      %v7760 = vshll.u32 %v7691, 16
      %v7762 = vrot.slane %v7760, 5
      %v7763 = vsel %vm953, %v7758, %v7762
      %v7764 = vshrl.u32 %v7691, 16
      %v7766 = vrot.slane %v7764, 4
      %v7767 = vor.u32 %v7766, %v7762
      %v7768 = vrot.slane %v7767, 4
      %v7770 = vshll.u32 %v7692, 16
      %v7772 = vrot.slane %v7770, 5
      %v7773 = vsel %vm953, %v7768, %v7772
      %v7774 = vshrl.u32 %v7692, 16
      %v7776 = vrot.slane %v7774, 4
      %v7777 = vor.u32 %v7776, %v7772
      %v7778 = vrot.slane %v7777, 4
      %v7780 = vshll.u32 %v7693, 16
      %v7782 = vrot.slane %v7780, 5
      %v7783 = vsel %vm953, %v7778, %v7782
      %v7784 = vshrl.u32 %v7693, 16
      %v7786 = vrot.slane %v7784, 4
      %v7787 = vor.u32 %v7786, %v7782
      %v7788 = vrot.slane %v7787, 4
      %v7790 = vshll.u32 %v7694, 16
      %v7792 = vrot.slane %v7790, 5
      %v7793 = vsel %vm953, %v7788, %v7792
      %v7794 = vshrl.u32 %v7694, 16
      %v7796 = vrot.slane %v7794, 4
      %v7797 = vor.u32 %v7796, %v7792
      %v7798 = vrot.slane %v7797, 4
      %v7800 = vshll.u32 %v7695, 16
      %v7802 = vrot.slane %v7800, 5
      %v7803 = vsel %vm953, %v7798, %v7802
      %v7804 = vshrl.u32 %v7695, 16
      %v7806 = vrot.slane %v7804, 4
      %v7807 = vor.u32 %v7806, %v7802
      %v7808 = vrot.slane %v7807, 4
      %v7810 = vshll.u32 %v7696, 16
      %v7812 = vrot.slane %v7810, 5
      %v7813 = vsel %vm953, %v7808, %v7812
      %v7814 = vshrl.u32 %v7696, 16
      %v7816 = vrot.slane %v7814, 4
      %v7817 = vor.u32 %v7816, %v7812
      %v7818 = vrot.slane %v7817, 4
      %v7820 = vshll.u32 %v7697, 16
      %v7822 = vrot.slane %v7820, 5
      %v7823 = vsel %vm953, %v7818, %v7822
      %v7824 = vshrl.u32 %v7697, 16
      %v7826 = vrot.slane %v7824, 4
      %v7827 = vor.u32 %v7826, %v7822
      %v7828 = vrot.slane %v7827, 4
      %v7830 = vshll.u32 %v7698, 16
      %v7832 = vrot.slane %v7830, 5
      %v7833 = vsel %vm953, %v7828, %v7832
      %v7834 = vshrl.u32 %v7698, 16
      %v7836 = vrot.slane %v7834, 4
      %v7837 = vor.u32 %v7836, %v7832
      %v7838 = vrot.slane %v7837, 4
      %v7840 = vshll.u32 %v7699, 16
      %v7842 = vrot.slane %v7840, 5
      %v7843 = vsel %vm953, %v7838, %v7842
      %v7844 = vshrl.u32 %v7699, 16
      %v7846 = vrot.slane %v7844, 4
      %v7847 = vor.u32 %v7846, %v7842
      %v7848 = vrot.slane %v7847, 4
      %v7850 = vshll.u32 %v7700, 16
      %v7852 = vrot.slane %v7850, 5
      %v7853 = vsel %vm953, %v7848, %v7852
      %v7854 = vshrl.u32 %v7700, 16
      %v7856 = vrot.slane %v7854, 4
      %v7857 = vor.u32 %v7856, %v7852
      %v7858 = vrot.slane %v7857, 4
      %v7860 = vshll.u32 %v7701, 16
      %v7862 = vrot.slane %v7860, 5
      %v7863 = vsel %vm953, %v7858, %v7862
      %v7864 = vshrl.u32 %v7701, 16
      %v7866 = vrot.slane %v7864, 4
      %v7867 = vor.u32 %v7866, %v7862
      %v7868 = vrot.slane %v7867, 4
      %v7870 = vshll.u32 %v7702, 16
      %v7872 = vrot.slane %v7870, 5
      %v7873 = vsel %vm953, %v7868, %v7872
      %v7874 = vshrl.u32 %v7702, 16
      %v7876 = vrot.slane %v7874, 4
      %v7877 = vor.u32 %v7876, %v7872
      %v7878 = vrot.slane %v7877, 4
      %v7880 = vshll.u32 %v7703, 16
      %v7882 = vrot.slane %v7880, 5
      %v7883 = vsel %vm953, %v7878, %v7882
      %v7884 = vshrl.u32 %v7703, 16
      %v7886 = vrot.slane %v7884, 4
      %v7887 = vor.u32 %v7886, %v7882
      %v7888 = vrot.slane %v7887, 4
      %v7890 = vshll.u32 %v7704, 16
      %v7892 = vrot.slane %v7890, 5
      %v7893 = vsel %vm953, %v7888, %v7892
      %v7894 = vshrl.u32 %v7704, 16
      %v7896 = vrot.slane %v7894, 4
      %v7897 = vor.u32 %v7896, %v7892
      %v7898 = vrot.slane %v7897, 4
      %v7900 = vshll.u32 %v7705, 16
      %v7902 = vrot.slane %v7900, 5
      %v7903 = vsel %vm953, %v7898, %v7902
      %v7904 = vshrl.u32 %v7705, 16
      %v7906 = vrot.slane %v7904, 4
      %v7907 = vor.u32 %v7906, %v7902
      %v7908 = vrot.slane %v7907, 4
      %v7910 = vshll.u32 %v7706, 16
      %v7912 = vrot.slane %v7910, 5
      %v7913 = vsel %vm953, %v7908, %v7912
      %v7914 = vshrl.u32 %v7706, 16
      %v7916 = vrot.slane %v7914, 4
      %v7917 = vor.u32 %v7916, %v7912
      %v7918 = vrot.slane %v7917, 4
      %v7920 = vshll.u32 %v7707, 16
      %v7922 = vrot.slane %v7920, 5
      %v7923 = vsel %vm953, %v7918, %v7922
      %v7924 = vshrl.u32 %v7707, 16
      %v7926 = vrot.slane %v7924, 4
      %v7927 = vor.u32 %v7926, %v7922
      %v7928 = vrot.slane %v7927, 4
      %v7930 = vshll.u32 %v7708, 16
      %v7932 = vrot.slane %v7930, 5
      %v7933 = vsel %vm953, %v7928, %v7932
      %v7934 = vshrl.u32 %v7708, 16
      %v7936 = vrot.slane %v7934, 4
      %v7937 = vor.u32 %v7936, %v7932
      %v7938 = vrot.slane %v7937, 4
      %v7940 = vshll.u32 %v7709, 16
      %v7942 = vrot.slane %v7940, 5
      %v7943 = vsel %vm953, %v7938, %v7942
      %v7944 = vshrl.u32 %v7709, 16
      %v7946 = vrot.slane %v7944, 4
      %v7947 = vor.u32 %v7946, %v7942
      %v7948 = vrot.slane %v7947, 4
      %v7950 = vshll.u32 %v7710, 16
      %v7952 = vrot.slane %v7950, 5
      %v7953 = vsel %vm953, %v7948, %v7952
      %v7954 = vshrl.u32 %v7710, 16
      %v7956 = vrot.slane %v7954, 4
      %v7957 = vor.u32 %v7956, %v7952
      %v7958 = vrot.slane %v7957, 4
      %v7960 = vshll.u32 %v7711, 16
      %v7962 = vrot.slane %v7960, 5
      %v7963 = vsel %vm953, %v7958, %v7962
      %v7964 = vshrl.u32 %v7711, 16
      %v7966 = vrot.slane %v7964, 4
      %v7967 = vor.u32 %v7966, %v7962
      %v7968 = vrot.slane %v7967, 4
      %v7970 = vshll.u32 %v7712, 16
      %v7972 = vrot.slane %v7970, 5
      %v7973 = vsel %vm953, %v7968, %v7972
      %v7974 = vshrl.u32 %v7712, 16
      %v7976 = vrot.slane %v7974, 4
      %v7977 = vor.u32 %v7976, %v7972
      %v7978 = vrot.slane %v7977, 4
      %v7980 = vshll.u32 %v7713, 16
      %v7982 = vrot.slane %v7980, 5
      %v7983 = vsel %vm953, %v7978, %v7982
      %v7984 = vshrl.u32 %v7713, 16
      %v7986 = vrot.slane %v7984, 4
      %v7987 = vor.u32 %v7986, %v7982
      %v7988 = vrot.slane %v7987, 4
      %v7990 = vshll.u32 %v7714, 16
      %v7992 = vrot.slane %v7990, 5
      %v7993 = vsel %vm953, %v7988, %v7992
      %v7994 = vshrl.u32 %v7714, 16
      %v7996 = vrot.slane %v7994, 4
      %v7997 = vor.u32 %v7996, %v7992
      %v7998 = vrot.slane %v7997, 4
      %v8000 = vshll.u32 %v7715, 16
      %v8002 = vrot.slane %v8000, 5
      %v8003 = vsel %vm953, %v7998, %v8002
      %v8004 = vshrl.u32 %v7715, 16
      %v8006 = vrot.slane %v8004, 4
      %v8007 = vor.u32 %v8006, %v8002
      %v8008 = vrot.slane %v8007, 4
      %v8010 = vshll.u32 %v7716, 16
      %v8012 = vrot.slane %v8010, 5
      %v8013 = vsel %vm953, %v8008, %v8012
      %v8014 = vshrl.u32 %v7716, 16
      %v8016 = vrot.slane %v8014, 4
      %v8017 = vor.u32 %v8016, %v8012
      %v8018 = vrot.slane %v8017, 4
      %v8020 = vshll.u32 %v7717, 16
      %v8022 = vrot.slane %v8020, 5
      %v8023 = vsel %vm953, %v8018, %v8022
      %v8024 = vshrl.u32 %v7717, 16
      %v8026 = vrot.slane %v8024, 4
      %v8027 = vor.u32 %v8026, %v8022
      %v8028 = vrot.slane %v8027, 4
      %v8030 = vshll.u32 %v7718, 16
      %v8032 = vrot.slane %v8030, 5
      %v8033 = vsel %vm953, %v8028, %v8032
      %v8034 = vshrl.u32 %v7718, 16
      %v8036 = vrot.slane %v8034, 4
      %v8037 = vor.u32 %v8036, %v8032
      %v8038 = vrot.slane %v8037, 4
      %v8040 = vshll.u32 %v7719, 16
      %v8042 = vrot.slane %v8040, 5
      %v8043 = vsel %vm953, %v8038, %v8042
      %8076 = vst.msk [vmem:[#allocation5 + $0x4] sm:$0xf] %vm709, %v7733
      %8077 = vst.msk [vmem:[#allocation5 + $0x18] sm:$0xf] %vm709, %v7743
      %8078 = vst.msk [vmem:[#allocation5 + $0x2c] sm:$0xf] %vm709, %v7753
      %8079 = vst.msk [vmem:[#allocation5 + $0x40] sm:$0xf] %vm709, %v7763
      %8080 = vst.msk [vmem:[#allocation5 + $0x54] sm:$0xf] %vm709, %v7773
      %8081 = vst.msk [vmem:[#allocation5 + $0x68] sm:$0xf] %vm709, %v7783
      %8082 = vst.msk [vmem:[#allocation5 + $0x7c] sm:$0xf] %vm709, %v7793
      %8083 = vst.msk [vmem:[#allocation5 + $0x90] sm:$0xf] %vm709, %v7803
      %8084 = vst.msk [vmem:[#allocation5 + $0xa4] sm:$0xf] %vm709, %v7813
      %8085 = vst.msk [vmem:[#allocation5 + $0xb8] sm:$0xf] %vm709, %v7823
      %8086 = vst.msk [vmem:[#allocation5 + $0xcc] sm:$0xf] %vm709, %v7833
      %8087 = vst.msk [vmem:[#allocation5 + $0xe0] sm:$0xf] %vm709, %v7843
      %8088 = vst.msk [vmem:[#allocation5 + $0xf4] sm:$0xf] %vm709, %v7853
      %8089 = vst.msk [vmem:[#allocation5 + $0x108] sm:$0xf] %vm709, %v7863
      %8090 = vst.msk [vmem:[#allocation5 + $0x11c] sm:$0xf] %vm709, %v7873
      %8091 = vst.msk [vmem:[#allocation5 + $0x130] sm:$0xf] %vm709, %v7883
      %8092 = vst.msk [vmem:[#allocation5 + $0x144] sm:$0xf] %vm709, %v7893
      %8093 = vst.msk [vmem:[#allocation5 + $0x158] sm:$0xf] %vm709, %v7903
      %8094 = vst.msk [vmem:[#allocation5 + $0x16c] sm:$0xf] %vm709, %v7913
      %8095 = vst.msk [vmem:[#allocation5 + $0x180] sm:$0xf] %vm709, %v7923
      %8096 = vst.msk [vmem:[#allocation5 + $0x194] sm:$0xf] %vm709, %v7933
      %8097 = vst.msk [vmem:[#allocation5 + $0x1a8] sm:$0xf] %vm709, %v7943
      %8098 = vst.msk [vmem:[#allocation5 + $0x1bc] sm:$0xf] %vm709, %v7953
      %8099 = vst.msk [vmem:[#allocation5 + $0x1d0] sm:$0xf] %vm709, %v7963
      %8100 = vst.msk [vmem:[#allocation5 + $0x1e4] sm:$0xf] %vm709, %v7973
      %8101 = vst.msk [vmem:[#allocation5 + $0x1f8] sm:$0xf] %vm709, %v7983
      %8102 = vst.msk [vmem:[#allocation5 + $0x20c] sm:$0xf] %vm709, %v7993
      %8103 = vst.msk [vmem:[#allocation5 + $0x220] sm:$0xf] %vm709, %v8003
      %8104 = vst.msk [vmem:[#allocation5 + $0x234] sm:$0xf] %vm709, %v8013
      %8105 = vst.msk [vmem:[#allocation5 + $0x248] sm:$0xf] %vm709, %v8023
      %8106 = vst.msk [vmem:[#allocation5 + $0x25c] sm:$0xf] %vm709, %v8033
      %8107 = vst.msk [vmem:[#allocation5 + $0x270] sm:$0xf] %vm709, %v8043
      %v8108 = vld [vmem:[#allocation3 + $0xc] sm:$0x8]
      %v8109 = vld [vmem:[#allocation3 + $0x10] sm:$0xf]
      %v8110 = vld [vmem:[#allocation3 + $0x14] sm:$0xf]
      %v8111 = vld [vmem:[#allocation3 + $0x18] sm:$0xf]
      %v8112 = vld [vmem:[#allocation3 + $0x1c] sm:$0xf]
      %v8113 = vld [vmem:[#allocation3 + $0x20] sm:$0xf]
      %v8114 = vld [vmem:[#allocation3 + $0x24] sm:$0xf]
      %v8115 = vld [vmem:[#allocation3 + $0x28] sm:$0xf]
      %v8116 = vld [vmem:[#allocation3 + $0x2c] sm:$0xf]
      %v8117 = vld [vmem:[#allocation3 + $0x30] sm:$0xf]
      %v8118 = vld [vmem:[#allocation3 + $0x34] sm:$0xf]
      %v8119 = vld [vmem:[#allocation3 + $0x38] sm:$0xf]
      %v8120 = vld [vmem:[#allocation3 + $0x3c] sm:$0xf]
      %v8121 = vld [vmem:[#allocation3 + $0x40] sm:$0xf]
      %v8122 = vld [vmem:[#allocation3 + $0x44] sm:$0xf]
      %v8123 = vld [vmem:[#allocation3 + $0x48] sm:$0xf]
      %v8124 = vld [vmem:[#allocation3 + $0x4c] sm:$0xf]
      %v8125 = vld [vmem:[#allocation3 + $0x50] sm:$0xf]
      %v8126 = vld [vmem:[#allocation3 + $0x54] sm:$0xf]
      %v8127 = vld [vmem:[#allocation3 + $0x58] sm:$0xf]
      %v8128 = vld [vmem:[#allocation3 + $0x5c] sm:$0xf]
      %v8129 = vld [vmem:[#allocation3 + $0x60] sm:$0xf]
      %v8130 = vld [vmem:[#allocation3 + $0x64] sm:$0xf]
      %v8131 = vld [vmem:[#allocation3 + $0x68] sm:$0xf]
      %v8132 = vld [vmem:[#allocation3 + $0x6c] sm:$0xf]
      %v8133 = vld [vmem:[#allocation3 + $0x70] sm:$0xf]
      %v8134 = vld [vmem:[#allocation3 + $0x74] sm:$0xf]
      %v8135 = vld [vmem:[#allocation3 + $0x78] sm:$0xf]
      %v8136 = vld [vmem:[#allocation3 + $0x7c] sm:$0xf]
      %v8137 = vld [vmem:[#allocation3 + $0x80] sm:$0xf]
      %v8138 = vld [vmem:[#allocation3 + $0x84] sm:$0xf]
      %v8139 = vld [vmem:[#allocation3 + $0x88] sm:$0xf]
      %v8140 = vld [vmem:[#allocation3 + $0x8c] sm:$0xf]
      %v8141 = vsel %vm1279, %v8108, 0
      %v8142 = vsel %vm1286, %v8109, 0
      %v8143 = vsel %vm1293, %v8110, 0
      %v8144 = vsel %vm1300, %v8111, 0
      %v8145 = vsel %vm1307, %v8112, 0
      %v8146 = vsel %vm1314, %v8113, 0
      %v8147 = vsel %vm1321, %v8114, 0
      %v8148 = vsel %vm1328, %v8115, 0
      %v8149 = vsel %vm1335, %v8116, 0
      %v8150 = vsel %vm1342, %v8117, 0
      %v8151 = vsel %vm1349, %v8118, 0
      %v8152 = vsel %vm1356, %v8119, 0
      %v8153 = vsel %vm1363, %v8120, 0
      %v8154 = vsel %vm1370, %v8121, 0
      %v8155 = vsel %vm1377, %v8122, 0
      %v8156 = vsel %vm1384, %v8123, 0
      %v8157 = vsel %vm1391, %v8124, 0
      %v8158 = vsel %vm1398, %v8125, 0
      %v8159 = vsel %vm1405, %v8126, 0
      %v8160 = vsel %vm1412, %v8127, 0
      %v8161 = vsel %vm1419, %v8128, 0
      %v8162 = vsel %vm1426, %v8129, 0
      %v8163 = vsel %vm1433, %v8130, 0
      %v8164 = vsel %vm1440, %v8131, 0
      %v8165 = vsel %vm1447, %v8132, 0
      %v8166 = vsel %vm1454, %v8133, 0
      %v8167 = vsel %vm1461, %v8134, 0
      %v8168 = vsel %vm1468, %v8135, 0
      %v8169 = vsel %vm1475, %v8136, 0
      %v8170 = vsel %vm1482, %v8137, 0
      %v8171 = vsel %vm1489, %v8138, 0
      %v8172 = vsel %vm1496, %v8139, 0
      %v8173 = vsel %vm1503, %v8140, 0
      %v8175 = vshrl.u32 %v8141, 16
      %v8177 = vrot.slane %v8175, 7
      %v8178 = vrot.slane %v8177, 4
      %v8180 = vshrl.u32 %v8142, 16
      %v8182 = vrot.slane %v8180, 7
      %v8183 = vshll.u32 %v8142, 16
      %v8185 = vor.u32 %v8182, %v8183
      %v8186 = vsel %vm1539, %v8178, %v8185
      %v8187 = vrot.slane %v8182, 4
      %v8189 = vshrl.u32 %v8143, 16
      %v8191 = vrot.slane %v8189, 7
      %v8192 = vshll.u32 %v8143, 16
      %v8194 = vor.u32 %v8191, %v8192
      %v8195 = vsel %vm1539, %v8187, %v8194
      %v8196 = vrot.slane %v8191, 4
      %v8198 = vshrl.u32 %v8144, 16
      %v8200 = vrot.slane %v8198, 7
      %v8201 = vshll.u32 %v8144, 16
      %v8203 = vor.u32 %v8200, %v8201
      %v8204 = vsel %vm1539, %v8196, %v8203
      %v8205 = vrot.slane %v8200, 4
      %v8207 = vshrl.u32 %v8145, 16
      %v8209 = vrot.slane %v8207, 7
      %v8210 = vshll.u32 %v8145, 16
      %v8212 = vor.u32 %v8209, %v8210
      %v8213 = vsel %vm1539, %v8205, %v8212
      %v8214 = vrot.slane %v8209, 4
      %v8216 = vshrl.u32 %v8146, 16
      %v8218 = vrot.slane %v8216, 7
      %v8219 = vshll.u32 %v8146, 16
      %v8221 = vor.u32 %v8218, %v8219
      %v8222 = vsel %vm1539, %v8214, %v8221
      %v8223 = vrot.slane %v8218, 4
      %v8225 = vshrl.u32 %v8147, 16
      %v8227 = vrot.slane %v8225, 7
      %v8228 = vshll.u32 %v8147, 16
      %v8230 = vor.u32 %v8227, %v8228
      %v8231 = vsel %vm1539, %v8223, %v8230
      %v8232 = vrot.slane %v8227, 4
      %v8234 = vshrl.u32 %v8148, 16
      %v8236 = vrot.slane %v8234, 7
      %v8237 = vshll.u32 %v8148, 16
      %v8239 = vor.u32 %v8236, %v8237
      %v8240 = vsel %vm1539, %v8232, %v8239
      %v8241 = vrot.slane %v8236, 4
      %v8243 = vshrl.u32 %v8149, 16
      %v8245 = vrot.slane %v8243, 7
      %v8246 = vshll.u32 %v8149, 16
      %v8248 = vor.u32 %v8245, %v8246
      %v8249 = vsel %vm1539, %v8241, %v8248
      %v8250 = vrot.slane %v8245, 4
      %v8252 = vshrl.u32 %v8150, 16
      %v8254 = vrot.slane %v8252, 7
      %v8255 = vshll.u32 %v8150, 16
      %v8257 = vor.u32 %v8254, %v8255
      %v8258 = vsel %vm1539, %v8250, %v8257
      %v8259 = vrot.slane %v8254, 4
      %v8261 = vshrl.u32 %v8151, 16
      %v8263 = vrot.slane %v8261, 7
      %v8264 = vshll.u32 %v8151, 16
      %v8266 = vor.u32 %v8263, %v8264
      %v8267 = vsel %vm1539, %v8259, %v8266
      %v8268 = vrot.slane %v8263, 4
      %v8270 = vshrl.u32 %v8152, 16
      %v8272 = vrot.slane %v8270, 7
      %v8273 = vshll.u32 %v8152, 16
      %v8275 = vor.u32 %v8272, %v8273
      %v8276 = vsel %vm1539, %v8268, %v8275
      %v8277 = vrot.slane %v8272, 4
      %v8279 = vshrl.u32 %v8153, 16
      %v8281 = vrot.slane %v8279, 7
      %v8282 = vshll.u32 %v8153, 16
      %v8284 = vor.u32 %v8281, %v8282
      %v8285 = vsel %vm1539, %v8277, %v8284
      %v8286 = vrot.slane %v8281, 4
      %v8288 = vshrl.u32 %v8154, 16
      %v8290 = vrot.slane %v8288, 7
      %v8291 = vshll.u32 %v8154, 16
      %v8293 = vor.u32 %v8290, %v8291
      %v8294 = vsel %vm1539, %v8286, %v8293
      %v8295 = vrot.slane %v8290, 4
      %v8297 = vshrl.u32 %v8155, 16
      %v8299 = vrot.slane %v8297, 7
      %v8300 = vshll.u32 %v8155, 16
      %v8302 = vor.u32 %v8299, %v8300
      %v8303 = vsel %vm1539, %v8295, %v8302
      %v8304 = vrot.slane %v8299, 4
      %v8306 = vshrl.u32 %v8156, 16
      %v8308 = vrot.slane %v8306, 7
      %v8309 = vshll.u32 %v8156, 16
      %v8311 = vor.u32 %v8308, %v8309
      %v8312 = vsel %vm1539, %v8304, %v8311
      %v8313 = vrot.slane %v8308, 4
      %v8315 = vshrl.u32 %v8157, 16
      %v8317 = vrot.slane %v8315, 7
      %v8318 = vshll.u32 %v8157, 16
      %v8320 = vor.u32 %v8317, %v8318
      %v8321 = vsel %vm1539, %v8313, %v8320
      %v8322 = vrot.slane %v8317, 4
      %v8324 = vshrl.u32 %v8158, 16
      %v8326 = vrot.slane %v8324, 7
      %v8327 = vshll.u32 %v8158, 16
      %v8329 = vor.u32 %v8326, %v8327
      %v8330 = vsel %vm1539, %v8322, %v8329
      %v8331 = vrot.slane %v8326, 4
      %v8333 = vshrl.u32 %v8159, 16
      %v8335 = vrot.slane %v8333, 7
      %v8336 = vshll.u32 %v8159, 16
      %v8338 = vor.u32 %v8335, %v8336
      %v8339 = vsel %vm1539, %v8331, %v8338
      %v8340 = vrot.slane %v8335, 4
      %v8342 = vshrl.u32 %v8160, 16
      %v8344 = vrot.slane %v8342, 7
      %v8345 = vshll.u32 %v8160, 16
      %v8347 = vor.u32 %v8344, %v8345
      %v8348 = vsel %vm1539, %v8340, %v8347
      %v8349 = vrot.slane %v8344, 4
      %v8351 = vshrl.u32 %v8161, 16
      %v8353 = vrot.slane %v8351, 7
      %v8354 = vshll.u32 %v8161, 16
      %v8356 = vor.u32 %v8353, %v8354
      %v8357 = vsel %vm1539, %v8349, %v8356
      %v8358 = vrot.slane %v8353, 4
      %v8360 = vshrl.u32 %v8162, 16
      %v8362 = vrot.slane %v8360, 7
      %v8363 = vshll.u32 %v8162, 16
      %v8365 = vor.u32 %v8362, %v8363
      %v8366 = vsel %vm1539, %v8358, %v8365
      %v8367 = vrot.slane %v8362, 4
      %v8369 = vshrl.u32 %v8163, 16
      %v8371 = vrot.slane %v8369, 7
      %v8372 = vshll.u32 %v8163, 16
      %v8374 = vor.u32 %v8371, %v8372
      %v8375 = vsel %vm1539, %v8367, %v8374
      %v8376 = vrot.slane %v8371, 4
      %v8378 = vshrl.u32 %v8164, 16
      %v8380 = vrot.slane %v8378, 7
      %v8381 = vshll.u32 %v8164, 16
      %v8383 = vor.u32 %v8380, %v8381
      %v8384 = vsel %vm1539, %v8376, %v8383
      %v8385 = vrot.slane %v8380, 4
      %v8387 = vshrl.u32 %v8165, 16
      %v8389 = vrot.slane %v8387, 7
      %v8390 = vshll.u32 %v8165, 16
      %v8392 = vor.u32 %v8389, %v8390
      %v8393 = vsel %vm1539, %v8385, %v8392
      %v8394 = vrot.slane %v8389, 4
      %v8396 = vshrl.u32 %v8166, 16
      %v8398 = vrot.slane %v8396, 7
      %v8399 = vshll.u32 %v8166, 16
      %v8401 = vor.u32 %v8398, %v8399
      %v8402 = vsel %vm1539, %v8394, %v8401
      %v8403 = vrot.slane %v8398, 4
      %v8405 = vshrl.u32 %v8167, 16
      %v8407 = vrot.slane %v8405, 7
      %v8408 = vshll.u32 %v8167, 16
      %v8410 = vor.u32 %v8407, %v8408
      %v8411 = vsel %vm1539, %v8403, %v8410
      %v8412 = vrot.slane %v8407, 4
      %v8414 = vshrl.u32 %v8168, 16
      %v8416 = vrot.slane %v8414, 7
      %v8417 = vshll.u32 %v8168, 16
      %v8419 = vor.u32 %v8416, %v8417
      %v8420 = vsel %vm1539, %v8412, %v8419
      %v8421 = vrot.slane %v8416, 4
      %v8423 = vshrl.u32 %v8169, 16
      %v8425 = vrot.slane %v8423, 7
      %v8426 = vshll.u32 %v8169, 16
      %v8428 = vor.u32 %v8425, %v8426
      %v8429 = vsel %vm1539, %v8421, %v8428
      %v8430 = vrot.slane %v8425, 4
      %v8432 = vshrl.u32 %v8170, 16
      %v8434 = vrot.slane %v8432, 7
      %v8435 = vshll.u32 %v8170, 16
      %v8437 = vor.u32 %v8434, %v8435
      %v8438 = vsel %vm1539, %v8430, %v8437
      %v8439 = vrot.slane %v8434, 4
      %v8441 = vshrl.u32 %v8171, 16
      %v8443 = vrot.slane %v8441, 7
      %v8444 = vshll.u32 %v8171, 16
      %v8446 = vor.u32 %v8443, %v8444
      %v8447 = vsel %vm1539, %v8439, %v8446
      %v8448 = vrot.slane %v8443, 4
      %v8450 = vshrl.u32 %v8172, 16
      %v8452 = vrot.slane %v8450, 7
      %v8453 = vshll.u32 %v8172, 16
      %v8455 = vor.u32 %v8452, %v8453
      %v8456 = vsel %vm1539, %v8448, %v8455
      %v8457 = vrot.slane %v8452, 4
      %v8459 = vshrl.u32 %v8173, 16
      %v8461 = vrot.slane %v8459, 7
      %v8462 = vshll.u32 %v8173, 16
      %v8464 = vor.u32 %v8461, %v8462
      %v8465 = vsel %vm1539, %v8457, %v8464
      %8466 = vrot.lane.b32.xlu0 %v8186, 64
      %v8467 = vpop.permute.xlu0 %8466
      %8468 = vrot.lane.b32.xlu0 %v8195, 64
      %v8469 = vpop.permute.xlu0 %8468
      %8470 = vrot.lane.b32.xlu0 %v8204, 64
      %v8471 = vpop.permute.xlu0 %8470
      %8472 = vrot.lane.b32.xlu0 %v8213, 64
      %v8473 = vpop.permute.xlu0 %8472
      %8474 = vrot.lane.b32.xlu0 %v8222, 64
      %v8475 = vpop.permute.xlu0 %8474
      %8476 = vrot.lane.b32.xlu0 %v8231, 64
      %v8477 = vpop.permute.xlu0 %8476
      %8478 = vrot.lane.b32.xlu0 %v8240, 64
      %v8479 = vpop.permute.xlu0 %8478
      %8480 = vrot.lane.b32.xlu0 %v8249, 64
      %v8481 = vpop.permute.xlu0 %8480
      %8482 = vrot.lane.b32.xlu0 %v8258, 64
      %v8483 = vpop.permute.xlu0 %8482
      %8484 = vrot.lane.b32.xlu0 %v8267, 64
      %v8485 = vpop.permute.xlu0 %8484
      %8486 = vrot.lane.b32.xlu0 %v8276, 64
      %v8487 = vpop.permute.xlu0 %8486
      %8488 = vrot.lane.b32.xlu0 %v8285, 64
      %v8489 = vpop.permute.xlu0 %8488
      %8490 = vrot.lane.b32.xlu0 %v8294, 64
      %v8491 = vpop.permute.xlu0 %8490
      %8492 = vrot.lane.b32.xlu0 %v8303, 64
      %v8493 = vpop.permute.xlu0 %8492
      %8494 = vrot.lane.b32.xlu0 %v8312, 64
      %v8495 = vpop.permute.xlu0 %8494
      %8496 = vrot.lane.b32.xlu0 %v8321, 64
      %v8497 = vpop.permute.xlu0 %8496
      %8498 = vrot.lane.b32.xlu0 %v8330, 64
      %v8499 = vpop.permute.xlu0 %8498
      %8500 = vrot.lane.b32.xlu0 %v8339, 64
      %v8501 = vpop.permute.xlu0 %8500
      %8502 = vrot.lane.b32.xlu0 %v8348, 64
      %v8503 = vpop.permute.xlu0 %8502
      %8504 = vrot.lane.b32.xlu0 %v8357, 64
      %v8505 = vpop.permute.xlu0 %8504
      %8506 = vrot.lane.b32.xlu0 %v8366, 64
      %v8507 = vpop.permute.xlu0 %8506
      %8508 = vrot.lane.b32.xlu0 %v8375, 64
      %v8509 = vpop.permute.xlu0 %8508
      %8510 = vrot.lane.b32.xlu0 %v8384, 64
      %v8511 = vpop.permute.xlu0 %8510
      %8512 = vrot.lane.b32.xlu0 %v8393, 64
      %v8513 = vpop.permute.xlu0 %8512
      %8514 = vrot.lane.b32.xlu0 %v8402, 64
      %v8515 = vpop.permute.xlu0 %8514
      %8516 = vrot.lane.b32.xlu0 %v8411, 64
      %v8517 = vpop.permute.xlu0 %8516
      %8518 = vrot.lane.b32.xlu0 %v8420, 64
      %v8519 = vpop.permute.xlu0 %8518
      %8520 = vrot.lane.b32.xlu0 %v8429, 64
      %v8521 = vpop.permute.xlu0 %8520
      %8522 = vrot.lane.b32.xlu0 %v8438, 64
      %v8523 = vpop.permute.xlu0 %8522
      %8524 = vrot.lane.b32.xlu0 %v8447, 64
      %v8525 = vpop.permute.xlu0 %8524
      %8526 = vrot.lane.b32.xlu0 %v8456, 64
      %v8527 = vpop.permute.xlu0 %8526
      %8528 = vrot.lane.b32.xlu0 %v8465, 64
      %v8529 = vpop.permute.xlu0 %8528
      %8562 = vst.msk [vmem:[#allocation5 + $0x4] sm:$0xf] %vm2056, %v8467
      %8563 = vst.msk [vmem:[#allocation5 + $0x18] sm:$0xf] %vm2056, %v8469
      %8564 = vst.msk [vmem:[#allocation5 + $0x2c] sm:$0xf] %vm2056, %v8471
      %8565 = vst.msk [vmem:[#allocation5 + $0x40] sm:$0xf] %vm2056, %v8473
      %8566 = vst.msk [vmem:[#allocation5 + $0x54] sm:$0xf] %vm2056, %v8475
      %8567 = vst.msk [vmem:[#allocation5 + $0x68] sm:$0xf] %vm2056, %v8477
      %8568 = vst.msk [vmem:[#allocation5 + $0x7c] sm:$0xf] %vm2056, %v8479
      %8569 = vst.msk [vmem:[#allocation5 + $0x90] sm:$0xf] %vm2056, %v8481
      %8570 = vst.msk [vmem:[#allocation5 + $0xa4] sm:$0xf] %vm2056, %v8483
      %8571 = vst.msk [vmem:[#allocation5 + $0xb8] sm:$0xf] %vm2056, %v8485
      %8572 = vst.msk [vmem:[#allocation5 + $0xcc] sm:$0xf] %vm2056, %v8487
      %8573 = vst.msk [vmem:[#allocation5 + $0xe0] sm:$0xf] %vm2056, %v8489
      %8574 = vst.msk [vmem:[#allocation5 + $0xf4] sm:$0xf] %vm2056, %v8491
      %8575 = vst.msk [vmem:[#allocation5 + $0x108] sm:$0xf] %vm2056, %v8493
      %8576 = vst.msk [vmem:[#allocation5 + $0x11c] sm:$0xf] %vm2056, %v8495
      %8577 = vst.msk [vmem:[#allocation5 + $0x130] sm:$0xf] %vm2056, %v8497
      %8578 = vst.msk [vmem:[#allocation5 + $0x144] sm:$0xf] %vm2056, %v8499
      %8579 = vst.msk [vmem:[#allocation5 + $0x158] sm:$0xf] %vm2056, %v8501
      %8580 = vst.msk [vmem:[#allocation5 + $0x16c] sm:$0xf] %vm2056, %v8503
      %8581 = vst.msk [vmem:[#allocation5 + $0x180] sm:$0xf] %vm2056, %v8505
      %8582 = vst.msk [vmem:[#allocation5 + $0x194] sm:$0xf] %vm2056, %v8507
      %8583 = vst.msk [vmem:[#allocation5 + $0x1a8] sm:$0xf] %vm2056, %v8509
      %8584 = vst.msk [vmem:[#allocation5 + $0x1bc] sm:$0xf] %vm2056, %v8511
      %8585 = vst.msk [vmem:[#allocation5 + $0x1d0] sm:$0xf] %vm2056, %v8513
      %8586 = vst.msk [vmem:[#allocation5 + $0x1e4] sm:$0xf] %vm2056, %v8515
      %8587 = vst.msk [vmem:[#allocation5 + $0x1f8] sm:$0xf] %vm2056, %v8517
      %8588 = vst.msk [vmem:[#allocation5 + $0x20c] sm:$0xf] %vm2056, %v8519
      %8589 = vst.msk [vmem:[#allocation5 + $0x220] sm:$0xf] %vm2056, %v8521
      %8590 = vst.msk [vmem:[#allocation5 + $0x234] sm:$0xf] %vm2056, %v8523
      %8591 = vst.msk [vmem:[#allocation5 + $0x248] sm:$0xf] %vm2056, %v8525
      %8592 = vst.msk [vmem:[#allocation5 + $0x25c] sm:$0xf] %vm2056, %v8527
      %8593 = vst.msk [vmem:[#allocation5 + $0x270] sm:$0xf] %vm2056, %v8529
      %v8594 = vld [vmem:[#allocation3 + $0x10] sm:$0xf]
      %v8595 = vld [vmem:[#allocation3 + $0x14] sm:$0xf]
      %v8596 = vld [vmem:[#allocation3 + $0x18] sm:$0xf]
      %v8597 = vld [vmem:[#allocation3 + $0x1c] sm:$0xf]
      %v8598 = vld [vmem:[#allocation3 + $0x20] sm:$0xf]
      %v8599 = vld [vmem:[#allocation3 + $0x24] sm:$0xf]
      %v8600 = vld [vmem:[#allocation3 + $0x28] sm:$0xf]
      %v8601 = vld [vmem:[#allocation3 + $0x2c] sm:$0xf]
      %v8602 = vld [vmem:[#allocation3 + $0x30] sm:$0xf]
      %v8603 = vld [vmem:[#allocation3 + $0x34] sm:$0xf]
      %v8604 = vld [vmem:[#allocation3 + $0x38] sm:$0xf]
      %v8605 = vld [vmem:[#allocation3 + $0x3c] sm:$0xf]
      %v8606 = vld [vmem:[#allocation3 + $0x40] sm:$0xf]
      %v8607 = vld [vmem:[#allocation3 + $0x44] sm:$0xf]
      %v8608 = vld [vmem:[#allocation3 + $0x48] sm:$0xf]
      %v8609 = vld [vmem:[#allocation3 + $0x4c] sm:$0xf]
      %v8610 = vld [vmem:[#allocation3 + $0x50] sm:$0xf]
      %v8611 = vld [vmem:[#allocation3 + $0x54] sm:$0xf]
      %v8612 = vld [vmem:[#allocation3 + $0x58] sm:$0xf]
      %v8613 = vld [vmem:[#allocation3 + $0x5c] sm:$0xf]
      %v8614 = vld [vmem:[#allocation3 + $0x60] sm:$0xf]
      %v8615 = vld [vmem:[#allocation3 + $0x64] sm:$0xf]
      %v8616 = vld [vmem:[#allocation3 + $0x68] sm:$0xf]
      %v8617 = vld [vmem:[#allocation3 + $0x6c] sm:$0xf]
      %v8618 = vld [vmem:[#allocation3 + $0x70] sm:$0xf]
      %v8619 = vld [vmem:[#allocation3 + $0x74] sm:$0xf]
      %v8620 = vld [vmem:[#allocation3 + $0x78] sm:$0xf]
      %v8621 = vld [vmem:[#allocation3 + $0x7c] sm:$0xf]
      %v8622 = vld [vmem:[#allocation3 + $0x80] sm:$0xf]
      %v8623 = vld [vmem:[#allocation3 + $0x84] sm:$0xf]
      %v8624 = vld [vmem:[#allocation3 + $0x88] sm:$0xf]
      %v8625 = vld [vmem:[#allocation3 + $0x8c] sm:$0xf]
      %8626 = vst.msk [vmem:[#allocation5 + $0x8] sm:$0xf] %vm709, %v8594
      %8627 = vst.msk [vmem:[#allocation5 + $0x1c] sm:$0xf] %vm709, %v8595
      %8628 = vst.msk [vmem:[#allocation5 + $0x30] sm:$0xf] %vm709, %v8596
      %8629 = vst.msk [vmem:[#allocation5 + $0x44] sm:$0xf] %vm709, %v8597
      %8630 = vst.msk [vmem:[#allocation5 + $0x58] sm:$0xf] %vm709, %v8598
      %8631 = vst.msk [vmem:[#allocation5 + $0x6c] sm:$0xf] %vm709, %v8599
      %8632 = vst.msk [vmem:[#allocation5 + $0x80] sm:$0xf] %vm709, %v8600
      %8633 = vst.msk [vmem:[#allocation5 + $0x94] sm:$0xf] %vm709, %v8601
      %8634 = vst.msk [vmem:[#allocation5 + $0xa8] sm:$0xf] %vm709, %v8602
      %8635 = vst.msk [vmem:[#allocation5 + $0xbc] sm:$0xf] %vm709, %v8603
      %8636 = vst.msk [vmem:[#allocation5 + $0xd0] sm:$0xf] %vm709, %v8604
      %8637 = vst.msk [vmem:[#allocation5 + $0xe4] sm:$0xf] %vm709, %v8605
      %8638 = vst.msk [vmem:[#allocation5 + $0xf8] sm:$0xf] %vm709, %v8606
      %8639 = vst.msk [vmem:[#allocation5 + $0x10c] sm:$0xf] %vm709, %v8607
      %8640 = vst.msk [vmem:[#allocation5 + $0x120] sm:$0xf] %vm709, %v8608
      %8641 = vst.msk [vmem:[#allocation5 + $0x134] sm:$0xf] %vm709, %v8609
      %8642 = vst.msk [vmem:[#allocation5 + $0x148] sm:$0xf] %vm709, %v8610
      %8643 = vst.msk [vmem:[#allocation5 + $0x15c] sm:$0xf] %vm709, %v8611
      %8644 = vst.msk [vmem:[#allocation5 + $0x170] sm:$0xf] %vm709, %v8612
      %8645 = vst.msk [vmem:[#allocation5 + $0x184] sm:$0xf] %vm709, %v8613
      %8646 = vst.msk [vmem:[#allocation5 + $0x198] sm:$0xf] %vm709, %v8614
      %8647 = vst.msk [vmem:[#allocation5 + $0x1ac] sm:$0xf] %vm709, %v8615
      %8648 = vst.msk [vmem:[#allocation5 + $0x1c0] sm:$0xf] %vm709, %v8616
      %8649 = vst.msk [vmem:[#allocation5 + $0x1d4] sm:$0xf] %vm709, %v8617
      %8650 = vst.msk [vmem:[#allocation5 + $0x1e8] sm:$0xf] %vm709, %v8618
      %8651 = vst.msk [vmem:[#allocation5 + $0x1fc] sm:$0xf] %vm709, %v8619
      %8652 = vst.msk [vmem:[#allocation5 + $0x210] sm:$0xf] %vm709, %v8620
      %8653 = vst.msk [vmem:[#allocation5 + $0x224] sm:$0xf] %vm709, %v8621
      %8654 = vst.msk [vmem:[#allocation5 + $0x238] sm:$0xf] %vm709, %v8622
      %8655 = vst.msk [vmem:[#allocation5 + $0x24c] sm:$0xf] %vm709, %v8623
      %8656 = vst.msk [vmem:[#allocation5 + $0x260] sm:$0xf] %vm709, %v8624
      %8657 = vst.msk [vmem:[#allocation5 + $0x274] sm:$0xf] %vm709, %v8625
      %v8658 = vld [vmem:[#allocation3 + $0x10] sm:$0xf]
      %v8659 = vld [vmem:[#allocation3 + $0x14] sm:$0xf]
      %v8660 = vld [vmem:[#allocation3 + $0x18] sm:$0xf]
      %v8661 = vld [vmem:[#allocation3 + $0x1c] sm:$0xf]
      %v8662 = vld [vmem:[#allocation3 + $0x20] sm:$0xf]
      %v8663 = vld [vmem:[#allocation3 + $0x24] sm:$0xf]
      %v8664 = vld [vmem:[#allocation3 + $0x28] sm:$0xf]
      %v8665 = vld [vmem:[#allocation3 + $0x2c] sm:$0xf]
      %v8666 = vld [vmem:[#allocation3 + $0x30] sm:$0xf]
      %v8667 = vld [vmem:[#allocation3 + $0x34] sm:$0xf]
      %v8668 = vld [vmem:[#allocation3 + $0x38] sm:$0xf]
      %v8669 = vld [vmem:[#allocation3 + $0x3c] sm:$0xf]
      %v8670 = vld [vmem:[#allocation3 + $0x40] sm:$0xf]
      %v8671 = vld [vmem:[#allocation3 + $0x44] sm:$0xf]
      %v8672 = vld [vmem:[#allocation3 + $0x48] sm:$0xf]
      %v8673 = vld [vmem:[#allocation3 + $0x4c] sm:$0xf]
      %v8674 = vld [vmem:[#allocation3 + $0x50] sm:$0xf]
      %v8675 = vld [vmem:[#allocation3 + $0x54] sm:$0xf]
      %v8676 = vld [vmem:[#allocation3 + $0x58] sm:$0xf]
      %v8677 = vld [vmem:[#allocation3 + $0x5c] sm:$0xf]
      %v8678 = vld [vmem:[#allocation3 + $0x60] sm:$0xf]
      %v8679 = vld [vmem:[#allocation3 + $0x64] sm:$0xf]
      %v8680 = vld [vmem:[#allocation3 + $0x68] sm:$0xf]
      %v8681 = vld [vmem:[#allocation3 + $0x6c] sm:$0xf]
      %v8682 = vld [vmem:[#allocation3 + $0x70] sm:$0xf]
      %v8683 = vld [vmem:[#allocation3 + $0x74] sm:$0xf]
      %v8684 = vld [vmem:[#allocation3 + $0x78] sm:$0xf]
      %v8685 = vld [vmem:[#allocation3 + $0x7c] sm:$0xf]
      %v8686 = vld [vmem:[#allocation3 + $0x80] sm:$0xf]
      %v8687 = vld [vmem:[#allocation3 + $0x84] sm:$0xf]
      %v8688 = vld [vmem:[#allocation3 + $0x88] sm:$0xf]
      %v8689 = vld [vmem:[#allocation3 + $0x8c] sm:$0xf]
      %v8690 = vld [vmem:[#allocation3 + $0x90] sm:$0x1]
      %v8691 = vsel %vm2543, %v8658, 0
      %v8692 = vsel %vm2550, %v8659, 0
      %v8693 = vsel %vm2557, %v8660, 0
      %v8694 = vsel %vm2564, %v8661, 0
      %v8695 = vsel %vm2571, %v8662, 0
      %v8696 = vsel %vm2578, %v8663, 0
      %v8697 = vsel %vm2585, %v8664, 0
      %v8698 = vsel %vm2592, %v8665, 0
      %v8699 = vsel %vm2599, %v8666, 0
      %v8700 = vsel %vm2606, %v8667, 0
      %v8701 = vsel %vm2613, %v8668, 0
      %v8702 = vsel %vm2620, %v8669, 0
      %v8703 = vsel %vm2627, %v8670, 0
      %v8704 = vsel %vm2634, %v8671, 0
      %v8705 = vsel %vm2641, %v8672, 0
      %v8706 = vsel %vm2648, %v8673, 0
      %v8707 = vsel %vm2655, %v8674, 0
      %v8708 = vsel %vm2662, %v8675, 0
      %v8709 = vsel %vm2669, %v8676, 0
      %v8710 = vsel %vm2676, %v8677, 0
      %v8711 = vsel %vm2683, %v8678, 0
      %v8712 = vsel %vm2690, %v8679, 0
      %v8713 = vsel %vm2697, %v8680, 0
      %v8714 = vsel %vm2704, %v8681, 0
      %v8715 = vsel %vm2711, %v8682, 0
      %v8716 = vsel %vm2718, %v8683, 0
      %v8717 = vsel %vm2725, %v8684, 0
      %v8718 = vsel %vm2732, %v8685, 0
      %v8719 = vsel %vm2739, %v8686, 0
      %v8720 = vsel %vm2746, %v8687, 0
      %v8721 = vsel %vm2753, %v8688, 0
      %v8722 = vsel %vm2760, %v8689, 0
      %v8723 = vsel %vm2767, %v8690, 0
      %v8725 = vshrl.u32 %v8691, 16
      %v8727 = vrot.slane %v8725, 4
      %v8728 = vshll.u32 %v8691, 16
      %v8730 = vrot.slane %v8728, 5
      %v8731 = vor.u32 %v8727, %v8730
      %v8732 = vrot.slane %v8731, 4
      %v8734 = vshll.u32 %v8692, 16
      %v8736 = vrot.slane %v8734, 5
      %v8737 = vsel %vm953, %v8732, %v8736
      %v8738 = vshrl.u32 %v8692, 16
      %v8740 = vrot.slane %v8738, 4
      %v8741 = vor.u32 %v8740, %v8736
      %v8742 = vrot.slane %v8741, 4
      %v8744 = vshll.u32 %v8693, 16
      %v8746 = vrot.slane %v8744, 5
      %v8747 = vsel %vm953, %v8742, %v8746
      %v8748 = vshrl.u32 %v8693, 16
      %v8750 = vrot.slane %v8748, 4
      %v8751 = vor.u32 %v8750, %v8746
      %v8752 = vrot.slane %v8751, 4
      %v8754 = vshll.u32 %v8694, 16
      %v8756 = vrot.slane %v8754, 5
      %v8757 = vsel %vm953, %v8752, %v8756
      %v8758 = vshrl.u32 %v8694, 16
      %v8760 = vrot.slane %v8758, 4
      %v8761 = vor.u32 %v8760, %v8756
      %v8762 = vrot.slane %v8761, 4
      %v8764 = vshll.u32 %v8695, 16
      %v8766 = vrot.slane %v8764, 5
      %v8767 = vsel %vm953, %v8762, %v8766
      %v8768 = vshrl.u32 %v8695, 16
      %v8770 = vrot.slane %v8768, 4
      %v8771 = vor.u32 %v8770, %v8766
      %v8772 = vrot.slane %v8771, 4
      %v8774 = vshll.u32 %v8696, 16
      %v8776 = vrot.slane %v8774, 5
      %v8777 = vsel %vm953, %v8772, %v8776
      %v8778 = vshrl.u32 %v8696, 16
      %v8780 = vrot.slane %v8778, 4
      %v8781 = vor.u32 %v8780, %v8776
      %v8782 = vrot.slane %v8781, 4
      %v8784 = vshll.u32 %v8697, 16
      %v8786 = vrot.slane %v8784, 5
      %v8787 = vsel %vm953, %v8782, %v8786
      %v8788 = vshrl.u32 %v8697, 16
      %v8790 = vrot.slane %v8788, 4
      %v8791 = vor.u32 %v8790, %v8786
      %v8792 = vrot.slane %v8791, 4
      %v8794 = vshll.u32 %v8698, 16
      %v8796 = vrot.slane %v8794, 5
      %v8797 = vsel %vm953, %v8792, %v8796
      %v8798 = vshrl.u32 %v8698, 16
      %v8800 = vrot.slane %v8798, 4
      %v8801 = vor.u32 %v8800, %v8796
      %v8802 = vrot.slane %v8801, 4
      %v8804 = vshll.u32 %v8699, 16
      %v8806 = vrot.slane %v8804, 5
      %v8807 = vsel %vm953, %v8802, %v8806
      %v8808 = vshrl.u32 %v8699, 16
      %v8810 = vrot.slane %v8808, 4
      %v8811 = vor.u32 %v8810, %v8806
      %v8812 = vrot.slane %v8811, 4
      %v8814 = vshll.u32 %v8700, 16
      %v8816 = vrot.slane %v8814, 5
      %v8817 = vsel %vm953, %v8812, %v8816
      %v8818 = vshrl.u32 %v8700, 16
      %v8820 = vrot.slane %v8818, 4
      %v8821 = vor.u32 %v8820, %v8816
      %v8822 = vrot.slane %v8821, 4
      %v8824 = vshll.u32 %v8701, 16
      %v8826 = vrot.slane %v8824, 5
      %v8827 = vsel %vm953, %v8822, %v8826
      %v8828 = vshrl.u32 %v8701, 16
      %v8830 = vrot.slane %v8828, 4
      %v8831 = vor.u32 %v8830, %v8826
      %v8832 = vrot.slane %v8831, 4
      %v8834 = vshll.u32 %v8702, 16
      %v8836 = vrot.slane %v8834, 5
      %v8837 = vsel %vm953, %v8832, %v8836
      %v8838 = vshrl.u32 %v8702, 16
      %v8840 = vrot.slane %v8838, 4
      %v8841 = vor.u32 %v8840, %v8836
      %v8842 = vrot.slane %v8841, 4
      %v8844 = vshll.u32 %v8703, 16
      %v8846 = vrot.slane %v8844, 5
      %v8847 = vsel %vm953, %v8842, %v8846
      %v8848 = vshrl.u32 %v8703, 16
      %v8850 = vrot.slane %v8848, 4
      %v8851 = vor.u32 %v8850, %v8846
      %v8852 = vrot.slane %v8851, 4
      %v8854 = vshll.u32 %v8704, 16
      %v8856 = vrot.slane %v8854, 5
      %v8857 = vsel %vm953, %v8852, %v8856
      %v8858 = vshrl.u32 %v8704, 16
      %v8860 = vrot.slane %v8858, 4
      %v8861 = vor.u32 %v8860, %v8856
      %v8862 = vrot.slane %v8861, 4
      %v8864 = vshll.u32 %v8705, 16
      %v8866 = vrot.slane %v8864, 5
      %v8867 = vsel %vm953, %v8862, %v8866
      %v8868 = vshrl.u32 %v8705, 16
      %v8870 = vrot.slane %v8868, 4
      %v8871 = vor.u32 %v8870, %v8866
      %v8872 = vrot.slane %v8871, 4
      %v8874 = vshll.u32 %v8706, 16
      %v8876 = vrot.slane %v8874, 5
      %v8877 = vsel %vm953, %v8872, %v8876
      %v8878 = vshrl.u32 %v8706, 16
      %v8880 = vrot.slane %v8878, 4
      %v8881 = vor.u32 %v8880, %v8876
      %v8882 = vrot.slane %v8881, 4
      %v8884 = vshll.u32 %v8707, 16
      %v8886 = vrot.slane %v8884, 5
      %v8887 = vsel %vm953, %v8882, %v8886
      %v8888 = vshrl.u32 %v8707, 16
      %v8890 = vrot.slane %v8888, 4
      %v8891 = vor.u32 %v8890, %v8886
      %v8892 = vrot.slane %v8891, 4
      %v8894 = vshll.u32 %v8708, 16
      %v8896 = vrot.slane %v8894, 5
      %v8897 = vsel %vm953, %v8892, %v8896
      %v8898 = vshrl.u32 %v8708, 16
      %v8900 = vrot.slane %v8898, 4
      %v8901 = vor.u32 %v8900, %v8896
      %v8902 = vrot.slane %v8901, 4
      %v8904 = vshll.u32 %v8709, 16
      %v8906 = vrot.slane %v8904, 5
      %v8907 = vsel %vm953, %v8902, %v8906
      %v8908 = vshrl.u32 %v8709, 16
      %v8910 = vrot.slane %v8908, 4
      %v8911 = vor.u32 %v8910, %v8906
      %v8912 = vrot.slane %v8911, 4
      %v8914 = vshll.u32 %v8710, 16
      %v8916 = vrot.slane %v8914, 5
      %v8917 = vsel %vm953, %v8912, %v8916
      %v8918 = vshrl.u32 %v8710, 16
      %v8920 = vrot.slane %v8918, 4
      %v8921 = vor.u32 %v8920, %v8916
      %v8922 = vrot.slane %v8921, 4
      %v8924 = vshll.u32 %v8711, 16
      %v8926 = vrot.slane %v8924, 5
      %v8927 = vsel %vm953, %v8922, %v8926
      %v8928 = vshrl.u32 %v8711, 16
      %v8930 = vrot.slane %v8928, 4
      %v8931 = vor.u32 %v8930, %v8926
      %v8932 = vrot.slane %v8931, 4
      %v8934 = vshll.u32 %v8712, 16
      %v8936 = vrot.slane %v8934, 5
      %v8937 = vsel %vm953, %v8932, %v8936
      %v8938 = vshrl.u32 %v8712, 16
      %v8940 = vrot.slane %v8938, 4
      %v8941 = vor.u32 %v8940, %v8936
      %v8942 = vrot.slane %v8941, 4
      %v8944 = vshll.u32 %v8713, 16
      %v8946 = vrot.slane %v8944, 5
      %v8947 = vsel %vm953, %v8942, %v8946
      %v8948 = vshrl.u32 %v8713, 16
      %v8950 = vrot.slane %v8948, 4
      %v8951 = vor.u32 %v8950, %v8946
      %v8952 = vrot.slane %v8951, 4
      %v8954 = vshll.u32 %v8714, 16
      %v8956 = vrot.slane %v8954, 5
      %v8957 = vsel %vm953, %v8952, %v8956
      %v8958 = vshrl.u32 %v8714, 16
      %v8960 = vrot.slane %v8958, 4
      %v8961 = vor.u32 %v8960, %v8956
      %v8962 = vrot.slane %v8961, 4
      %v8964 = vshll.u32 %v8715, 16
      %v8966 = vrot.slane %v8964, 5
      %v8967 = vsel %vm953, %v8962, %v8966
      %v8968 = vshrl.u32 %v8715, 16
      %v8970 = vrot.slane %v8968, 4
      %v8971 = vor.u32 %v8970, %v8966
      %v8972 = vrot.slane %v8971, 4
      %v8974 = vshll.u32 %v8716, 16
      %v8976 = vrot.slane %v8974, 5
      %v8977 = vsel %vm953, %v8972, %v8976
      %v8978 = vshrl.u32 %v8716, 16
      %v8980 = vrot.slane %v8978, 4
      %v8981 = vor.u32 %v8980, %v8976
      %v8982 = vrot.slane %v8981, 4
      %v8984 = vshll.u32 %v8717, 16
      %v8986 = vrot.slane %v8984, 5
      %v8987 = vsel %vm953, %v8982, %v8986
      %v8988 = vshrl.u32 %v8717, 16
      %v8990 = vrot.slane %v8988, 4
      %v8991 = vor.u32 %v8990, %v8986
      %v8992 = vrot.slane %v8991, 4
      %v8994 = vshll.u32 %v8718, 16
      %v8996 = vrot.slane %v8994, 5
      %v8997 = vsel %vm953, %v8992, %v8996
      %v8998 = vshrl.u32 %v8718, 16
      %v9000 = vrot.slane %v8998, 4
      %v9001 = vor.u32 %v9000, %v8996
      %v9002 = vrot.slane %v9001, 4
      %v9004 = vshll.u32 %v8719, 16
      %v9006 = vrot.slane %v9004, 5
      %v9007 = vsel %vm953, %v9002, %v9006
      %v9008 = vshrl.u32 %v8719, 16
      %v9010 = vrot.slane %v9008, 4
      %v9011 = vor.u32 %v9010, %v9006
      %v9012 = vrot.slane %v9011, 4
      %v9014 = vshll.u32 %v8720, 16
      %v9016 = vrot.slane %v9014, 5
      %v9017 = vsel %vm953, %v9012, %v9016
      %v9018 = vshrl.u32 %v8720, 16
      %v9020 = vrot.slane %v9018, 4
      %v9021 = vor.u32 %v9020, %v9016
      %v9022 = vrot.slane %v9021, 4
      %v9024 = vshll.u32 %v8721, 16
      %v9026 = vrot.slane %v9024, 5
      %v9027 = vsel %vm953, %v9022, %v9026
      %v9028 = vshrl.u32 %v8721, 16
      %v9030 = vrot.slane %v9028, 4
      %v9031 = vor.u32 %v9030, %v9026
      %v9032 = vrot.slane %v9031, 4
      %v9034 = vshll.u32 %v8722, 16
      %v9036 = vrot.slane %v9034, 5
      %v9037 = vsel %vm953, %v9032, %v9036
      %v9038 = vshrl.u32 %v8722, 16
      %v9040 = vrot.slane %v9038, 4
      %v9041 = vor.u32 %v9040, %v9036
      %v9042 = vrot.slane %v9041, 4
      %v9044 = vshll.u32 %v8723, 16
      %v9046 = vrot.slane %v9044, 5
      %v9047 = vsel %vm953, %v9042, %v9046
      %9048 = vrot.lane.b32.xlu0 %v8737, 64
      %v9049 = vpop.permute.xlu0 %9048
      %9050 = vrot.lane.b32.xlu0 %v8747, 64
      %v9051 = vpop.permute.xlu0 %9050
      %9052 = vrot.lane.b32.xlu0 %v8757, 64
      %v9053 = vpop.permute.xlu0 %9052
      %9054 = vrot.lane.b32.xlu0 %v8767, 64
      %v9055 = vpop.permute.xlu0 %9054
      %9056 = vrot.lane.b32.xlu0 %v8777, 64
      %v9057 = vpop.permute.xlu0 %9056
      %9058 = vrot.lane.b32.xlu0 %v8787, 64
      %v9059 = vpop.permute.xlu0 %9058
      %9060 = vrot.lane.b32.xlu0 %v8797, 64
      %v9061 = vpop.permute.xlu0 %9060
      %9062 = vrot.lane.b32.xlu0 %v8807, 64
      %v9063 = vpop.permute.xlu0 %9062
      %9064 = vrot.lane.b32.xlu0 %v8817, 64
      %v9065 = vpop.permute.xlu0 %9064
      %9066 = vrot.lane.b32.xlu0 %v8827, 64
      %v9067 = vpop.permute.xlu0 %9066
      %9068 = vrot.lane.b32.xlu0 %v8837, 64
      %v9069 = vpop.permute.xlu0 %9068
      %9070 = vrot.lane.b32.xlu0 %v8847, 64
      %v9071 = vpop.permute.xlu0 %9070
      %9072 = vrot.lane.b32.xlu0 %v8857, 64
      %v9073 = vpop.permute.xlu0 %9072
      %9074 = vrot.lane.b32.xlu0 %v8867, 64
      %v9075 = vpop.permute.xlu0 %9074
      %9076 = vrot.lane.b32.xlu0 %v8877, 64
      %v9077 = vpop.permute.xlu0 %9076
      %9078 = vrot.lane.b32.xlu0 %v8887, 64
      %v9079 = vpop.permute.xlu0 %9078
      %9080 = vrot.lane.b32.xlu0 %v8897, 64
      %v9081 = vpop.permute.xlu0 %9080
      %9082 = vrot.lane.b32.xlu0 %v8907, 64
      %v9083 = vpop.permute.xlu0 %9082
      %9084 = vrot.lane.b32.xlu0 %v8917, 64
      %v9085 = vpop.permute.xlu0 %9084
      %9086 = vrot.lane.b32.xlu0 %v8927, 64
      %v9087 = vpop.permute.xlu0 %9086
      %9088 = vrot.lane.b32.xlu0 %v8937, 64
      %v9089 = vpop.permute.xlu0 %9088
      %9090 = vrot.lane.b32.xlu0 %v8947, 64
      %v9091 = vpop.permute.xlu0 %9090
      %9092 = vrot.lane.b32.xlu0 %v8957, 64
      %v9093 = vpop.permute.xlu0 %9092
      %9094 = vrot.lane.b32.xlu0 %v8967, 64
      %v9095 = vpop.permute.xlu0 %9094
      %9096 = vrot.lane.b32.xlu0 %v8977, 64
      %v9097 = vpop.permute.xlu0 %9096
      %9098 = vrot.lane.b32.xlu0 %v8987, 64
      %v9099 = vpop.permute.xlu0 %9098
      %9100 = vrot.lane.b32.xlu0 %v8997, 64
      %v9101 = vpop.permute.xlu0 %9100
      %9102 = vrot.lane.b32.xlu0 %v9007, 64
      %v9103 = vpop.permute.xlu0 %9102
      %9104 = vrot.lane.b32.xlu0 %v9017, 64
      %v9105 = vpop.permute.xlu0 %9104
      %9106 = vrot.lane.b32.xlu0 %v9027, 64
      %v9107 = vpop.permute.xlu0 %9106
      %9108 = vrot.lane.b32.xlu0 %v9037, 64
      %v9109 = vpop.permute.xlu0 %9108
      %9110 = vrot.lane.b32.xlu0 %v9047, 64
      %v9111 = vpop.permute.xlu0 %9110
      %9144 = vst.msk [vmem:[#allocation5 + $0x8] sm:$0xf] %vm2056, %v9049
      %9145 = vst.msk [vmem:[#allocation5 + $0x1c] sm:$0xf] %vm2056, %v9051
      %9146 = vst.msk [vmem:[#allocation5 + $0x30] sm:$0xf] %vm2056, %v9053
      %9147 = vst.msk [vmem:[#allocation5 + $0x44] sm:$0xf] %vm2056, %v9055
      %9148 = vst.msk [vmem:[#allocation5 + $0x58] sm:$0xf] %vm2056, %v9057
      %9149 = vst.msk [vmem:[#allocation5 + $0x6c] sm:$0xf] %vm2056, %v9059
      %9150 = vst.msk [vmem:[#allocation5 + $0x80] sm:$0xf] %vm2056, %v9061
      %9151 = vst.msk [vmem:[#allocation5 + $0x94] sm:$0xf] %vm2056, %v9063
      %9152 = vst.msk [vmem:[#allocation5 + $0xa8] sm:$0xf] %vm2056, %v9065
      %9153 = vst.msk [vmem:[#allocation5 + $0xbc] sm:$0xf] %vm2056, %v9067
      %9154 = vst.msk [vmem:[#allocation5 + $0xd0] sm:$0xf] %vm2056, %v9069
      %9155 = vst.msk [vmem:[#allocation5 + $0xe4] sm:$0xf] %vm2056, %v9071
      %9156 = vst.msk [vmem:[#allocation5 + $0xf8] sm:$0xf] %vm2056, %v9073
      %9157 = vst.msk [vmem:[#allocation5 + $0x10c] sm:$0xf] %vm2056, %v9075
      %9158 = vst.msk [vmem:[#allocation5 + $0x120] sm:$0xf] %vm2056, %v9077
      %9159 = vst.msk [vmem:[#allocation5 + $0x134] sm:$0xf] %vm2056, %v9079
      %9160 = vst.msk [vmem:[#allocation5 + $0x148] sm:$0xf] %vm2056, %v9081
      %9161 = vst.msk [vmem:[#allocation5 + $0x15c] sm:$0xf] %vm2056, %v9083
      %9162 = vst.msk [vmem:[#allocation5 + $0x170] sm:$0xf] %vm2056, %v9085
      %9163 = vst.msk [vmem:[#allocation5 + $0x184] sm:$0xf] %vm2056, %v9087
      %9164 = vst.msk [vmem:[#allocation5 + $0x198] sm:$0xf] %vm2056, %v9089
      %9165 = vst.msk [vmem:[#allocation5 + $0x1ac] sm:$0xf] %vm2056, %v9091
      %9166 = vst.msk [vmem:[#allocation5 + $0x1c0] sm:$0xf] %vm2056, %v9093
      %9167 = vst.msk [vmem:[#allocation5 + $0x1d4] sm:$0xf] %vm2056, %v9095
      %9168 = vst.msk [vmem:[#allocation5 + $0x1e8] sm:$0xf] %vm2056, %v9097
      %9169 = vst.msk [vmem:[#allocation5 + $0x1fc] sm:$0xf] %vm2056, %v9099
      %9170 = vst.msk [vmem:[#allocation5 + $0x210] sm:$0xf] %vm2056, %v9101
      %9171 = vst.msk [vmem:[#allocation5 + $0x224] sm:$0xf] %vm2056, %v9103
      %9172 = vst.msk [vmem:[#allocation5 + $0x238] sm:$0xf] %vm2056, %v9105
      %9173 = vst.msk [vmem:[#allocation5 + $0x24c] sm:$0xf] %vm2056, %v9107
      %9174 = vst.msk [vmem:[#allocation5 + $0x260] sm:$0xf] %vm2056, %v9109
      %9175 = vst.msk [vmem:[#allocation5 + $0x274] sm:$0xf] %vm2056, %v9111
      %v9176 = vld [vmem:[#allocation3 + $0x14] sm:$0x8]
      %v9177 = vld [vmem:[#allocation3 + $0x18] sm:$0xf]
      %v9178 = vld [vmem:[#allocation3 + $0x1c] sm:$0xf]
      %v9179 = vld [vmem:[#allocation3 + $0x20] sm:$0xf]
      %v9180 = vld [vmem:[#allocation3 + $0x24] sm:$0xf]
      %v9181 = vld [vmem:[#allocation3 + $0x28] sm:$0xf]
      %v9182 = vld [vmem:[#allocation3 + $0x2c] sm:$0xf]
      %v9183 = vld [vmem:[#allocation3 + $0x30] sm:$0xf]
      %v9184 = vld [vmem:[#allocation3 + $0x34] sm:$0xf]
      %v9185 = vld [vmem:[#allocation3 + $0x38] sm:$0xf]
      %v9186 = vld [vmem:[#allocation3 + $0x3c] sm:$0xf]
      %v9187 = vld [vmem:[#allocation3 + $0x40] sm:$0xf]
      %v9188 = vld [vmem:[#allocation3 + $0x44] sm:$0xf]
      %v9189 = vld [vmem:[#allocation3 + $0x48] sm:$0xf]
      %v9190 = vld [vmem:[#allocation3 + $0x4c] sm:$0xf]
      %v9191 = vld [vmem:[#allocation3 + $0x50] sm:$0xf]
      %v9192 = vld [vmem:[#allocation3 + $0x54] sm:$0xf]
      %v9193 = vld [vmem:[#allocation3 + $0x58] sm:$0xf]
      %v9194 = vld [vmem:[#allocation3 + $0x5c] sm:$0xf]
      %v9195 = vld [vmem:[#allocation3 + $0x60] sm:$0xf]
      %v9196 = vld [vmem:[#allocation3 + $0x64] sm:$0xf]
      %v9197 = vld [vmem:[#allocation3 + $0x68] sm:$0xf]
      %v9198 = vld [vmem:[#allocation3 + $0x6c] sm:$0xf]
      %v9199 = vld [vmem:[#allocation3 + $0x70] sm:$0xf]
      %v9200 = vld [vmem:[#allocation3 + $0x74] sm:$0xf]
      %v9201 = vld [vmem:[#allocation3 + $0x78] sm:$0xf]
      %v9202 = vld [vmem:[#allocation3 + $0x7c] sm:$0xf]
      %v9203 = vld [vmem:[#allocation3 + $0x80] sm:$0xf]
      %v9204 = vld [vmem:[#allocation3 + $0x84] sm:$0xf]
      %v9205 = vld [vmem:[#allocation3 + $0x88] sm:$0xf]
      %v9206 = vld [vmem:[#allocation3 + $0x8c] sm:$0xf]
      %v9207 = vld [vmem:[#allocation3 + $0x90] sm:$0xf]
      %v9208 = vld [vmem:[#allocation3 + $0x94] sm:$0xf]
      %v9209 = vsel %vm1279, %v9176, 0
      %v9210 = vsel %vm1286, %v9177, 0
      %v9211 = vsel %vm1293, %v9178, 0
      %v9212 = vsel %vm1300, %v9179, 0
      %v9213 = vsel %vm1307, %v9180, 0
      %v9214 = vsel %vm1314, %v9181, 0
      %v9215 = vsel %vm1321, %v9182, 0
      %v9216 = vsel %vm1328, %v9183, 0
      %v9217 = vsel %vm1335, %v9184, 0
      %v9218 = vsel %vm1342, %v9185, 0
      %v9219 = vsel %vm1349, %v9186, 0
      %v9220 = vsel %vm1356, %v9187, 0
      %v9221 = vsel %vm1363, %v9188, 0
      %v9222 = vsel %vm1370, %v9189, 0
      %v9223 = vsel %vm1377, %v9190, 0
      %v9224 = vsel %vm1384, %v9191, 0
      %v9225 = vsel %vm1391, %v9192, 0
      %v9226 = vsel %vm1398, %v9193, 0
      %v9227 = vsel %vm1405, %v9194, 0
      %v9228 = vsel %vm1412, %v9195, 0
      %v9229 = vsel %vm1419, %v9196, 0
      %v9230 = vsel %vm1426, %v9197, 0
      %v9231 = vsel %vm1433, %v9198, 0
      %v9232 = vsel %vm1440, %v9199, 0
      %v9233 = vsel %vm1447, %v9200, 0
      %v9234 = vsel %vm1454, %v9201, 0
      %v9235 = vsel %vm1461, %v9202, 0
      %v9236 = vsel %vm1468, %v9203, 0
      %v9237 = vsel %vm1475, %v9204, 0
      %v9238 = vsel %vm1482, %v9205, 0
      %v9239 = vsel %vm1489, %v9206, 0
      %v9240 = vsel %vm1496, %v9207, 0
      %v9241 = vsel %vm1503, %v9208, 0
      %v9243 = vshrl.u32 %v9209, 16
      %v9245 = vrot.slane %v9243, 7
      %v9246 = vrot.slane %v9245, 4
      %v9248 = vshrl.u32 %v9210, 16
      %v9250 = vrot.slane %v9248, 7
      %v9251 = vshll.u32 %v9210, 16
      %v9253 = vor.u32 %v9250, %v9251
      %v9254 = vsel %vm1539, %v9246, %v9253
      %v9255 = vrot.slane %v9250, 4
      %v9257 = vshrl.u32 %v9211, 16
      %v9259 = vrot.slane %v9257, 7
      %v9260 = vshll.u32 %v9211, 16
      %v9262 = vor.u32 %v9259, %v9260
      %v9263 = vsel %vm1539, %v9255, %v9262
      %v9264 = vrot.slane %v9259, 4
      %v9266 = vshrl.u32 %v9212, 16
      %v9268 = vrot.slane %v9266, 7
      %v9269 = vshll.u32 %v9212, 16
      %v9271 = vor.u32 %v9268, %v9269
      %v9272 = vsel %vm1539, %v9264, %v9271
      %v9273 = vrot.slane %v9268, 4
      %v9275 = vshrl.u32 %v9213, 16
      %v9277 = vrot.slane %v9275, 7
      %v9278 = vshll.u32 %v9213, 16
      %v9280 = vor.u32 %v9277, %v9278
      %v9281 = vsel %vm1539, %v9273, %v9280
      %v9282 = vrot.slane %v9277, 4
      %v9284 = vshrl.u32 %v9214, 16
      %v9286 = vrot.slane %v9284, 7
      %v9287 = vshll.u32 %v9214, 16
      %v9289 = vor.u32 %v9286, %v9287
      %v9290 = vsel %vm1539, %v9282, %v9289
      %v9291 = vrot.slane %v9286, 4
      %v9293 = vshrl.u32 %v9215, 16
      %v9295 = vrot.slane %v9293, 7
      %v9296 = vshll.u32 %v9215, 16
      %v9298 = vor.u32 %v9295, %v9296
      %v9299 = vsel %vm1539, %v9291, %v9298
      %v9300 = vrot.slane %v9295, 4
      %v9302 = vshrl.u32 %v9216, 16
      %v9304 = vrot.slane %v9302, 7
      %v9305 = vshll.u32 %v9216, 16
      %v9307 = vor.u32 %v9304, %v9305
      %v9308 = vsel %vm1539, %v9300, %v9307
      %v9309 = vrot.slane %v9304, 4
      %v9311 = vshrl.u32 %v9217, 16
      %v9313 = vrot.slane %v9311, 7
      %v9314 = vshll.u32 %v9217, 16
      %v9316 = vor.u32 %v9313, %v9314
      %v9317 = vsel %vm1539, %v9309, %v9316
      %v9318 = vrot.slane %v9313, 4
      %v9320 = vshrl.u32 %v9218, 16
      %v9322 = vrot.slane %v9320, 7
      %v9323 = vshll.u32 %v9218, 16
      %v9325 = vor.u32 %v9322, %v9323
      %v9326 = vsel %vm1539, %v9318, %v9325
      %v9327 = vrot.slane %v9322, 4
      %v9329 = vshrl.u32 %v9219, 16
      %v9331 = vrot.slane %v9329, 7
      %v9332 = vshll.u32 %v9219, 16
      %v9334 = vor.u32 %v9331, %v9332
      %v9335 = vsel %vm1539, %v9327, %v9334
      %v9336 = vrot.slane %v9331, 4
      %v9338 = vshrl.u32 %v9220, 16
      %v9340 = vrot.slane %v9338, 7
      %v9341 = vshll.u32 %v9220, 16
      %v9343 = vor.u32 %v9340, %v9341
      %v9344 = vsel %vm1539, %v9336, %v9343
      %v9345 = vrot.slane %v9340, 4
      %v9347 = vshrl.u32 %v9221, 16
      %v9349 = vrot.slane %v9347, 7
      %v9350 = vshll.u32 %v9221, 16
      %v9352 = vor.u32 %v9349, %v9350
      %v9353 = vsel %vm1539, %v9345, %v9352
      %v9354 = vrot.slane %v9349, 4
      %v9356 = vshrl.u32 %v9222, 16
      %v9358 = vrot.slane %v9356, 7
      %v9359 = vshll.u32 %v9222, 16
      %v9361 = vor.u32 %v9358, %v9359
      %v9362 = vsel %vm1539, %v9354, %v9361
      %v9363 = vrot.slane %v9358, 4
      %v9365 = vshrl.u32 %v9223, 16
      %v9367 = vrot.slane %v9365, 7
      %v9368 = vshll.u32 %v9223, 16
      %v9370 = vor.u32 %v9367, %v9368
      %v9371 = vsel %vm1539, %v9363, %v9370
      %v9372 = vrot.slane %v9367, 4
      %v9374 = vshrl.u32 %v9224, 16
      %v9376 = vrot.slane %v9374, 7
      %v9377 = vshll.u32 %v9224, 16
      %v9379 = vor.u32 %v9376, %v9377
      %v9380 = vsel %vm1539, %v9372, %v9379
      %v9381 = vrot.slane %v9376, 4
      %v9383 = vshrl.u32 %v9225, 16
      %v9385 = vrot.slane %v9383, 7
      %v9386 = vshll.u32 %v9225, 16
      %v9388 = vor.u32 %v9385, %v9386
      %v9389 = vsel %vm1539, %v9381, %v9388
      %v9390 = vrot.slane %v9385, 4
      %v9392 = vshrl.u32 %v9226, 16
      %v9394 = vrot.slane %v9392, 7
      %v9395 = vshll.u32 %v9226, 16
      %v9397 = vor.u32 %v9394, %v9395
      %v9398 = vsel %vm1539, %v9390, %v9397
      %v9399 = vrot.slane %v9394, 4
      %v9401 = vshrl.u32 %v9227, 16
      %v9403 = vrot.slane %v9401, 7
      %v9404 = vshll.u32 %v9227, 16
      %v9406 = vor.u32 %v9403, %v9404
      %v9407 = vsel %vm1539, %v9399, %v9406
      %v9408 = vrot.slane %v9403, 4
      %v9410 = vshrl.u32 %v9228, 16
      %v9412 = vrot.slane %v9410, 7
      %v9413 = vshll.u32 %v9228, 16
      %v9415 = vor.u32 %v9412, %v9413
      %v9416 = vsel %vm1539, %v9408, %v9415
      %v9417 = vrot.slane %v9412, 4
      %v9419 = vshrl.u32 %v9229, 16
      %v9421 = vrot.slane %v9419, 7
      %v9422 = vshll.u32 %v9229, 16
      %v9424 = vor.u32 %v9421, %v9422
      %v9425 = vsel %vm1539, %v9417, %v9424
      %v9426 = vrot.slane %v9421, 4
      %v9428 = vshrl.u32 %v9230, 16
      %v9430 = vrot.slane %v9428, 7
      %v9431 = vshll.u32 %v9230, 16
      %v9433 = vor.u32 %v9430, %v9431
      %v9434 = vsel %vm1539, %v9426, %v9433
      %v9435 = vrot.slane %v9430, 4
      %v9437 = vshrl.u32 %v9231, 16
      %v9439 = vrot.slane %v9437, 7
      %v9440 = vshll.u32 %v9231, 16
      %v9442 = vor.u32 %v9439, %v9440
      %v9443 = vsel %vm1539, %v9435, %v9442
      %v9444 = vrot.slane %v9439, 4
      %v9446 = vshrl.u32 %v9232, 16
      %v9448 = vrot.slane %v9446, 7
      %v9449 = vshll.u32 %v9232, 16
      %v9451 = vor.u32 %v9448, %v9449
      %v9452 = vsel %vm1539, %v9444, %v9451
      %v9453 = vrot.slane %v9448, 4
      %v9455 = vshrl.u32 %v9233, 16
      %v9457 = vrot.slane %v9455, 7
      %v9458 = vshll.u32 %v9233, 16
      %v9460 = vor.u32 %v9457, %v9458
      %v9461 = vsel %vm1539, %v9453, %v9460
      %v9462 = vrot.slane %v9457, 4
      %v9464 = vshrl.u32 %v9234, 16
      %v9466 = vrot.slane %v9464, 7
      %v9467 = vshll.u32 %v9234, 16
      %v9469 = vor.u32 %v9466, %v9467
      %v9470 = vsel %vm1539, %v9462, %v9469
      %v9471 = vrot.slane %v9466, 4
      %v9473 = vshrl.u32 %v9235, 16
      %v9475 = vrot.slane %v9473, 7
      %v9476 = vshll.u32 %v9235, 16
      %v9478 = vor.u32 %v9475, %v9476
      %v9479 = vsel %vm1539, %v9471, %v9478
      %v9480 = vrot.slane %v9475, 4
      %v9482 = vshrl.u32 %v9236, 16
      %v9484 = vrot.slane %v9482, 7
      %v9485 = vshll.u32 %v9236, 16
      %v9487 = vor.u32 %v9484, %v9485
      %v9488 = vsel %vm1539, %v9480, %v9487
      %v9489 = vrot.slane %v9484, 4
      %v9491 = vshrl.u32 %v9237, 16
      %v9493 = vrot.slane %v9491, 7
      %v9494 = vshll.u32 %v9237, 16
      %v9496 = vor.u32 %v9493, %v9494
      %v9497 = vsel %vm1539, %v9489, %v9496
      %v9498 = vrot.slane %v9493, 4
      %v9500 = vshrl.u32 %v9238, 16
      %v9502 = vrot.slane %v9500, 7
      %v9503 = vshll.u32 %v9238, 16
      %v9505 = vor.u32 %v9502, %v9503
      %v9506 = vsel %vm1539, %v9498, %v9505
      %v9507 = vrot.slane %v9502, 4
      %v9509 = vshrl.u32 %v9239, 16
      %v9511 = vrot.slane %v9509, 7
      %v9512 = vshll.u32 %v9239, 16
      %v9514 = vor.u32 %v9511, %v9512
      %v9515 = vsel %vm1539, %v9507, %v9514
      %v9516 = vrot.slane %v9511, 4
      %v9518 = vshrl.u32 %v9240, 16
      %v9520 = vrot.slane %v9518, 7
      %v9521 = vshll.u32 %v9240, 16
      %v9523 = vor.u32 %v9520, %v9521
      %v9524 = vsel %vm1539, %v9516, %v9523
      %v9525 = vrot.slane %v9520, 4
      %v9527 = vshrl.u32 %v9241, 16
      %v9529 = vrot.slane %v9527, 7
      %v9530 = vshll.u32 %v9241, 16
      %v9532 = vor.u32 %v9529, %v9530
      %v9533 = vsel %vm1539, %v9525, %v9532
      %9566 = vst.msk [vmem:[#allocation5 + $0xc] sm:$0xf] %vm709, %v9254
      %9567 = vst.msk [vmem:[#allocation5 + $0x20] sm:$0xf] %vm709, %v9263
      %9568 = vst.msk [vmem:[#allocation5 + $0x34] sm:$0xf] %vm709, %v9272
      %9569 = vst.msk [vmem:[#allocation5 + $0x48] sm:$0xf] %vm709, %v9281
      %9570 = vst.msk [vmem:[#allocation5 + $0x5c] sm:$0xf] %vm709, %v9290
      %9571 = vst.msk [vmem:[#allocation5 + $0x70] sm:$0xf] %vm709, %v9299
      %9572 = vst.msk [vmem:[#allocation5 + $0x84] sm:$0xf] %vm709, %v9308
      %9573 = vst.msk [vmem:[#allocation5 + $0x98] sm:$0xf] %vm709, %v9317
      %9574 = vst.msk [vmem:[#allocation5 + $0xac] sm:$0xf] %vm709, %v9326
      %9575 = vst.msk [vmem:[#allocation5 + $0xc0] sm:$0xf] %vm709, %v9335
      %9576 = vst.msk [vmem:[#allocation5 + $0xd4] sm:$0xf] %vm709, %v9344
      %9577 = vst.msk [vmem:[#allocation5 + $0xe8] sm:$0xf] %vm709, %v9353
      %9578 = vst.msk [vmem:[#allocation5 + $0xfc] sm:$0xf] %vm709, %v9362
      %9579 = vst.msk [vmem:[#allocation5 + $0x110] sm:$0xf] %vm709, %v9371
      %9580 = vst.msk [vmem:[#allocation5 + $0x124] sm:$0xf] %vm709, %v9380
      %9581 = vst.msk [vmem:[#allocation5 + $0x138] sm:$0xf] %vm709, %v9389
      %9582 = vst.msk [vmem:[#allocation5 + $0x14c] sm:$0xf] %vm709, %v9398
      %9583 = vst.msk [vmem:[#allocation5 + $0x160] sm:$0xf] %vm709, %v9407
      %9584 = vst.msk [vmem:[#allocation5 + $0x174] sm:$0xf] %vm709, %v9416
      %9585 = vst.msk [vmem:[#allocation5 + $0x188] sm:$0xf] %vm709, %v9425
      %9586 = vst.msk [vmem:[#allocation5 + $0x19c] sm:$0xf] %vm709, %v9434
      %9587 = vst.msk [vmem:[#allocation5 + $0x1b0] sm:$0xf] %vm709, %v9443
      %9588 = vst.msk [vmem:[#allocation5 + $0x1c4] sm:$0xf] %vm709, %v9452
      %9589 = vst.msk [vmem:[#allocation5 + $0x1d8] sm:$0xf] %vm709, %v9461
      %9590 = vst.msk [vmem:[#allocation5 + $0x1ec] sm:$0xf] %vm709, %v9470
      %9591 = vst.msk [vmem:[#allocation5 + $0x200] sm:$0xf] %vm709, %v9479
      %9592 = vst.msk [vmem:[#allocation5 + $0x214] sm:$0xf] %vm709, %v9488
      %9593 = vst.msk [vmem:[#allocation5 + $0x228] sm:$0xf] %vm709, %v9497
      %9594 = vst.msk [vmem:[#allocation5 + $0x23c] sm:$0xf] %vm709, %v9506
      %9595 = vst.msk [vmem:[#allocation5 + $0x250] sm:$0xf] %vm709, %v9515
      %9596 = vst.msk [vmem:[#allocation5 + $0x264] sm:$0xf] %vm709, %v9524
      %9597 = vst.msk [vmem:[#allocation5 + $0x278] sm:$0xf] %vm709, %v9533
      %v9598 = vld [vmem:[#allocation3 + $0x18] sm:$0xf]
      %v9599 = vld [vmem:[#allocation3 + $0x1c] sm:$0xf]
      %v9600 = vld [vmem:[#allocation3 + $0x20] sm:$0xf]
      %v9601 = vld [vmem:[#allocation3 + $0x24] sm:$0xf]
      %v9602 = vld [vmem:[#allocation3 + $0x28] sm:$0xf]
      %v9603 = vld [vmem:[#allocation3 + $0x2c] sm:$0xf]
      %v9604 = vld [vmem:[#allocation3 + $0x30] sm:$0xf]
      %v9605 = vld [vmem:[#allocation3 + $0x34] sm:$0xf]
      %v9606 = vld [vmem:[#allocation3 + $0x38] sm:$0xf]
      %v9607 = vld [vmem:[#allocation3 + $0x3c] sm:$0xf]
      %v9608 = vld [vmem:[#allocation3 + $0x40] sm:$0xf]
      %v9609 = vld [vmem:[#allocation3 + $0x44] sm:$0xf]
      %v9610 = vld [vmem:[#allocation3 + $0x48] sm:$0xf]
      %v9611 = vld [vmem:[#allocation3 + $0x4c] sm:$0xf]
      %v9612 = vld [vmem:[#allocation3 + $0x50] sm:$0xf]
      %v9613 = vld [vmem:[#allocation3 + $0x54] sm:$0xf]
      %v9614 = vld [vmem:[#allocation3 + $0x58] sm:$0xf]
      %v9615 = vld [vmem:[#allocation3 + $0x5c] sm:$0xf]
      %v9616 = vld [vmem:[#allocation3 + $0x60] sm:$0xf]
      %v9617 = vld [vmem:[#allocation3 + $0x64] sm:$0xf]
      %v9618 = vld [vmem:[#allocation3 + $0x68] sm:$0xf]
      %v9619 = vld [vmem:[#allocation3 + $0x6c] sm:$0xf]
      %v9620 = vld [vmem:[#allocation3 + $0x70] sm:$0xf]
      %v9621 = vld [vmem:[#allocation3 + $0x74] sm:$0xf]
      %v9622 = vld [vmem:[#allocation3 + $0x78] sm:$0xf]
      %v9623 = vld [vmem:[#allocation3 + $0x7c] sm:$0xf]
      %v9624 = vld [vmem:[#allocation3 + $0x80] sm:$0xf]
      %v9625 = vld [vmem:[#allocation3 + $0x84] sm:$0xf]
      %v9626 = vld [vmem:[#allocation3 + $0x88] sm:$0xf]
      %v9627 = vld [vmem:[#allocation3 + $0x8c] sm:$0xf]
      %v9628 = vld [vmem:[#allocation3 + $0x90] sm:$0xf]
      %v9629 = vld [vmem:[#allocation3 + $0x94] sm:$0xf]
      %9662 = vrot.lane.b32.xlu0 %v9598, 64
      %v9663 = vpop.permute.xlu0 %9662
      %9664 = vrot.lane.b32.xlu0 %v9599, 64
      %v9665 = vpop.permute.xlu0 %9664
      %9666 = vrot.lane.b32.xlu0 %v9600, 64
      %v9667 = vpop.permute.xlu0 %9666
      %9668 = vrot.lane.b32.xlu0 %v9601, 64
      %v9669 = vpop.permute.xlu0 %9668
      %9670 = vrot.lane.b32.xlu0 %v9602, 64
      %v9671 = vpop.permute.xlu0 %9670
      %9672 = vrot.lane.b32.xlu0 %v9603, 64
      %v9673 = vpop.permute.xlu0 %9672
      %9674 = vrot.lane.b32.xlu0 %v9604, 64
      %v9675 = vpop.permute.xlu0 %9674
      %9676 = vrot.lane.b32.xlu0 %v9605, 64
      %v9677 = vpop.permute.xlu0 %9676
      %9678 = vrot.lane.b32.xlu0 %v9606, 64
      %v9679 = vpop.permute.xlu0 %9678
      %9680 = vrot.lane.b32.xlu0 %v9607, 64
      %v9681 = vpop.permute.xlu0 %9680
      %9682 = vrot.lane.b32.xlu0 %v9608, 64
      %v9683 = vpop.permute.xlu0 %9682
      %9684 = vrot.lane.b32.xlu0 %v9609, 64
      %v9685 = vpop.permute.xlu0 %9684
      %9686 = vrot.lane.b32.xlu0 %v9610, 64
      %v9687 = vpop.permute.xlu0 %9686
      %9688 = vrot.lane.b32.xlu0 %v9611, 64
      %v9689 = vpop.permute.xlu0 %9688
      %9690 = vrot.lane.b32.xlu0 %v9612, 64
      %v9691 = vpop.permute.xlu0 %9690
      %9692 = vrot.lane.b32.xlu0 %v9613, 64
      %v9693 = vpop.permute.xlu0 %9692
      %9694 = vrot.lane.b32.xlu0 %v9614, 64
      %v9695 = vpop.permute.xlu0 %9694
      %9696 = vrot.lane.b32.xlu0 %v9615, 64
      %v9697 = vpop.permute.xlu0 %9696
      %9698 = vrot.lane.b32.xlu0 %v9616, 64
      %v9699 = vpop.permute.xlu0 %9698
      %9700 = vrot.lane.b32.xlu0 %v9617, 64
      %v9701 = vpop.permute.xlu0 %9700
      %9702 = vrot.lane.b32.xlu0 %v9618, 64
      %v9703 = vpop.permute.xlu0 %9702
      %9704 = vrot.lane.b32.xlu0 %v9619, 64
      %v9705 = vpop.permute.xlu0 %9704
      %9706 = vrot.lane.b32.xlu0 %v9620, 64
      %v9707 = vpop.permute.xlu0 %9706
      %9708 = vrot.lane.b32.xlu0 %v9621, 64
      %v9709 = vpop.permute.xlu0 %9708
      %9710 = vrot.lane.b32.xlu0 %v9622, 64
      %v9711 = vpop.permute.xlu0 %9710
      %9712 = vrot.lane.b32.xlu0 %v9623, 64
      %v9713 = vpop.permute.xlu0 %9712
      %9714 = vrot.lane.b32.xlu0 %v9624, 64
      %v9715 = vpop.permute.xlu0 %9714
      %9716 = vrot.lane.b32.xlu0 %v9625, 64
      %v9717 = vpop.permute.xlu0 %9716
      %9718 = vrot.lane.b32.xlu0 %v9626, 64
      %v9719 = vpop.permute.xlu0 %9718
      %9720 = vrot.lane.b32.xlu0 %v9627, 64
      %v9721 = vpop.permute.xlu0 %9720
      %9722 = vrot.lane.b32.xlu0 %v9628, 64
      %v9723 = vpop.permute.xlu0 %9722
      %9724 = vrot.lane.b32.xlu0 %v9629, 64
      %v9725 = vpop.permute.xlu0 %9724
      %9758 = vst.msk [vmem:[#allocation5 + $0xc] sm:$0xf] %vm2056, %v9663
      %9759 = vst.msk [vmem:[#allocation5 + $0x20] sm:$0xf] %vm2056, %v9665
      %9760 = vst.msk [vmem:[#allocation5 + $0x34] sm:$0xf] %vm2056, %v9667
      %9761 = vst.msk [vmem:[#allocation5 + $0x48] sm:$0xf] %vm2056, %v9669
      %9762 = vst.msk [vmem:[#allocation5 + $0x5c] sm:$0xf] %vm2056, %v9671
      %9763 = vst.msk [vmem:[#allocation5 + $0x70] sm:$0xf] %vm2056, %v9673
      %9764 = vst.msk [vmem:[#allocation5 + $0x84] sm:$0xf] %vm2056, %v9675
      %9765 = vst.msk [vmem:[#allocation5 + $0x98] sm:$0xf] %vm2056, %v9677
      %9766 = vst.msk [vmem:[#allocation5 + $0xac] sm:$0xf] %vm2056, %v9679
      %9767 = vst.msk [vmem:[#allocation5 + $0xc0] sm:$0xf] %vm2056, %v9681
      %9768 = vst.msk [vmem:[#allocation5 + $0xd4] sm:$0xf] %vm2056, %v9683
      %9769 = vst.msk [vmem:[#allocation5 + $0xe8] sm:$0xf] %vm2056, %v9685
      %9770 = vst.msk [vmem:[#allocation5 + $0xfc] sm:$0xf] %vm2056, %v9687
      %9771 = vst.msk [vmem:[#allocation5 + $0x110] sm:$0xf] %vm2056, %v9689
      %9772 = vst.msk [vmem:[#allocation5 + $0x124] sm:$0xf] %vm2056, %v9691
      %9773 = vst.msk [vmem:[#allocation5 + $0x138] sm:$0xf] %vm2056, %v9693
      %9774 = vst.msk [vmem:[#allocation5 + $0x14c] sm:$0xf] %vm2056, %v9695
      %9775 = vst.msk [vmem:[#allocation5 + $0x160] sm:$0xf] %vm2056, %v9697
      %9776 = vst.msk [vmem:[#allocation5 + $0x174] sm:$0xf] %vm2056, %v9699
      %9777 = vst.msk [vmem:[#allocation5 + $0x188] sm:$0xf] %vm2056, %v9701
      %9778 = vst.msk [vmem:[#allocation5 + $0x19c] sm:$0xf] %vm2056, %v9703
      %9779 = vst.msk [vmem:[#allocation5 + $0x1b0] sm:$0xf] %vm2056, %v9705
      %9780 = vst.msk [vmem:[#allocation5 + $0x1c4] sm:$0xf] %vm2056, %v9707
      %9781 = vst.msk [vmem:[#allocation5 + $0x1d8] sm:$0xf] %vm2056, %v9709
      %9782 = vst.msk [vmem:[#allocation5 + $0x1ec] sm:$0xf] %vm2056, %v9711
      %9783 = vst.msk [vmem:[#allocation5 + $0x200] sm:$0xf] %vm2056, %v9713
      %9784 = vst.msk [vmem:[#allocation5 + $0x214] sm:$0xf] %vm2056, %v9715
      %9785 = vst.msk [vmem:[#allocation5 + $0x228] sm:$0xf] %vm2056, %v9717
      %9786 = vst.msk [vmem:[#allocation5 + $0x23c] sm:$0xf] %vm2056, %v9719
      %9787 = vst.msk [vmem:[#allocation5 + $0x250] sm:$0xf] %vm2056, %v9721
      %9788 = vst.msk [vmem:[#allocation5 + $0x264] sm:$0xf] %vm2056, %v9723
      %9789 = vst.msk [vmem:[#allocation5 + $0x278] sm:$0xf] %vm2056, %v9725
      %v9790 = vld [vmem:[#allocation3 + $0x18] sm:$0xf]
      %v9791 = vld [vmem:[#allocation3 + $0x1c] sm:$0xf]
      %v9792 = vld [vmem:[#allocation3 + $0x20] sm:$0xf]
      %v9793 = vld [vmem:[#allocation3 + $0x24] sm:$0xf]
      %v9794 = vld [vmem:[#allocation3 + $0x28] sm:$0xf]
      %v9795 = vld [vmem:[#allocation3 + $0x2c] sm:$0xf]
      %v9796 = vld [vmem:[#allocation3 + $0x30] sm:$0xf]
      %v9797 = vld [vmem:[#allocation3 + $0x34] sm:$0xf]
      %v9798 = vld [vmem:[#allocation3 + $0x38] sm:$0xf]
      %v9799 = vld [vmem:[#allocation3 + $0x3c] sm:$0xf]
      %v9800 = vld [vmem:[#allocation3 + $0x40] sm:$0xf]
      %v9801 = vld [vmem:[#allocation3 + $0x44] sm:$0xf]
      %v9802 = vld [vmem:[#allocation3 + $0x48] sm:$0xf]
      %v9803 = vld [vmem:[#allocation3 + $0x4c] sm:$0xf]
      %v9804 = vld [vmem:[#allocation3 + $0x50] sm:$0xf]
      %v9805 = vld [vmem:[#allocation3 + $0x54] sm:$0xf]
      %v9806 = vld [vmem:[#allocation3 + $0x58] sm:$0xf]
      %v9807 = vld [vmem:[#allocation3 + $0x5c] sm:$0xf]
      %v9808 = vld [vmem:[#allocation3 + $0x60] sm:$0xf]
      %v9809 = vld [vmem:[#allocation3 + $0x64] sm:$0xf]
      %v9810 = vld [vmem:[#allocation3 + $0x68] sm:$0xf]
      %v9811 = vld [vmem:[#allocation3 + $0x6c] sm:$0xf]
      %v9812 = vld [vmem:[#allocation3 + $0x70] sm:$0xf]
      %v9813 = vld [vmem:[#allocation3 + $0x74] sm:$0xf]
      %v9814 = vld [vmem:[#allocation3 + $0x78] sm:$0xf]
      %v9815 = vld [vmem:[#allocation3 + $0x7c] sm:$0xf]
      %v9816 = vld [vmem:[#allocation3 + $0x80] sm:$0xf]
      %v9817 = vld [vmem:[#allocation3 + $0x84] sm:$0xf]
      %v9818 = vld [vmem:[#allocation3 + $0x88] sm:$0xf]
      %v9819 = vld [vmem:[#allocation3 + $0x8c] sm:$0xf]
      %v9820 = vld [vmem:[#allocation3 + $0x90] sm:$0xf]
      %v9821 = vld [vmem:[#allocation3 + $0x94] sm:$0xf]
      %v9822 = vld [vmem:[#allocation3 + $0x98] sm:$0x1]
      %v9823 = vsel %vm2543, %v9790, 0
      %v9824 = vsel %vm2550, %v9791, 0
      %v9825 = vsel %vm2557, %v9792, 0
      %v9826 = vsel %vm2564, %v9793, 0
      %v9827 = vsel %vm2571, %v9794, 0
      %v9828 = vsel %vm2578, %v9795, 0
      %v9829 = vsel %vm2585, %v9796, 0
      %v9830 = vsel %vm2592, %v9797, 0
      %v9831 = vsel %vm2599, %v9798, 0
      %v9832 = vsel %vm2606, %v9799, 0
      %v9833 = vsel %vm2613, %v9800, 0
      %v9834 = vsel %vm2620, %v9801, 0
      %v9835 = vsel %vm2627, %v9802, 0
      %v9836 = vsel %vm2634, %v9803, 0
      %v9837 = vsel %vm2641, %v9804, 0
      %v9838 = vsel %vm2648, %v9805, 0
      %v9839 = vsel %vm2655, %v9806, 0
      %v9840 = vsel %vm2662, %v9807, 0
      %v9841 = vsel %vm2669, %v9808, 0
      %v9842 = vsel %vm2676, %v9809, 0
      %v9843 = vsel %vm2683, %v9810, 0
      %v9844 = vsel %vm2690, %v9811, 0
      %v9845 = vsel %vm2697, %v9812, 0
      %v9846 = vsel %vm2704, %v9813, 0
      %v9847 = vsel %vm2711, %v9814, 0
      %v9848 = vsel %vm2718, %v9815, 0
      %v9849 = vsel %vm2725, %v9816, 0
      %v9850 = vsel %vm2732, %v9817, 0
      %v9851 = vsel %vm2739, %v9818, 0
      %v9852 = vsel %vm2746, %v9819, 0
      %v9853 = vsel %vm2753, %v9820, 0
      %v9854 = vsel %vm2760, %v9821, 0
      %v9855 = vsel %vm2767, %v9822, 0
      %v9857 = vshrl.u32 %v9823, 16
      %v9859 = vrot.slane %v9857, 4
      %v9860 = vshll.u32 %v9823, 16
      %v9862 = vrot.slane %v9860, 5
      %v9863 = vor.u32 %v9859, %v9862
      %v9864 = vrot.slane %v9863, 4
      %v9866 = vshll.u32 %v9824, 16
      %v9868 = vrot.slane %v9866, 5
      %v9869 = vsel %vm953, %v9864, %v9868
      %v9870 = vshrl.u32 %v9824, 16
      %v9872 = vrot.slane %v9870, 4
      %v9873 = vor.u32 %v9872, %v9868
      %v9874 = vrot.slane %v9873, 4
      %v9876 = vshll.u32 %v9825, 16
      %v9878 = vrot.slane %v9876, 5
      %v9879 = vsel %vm953, %v9874, %v9878
      %v9880 = vshrl.u32 %v9825, 16
      %v9882 = vrot.slane %v9880, 4
      %v9883 = vor.u32 %v9882, %v9878
      %v9884 = vrot.slane %v9883, 4
      %v9886 = vshll.u32 %v9826, 16
      %v9888 = vrot.slane %v9886, 5
      %v9889 = vsel %vm953, %v9884, %v9888
      %v9890 = vshrl.u32 %v9826, 16
      %v9892 = vrot.slane %v9890, 4
      %v9893 = vor.u32 %v9892, %v9888
      %v9894 = vrot.slane %v9893, 4
      %v9896 = vshll.u32 %v9827, 16
      %v9898 = vrot.slane %v9896, 5
      %v9899 = vsel %vm953, %v9894, %v9898
      %v9900 = vshrl.u32 %v9827, 16
      %v9902 = vrot.slane %v9900, 4
      %v9903 = vor.u32 %v9902, %v9898
      %v9904 = vrot.slane %v9903, 4
      %v9906 = vshll.u32 %v9828, 16
      %v9908 = vrot.slane %v9906, 5
      %v9909 = vsel %vm953, %v9904, %v9908
      %v9910 = vshrl.u32 %v9828, 16
      %v9912 = vrot.slane %v9910, 4
      %v9913 = vor.u32 %v9912, %v9908
      %v9914 = vrot.slane %v9913, 4
      %v9916 = vshll.u32 %v9829, 16
      %v9918 = vrot.slane %v9916, 5
      %v9919 = vsel %vm953, %v9914, %v9918
      %v9920 = vshrl.u32 %v9829, 16
      %v9922 = vrot.slane %v9920, 4
      %v9923 = vor.u32 %v9922, %v9918
      %v9924 = vrot.slane %v9923, 4
      %v9926 = vshll.u32 %v9830, 16
      %v9928 = vrot.slane %v9926, 5
      %v9929 = vsel %vm953, %v9924, %v9928
      %v9930 = vshrl.u32 %v9830, 16
      %v9932 = vrot.slane %v9930, 4
      %v9933 = vor.u32 %v9932, %v9928
      %v9934 = vrot.slane %v9933, 4
      %v9936 = vshll.u32 %v9831, 16
      %v9938 = vrot.slane %v9936, 5
      %v9939 = vsel %vm953, %v9934, %v9938
      %v9940 = vshrl.u32 %v9831, 16
      %v9942 = vrot.slane %v9940, 4
      %v9943 = vor.u32 %v9942, %v9938
      %v9944 = vrot.slane %v9943, 4
      %v9946 = vshll.u32 %v9832, 16
      %v9948 = vrot.slane %v9946, 5
      %v9949 = vsel %vm953, %v9944, %v9948
      %v9950 = vshrl.u32 %v9832, 16
      %v9952 = vrot.slane %v9950, 4
      %v9953 = vor.u32 %v9952, %v9948
      %v9954 = vrot.slane %v9953, 4
      %v9956 = vshll.u32 %v9833, 16
      %v9958 = vrot.slane %v9956, 5
      %v9959 = vsel %vm953, %v9954, %v9958
      %v9960 = vshrl.u32 %v9833, 16
      %v9962 = vrot.slane %v9960, 4
      %v9963 = vor.u32 %v9962, %v9958
      %v9964 = vrot.slane %v9963, 4
      %v9966 = vshll.u32 %v9834, 16
      %v9968 = vrot.slane %v9966, 5
      %v9969 = vsel %vm953, %v9964, %v9968
      %v9970 = vshrl.u32 %v9834, 16
      %v9972 = vrot.slane %v9970, 4
      %v9973 = vor.u32 %v9972, %v9968
      %v9974 = vrot.slane %v9973, 4
      %v9976 = vshll.u32 %v9835, 16
      %v9978 = vrot.slane %v9976, 5
      %v9979 = vsel %vm953, %v9974, %v9978
      %v9980 = vshrl.u32 %v9835, 16
      %v9982 = vrot.slane %v9980, 4
      %v9983 = vor.u32 %v9982, %v9978
      %v9984 = vrot.slane %v9983, 4
      %v9986 = vshll.u32 %v9836, 16
      %v9988 = vrot.slane %v9986, 5
      %v9989 = vsel %vm953, %v9984, %v9988
      %v9990 = vshrl.u32 %v9836, 16
      %v9992 = vrot.slane %v9990, 4
      %v9993 = vor.u32 %v9992, %v9988
      %v9994 = vrot.slane %v9993, 4
      %v9996 = vshll.u32 %v9837, 16
      %v9998 = vrot.slane %v9996, 5
      %v9999 = vsel %vm953, %v9994, %v9998
      %v10000 = vshrl.u32 %v9837, 16
      %v10002 = vrot.slane %v10000, 4
      %v10003 = vor.u32 %v10002, %v9998
      %v10004 = vrot.slane %v10003, 4
      %v10006 = vshll.u32 %v9838, 16
      %v10008 = vrot.slane %v10006, 5
      %v10009 = vsel %vm953, %v10004, %v10008
      %v10010 = vshrl.u32 %v9838, 16
      %v10012 = vrot.slane %v10010, 4
      %v10013 = vor.u32 %v10012, %v10008
      %v10014 = vrot.slane %v10013, 4
      %v10016 = vshll.u32 %v9839, 16
      %v10018 = vrot.slane %v10016, 5
      %v10019 = vsel %vm953, %v10014, %v10018
      %v10020 = vshrl.u32 %v9839, 16
      %v10022 = vrot.slane %v10020, 4
      %v10023 = vor.u32 %v10022, %v10018
      %v10024 = vrot.slane %v10023, 4
      %v10026 = vshll.u32 %v9840, 16
      %v10028 = vrot.slane %v10026, 5
      %v10029 = vsel %vm953, %v10024, %v10028
      %v10030 = vshrl.u32 %v9840, 16
      %v10032 = vrot.slane %v10030, 4
      %v10033 = vor.u32 %v10032, %v10028
      %v10034 = vrot.slane %v10033, 4
      %v10036 = vshll.u32 %v9841, 16
      %v10038 = vrot.slane %v10036, 5
      %v10039 = vsel %vm953, %v10034, %v10038
      %v10040 = vshrl.u32 %v9841, 16
      %v10042 = vrot.slane %v10040, 4
      %v10043 = vor.u32 %v10042, %v10038
      %v10044 = vrot.slane %v10043, 4
      %v10046 = vshll.u32 %v9842, 16
      %v10048 = vrot.slane %v10046, 5
      %v10049 = vsel %vm953, %v10044, %v10048
      %v10050 = vshrl.u32 %v9842, 16
      %v10052 = vrot.slane %v10050, 4
      %v10053 = vor.u32 %v10052, %v10048
      %v10054 = vrot.slane %v10053, 4
      %v10056 = vshll.u32 %v9843, 16
      %v10058 = vrot.slane %v10056, 5
      %v10059 = vsel %vm953, %v10054, %v10058
      %v10060 = vshrl.u32 %v9843, 16
      %v10062 = vrot.slane %v10060, 4
      %v10063 = vor.u32 %v10062, %v10058
      %v10064 = vrot.slane %v10063, 4
      %v10066 = vshll.u32 %v9844, 16
      %v10068 = vrot.slane %v10066, 5
      %v10069 = vsel %vm953, %v10064, %v10068
      %v10070 = vshrl.u32 %v9844, 16
      %v10072 = vrot.slane %v10070, 4
      %v10073 = vor.u32 %v10072, %v10068
      %v10074 = vrot.slane %v10073, 4
      %v10076 = vshll.u32 %v9845, 16
      %v10078 = vrot.slane %v10076, 5
      %v10079 = vsel %vm953, %v10074, %v10078
      %v10080 = vshrl.u32 %v9845, 16
      %v10082 = vrot.slane %v10080, 4
      %v10083 = vor.u32 %v10082, %v10078
      %v10084 = vrot.slane %v10083, 4
      %v10086 = vshll.u32 %v9846, 16
      %v10088 = vrot.slane %v10086, 5
      %v10089 = vsel %vm953, %v10084, %v10088
      %v10090 = vshrl.u32 %v9846, 16
      %v10092 = vrot.slane %v10090, 4
      %v10093 = vor.u32 %v10092, %v10088
      %v10094 = vrot.slane %v10093, 4
      %v10096 = vshll.u32 %v9847, 16
      %v10098 = vrot.slane %v10096, 5
      %v10099 = vsel %vm953, %v10094, %v10098
      %v10100 = vshrl.u32 %v9847, 16
      %v10102 = vrot.slane %v10100, 4
      %v10103 = vor.u32 %v10102, %v10098
      %v10104 = vrot.slane %v10103, 4
      %v10106 = vshll.u32 %v9848, 16
      %v10108 = vrot.slane %v10106, 5
      %v10109 = vsel %vm953, %v10104, %v10108
      %v10110 = vshrl.u32 %v9848, 16
      %v10112 = vrot.slane %v10110, 4
      %v10113 = vor.u32 %v10112, %v10108
      %v10114 = vrot.slane %v10113, 4
      %v10116 = vshll.u32 %v9849, 16
      %v10118 = vrot.slane %v10116, 5
      %v10119 = vsel %vm953, %v10114, %v10118
      %v10120 = vshrl.u32 %v9849, 16
      %v10122 = vrot.slane %v10120, 4
      %v10123 = vor.u32 %v10122, %v10118
      %v10124 = vrot.slane %v10123, 4
      %v10126 = vshll.u32 %v9850, 16
      %v10128 = vrot.slane %v10126, 5
      %v10129 = vsel %vm953, %v10124, %v10128
      %v10130 = vshrl.u32 %v9850, 16
      %v10132 = vrot.slane %v10130, 4
      %v10133 = vor.u32 %v10132, %v10128
      %v10134 = vrot.slane %v10133, 4
      %v10136 = vshll.u32 %v9851, 16
      %v10138 = vrot.slane %v10136, 5
      %v10139 = vsel %vm953, %v10134, %v10138
      %v10140 = vshrl.u32 %v9851, 16
      %v10142 = vrot.slane %v10140, 4
      %v10143 = vor.u32 %v10142, %v10138
      %v10144 = vrot.slane %v10143, 4
      %v10146 = vshll.u32 %v9852, 16
      %v10148 = vrot.slane %v10146, 5
      %v10149 = vsel %vm953, %v10144, %v10148
      %v10150 = vshrl.u32 %v9852, 16
      %v10152 = vrot.slane %v10150, 4
      %v10153 = vor.u32 %v10152, %v10148
      %v10154 = vrot.slane %v10153, 4
      %v10156 = vshll.u32 %v9853, 16
      %v10158 = vrot.slane %v10156, 5
      %v10159 = vsel %vm953, %v10154, %v10158
      %v10160 = vshrl.u32 %v9853, 16
      %v10162 = vrot.slane %v10160, 4
      %v10163 = vor.u32 %v10162, %v10158
      %v10164 = vrot.slane %v10163, 4
      %v10166 = vshll.u32 %v9854, 16
      %v10168 = vrot.slane %v10166, 5
      %v10169 = vsel %vm953, %v10164, %v10168
      %v10170 = vshrl.u32 %v9854, 16
      %v10172 = vrot.slane %v10170, 4
      %v10173 = vor.u32 %v10172, %v10168
      %v10174 = vrot.slane %v10173, 4
      %v10176 = vshll.u32 %v9855, 16
      %v10178 = vrot.slane %v10176, 5
      %v10179 = vsel %vm953, %v10174, %v10178
      %10212 = vst.msk [vmem:[#allocation5 + $0x10] sm:$0xf] %vm709, %v9869
      %10213 = vst.msk [vmem:[#allocation5 + $0x24] sm:$0xf] %vm709, %v9879
      %10214 = vst.msk [vmem:[#allocation5 + $0x38] sm:$0xf] %vm709, %v9889
      %10215 = vst.msk [vmem:[#allocation5 + $0x4c] sm:$0xf] %vm709, %v9899
      %10216 = vst.msk [vmem:[#allocation5 + $0x60] sm:$0xf] %vm709, %v9909
      %10217 = vst.msk [vmem:[#allocation5 + $0x74] sm:$0xf] %vm709, %v9919
      %10218 = vst.msk [vmem:[#allocation5 + $0x88] sm:$0xf] %vm709, %v9929
      %10219 = vst.msk [vmem:[#allocation5 + $0x9c] sm:$0xf] %vm709, %v9939
      %10220 = vst.msk [vmem:[#allocation5 + $0xb0] sm:$0xf] %vm709, %v9949
      %10221 = vst.msk [vmem:[#allocation5 + $0xc4] sm:$0xf] %vm709, %v9959
      %10222 = vst.msk [vmem:[#allocation5 + $0xd8] sm:$0xf] %vm709, %v9969
      %10223 = vst.msk [vmem:[#allocation5 + $0xec] sm:$0xf] %vm709, %v9979
      %10224 = vst.msk [vmem:[#allocation5 + $0x100] sm:$0xf] %vm709, %v9989
      %10225 = vst.msk [vmem:[#allocation5 + $0x114] sm:$0xf] %vm709, %v9999
      %10226 = vst.msk [vmem:[#allocation5 + $0x128] sm:$0xf] %vm709, %v10009
      %10227 = vst.msk [vmem:[#allocation5 + $0x13c] sm:$0xf] %vm709, %v10019
      %10228 = vst.msk [vmem:[#allocation5 + $0x150] sm:$0xf] %vm709, %v10029
      %10229 = vst.msk [vmem:[#allocation5 + $0x164] sm:$0xf] %vm709, %v10039
      %10230 = vst.msk [vmem:[#allocation5 + $0x178] sm:$0xf] %vm709, %v10049
      %10231 = vst.msk [vmem:[#allocation5 + $0x18c] sm:$0xf] %vm709, %v10059
      %10232 = vst.msk [vmem:[#allocation5 + $0x1a0] sm:$0xf] %vm709, %v10069
      %10233 = vst.msk [vmem:[#allocation5 + $0x1b4] sm:$0xf] %vm709, %v10079
      %10234 = vst.msk [vmem:[#allocation5 + $0x1c8] sm:$0xf] %vm709, %v10089
      %10235 = vst.msk [vmem:[#allocation5 + $0x1dc] sm:$0xf] %vm709, %v10099
      %10236 = vst.msk [vmem:[#allocation5 + $0x1f0] sm:$0xf] %vm709, %v10109
      %10237 = vst.msk [vmem:[#allocation5 + $0x204] sm:$0xf] %vm709, %v10119
      %10238 = vst.msk [vmem:[#allocation5 + $0x218] sm:$0xf] %vm709, %v10129
      %10239 = vst.msk [vmem:[#allocation5 + $0x22c] sm:$0xf] %vm709, %v10139
      %10240 = vst.msk [vmem:[#allocation5 + $0x240] sm:$0xf] %vm709, %v10149
      %10241 = vst.msk [vmem:[#allocation5 + $0x254] sm:$0xf] %vm709, %v10159
      %10242 = vst.msk [vmem:[#allocation5 + $0x268] sm:$0xf] %vm709, %v10169
      %10243 = vst.msk [vmem:[#allocation5 + $0x27c] sm:$0xf] %vm709, %v10179
      %v10244 = vld [vmem:[#allocation5] sm:$0xff]
      %v10245 = vld [vmem:[#allocation5 + $0x8] sm:$0xff]
      %v10246 = vld [vmem:[#allocation5 + $0x10] sm:$0xf]
      %v10247 = vld [vmem:[#allocation5 + $0x14] sm:$0xff]
      %v10248 = vld [vmem:[#allocation5 + $0x1c] sm:$0xff]
      %v10249 = vld [vmem:[#allocation5 + $0x24] sm:$0xf]
      %v10250 = vld [vmem:[#allocation5 + $0x28] sm:$0xff]
      %v10251 = vld [vmem:[#allocation5 + $0x30] sm:$0xff]
      %v10252 = vld [vmem:[#allocation5 + $0x38] sm:$0xf]
      %v10253 = vld [vmem:[#allocation5 + $0x3c] sm:$0xff]
      %v10254 = vld [vmem:[#allocation5 + $0x44] sm:$0xff]
      %v10255 = vld [vmem:[#allocation5 + $0x4c] sm:$0xf]
      %v10256 = vld [vmem:[#allocation5 + $0x50] sm:$0xff]
      %v10257 = vld [vmem:[#allocation5 + $0x58] sm:$0xff]
      %v10258 = vld [vmem:[#allocation5 + $0x60] sm:$0xf]
      %v10259 = vld [vmem:[#allocation5 + $0x64] sm:$0xff]
      %v10260 = vld [vmem:[#allocation5 + $0x6c] sm:$0xff]
      %v10261 = vld [vmem:[#allocation5 + $0x74] sm:$0xf]
      %v10262 = vld [vmem:[#allocation5 + $0x78] sm:$0xff]
      %v10263 = vld [vmem:[#allocation5 + $0x80] sm:$0xff]
      %v10264 = vld [vmem:[#allocation5 + $0x88] sm:$0xf]
      %v10265 = vld [vmem:[#allocation5 + $0x8c] sm:$0xff]
      %v10266 = vld [vmem:[#allocation5 + $0x94] sm:$0xff]
      %v10267 = vld [vmem:[#allocation5 + $0x9c] sm:$0xf]
      %v10268 = vld [vmem:[#allocation5 + $0xa0] sm:$0xff]
      %v10269 = vld [vmem:[#allocation5 + $0xa8] sm:$0xff]
      %v10270 = vld [vmem:[#allocation5 + $0xb0] sm:$0xf]
      %v10271 = vld [vmem:[#allocation5 + $0xb4] sm:$0xff]
      %v10272 = vld [vmem:[#allocation5 + $0xbc] sm:$0xff]
      %v10273 = vld [vmem:[#allocation5 + $0xc4] sm:$0xf]
      %v10274 = vld [vmem:[#allocation5 + $0xc8] sm:$0xff]
      %v10275 = vld [vmem:[#allocation5 + $0xd0] sm:$0xff]
      %v10276 = vld [vmem:[#allocation5 + $0xd8] sm:$0xf]
      %v10277 = vld [vmem:[#allocation5 + $0xdc] sm:$0xff]
      %v10278 = vld [vmem:[#allocation5 + $0xe4] sm:$0xff]
      %v10279 = vld [vmem:[#allocation5 + $0xec] sm:$0xf]
      %v10280 = vld [vmem:[#allocation5 + $0xf0] sm:$0xff]
      %v10281 = vld [vmem:[#allocation5 + $0xf8] sm:$0xff]
      %v10282 = vld [vmem:[#allocation5 + $0x100] sm:$0xf]
      %v10283 = vld [vmem:[#allocation5 + $0x104] sm:$0xff]
      %v10284 = vld [vmem:[#allocation5 + $0x10c] sm:$0xff]
      %v10285 = vld [vmem:[#allocation5 + $0x114] sm:$0xf]
      %v10286 = vld [vmem:[#allocation5 + $0x118] sm:$0xff]
      %v10287 = vld [vmem:[#allocation5 + $0x120] sm:$0xff]
      %v10288 = vld [vmem:[#allocation5 + $0x128] sm:$0xf]
      %v10289 = vld [vmem:[#allocation5 + $0x12c] sm:$0xff]
      %v10290 = vld [vmem:[#allocation5 + $0x134] sm:$0xff]
      %v10291 = vld [vmem:[#allocation5 + $0x13c] sm:$0xf]
      %v10292 = vld [vmem:[%s3] sm:$0xf]
      %v10293 = vld [vmem:[%s3 + $0x4] sm:$0xf]
      %v10294 = vld [vmem:[%s3 + $0x8] sm:$0xf]
      %v10295 = vld [vmem:[%s3 + $0xc] sm:$0xf]
      %v10296 = vld [vmem:[%s3 + $0x10] sm:$0xf]
      %v10297 = vld [vmem:[%s3 + $0x14] sm:$0xf]
      %v10298 = vld [vmem:[%s3 + $0x18] sm:$0xf]
      %v10299 = vld [vmem:[%s3 + $0x1c] sm:$0xf]
      %v10300 = vld [vmem:[%s3 + $0x20] sm:$0xf]
      %v10301 = vld [vmem:[%s3 + $0x24] sm:$0xf]
      %v10302 = vld [vmem:[%s3 + $0x28] sm:$0xf]
      %v10303 = vld [vmem:[%s3 + $0x2c] sm:$0xf]
      %v10304 = vld [vmem:[%s3 + $0x30] sm:$0xf]
      %v10305 = vld [vmem:[%s3 + $0x34] sm:$0xf]
      %v10306 = vld [vmem:[%s3 + $0x38] sm:$0xf]
      %v10307 = vld [vmem:[%s3 + $0x3c] sm:$0xf]
      %v10308 = vld [vmem:[%s3 + $0x40] sm:$0xf]
      %v10309 = vld [vmem:[%s3 + $0x44] sm:$0xf]
      %v10310 = vld [vmem:[%s3 + $0x48] sm:$0xf]
      %v10311 = vld [vmem:[%s3 + $0x4c] sm:$0xf]
      %v10312 = vld [vmem:[%s3 + $0x50] sm:$0xf]
      %v10313 = vld [vmem:[%s3 + $0x54] sm:$0xf]
      %v10314 = vld [vmem:[%s3 + $0x58] sm:$0xf]
      %v10315 = vld [vmem:[%s3 + $0x5c] sm:$0xf]
      %v10316 = vld [vmem:[%s3 + $0x60] sm:$0xf]
      %v10317 = vld [vmem:[%s3 + $0x64] sm:$0xf]
      %v10318 = vld [vmem:[%s3 + $0x68] sm:$0xf]
      %v10319 = vld [vmem:[%s3 + $0x6c] sm:$0xf]
      %v10320 = vld [vmem:[%s3 + $0x70] sm:$0xf]
      %v10321 = vld [vmem:[%s3 + $0x74] sm:$0xf]
      %v10322 = vld [vmem:[%s3 + $0x78] sm:$0xf]
      %v10323 = vld [vmem:[%s3 + $0x7c] sm:$0xf]
      %v10324 = vld [vmem:[%s3 + $0x80] sm:$0xf]
      %v10325 = vld [vmem:[%s3 + $0x84] sm:$0xf]
      %v10326 = vld [vmem:[%s3 + $0x88] sm:$0xf]
      %v10327 = vld [vmem:[%s3 + $0x8c] sm:$0xf]
      %v10328 = vld [vmem:[%s3 + $0x90] sm:$0xf]
      %v10329 = vld [vmem:[%s3 + $0x94] sm:$0xf]
      %v10330 = vld [vmem:[%s3 + $0x98] sm:$0xf]
      %v10331 = vld [vmem:[%s3 + $0x9c] sm:$0xf]
      %v10332 = vld [vmem:[%s3 + $0xa0] sm:$0xf]
      %v10333 = vld [vmem:[%s3 + $0xa4] sm:$0xf]
      %v10334 = vld [vmem:[%s3 + $0xa8] sm:$0xf]
      %v10335 = vld [vmem:[%s3 + $0xac] sm:$0xf]
      %v10336 = vld [vmem:[%s3 + $0xb0] sm:$0xf]
      %v10337 = vld [vmem:[%s3 + $0xb4] sm:$0xf]
      %v10338 = vld [vmem:[%s3 + $0xb8] sm:$0xf]
      %v10339 = vld [vmem:[%s3 + $0xbc] sm:$0xf]
      %v10340 = vld [vmem:[%s3 + $0xc0] sm:$0xf]
      %v10341 = vld [vmem:[%s3 + $0xc4] sm:$0xf]
      %v10342 = vld [vmem:[%s3 + $0xc8] sm:$0xf]
      %v10343 = vld [vmem:[%s3 + $0xcc] sm:$0xf]
      %v10344 = vld [vmem:[%s3 + $0xd0] sm:$0xf]
      %v10345 = vld [vmem:[%s3 + $0xd4] sm:$0xf]
      %v10346 = vld [vmem:[%s3 + $0xd8] sm:$0xf]
      %v10347 = vld [vmem:[%s3 + $0xdc] sm:$0xf]
      %v10348 = vld [vmem:[%s3 + $0xe0] sm:$0xf]
      %v10349 = vld [vmem:[%s3 + $0xe4] sm:$0xf]
      %v10350 = vld [vmem:[%s3 + $0xe8] sm:$0xf]
      %v10351 = vld [vmem:[%s3 + $0xec] sm:$0xf]
      %v10352 = vld [vmem:[%s3 + $0xf0] sm:$0xf]
      %v10353 = vld [vmem:[%s3 + $0xf4] sm:$0xf]
      %v10354 = vld [vmem:[%s3 + $0xf8] sm:$0xf]
      %v10355 = vld [vmem:[%s3 + $0xfc] sm:$0xf]
      %v10356 = vld [vmem:[%s3 + $0x100] sm:$0xf]
      %v10357 = vld [vmem:[%s3 + $0x104] sm:$0xf]
      %v10358 = vld [vmem:[%s3 + $0x108] sm:$0xf]
      %v10359 = vld [vmem:[%s3 + $0x10c] sm:$0xf]
      %v10360 = vld [vmem:[%s3 + $0x110] sm:$0xf]
      %v10361 = vld [vmem:[%s3 + $0x114] sm:$0xf]
      %v10362 = vld [vmem:[%s3 + $0x118] sm:$0xf]
      %v10363 = vld [vmem:[%s3 + $0x11c] sm:$0xf]
      %v10364 = vld [vmem:[%s4] sm:$0x1]
      %v10366 = vperm.slane %v10364, 0
      %v10416 = vunpack.c.l.b16 %v10244
      %v10417 = vunpack.c.h.b16 %v10244
      %v10418 = vunpack.c.l.b16 %v10245
      %v10419 = vunpack.c.h.b16 %v10245
      %v10420 = vunpack.c.l.b16 %v10246
      %v10421 = vunpack.c.l.b16 %v10247
      %v10422 = vunpack.c.h.b16 %v10247
      %v10423 = vunpack.c.l.b16 %v10248
      %v10424 = vunpack.c.h.b16 %v10248
      %v10425 = vunpack.c.l.b16 %v10249
      %v10426 = vunpack.c.l.b16 %v10250
      %v10427 = vunpack.c.h.b16 %v10250
      %v10428 = vunpack.c.l.b16 %v10251
      %v10429 = vunpack.c.h.b16 %v10251
      %v10430 = vunpack.c.l.b16 %v10252
      %v10431 = vunpack.c.l.b16 %v10253
      %v10432 = vunpack.c.h.b16 %v10253
      %v10433 = vunpack.c.l.b16 %v10254
      %v10434 = vunpack.c.h.b16 %v10254
      %v10435 = vunpack.c.l.b16 %v10255
      %v10436 = vunpack.c.l.b16 %v10256
      %v10437 = vunpack.c.h.b16 %v10256
      %v10438 = vunpack.c.l.b16 %v10257
      %v10439 = vunpack.c.h.b16 %v10257
      %v10440 = vunpack.c.l.b16 %v10258
      %v10441 = vunpack.c.l.b16 %v10259
      %v10442 = vunpack.c.h.b16 %v10259
      %v10443 = vunpack.c.l.b16 %v10260
      %v10444 = vunpack.c.h.b16 %v10260
      %v10445 = vunpack.c.l.b16 %v10261
      %v10446 = vunpack.c.l.b16 %v10262
      %v10447 = vunpack.c.h.b16 %v10262
      %v10448 = vunpack.c.l.b16 %v10263
      %v10449 = vunpack.c.h.b16 %v10263
      %v10450 = vunpack.c.l.b16 %v10264
      %v10451 = vunpack.c.l.b16 %v10265
      %v10452 = vunpack.c.h.b16 %v10265
      %v10453 = vunpack.c.l.b16 %v10266
      %v10454 = vunpack.c.h.b16 %v10266
      %v10455 = vunpack.c.l.b16 %v10267
      %v10456 = vunpack.c.l.b16 %v10268
      %v10457 = vunpack.c.h.b16 %v10268
      %v10458 = vunpack.c.l.b16 %v10269
      %v10459 = vunpack.c.h.b16 %v10269
      %v10460 = vunpack.c.l.b16 %v10270
      %v10461 = vunpack.c.l.b16 %v10271
      %v10462 = vunpack.c.h.b16 %v10271
      %v10463 = vunpack.c.l.b16 %v10272
      %v10464 = vunpack.c.h.b16 %v10272
      %v10465 = vunpack.c.l.b16 %v10273
      %v10466 = vunpack.c.l.b16 %v10274
      %v10467 = vunpack.c.h.b16 %v10274
      %v10468 = vunpack.c.l.b16 %v10275
      %v10469 = vunpack.c.h.b16 %v10275
      %v10470 = vunpack.c.l.b16 %v10276
      %v10471 = vunpack.c.l.b16 %v10277
      %v10472 = vunpack.c.h.b16 %v10277
      %v10473 = vunpack.c.l.b16 %v10278
      %v10474 = vunpack.c.h.b16 %v10278
      %v10475 = vunpack.c.l.b16 %v10279
      %v10476 = vunpack.c.l.b16 %v10280
      %v10477 = vunpack.c.h.b16 %v10280
      %v10478 = vunpack.c.l.b16 %v10281
      %v10479 = vunpack.c.h.b16 %v10281
      %v10480 = vunpack.c.l.b16 %v10282
      %v10481 = vunpack.c.l.b16 %v10283
      %v10482 = vunpack.c.h.b16 %v10283
      %v10483 = vunpack.c.l.b16 %v10284
      %v10484 = vunpack.c.h.b16 %v10284
      %v10485 = vunpack.c.l.b16 %v10285
      %v10486 = vunpack.c.l.b16 %v10286
      %v10487 = vunpack.c.h.b16 %v10286
      %v10488 = vunpack.c.l.b16 %v10287
      %v10489 = vunpack.c.h.b16 %v10287
      %v10490 = vunpack.c.l.b16 %v10288
      %v10491 = vunpack.c.l.b16 %v10289
      %v10492 = vunpack.c.h.b16 %v10289
      %v10493 = vunpack.c.l.b16 %v10290
      %v10494 = vunpack.c.h.b16 %v10290
      %v10495 = vunpack.c.l.b16 %v10291
      %v10496 = vpack.c.b16 %v10421, %v10416
      %v10497 = vpack.c.b16 %v10422, %v10417
      %v10498 = vpack.c.b16 %v10423, %v10418
      %v10499 = vpack.c.b16 %v10424, %v10419
      %v10500 = vpack.c.b16 %v10425, %v10420
      %v10501 = vpack.c.b16 %v10431, %v10426
      %v10502 = vpack.c.b16 %v10432, %v10427
      %v10503 = vpack.c.b16 %v10433, %v10428
      %v10504 = vpack.c.b16 %v10434, %v10429
      %v10505 = vpack.c.b16 %v10435, %v10430
      %v10506 = vpack.c.b16 %v10441, %v10436
      %v10507 = vpack.c.b16 %v10442, %v10437
      %v10508 = vpack.c.b16 %v10443, %v10438
      %v10509 = vpack.c.b16 %v10444, %v10439
      %v10510 = vpack.c.b16 %v10445, %v10440
      %v10511 = vpack.c.b16 %v10451, %v10446
      %v10512 = vpack.c.b16 %v10452, %v10447
      %v10513 = vpack.c.b16 %v10453, %v10448
      %v10514 = vpack.c.b16 %v10454, %v10449
      %v10515 = vpack.c.b16 %v10455, %v10450
      %v10516 = vpack.c.b16 %v10461, %v10456
      %v10517 = vpack.c.b16 %v10462, %v10457
      %v10518 = vpack.c.b16 %v10463, %v10458
      %v10519 = vpack.c.b16 %v10464, %v10459
      %v10520 = vpack.c.b16 %v10465, %v10460
      %v10521 = vpack.c.b16 %v10471, %v10466
      %v10522 = vpack.c.b16 %v10472, %v10467
      %v10523 = vpack.c.b16 %v10473, %v10468
      %v10524 = vpack.c.b16 %v10474, %v10469
      %v10525 = vpack.c.b16 %v10475, %v10470
      %v10526 = vpack.c.b16 %v10481, %v10476
      %v10527 = vpack.c.b16 %v10482, %v10477
      %v10528 = vpack.c.b16 %v10483, %v10478
      %v10529 = vpack.c.b16 %v10484, %v10479
      %v10530 = vpack.c.b16 %v10485, %v10480
      %v10531 = vpack.c.b16 %v10491, %v10486
      %v10532 = vpack.c.b16 %v10492, %v10487
      %v10533 = vpack.c.b16 %v10493, %v10488
      %v10534 = vpack.c.b16 %v10494, %v10489
      %v10535 = vpack.c.b16 %v10495, %v10490
      %v10640 = vunpack.c.l.b16 %v10292
      %v10641 = vunpack.c.l.b16 %v10293
      %v10642 = vunpack.c.l.b16 %v10294
      %v10643 = vunpack.c.l.b16 %v10295
      %v10644 = vunpack.c.l.b16 %v10296
      %v10645 = vunpack.c.l.b16 %v10297
      %v10646 = vunpack.c.l.b16 %v10298
      %v10647 = vunpack.c.l.b16 %v10299
      %v10648 = vunpack.c.l.b16 %v10300
      %v10649 = vunpack.c.l.b16 %v10301
      %v10650 = vunpack.c.l.b16 %v10302
      %v10651 = vunpack.c.l.b16 %v10303
      %v10652 = vunpack.c.l.b16 %v10304
      %v10653 = vunpack.c.l.b16 %v10305
      %v10654 = vunpack.c.l.b16 %v10306
      %v10655 = vunpack.c.l.b16 %v10307
      %v10656 = vunpack.c.l.b16 %v10308
      %v10657 = vunpack.c.l.b16 %v10309
      %v10658 = vunpack.c.l.b16 %v10310
      %v10659 = vunpack.c.l.b16 %v10311
      %v10660 = vunpack.c.l.b16 %v10312
      %v10661 = vunpack.c.l.b16 %v10313
      %v10662 = vunpack.c.l.b16 %v10314
      %v10663 = vunpack.c.l.b16 %v10315
      %v10664 = vunpack.c.l.b16 %v10316
      %v10665 = vunpack.c.l.b16 %v10317
      %v10666 = vunpack.c.l.b16 %v10318
      %v10667 = vunpack.c.l.b16 %v10319
      %v10668 = vunpack.c.l.b16 %v10320
      %v10669 = vunpack.c.l.b16 %v10321
      %v10670 = vunpack.c.l.b16 %v10322
      %v10671 = vunpack.c.l.b16 %v10323
      %v10672 = vunpack.c.l.b16 %v10324
      %v10673 = vunpack.c.l.b16 %v10325
      %v10674 = vunpack.c.l.b16 %v10326
      %v10675 = vunpack.c.l.b16 %v10327
      %v10676 = vunpack.c.l.b16 %v10328
      %v10677 = vunpack.c.l.b16 %v10329
      %v10678 = vunpack.c.l.b16 %v10330
      %v10679 = vunpack.c.l.b16 %v10331
      %v10680 = vunpack.c.l.b16 %v10332
      %v10681 = vunpack.c.l.b16 %v10333
      %v10682 = vunpack.c.l.b16 %v10334
      %v10683 = vunpack.c.l.b16 %v10335
      %v10684 = vunpack.c.l.b16 %v10336
      %v10685 = vunpack.c.l.b16 %v10337
      %v10686 = vunpack.c.l.b16 %v10338
      %v10687 = vunpack.c.l.b16 %v10339
      %v10688 = vunpack.c.l.b16 %v10340
      %v10689 = vunpack.c.l.b16 %v10341
      %v10690 = vunpack.c.l.b16 %v10342
      %v10691 = vunpack.c.l.b16 %v10343
      %v10692 = vunpack.c.l.b16 %v10344
      %v10693 = vunpack.c.l.b16 %v10345
      %v10694 = vunpack.c.l.b16 %v10346
      %v10695 = vunpack.c.l.b16 %v10347
      %v10696 = vunpack.c.l.b16 %v10348
      %v10697 = vunpack.c.l.b16 %v10349
      %v10698 = vunpack.c.l.b16 %v10350
      %v10699 = vunpack.c.l.b16 %v10351
      %v10700 = vunpack.c.l.b16 %v10352
      %v10701 = vunpack.c.l.b16 %v10353
      %v10702 = vunpack.c.l.b16 %v10354
      %v10703 = vunpack.c.l.b16 %v10355
      %v10704 = vunpack.c.l.b16 %v10356
      %v10705 = vunpack.c.l.b16 %v10357
      %v10706 = vunpack.c.l.b16 %v10358
      %v10707 = vunpack.c.l.b16 %v10359
      %v10708 = vunpack.c.l.b16 %v10360
      %v10709 = vunpack.c.l.b16 %v10361
      %v10710 = vunpack.c.l.b16 %v10362
      %v10711 = vunpack.c.l.b16 %v10363
      %v10712 = vpack.c.b16 %v10641, %v10640
      %v10713 = vpack.c.b16 %v10643, %v10642
      %v10714 = vpack.c.b16 %v10645, %v10644
      %v10715 = vpack.c.b16 %v10647, %v10646
      %v10716 = vpack.c.b16 %v10649, %v10648
      %v10717 = vpack.c.b16 %v10651, %v10650
      %v10718 = vpack.c.b16 %v10653, %v10652
      %v10719 = vpack.c.b16 %v10655, %v10654
      %v10720 = vpack.c.b16 %v10657, %v10656
      %v10721 = vpack.c.b16 %v10659, %v10658
      %v10722 = vpack.c.b16 %v10661, %v10660
      %v10723 = vpack.c.b16 %v10663, %v10662
      %v10724 = vpack.c.b16 %v10665, %v10664
      %v10725 = vpack.c.b16 %v10667, %v10666
      %v10726 = vpack.c.b16 %v10669, %v10668
      %v10727 = vpack.c.b16 %v10671, %v10670
      %v10728 = vpack.c.b16 %v10673, %v10672
      %v10729 = vpack.c.b16 %v10675, %v10674
      %v10730 = vpack.c.b16 %v10677, %v10676
      %v10731 = vpack.c.b16 %v10679, %v10678
      %v10732 = vpack.c.b16 %v10681, %v10680
      %v10733 = vpack.c.b16 %v10683, %v10682
      %v10734 = vpack.c.b16 %v10685, %v10684
      %v10735 = vpack.c.b16 %v10687, %v10686
      %v10736 = vpack.c.b16 %v10689, %v10688
      %v10737 = vpack.c.b16 %v10691, %v10690
      %v10738 = vpack.c.b16 %v10693, %v10692
      %v10739 = vpack.c.b16 %v10695, %v10694
      %v10740 = vpack.c.b16 %v10697, %v10696
      %v10741 = vpack.c.b16 %v10699, %v10698
      %v10742 = vpack.c.b16 %v10701, %v10700
      %v10743 = vpack.c.b16 %v10703, %v10702
      %v10744 = vpack.c.b16 %v10705, %v10704
      %v10745 = vpack.c.b16 %v10707, %v10706
      %v10746 = vpack.c.b16 %v10709, %v10708
      %v10747 = vpack.c.b16 %v10711, %v10710
      %v10785 = vsel %vm5865, %v10500, 0
      %v10788 = vsel %vm5865, %v10505, 0
      %v10791 = vsel %vm5865, %v10510, 0
      %v10794 = vsel %vm5865, %v10515, 0
      %v10797 = vsel %vm5865, %v10520, 0
      %v10800 = vsel %vm5865, %v10525, 0
      %v10803 = vsel %vm5865, %v10530, 0
      %v10806 = vsel %vm5865, %v10535, 0
      %10808 = vmatpush.bf16.msra.mxu0 %v10719
      %10809 = vmatpush.bf16.msra.mxu0 %v10718
      %10810 = vmatpush.bf16.msra.mxu0 %v10717
      %10811 = vmatpush.bf16.msra.mxu0 %v10716
      %10812 = vmatpush.bf16.msra.mxu0 %v10715
      %10813 = vmatpush.bf16.msra.mxu0 %v10714
      %10814 = vmatpush.bf16.msra.mxu0 %v10713
      %10815 = vmatpush.bf16.msra.mxu0 %v10712
      %10816 = vmatmul.bf16.gmra.mxu0 %v10496
      %v10817 = vpop.f32.mrf.mxu0
      %v10818 = vadd.f32 %v10366, %v10817
      %v10819 = vpop.f32.mrf.mxu0
      %v10820 = vadd.f32 %v10366, %v10819
      %10821 = vmatmul.bf16.gmra.mxu0 %v10501
      %v10822 = vpop.f32.mrf.mxu0
      %v10823 = vadd.f32 %v10366, %v10822
      %v10824 = vpop.f32.mrf.mxu0
      %v10825 = vadd.f32 %v10366, %v10824
      %10826 = vmatmul.bf16.gmra.mxu0 %v10506
      %v10827 = vpop.f32.mrf.mxu0
      %v10828 = vadd.f32 %v10366, %v10827
      %v10829 = vpop.f32.mrf.mxu0
      %v10830 = vadd.f32 %v10366, %v10829
      %10831 = vmatmul.bf16.gmra.mxu0 %v10511
      %v10832 = vpop.f32.mrf.mxu0
      %v10833 = vadd.f32 %v10366, %v10832
      %v10834 = vpop.f32.mrf.mxu0
      %v10835 = vadd.f32 %v10366, %v10834
      %10836 = vmatmul.bf16.gmra.mxu0 %v10516
      %v10837 = vpop.f32.mrf.mxu0
      %v10838 = vadd.f32 %v10366, %v10837
      %v10839 = vpop.f32.mrf.mxu0
      %v10840 = vadd.f32 %v10366, %v10839
      %10841 = vmatmul.bf16.gmra.mxu0 %v10521
      %v10842 = vpop.f32.mrf.mxu0
      %v10843 = vadd.f32 %v10366, %v10842
      %v10844 = vpop.f32.mrf.mxu0
      %v10845 = vadd.f32 %v10366, %v10844
      %10846 = vmatmul.bf16.gmra.mxu0 %v10526
      %v10847 = vpop.f32.mrf.mxu0
      %v10848 = vadd.f32 %v10366, %v10847
      %v10849 = vpop.f32.mrf.mxu0
      %v10850 = vadd.f32 %v10366, %v10849
      %10851 = vmatmul.bf16.gmra.mxu0 %v10531
      %v10852 = vpop.f32.mrf.mxu0
      %v10853 = vadd.f32 %v10366, %v10852
      %v10854 = vpop.f32.mrf.mxu0
      %v10855 = vadd.f32 %v10366, %v10854
      %10856 = vdwg.mxu0
      %10857 = vmatpush.bf16.msra.mxu0 %v10727
      %10858 = vmatpush.bf16.msra.mxu0 %v10726
      %10859 = vmatpush.bf16.msra.mxu0 %v10725
      %10860 = vmatpush.bf16.msra.mxu0 %v10724
      %10861 = vmatpush.bf16.msra.mxu0 %v10723
      %10862 = vmatpush.bf16.msra.mxu0 %v10722
      %10863 = vmatpush.bf16.msra.mxu0 %v10721
      %10864 = vmatpush.bf16.msra.mxu0 %v10720
      %10865 = vmatmul.bf16.gmra.mxu0 %v10497
      %v10866 = vpop.f32.mrf.mxu0
      %v10867 = vadd.f32 %v10818, %v10866
      %v10868 = vpop.f32.mrf.mxu0
      %v10869 = vadd.f32 %v10820, %v10868
      %10870 = vmatmul.bf16.gmra.mxu0 %v10502
      %v10871 = vpop.f32.mrf.mxu0
      %v10872 = vadd.f32 %v10823, %v10871
      %v10873 = vpop.f32.mrf.mxu0
      %v10874 = vadd.f32 %v10825, %v10873
      %10875 = vmatmul.bf16.gmra.mxu0 %v10507
      %v10876 = vpop.f32.mrf.mxu0
      %v10877 = vadd.f32 %v10828, %v10876
      %v10878 = vpop.f32.mrf.mxu0
      %v10879 = vadd.f32 %v10830, %v10878
      %10880 = vmatmul.bf16.gmra.mxu0 %v10512
      %v10881 = vpop.f32.mrf.mxu0
      %v10882 = vadd.f32 %v10833, %v10881
      %v10883 = vpop.f32.mrf.mxu0
      %v10884 = vadd.f32 %v10835, %v10883
      %10885 = vmatmul.bf16.gmra.mxu0 %v10517
      %v10886 = vpop.f32.mrf.mxu0
      %v10887 = vadd.f32 %v10838, %v10886
      %v10888 = vpop.f32.mrf.mxu0
      %v10889 = vadd.f32 %v10840, %v10888
      %10890 = vmatmul.bf16.gmra.mxu0 %v10522
      %v10891 = vpop.f32.mrf.mxu0
      %v10892 = vadd.f32 %v10843, %v10891
      %v10893 = vpop.f32.mrf.mxu0
      %v10894 = vadd.f32 %v10845, %v10893
      %10895 = vmatmul.bf16.gmra.mxu0 %v10527
      %v10896 = vpop.f32.mrf.mxu0
      %v10897 = vadd.f32 %v10848, %v10896
      %v10898 = vpop.f32.mrf.mxu0
      %v10899 = vadd.f32 %v10850, %v10898
      %10900 = vmatmul.bf16.gmra.mxu0 %v10532
      %v10901 = vpop.f32.mrf.mxu0
      %v10902 = vadd.f32 %v10853, %v10901
      %v10903 = vpop.f32.mrf.mxu0
      %v10904 = vadd.f32 %v10855, %v10903
      %10905 = vdwg.mxu0
      %10906 = vmatpush.bf16.msra.mxu0 %v10735
      %10907 = vmatpush.bf16.msra.mxu0 %v10734
      %10908 = vmatpush.bf16.msra.mxu0 %v10733
      %10909 = vmatpush.bf16.msra.mxu0 %v10732
      %10910 = vmatpush.bf16.msra.mxu0 %v10731
      %10911 = vmatpush.bf16.msra.mxu0 %v10730
      %10912 = vmatpush.bf16.msra.mxu0 %v10729
      %10913 = vmatpush.bf16.msra.mxu0 %v10728
      %10914 = vmatmul.bf16.gmra.mxu0 %v10498
      %v10915 = vpop.f32.mrf.mxu0
      %v10916 = vadd.f32 %v10867, %v10915
      %v10917 = vpop.f32.mrf.mxu0
      %v10918 = vadd.f32 %v10869, %v10917
      %10919 = vmatmul.bf16.gmra.mxu0 %v10503
      %v10920 = vpop.f32.mrf.mxu0
      %v10921 = vadd.f32 %v10872, %v10920
      %v10922 = vpop.f32.mrf.mxu0
      %v10923 = vadd.f32 %v10874, %v10922
      %10924 = vmatmul.bf16.gmra.mxu0 %v10508
      %v10925 = vpop.f32.mrf.mxu0
      %v10926 = vadd.f32 %v10877, %v10925
      %v10927 = vpop.f32.mrf.mxu0
      %v10928 = vadd.f32 %v10879, %v10927
      %10929 = vmatmul.bf16.gmra.mxu0 %v10513
      %v10930 = vpop.f32.mrf.mxu0
      %v10931 = vadd.f32 %v10882, %v10930
      %v10932 = vpop.f32.mrf.mxu0
      %v10933 = vadd.f32 %v10884, %v10932
      %10934 = vmatmul.bf16.gmra.mxu0 %v10518
      %v10935 = vpop.f32.mrf.mxu0
      %v10936 = vadd.f32 %v10887, %v10935
      %v10937 = vpop.f32.mrf.mxu0
      %v10938 = vadd.f32 %v10889, %v10937
      %10939 = vmatmul.bf16.gmra.mxu0 %v10523
      %v10940 = vpop.f32.mrf.mxu0
      %v10941 = vadd.f32 %v10892, %v10940
      %v10942 = vpop.f32.mrf.mxu0
      %v10943 = vadd.f32 %v10894, %v10942
      %10944 = vmatmul.bf16.gmra.mxu0 %v10528
      %v10945 = vpop.f32.mrf.mxu0
      %v10946 = vadd.f32 %v10897, %v10945
      %v10947 = vpop.f32.mrf.mxu0
      %v10948 = vadd.f32 %v10899, %v10947
      %10949 = vmatmul.bf16.gmra.mxu0 %v10533
      %v10950 = vpop.f32.mrf.mxu0
      %v10951 = vadd.f32 %v10902, %v10950
      %v10952 = vpop.f32.mrf.mxu0
      %v10953 = vadd.f32 %v10904, %v10952
      %10954 = vdwg.mxu0
      %10955 = vmatpush.bf16.msra.mxu0 %v10743
      %10956 = vmatpush.bf16.msra.mxu0 %v10742
      %10957 = vmatpush.bf16.msra.mxu0 %v10741
      %10958 = vmatpush.bf16.msra.mxu0 %v10740
      %10959 = vmatpush.bf16.msra.mxu0 %v10739
      %10960 = vmatpush.bf16.msra.mxu0 %v10738
      %10961 = vmatpush.bf16.msra.mxu0 %v10737
      %10962 = vmatpush.bf16.msra.mxu0 %v10736
      %10963 = vmatmul.bf16.gmra.mxu0 %v10499
      %v10964 = vpop.f32.mrf.mxu0
      %v10965 = vadd.f32 %v10916, %v10964
      %v10966 = vpop.f32.mrf.mxu0
      %v10967 = vadd.f32 %v10918, %v10966
      %10968 = vmatmul.bf16.gmra.mxu0 %v10504
      %v10969 = vpop.f32.mrf.mxu0
      %v10970 = vadd.f32 %v10921, %v10969
      %v10971 = vpop.f32.mrf.mxu0
      %v10972 = vadd.f32 %v10923, %v10971
      %10973 = vmatmul.bf16.gmra.mxu0 %v10509
      %v10974 = vpop.f32.mrf.mxu0
      %v10975 = vadd.f32 %v10926, %v10974
      %v10976 = vpop.f32.mrf.mxu0
      %v10977 = vadd.f32 %v10928, %v10976
      %10978 = vmatmul.bf16.gmra.mxu0 %v10514
      %v10979 = vpop.f32.mrf.mxu0
      %v10980 = vadd.f32 %v10931, %v10979
      %v10981 = vpop.f32.mrf.mxu0
      %v10982 = vadd.f32 %v10933, %v10981
      %10983 = vmatmul.bf16.gmra.mxu0 %v10519
      %v10984 = vpop.f32.mrf.mxu0
      %v10985 = vadd.f32 %v10936, %v10984
      %v10986 = vpop.f32.mrf.mxu0
      %v10987 = vadd.f32 %v10938, %v10986
      %10988 = vmatmul.bf16.gmra.mxu0 %v10524
      %v10989 = vpop.f32.mrf.mxu0
      %v10990 = vadd.f32 %v10941, %v10989
      %v10991 = vpop.f32.mrf.mxu0
      %v10992 = vadd.f32 %v10943, %v10991
      %10993 = vmatmul.bf16.gmra.mxu0 %v10529
      %v10994 = vpop.f32.mrf.mxu0
      %v10995 = vadd.f32 %v10946, %v10994
      %v10996 = vpop.f32.mrf.mxu0
      %v10997 = vadd.f32 %v10948, %v10996
      %10998 = vmatmul.bf16.gmra.mxu0 %v10534
      %v10999 = vpop.f32.mrf.mxu0
      %v11000 = vadd.f32 %v10951, %v10999
      %v11001 = vpop.f32.mrf.mxu0
      %v11002 = vadd.f32 %v10953, %v11001
      %11003 = vdwg.mxu0
      %11004 = vmatpush.bf16.msra.mxu0 0
      %11005 = vmatpush.bf16.msra.mxu0 0
      %11006 = vmatpush.bf16.msra.mxu0 0
      %11007 = vmatpush.bf16.msra.mxu0 0
      %11008 = vmatpush.bf16.msra.mxu0 %v10747
      %11009 = vmatpush.bf16.msra.mxu0 %v10746
      %11010 = vmatpush.bf16.msra.mxu0 %v10745
      %11011 = vmatpush.bf16.msra.mxu0 %v10744
      %11012 = vmatmul.bf16.gmra.mxu0 %v10785
      %v11013 = vpop.f32.mrf.mxu0
      %v11014 = vadd.f32 %v10965, %v11013
      %v11015 = vpop.f32.mrf.mxu0
      %v11016 = vadd.f32 %v10967, %v11015
      %11017 = vmatmul.bf16.gmra.mxu0 %v10788
      %v11018 = vpop.f32.mrf.mxu0
      %v11019 = vadd.f32 %v10970, %v11018
      %v11020 = vpop.f32.mrf.mxu0
      %v11021 = vadd.f32 %v10972, %v11020
      %11022 = vmatmul.bf16.gmra.mxu0 %v10791
      %v11023 = vpop.f32.mrf.mxu0
      %v11024 = vadd.f32 %v10975, %v11023
      %v11025 = vpop.f32.mrf.mxu0
      %v11026 = vadd.f32 %v10977, %v11025
      %11027 = vmatmul.bf16.gmra.mxu0 %v10794
      %v11028 = vpop.f32.mrf.mxu0
      %v11029 = vadd.f32 %v10980, %v11028
      %v11030 = vpop.f32.mrf.mxu0
      %v11031 = vadd.f32 %v10982, %v11030
      %11032 = vmatmul.bf16.gmra.mxu0 %v10797
      %v11033 = vpop.f32.mrf.mxu0
      %v11034 = vadd.f32 %v10985, %v11033
      %v11035 = vpop.f32.mrf.mxu0
      %v11036 = vadd.f32 %v10987, %v11035
      %11037 = vmatmul.bf16.gmra.mxu0 %v10800
      %v11038 = vpop.f32.mrf.mxu0
      %v11039 = vadd.f32 %v10990, %v11038
      %v11040 = vpop.f32.mrf.mxu0
      %v11041 = vadd.f32 %v10992, %v11040
      %11042 = vmatmul.bf16.gmra.mxu0 %v10803
      %v11043 = vpop.f32.mrf.mxu0
      %v11044 = vadd.f32 %v10995, %v11043
      %v11045 = vpop.f32.mrf.mxu0
      %v11046 = vadd.f32 %v10997, %v11045
      %11047 = vmatmul.bf16.gmra.mxu0 %v10806
      %v11048 = vpop.f32.mrf.mxu0
      %v11049 = vadd.f32 %v11000, %v11048
      %v11050 = vpop.f32.mrf.mxu0
      %v11051 = vadd.f32 %v11002, %v11050
      %11052 = vdwg.mxu0
      %11053 = vst.msk [vmem:[%s224] sm:$0xff] %vm5865, %v11014
      %11054 = vst.msk [vmem:[%s224 + $0x8] sm:$0xff] %vm5865, %v11016
      %11055 = vst.msk [vmem:[%s224 + $0x10] sm:$0xff] %vm5865, %v11019
      %11056 = vst.msk [vmem:[%s224 + $0x18] sm:$0xff] %vm5865, %v11021
      %11057 = vst.msk [vmem:[%s224 + $0x20] sm:$0xff] %vm5865, %v11024
      %11058 = vst.msk [vmem:[%s224 + $0x28] sm:$0xff] %vm5865, %v11026
      %11059 = vst.msk [vmem:[%s224 + $0x30] sm:$0xff] %vm5865, %v11029
      %11060 = vst.msk [vmem:[%s224 + $0x38] sm:$0xff] %vm5865, %v11031
      %11061 = vst.msk [vmem:[%s224 + $0x40] sm:$0xff] %vm5865, %v11034
      %11062 = vst.msk [vmem:[%s224 + $0x48] sm:$0xff] %vm5865, %v11036
      %11063 = vst.msk [vmem:[%s224 + $0x50] sm:$0xff] %vm5865, %v11039
      %11064 = vst.msk [vmem:[%s224 + $0x58] sm:$0xff] %vm5865, %v11041
      %11065 = vst.msk [vmem:[%s224 + $0x60] sm:$0xff] %vm5865, %v11044
      %11066 = vst.msk [vmem:[%s224 + $0x68] sm:$0xff] %vm5865, %v11046
      %11067 = vst.msk [vmem:[%s224 + $0x70] sm:$0xff] %vm5865, %v11049
      %11068 = vst.msk [vmem:[%s224 + $0x78] sm:$0xff] %vm5865, %v11051
      %v11069 = vld [vmem:[#allocation5 + $0x140] sm:$0xff]
      %v11070 = vld [vmem:[#allocation5 + $0x148] sm:$0xff]
      %v11071 = vld [vmem:[#allocation5 + $0x150] sm:$0xf]
      %v11072 = vld [vmem:[#allocation5 + $0x154] sm:$0xff]
      %v11073 = vld [vmem:[#allocation5 + $0x15c] sm:$0xff]
      %v11074 = vld [vmem:[#allocation5 + $0x164] sm:$0xf]
      %v11075 = vld [vmem:[#allocation5 + $0x168] sm:$0xff]
      %v11076 = vld [vmem:[#allocation5 + $0x170] sm:$0xff]
      %v11077 = vld [vmem:[#allocation5 + $0x178] sm:$0xf]
      %v11078 = vld [vmem:[#allocation5 + $0x17c] sm:$0xff]
      %v11079 = vld [vmem:[#allocation5 + $0x184] sm:$0xff]
      %v11080 = vld [vmem:[#allocation5 + $0x18c] sm:$0xf]
      %v11081 = vld [vmem:[#allocation5 + $0x190] sm:$0xff]
      %v11082 = vld [vmem:[#allocation5 + $0x198] sm:$0xff]
      %v11083 = vld [vmem:[#allocation5 + $0x1a0] sm:$0xf]
      %v11084 = vld [vmem:[#allocation5 + $0x1a4] sm:$0xff]
      %v11085 = vld [vmem:[#allocation5 + $0x1ac] sm:$0xff]
      %v11086 = vld [vmem:[#allocation5 + $0x1b4] sm:$0xf]
      %v11087 = vld [vmem:[#allocation5 + $0x1b8] sm:$0xff]
      %v11088 = vld [vmem:[#allocation5 + $0x1c0] sm:$0xff]
      %v11089 = vld [vmem:[#allocation5 + $0x1c8] sm:$0xf]
      %v11090 = vld [vmem:[#allocation5 + $0x1cc] sm:$0xff]
      %v11091 = vld [vmem:[#allocation5 + $0x1d4] sm:$0xff]
      %v11092 = vld [vmem:[#allocation5 + $0x1dc] sm:$0xf]
      %v11093 = vld [vmem:[#allocation5 + $0x1e0] sm:$0xff]
      %v11094 = vld [vmem:[#allocation5 + $0x1e8] sm:$0xff]
      %v11095 = vld [vmem:[#allocation5 + $0x1f0] sm:$0xf]
      %v11096 = vld [vmem:[#allocation5 + $0x1f4] sm:$0xff]
      %v11097 = vld [vmem:[#allocation5 + $0x1fc] sm:$0xff]
      %v11098 = vld [vmem:[#allocation5 + $0x204] sm:$0xf]
      %v11099 = vld [vmem:[#allocation5 + $0x208] sm:$0xff]
      %v11100 = vld [vmem:[#allocation5 + $0x210] sm:$0xff]
      %v11101 = vld [vmem:[#allocation5 + $0x218] sm:$0xf]
      %v11102 = vld [vmem:[#allocation5 + $0x21c] sm:$0xff]
      %v11103 = vld [vmem:[#allocation5 + $0x224] sm:$0xff]
      %v11104 = vld [vmem:[#allocation5 + $0x22c] sm:$0xf]
      %v11105 = vld [vmem:[#allocation5 + $0x230] sm:$0xff]
      %v11106 = vld [vmem:[#allocation5 + $0x238] sm:$0xff]
      %v11107 = vld [vmem:[#allocation5 + $0x240] sm:$0xf]
      %v11108 = vld [vmem:[#allocation5 + $0x244] sm:$0xff]
      %v11109 = vld [vmem:[#allocation5 + $0x24c] sm:$0xff]
      %v11110 = vld [vmem:[#allocation5 + $0x254] sm:$0xf]
      %v11111 = vld [vmem:[#allocation5 + $0x258] sm:$0xff]
      %v11112 = vld [vmem:[#allocation5 + $0x260] sm:$0xff]
      %v11113 = vld [vmem:[#allocation5 + $0x268] sm:$0xf]
      %v11114 = vld [vmem:[#allocation5 + $0x26c] sm:$0xff]
      %v11115 = vld [vmem:[#allocation5 + $0x274] sm:$0xff]
      %v11116 = vld [vmem:[#allocation5 + $0x27c] sm:$0xf]
      %v11117 = vld [vmem:[%s3] sm:$0xf]
      %v11118 = vld [vmem:[%s3 + $0x4] sm:$0xf]
      %v11119 = vld [vmem:[%s3 + $0x8] sm:$0xf]
      %v11120 = vld [vmem:[%s3 + $0xc] sm:$0xf]
      %v11121 = vld [vmem:[%s3 + $0x10] sm:$0xf]
      %v11122 = vld [vmem:[%s3 + $0x14] sm:$0xf]
      %v11123 = vld [vmem:[%s3 + $0x18] sm:$0xf]
      %v11124 = vld [vmem:[%s3 + $0x1c] sm:$0xf]
      %v11125 = vld [vmem:[%s3 + $0x20] sm:$0xf]
      %v11126 = vld [vmem:[%s3 + $0x24] sm:$0xf]
      %v11127 = vld [vmem:[%s3 + $0x28] sm:$0xf]
      %v11128 = vld [vmem:[%s3 + $0x2c] sm:$0xf]
      %v11129 = vld [vmem:[%s3 + $0x30] sm:$0xf]
      %v11130 = vld [vmem:[%s3 + $0x34] sm:$0xf]
      %v11131 = vld [vmem:[%s3 + $0x38] sm:$0xf]
      %v11132 = vld [vmem:[%s3 + $0x3c] sm:$0xf]
      %v11133 = vld [vmem:[%s3 + $0x40] sm:$0xf]
      %v11134 = vld [vmem:[%s3 + $0x44] sm:$0xf]
      %v11135 = vld [vmem:[%s3 + $0x48] sm:$0xf]
      %v11136 = vld [vmem:[%s3 + $0x4c] sm:$0xf]
      %v11137 = vld [vmem:[%s3 + $0x50] sm:$0xf]
      %v11138 = vld [vmem:[%s3 + $0x54] sm:$0xf]
      %v11139 = vld [vmem:[%s3 + $0x58] sm:$0xf]
      %v11140 = vld [vmem:[%s3 + $0x5c] sm:$0xf]
      %v11141 = vld [vmem:[%s3 + $0x60] sm:$0xf]
      %v11142 = vld [vmem:[%s3 + $0x64] sm:$0xf]
      %v11143 = vld [vmem:[%s3 + $0x68] sm:$0xf]
      %v11144 = vld [vmem:[%s3 + $0x6c] sm:$0xf]
      %v11145 = vld [vmem:[%s3 + $0x70] sm:$0xf]
      %v11146 = vld [vmem:[%s3 + $0x74] sm:$0xf]
      %v11147 = vld [vmem:[%s3 + $0x78] sm:$0xf]
      %v11148 = vld [vmem:[%s3 + $0x7c] sm:$0xf]
      %v11149 = vld [vmem:[%s3 + $0x80] sm:$0xf]
      %v11150 = vld [vmem:[%s3 + $0x84] sm:$0xf]
      %v11151 = vld [vmem:[%s3 + $0x88] sm:$0xf]
      %v11152 = vld [vmem:[%s3 + $0x8c] sm:$0xf]
      %v11153 = vld [vmem:[%s3 + $0x90] sm:$0xf]
      %v11154 = vld [vmem:[%s3 + $0x94] sm:$0xf]
      %v11155 = vld [vmem:[%s3 + $0x98] sm:$0xf]
      %v11156 = vld [vmem:[%s3 + $0x9c] sm:$0xf]
      %v11157 = vld [vmem:[%s3 + $0xa0] sm:$0xf]
      %v11158 = vld [vmem:[%s3 + $0xa4] sm:$0xf]
      %v11159 = vld [vmem:[%s3 + $0xa8] sm:$0xf]
      %v11160 = vld [vmem:[%s3 + $0xac] sm:$0xf]
      %v11161 = vld [vmem:[%s3 + $0xb0] sm:$0xf]
      %v11162 = vld [vmem:[%s3 + $0xb4] sm:$0xf]
      %v11163 = vld [vmem:[%s3 + $0xb8] sm:$0xf]
      %v11164 = vld [vmem:[%s3 + $0xbc] sm:$0xf]
      %v11165 = vld [vmem:[%s3 + $0xc0] sm:$0xf]
      %v11166 = vld [vmem:[%s3 + $0xc4] sm:$0xf]
      %v11167 = vld [vmem:[%s3 + $0xc8] sm:$0xf]
      %v11168 = vld [vmem:[%s3 + $0xcc] sm:$0xf]
      %v11169 = vld [vmem:[%s3 + $0xd0] sm:$0xf]
      %v11170 = vld [vmem:[%s3 + $0xd4] sm:$0xf]
      %v11171 = vld [vmem:[%s3 + $0xd8] sm:$0xf]
      %v11172 = vld [vmem:[%s3 + $0xdc] sm:$0xf]
      %v11173 = vld [vmem:[%s3 + $0xe0] sm:$0xf]
      %v11174 = vld [vmem:[%s3 + $0xe4] sm:$0xf]
      %v11175 = vld [vmem:[%s3 + $0xe8] sm:$0xf]
      %v11176 = vld [vmem:[%s3 + $0xec] sm:$0xf]
      %v11177 = vld [vmem:[%s3 + $0xf0] sm:$0xf]
      %v11178 = vld [vmem:[%s3 + $0xf4] sm:$0xf]
      %v11179 = vld [vmem:[%s3 + $0xf8] sm:$0xf]
      %v11180 = vld [vmem:[%s3 + $0xfc] sm:$0xf]
      %v11181 = vld [vmem:[%s3 + $0x100] sm:$0xf]
      %v11182 = vld [vmem:[%s3 + $0x104] sm:$0xf]
      %v11183 = vld [vmem:[%s3 + $0x108] sm:$0xf]
      %v11184 = vld [vmem:[%s3 + $0x10c] sm:$0xf]
      %v11185 = vld [vmem:[%s3 + $0x110] sm:$0xf]
      %v11186 = vld [vmem:[%s3 + $0x114] sm:$0xf]
      %v11187 = vld [vmem:[%s3 + $0x118] sm:$0xf]
      %v11188 = vld [vmem:[%s3 + $0x11c] sm:$0xf]
      %v11189 = vld [vmem:[%s4] sm:$0x1]
      %v11191 = vperm.slane %v11189, 0
      %v11241 = vunpack.c.l.b16 %v11069
      %v11242 = vunpack.c.h.b16 %v11069
      %v11243 = vunpack.c.l.b16 %v11070
      %v11244 = vunpack.c.h.b16 %v11070
      %v11245 = vunpack.c.l.b16 %v11071
      %v11246 = vunpack.c.l.b16 %v11072
      %v11247 = vunpack.c.h.b16 %v11072
      %v11248 = vunpack.c.l.b16 %v11073
      %v11249 = vunpack.c.h.b16 %v11073
      %v11250 = vunpack.c.l.b16 %v11074
      %v11251 = vunpack.c.l.b16 %v11075
      %v11252 = vunpack.c.h.b16 %v11075
      %v11253 = vunpack.c.l.b16 %v11076
      %v11254 = vunpack.c.h.b16 %v11076
      %v11255 = vunpack.c.l.b16 %v11077
      %v11256 = vunpack.c.l.b16 %v11078
      %v11257 = vunpack.c.h.b16 %v11078
      %v11258 = vunpack.c.l.b16 %v11079
      %v11259 = vunpack.c.h.b16 %v11079
      %v11260 = vunpack.c.l.b16 %v11080
      %v11261 = vunpack.c.l.b16 %v11081
      %v11262 = vunpack.c.h.b16 %v11081
      %v11263 = vunpack.c.l.b16 %v11082
      %v11264 = vunpack.c.h.b16 %v11082
      %v11265 = vunpack.c.l.b16 %v11083
      %v11266 = vunpack.c.l.b16 %v11084
      %v11267 = vunpack.c.h.b16 %v11084
      %v11268 = vunpack.c.l.b16 %v11085
      %v11269 = vunpack.c.h.b16 %v11085
      %v11270 = vunpack.c.l.b16 %v11086
      %v11271 = vunpack.c.l.b16 %v11087
      %v11272 = vunpack.c.h.b16 %v11087
      %v11273 = vunpack.c.l.b16 %v11088
      %v11274 = vunpack.c.h.b16 %v11088
      %v11275 = vunpack.c.l.b16 %v11089
      %v11276 = vunpack.c.l.b16 %v11090
      %v11277 = vunpack.c.h.b16 %v11090
      %v11278 = vunpack.c.l.b16 %v11091
      %v11279 = vunpack.c.h.b16 %v11091
      %v11280 = vunpack.c.l.b16 %v11092
      %v11281 = vunpack.c.l.b16 %v11093
      %v11282 = vunpack.c.h.b16 %v11093
      %v11283 = vunpack.c.l.b16 %v11094
      %v11284 = vunpack.c.h.b16 %v11094
      %v11285 = vunpack.c.l.b16 %v11095
      %v11286 = vunpack.c.l.b16 %v11096
      %v11287 = vunpack.c.h.b16 %v11096
      %v11288 = vunpack.c.l.b16 %v11097
      %v11289 = vunpack.c.h.b16 %v11097
      %v11290 = vunpack.c.l.b16 %v11098
      %v11291 = vunpack.c.l.b16 %v11099
      %v11292 = vunpack.c.h.b16 %v11099
      %v11293 = vunpack.c.l.b16 %v11100
      %v11294 = vunpack.c.h.b16 %v11100
      %v11295 = vunpack.c.l.b16 %v11101
      %v11296 = vunpack.c.l.b16 %v11102
      %v11297 = vunpack.c.h.b16 %v11102
      %v11298 = vunpack.c.l.b16 %v11103
      %v11299 = vunpack.c.h.b16 %v11103
      %v11300 = vunpack.c.l.b16 %v11104
      %v11301 = vunpack.c.l.b16 %v11105
      %v11302 = vunpack.c.h.b16 %v11105
      %v11303 = vunpack.c.l.b16 %v11106
      %v11304 = vunpack.c.h.b16 %v11106
      %v11305 = vunpack.c.l.b16 %v11107
      %v11306 = vunpack.c.l.b16 %v11108
      %v11307 = vunpack.c.h.b16 %v11108
      %v11308 = vunpack.c.l.b16 %v11109
      %v11309 = vunpack.c.h.b16 %v11109
      %v11310 = vunpack.c.l.b16 %v11110
      %v11311 = vunpack.c.l.b16 %v11111
      %v11312 = vunpack.c.h.b16 %v11111
      %v11313 = vunpack.c.l.b16 %v11112
      %v11314 = vunpack.c.h.b16 %v11112
      %v11315 = vunpack.c.l.b16 %v11113
      %v11316 = vunpack.c.l.b16 %v11114
      %v11317 = vunpack.c.h.b16 %v11114
      %v11318 = vunpack.c.l.b16 %v11115
      %v11319 = vunpack.c.h.b16 %v11115
      %v11320 = vunpack.c.l.b16 %v11116
      %v11321 = vpack.c.b16 %v11246, %v11241
      %v11322 = vpack.c.b16 %v11247, %v11242
      %v11323 = vpack.c.b16 %v11248, %v11243
      %v11324 = vpack.c.b16 %v11249, %v11244
      %v11325 = vpack.c.b16 %v11250, %v11245
      %v11326 = vpack.c.b16 %v11256, %v11251
      %v11327 = vpack.c.b16 %v11257, %v11252
      %v11328 = vpack.c.b16 %v11258, %v11253
      %v11329 = vpack.c.b16 %v11259, %v11254
      %v11330 = vpack.c.b16 %v11260, %v11255
      %v11331 = vpack.c.b16 %v11266, %v11261
      %v11332 = vpack.c.b16 %v11267, %v11262
      %v11333 = vpack.c.b16 %v11268, %v11263
      %v11334 = vpack.c.b16 %v11269, %v11264
      %v11335 = vpack.c.b16 %v11270, %v11265
      %v11336 = vpack.c.b16 %v11276, %v11271
      %v11337 = vpack.c.b16 %v11277, %v11272
      %v11338 = vpack.c.b16 %v11278, %v11273
      %v11339 = vpack.c.b16 %v11279, %v11274
      %v11340 = vpack.c.b16 %v11280, %v11275
      %v11341 = vpack.c.b16 %v11286, %v11281
      %v11342 = vpack.c.b16 %v11287, %v11282
      %v11343 = vpack.c.b16 %v11288, %v11283
      %v11344 = vpack.c.b16 %v11289, %v11284
      %v11345 = vpack.c.b16 %v11290, %v11285
      %v11346 = vpack.c.b16 %v11296, %v11291
      %v11347 = vpack.c.b16 %v11297, %v11292
      %v11348 = vpack.c.b16 %v11298, %v11293
      %v11349 = vpack.c.b16 %v11299, %v11294
      %v11350 = vpack.c.b16 %v11300, %v11295
      %v11351 = vpack.c.b16 %v11306, %v11301
      %v11352 = vpack.c.b16 %v11307, %v11302
      %v11353 = vpack.c.b16 %v11308, %v11303
      %v11354 = vpack.c.b16 %v11309, %v11304
      %v11355 = vpack.c.b16 %v11310, %v11305
      %v11356 = vpack.c.b16 %v11316, %v11311
      %v11357 = vpack.c.b16 %v11317, %v11312
      %v11358 = vpack.c.b16 %v11318, %v11313
      %v11359 = vpack.c.b16 %v11319, %v11314
      %v11360 = vpack.c.b16 %v11320, %v11315
      %v11465 = vunpack.c.l.b16 %v11117
      %v11466 = vunpack.c.l.b16 %v11118
      %v11467 = vunpack.c.l.b16 %v11119
      %v11468 = vunpack.c.l.b16 %v11120
      %v11469 = vunpack.c.l.b16 %v11121
      %v11470 = vunpack.c.l.b16 %v11122
      %v11471 = vunpack.c.l.b16 %v11123
      %v11472 = vunpack.c.l.b16 %v11124
      %v11473 = vunpack.c.l.b16 %v11125
      %v11474 = vunpack.c.l.b16 %v11126
      %v11475 = vunpack.c.l.b16 %v11127
      %v11476 = vunpack.c.l.b16 %v11128
      %v11477 = vunpack.c.l.b16 %v11129
      %v11478 = vunpack.c.l.b16 %v11130
      %v11479 = vunpack.c.l.b16 %v11131
      %v11480 = vunpack.c.l.b16 %v11132
      %v11481 = vunpack.c.l.b16 %v11133
      %v11482 = vunpack.c.l.b16 %v11134
      %v11483 = vunpack.c.l.b16 %v11135
      %v11484 = vunpack.c.l.b16 %v11136
      %v11485 = vunpack.c.l.b16 %v11137
      %v11486 = vunpack.c.l.b16 %v11138
      %v11487 = vunpack.c.l.b16 %v11139
      %v11488 = vunpack.c.l.b16 %v11140
      %v11489 = vunpack.c.l.b16 %v11141
      %v11490 = vunpack.c.l.b16 %v11142
      %v11491 = vunpack.c.l.b16 %v11143
      %v11492 = vunpack.c.l.b16 %v11144
      %v11493 = vunpack.c.l.b16 %v11145
      %v11494 = vunpack.c.l.b16 %v11146
      %v11495 = vunpack.c.l.b16 %v11147
      %v11496 = vunpack.c.l.b16 %v11148
      %v11497 = vunpack.c.l.b16 %v11149
      %v11498 = vunpack.c.l.b16 %v11150
      %v11499 = vunpack.c.l.b16 %v11151
      %v11500 = vunpack.c.l.b16 %v11152
      %v11501 = vunpack.c.l.b16 %v11153
      %v11502 = vunpack.c.l.b16 %v11154
      %v11503 = vunpack.c.l.b16 %v11155
      %v11504 = vunpack.c.l.b16 %v11156
      %v11505 = vunpack.c.l.b16 %v11157
      %v11506 = vunpack.c.l.b16 %v11158
      %v11507 = vunpack.c.l.b16 %v11159
      %v11508 = vunpack.c.l.b16 %v11160
      %v11509 = vunpack.c.l.b16 %v11161
      %v11510 = vunpack.c.l.b16 %v11162
      %v11511 = vunpack.c.l.b16 %v11163
      %v11512 = vunpack.c.l.b16 %v11164
      %v11513 = vunpack.c.l.b16 %v11165
      %v11514 = vunpack.c.l.b16 %v11166
      %v11515 = vunpack.c.l.b16 %v11167
      %v11516 = vunpack.c.l.b16 %v11168
      %v11517 = vunpack.c.l.b16 %v11169
      %v11518 = vunpack.c.l.b16 %v11170
      %v11519 = vunpack.c.l.b16 %v11171
      %v11520 = vunpack.c.l.b16 %v11172
      %v11521 = vunpack.c.l.b16 %v11173
      %v11522 = vunpack.c.l.b16 %v11174
      %v11523 = vunpack.c.l.b16 %v11175
      %v11524 = vunpack.c.l.b16 %v11176
      %v11525 = vunpack.c.l.b16 %v11177
      %v11526 = vunpack.c.l.b16 %v11178
      %v11527 = vunpack.c.l.b16 %v11179
      %v11528 = vunpack.c.l.b16 %v11180
      %v11529 = vunpack.c.l.b16 %v11181
      %v11530 = vunpack.c.l.b16 %v11182
      %v11531 = vunpack.c.l.b16 %v11183
      %v11532 = vunpack.c.l.b16 %v11184
      %v11533 = vunpack.c.l.b16 %v11185
      %v11534 = vunpack.c.l.b16 %v11186
      %v11535 = vunpack.c.l.b16 %v11187
      %v11536 = vunpack.c.l.b16 %v11188
      %v11537 = vpack.c.b16 %v11466, %v11465
      %v11538 = vpack.c.b16 %v11468, %v11467
      %v11539 = vpack.c.b16 %v11470, %v11469
      %v11540 = vpack.c.b16 %v11472, %v11471
      %v11541 = vpack.c.b16 %v11474, %v11473
      %v11542 = vpack.c.b16 %v11476, %v11475
      %v11543 = vpack.c.b16 %v11478, %v11477
      %v11544 = vpack.c.b16 %v11480, %v11479
      %v11545 = vpack.c.b16 %v11482, %v11481
      %v11546 = vpack.c.b16 %v11484, %v11483
      %v11547 = vpack.c.b16 %v11486, %v11485
      %v11548 = vpack.c.b16 %v11488, %v11487
      %v11549 = vpack.c.b16 %v11490, %v11489
      %v11550 = vpack.c.b16 %v11492, %v11491
      %v11551 = vpack.c.b16 %v11494, %v11493
      %v11552 = vpack.c.b16 %v11496, %v11495
      %v11553 = vpack.c.b16 %v11498, %v11497
      %v11554 = vpack.c.b16 %v11500, %v11499
      %v11555 = vpack.c.b16 %v11502, %v11501
      %v11556 = vpack.c.b16 %v11504, %v11503
      %v11557 = vpack.c.b16 %v11506, %v11505
      %v11558 = vpack.c.b16 %v11508, %v11507
      %v11559 = vpack.c.b16 %v11510, %v11509
      %v11560 = vpack.c.b16 %v11512, %v11511
      %v11561 = vpack.c.b16 %v11514, %v11513
      %v11562 = vpack.c.b16 %v11516, %v11515
      %v11563 = vpack.c.b16 %v11518, %v11517
      %v11564 = vpack.c.b16 %v11520, %v11519
      %v11565 = vpack.c.b16 %v11522, %v11521
      %v11566 = vpack.c.b16 %v11524, %v11523
      %v11567 = vpack.c.b16 %v11526, %v11525
      %v11568 = vpack.c.b16 %v11528, %v11527
      %v11569 = vpack.c.b16 %v11530, %v11529
      %v11570 = vpack.c.b16 %v11532, %v11531
      %v11571 = vpack.c.b16 %v11534, %v11533
      %v11572 = vpack.c.b16 %v11536, %v11535
      %v11610 = vsel %vm5865, %v11325, 0
      %v11613 = vsel %vm5865, %v11330, 0
      %v11616 = vsel %vm5865, %v11335, 0
      %v11619 = vsel %vm5865, %v11340, 0
      %v11622 = vsel %vm5865, %v11345, 0
      %v11625 = vsel %vm5865, %v11350, 0
      %v11628 = vsel %vm5865, %v11355, 0
      %v11631 = vsel %vm5865, %v11360, 0
      %11633 = vmatpush.bf16.msra.mxu0 %v11544
      %11634 = vmatpush.bf16.msra.mxu0 %v11543
      %11635 = vmatpush.bf16.msra.mxu0 %v11542
      %11636 = vmatpush.bf16.msra.mxu0 %v11541
      %11637 = vmatpush.bf16.msra.mxu0 %v11540
      %11638 = vmatpush.bf16.msra.mxu0 %v11539
      %11639 = vmatpush.bf16.msra.mxu0 %v11538
      %11640 = vmatpush.bf16.msra.mxu0 %v11537
      %11641 = vmatmul.bf16.gmra.mxu0 %v11321
      %v11642 = vpop.f32.mrf.mxu0
      %v11643 = vadd.f32 %v11191, %v11642
      %v11644 = vpop.f32.mrf.mxu0
      %v11645 = vadd.f32 %v11191, %v11644
      %11646 = vmatmul.bf16.gmra.mxu0 %v11326
      %v11647 = vpop.f32.mrf.mxu0
      %v11648 = vadd.f32 %v11191, %v11647
      %v11649 = vpop.f32.mrf.mxu0
      %v11650 = vadd.f32 %v11191, %v11649
      %11651 = vmatmul.bf16.gmra.mxu0 %v11331
      %v11652 = vpop.f32.mrf.mxu0
      %v11653 = vadd.f32 %v11191, %v11652
      %v11654 = vpop.f32.mrf.mxu0
      %v11655 = vadd.f32 %v11191, %v11654
      %11656 = vmatmul.bf16.gmra.mxu0 %v11336
      %v11657 = vpop.f32.mrf.mxu0
      %v11658 = vadd.f32 %v11191, %v11657
      %v11659 = vpop.f32.mrf.mxu0
      %v11660 = vadd.f32 %v11191, %v11659
      %11661 = vmatmul.bf16.gmra.mxu0 %v11341
      %v11662 = vpop.f32.mrf.mxu0
      %v11663 = vadd.f32 %v11191, %v11662
      %v11664 = vpop.f32.mrf.mxu0
      %v11665 = vadd.f32 %v11191, %v11664
      %11666 = vmatmul.bf16.gmra.mxu0 %v11346
      %v11667 = vpop.f32.mrf.mxu0
      %v11668 = vadd.f32 %v11191, %v11667
      %v11669 = vpop.f32.mrf.mxu0
      %v11670 = vadd.f32 %v11191, %v11669
      %11671 = vmatmul.bf16.gmra.mxu0 %v11351
      %v11672 = vpop.f32.mrf.mxu0
      %v11673 = vadd.f32 %v11191, %v11672
      %v11674 = vpop.f32.mrf.mxu0
      %v11675 = vadd.f32 %v11191, %v11674
      %11676 = vmatmul.bf16.gmra.mxu0 %v11356
      %v11677 = vpop.f32.mrf.mxu0
      %v11678 = vadd.f32 %v11191, %v11677
      %v11679 = vpop.f32.mrf.mxu0
      %v11680 = vadd.f32 %v11191, %v11679
      %11681 = vdwg.mxu0
      %11682 = vmatpush.bf16.msra.mxu0 %v11552
      %11683 = vmatpush.bf16.msra.mxu0 %v11551
      %11684 = vmatpush.bf16.msra.mxu0 %v11550
      %11685 = vmatpush.bf16.msra.mxu0 %v11549
      %11686 = vmatpush.bf16.msra.mxu0 %v11548
      %11687 = vmatpush.bf16.msra.mxu0 %v11547
      %11688 = vmatpush.bf16.msra.mxu0 %v11546
      %11689 = vmatpush.bf16.msra.mxu0 %v11545
      %11690 = vmatmul.bf16.gmra.mxu0 %v11322
      %v11691 = vpop.f32.mrf.mxu0
      %v11692 = vadd.f32 %v11643, %v11691
      %v11693 = vpop.f32.mrf.mxu0
      %v11694 = vadd.f32 %v11645, %v11693
      %11695 = vmatmul.bf16.gmra.mxu0 %v11327
      %v11696 = vpop.f32.mrf.mxu0
      %v11697 = vadd.f32 %v11648, %v11696
      %v11698 = vpop.f32.mrf.mxu0
      %v11699 = vadd.f32 %v11650, %v11698
      %11700 = vmatmul.bf16.gmra.mxu0 %v11332
      %v11701 = vpop.f32.mrf.mxu0
      %v11702 = vadd.f32 %v11653, %v11701
      %v11703 = vpop.f32.mrf.mxu0
      %v11704 = vadd.f32 %v11655, %v11703
      %11705 = vmatmul.bf16.gmra.mxu0 %v11337
      %v11706 = vpop.f32.mrf.mxu0
      %v11707 = vadd.f32 %v11658, %v11706
      %v11708 = vpop.f32.mrf.mxu0
      %v11709 = vadd.f32 %v11660, %v11708
      %11710 = vmatmul.bf16.gmra.mxu0 %v11342
      %v11711 = vpop.f32.mrf.mxu0
      %v11712 = vadd.f32 %v11663, %v11711
      %v11713 = vpop.f32.mrf.mxu0
      %v11714 = vadd.f32 %v11665, %v11713
      %11715 = vmatmul.bf16.gmra.mxu0 %v11347
      %v11716 = vpop.f32.mrf.mxu0
      %v11717 = vadd.f32 %v11668, %v11716
      %v11718 = vpop.f32.mrf.mxu0
      %v11719 = vadd.f32 %v11670, %v11718
      %11720 = vmatmul.bf16.gmra.mxu0 %v11352
      %v11721 = vpop.f32.mrf.mxu0
      %v11722 = vadd.f32 %v11673, %v11721
      %v11723 = vpop.f32.mrf.mxu0
      %v11724 = vadd.f32 %v11675, %v11723
      %11725 = vmatmul.bf16.gmra.mxu0 %v11357
      %v11726 = vpop.f32.mrf.mxu0
      %v11727 = vadd.f32 %v11678, %v11726
      %v11728 = vpop.f32.mrf.mxu0
      %v11729 = vadd.f32 %v11680, %v11728
      %11730 = vdwg.mxu0
      %11731 = vmatpush.bf16.msra.mxu0 %v11560
      %11732 = vmatpush.bf16.msra.mxu0 %v11559
      %11733 = vmatpush.bf16.msra.mxu0 %v11558
      %11734 = vmatpush.bf16.msra.mxu0 %v11557
      %11735 = vmatpush.bf16.msra.mxu0 %v11556
      %11736 = vmatpush.bf16.msra.mxu0 %v11555
      %11737 = vmatpush.bf16.msra.mxu0 %v11554
      %11738 = vmatpush.bf16.msra.mxu0 %v11553
      %11739 = vmatmul.bf16.gmra.mxu0 %v11323
      %v11740 = vpop.f32.mrf.mxu0
      %v11741 = vadd.f32 %v11692, %v11740
      %v11742 = vpop.f32.mrf.mxu0
      %v11743 = vadd.f32 %v11694, %v11742
      %11744 = vmatmul.bf16.gmra.mxu0 %v11328
      %v11745 = vpop.f32.mrf.mxu0
      %v11746 = vadd.f32 %v11697, %v11745
      %v11747 = vpop.f32.mrf.mxu0
      %v11748 = vadd.f32 %v11699, %v11747
      %11749 = vmatmul.bf16.gmra.mxu0 %v11333
      %v11750 = vpop.f32.mrf.mxu0
      %v11751 = vadd.f32 %v11702, %v11750
      %v11752 = vpop.f32.mrf.mxu0
      %v11753 = vadd.f32 %v11704, %v11752
      %11754 = vmatmul.bf16.gmra.mxu0 %v11338
      %v11755 = vpop.f32.mrf.mxu0
      %v11756 = vadd.f32 %v11707, %v11755
      %v11757 = vpop.f32.mrf.mxu0
      %v11758 = vadd.f32 %v11709, %v11757
      %11759 = vmatmul.bf16.gmra.mxu0 %v11343
      %v11760 = vpop.f32.mrf.mxu0
      %v11761 = vadd.f32 %v11712, %v11760
      %v11762 = vpop.f32.mrf.mxu0
      %v11763 = vadd.f32 %v11714, %v11762
      %11764 = vmatmul.bf16.gmra.mxu0 %v11348
      %v11765 = vpop.f32.mrf.mxu0
      %v11766 = vadd.f32 %v11717, %v11765
      %v11767 = vpop.f32.mrf.mxu0
      %v11768 = vadd.f32 %v11719, %v11767
      %11769 = vmatmul.bf16.gmra.mxu0 %v11353
      %v11770 = vpop.f32.mrf.mxu0
      %v11771 = vadd.f32 %v11722, %v11770
      %v11772 = vpop.f32.mrf.mxu0
      %v11773 = vadd.f32 %v11724, %v11772
      %11774 = vmatmul.bf16.gmra.mxu0 %v11358
      %v11775 = vpop.f32.mrf.mxu0
      %v11776 = vadd.f32 %v11727, %v11775
      %v11777 = vpop.f32.mrf.mxu0
      %v11778 = vadd.f32 %v11729, %v11777
      %11779 = vdwg.mxu0
      %11780 = vmatpush.bf16.msra.mxu0 %v11568
      %11781 = vmatpush.bf16.msra.mxu0 %v11567
      %11782 = vmatpush.bf16.msra.mxu0 %v11566
      %11783 = vmatpush.bf16.msra.mxu0 %v11565
      %11784 = vmatpush.bf16.msra.mxu0 %v11564
      %11785 = vmatpush.bf16.msra.mxu0 %v11563
      %11786 = vmatpush.bf16.msra.mxu0 %v11562
      %11787 = vmatpush.bf16.msra.mxu0 %v11561
      %11788 = vmatmul.bf16.gmra.mxu0 %v11324
      %v11789 = vpop.f32.mrf.mxu0
      %v11790 = vadd.f32 %v11741, %v11789
      %v11791 = vpop.f32.mrf.mxu0
      %v11792 = vadd.f32 %v11743, %v11791
      %11793 = vmatmul.bf16.gmra.mxu0 %v11329
      %v11794 = vpop.f32.mrf.mxu0
      %v11795 = vadd.f32 %v11746, %v11794
      %v11796 = vpop.f32.mrf.mxu0
      %v11797 = vadd.f32 %v11748, %v11796
      %11798 = vmatmul.bf16.gmra.mxu0 %v11334
      %v11799 = vpop.f32.mrf.mxu0
      %v11800 = vadd.f32 %v11751, %v11799
      %v11801 = vpop.f32.mrf.mxu0
      %v11802 = vadd.f32 %v11753, %v11801
      %11803 = vmatmul.bf16.gmra.mxu0 %v11339
      %v11804 = vpop.f32.mrf.mxu0
      %v11805 = vadd.f32 %v11756, %v11804
      %v11806 = vpop.f32.mrf.mxu0
      %v11807 = vadd.f32 %v11758, %v11806
      %11808 = vmatmul.bf16.gmra.mxu0 %v11344
      %v11809 = vpop.f32.mrf.mxu0
      %v11810 = vadd.f32 %v11761, %v11809
      %v11811 = vpop.f32.mrf.mxu0
      %v11812 = vadd.f32 %v11763, %v11811
      %11813 = vmatmul.bf16.gmra.mxu0 %v11349
      %v11814 = vpop.f32.mrf.mxu0
      %v11815 = vadd.f32 %v11766, %v11814
      %v11816 = vpop.f32.mrf.mxu0
      %v11817 = vadd.f32 %v11768, %v11816
      %11818 = vmatmul.bf16.gmra.mxu0 %v11354
      %v11819 = vpop.f32.mrf.mxu0
      %v11820 = vadd.f32 %v11771, %v11819
      %v11821 = vpop.f32.mrf.mxu0
      %v11822 = vadd.f32 %v11773, %v11821
      %11823 = vmatmul.bf16.gmra.mxu0 %v11359
      %v11824 = vpop.f32.mrf.mxu0
      %v11825 = vadd.f32 %v11776, %v11824
      %v11826 = vpop.f32.mrf.mxu0
      %v11827 = vadd.f32 %v11778, %v11826
      %11828 = vdwg.mxu0
      %11829 = vmatpush.bf16.msra.mxu0 0
      %11830 = vmatpush.bf16.msra.mxu0 0
      %11831 = vmatpush.bf16.msra.mxu0 0
      %11832 = vmatpush.bf16.msra.mxu0 0
      %11833 = vmatpush.bf16.msra.mxu0 %v11572
      %11834 = vmatpush.bf16.msra.mxu0 %v11571
      %11835 = vmatpush.bf16.msra.mxu0 %v11570
      %11836 = vmatpush.bf16.msra.mxu0 %v11569
      %11837 = vmatmul.bf16.gmra.mxu0 %v11610
      %v11838 = vpop.f32.mrf.mxu0
      %v11839 = vadd.f32 %v11790, %v11838
      %v11840 = vpop.f32.mrf.mxu0
      %v11841 = vadd.f32 %v11792, %v11840
      %11842 = vmatmul.bf16.gmra.mxu0 %v11613
      %v11843 = vpop.f32.mrf.mxu0
      %v11844 = vadd.f32 %v11795, %v11843
      %v11845 = vpop.f32.mrf.mxu0
      %v11846 = vadd.f32 %v11797, %v11845
      %11847 = vmatmul.bf16.gmra.mxu0 %v11616
      %v11848 = vpop.f32.mrf.mxu0
      %v11849 = vadd.f32 %v11800, %v11848
      %v11850 = vpop.f32.mrf.mxu0
      %v11851 = vadd.f32 %v11802, %v11850
      %11852 = vmatmul.bf16.gmra.mxu0 %v11619
      %v11853 = vpop.f32.mrf.mxu0
      %v11854 = vadd.f32 %v11805, %v11853
      %v11855 = vpop.f32.mrf.mxu0
      %v11856 = vadd.f32 %v11807, %v11855
      %11857 = vmatmul.bf16.gmra.mxu0 %v11622
      %v11858 = vpop.f32.mrf.mxu0
      %v11859 = vadd.f32 %v11810, %v11858
      %v11860 = vpop.f32.mrf.mxu0
      %v11861 = vadd.f32 %v11812, %v11860
      %11862 = vmatmul.bf16.gmra.mxu0 %v11625
      %v11863 = vpop.f32.mrf.mxu0
      %v11864 = vadd.f32 %v11815, %v11863
      %v11865 = vpop.f32.mrf.mxu0
      %v11866 = vadd.f32 %v11817, %v11865
      %11867 = vmatmul.bf16.gmra.mxu0 %v11628
      %v11868 = vpop.f32.mrf.mxu0
      %v11869 = vadd.f32 %v11820, %v11868
      %v11870 = vpop.f32.mrf.mxu0
      %v11871 = vadd.f32 %v11822, %v11870
      %11872 = vmatmul.bf16.gmra.mxu0 %v11631
      %v11873 = vpop.f32.mrf.mxu0
      %v11874 = vadd.f32 %v11825, %v11873
      %v11875 = vpop.f32.mrf.mxu0
      %v11876 = vadd.f32 %v11827, %v11875
      %11877 = vdwg.mxu0
      %11894 = vrot.lane.b32.xlu0 %v11839, 64
      %v11895 = vpop.permute.xlu0 %11894
      %11896 = vrot.lane.b32.xlu0 %v11841, 64
      %v11897 = vpop.permute.xlu0 %11896
      %11898 = vrot.lane.b32.xlu0 %v11844, 64
      %v11899 = vpop.permute.xlu0 %11898
      %11900 = vrot.lane.b32.xlu0 %v11846, 64
      %v11901 = vpop.permute.xlu0 %11900
      %11902 = vrot.lane.b32.xlu0 %v11849, 64
      %v11903 = vpop.permute.xlu0 %11902
      %11904 = vrot.lane.b32.xlu0 %v11851, 64
      %v11905 = vpop.permute.xlu0 %11904
      %11906 = vrot.lane.b32.xlu0 %v11854, 64
      %v11907 = vpop.permute.xlu0 %11906
      %11908 = vrot.lane.b32.xlu0 %v11856, 64
      %v11909 = vpop.permute.xlu0 %11908
      %11910 = vrot.lane.b32.xlu0 %v11859, 64
      %v11911 = vpop.permute.xlu0 %11910
      %11912 = vrot.lane.b32.xlu0 %v11861, 64
      %v11913 = vpop.permute.xlu0 %11912
      %11914 = vrot.lane.b32.xlu0 %v11864, 64
      %v11915 = vpop.permute.xlu0 %11914
      %11916 = vrot.lane.b32.xlu0 %v11866, 64
      %v11917 = vpop.permute.xlu0 %11916
      %11918 = vrot.lane.b32.xlu0 %v11869, 64
      %v11919 = vpop.permute.xlu0 %11918
      %11920 = vrot.lane.b32.xlu0 %v11871, 64
      %v11921 = vpop.permute.xlu0 %11920
      %11922 = vrot.lane.b32.xlu0 %v11874, 64
      %v11923 = vpop.permute.xlu0 %11922
      %11924 = vrot.lane.b32.xlu0 %v11876, 64
      %v11925 = vpop.permute.xlu0 %11924
      %vm11942 = vcmask 1048064
      %11943 = vst.msk [vmem:[%s224] sm:$0xff] %vm11942, %v11895
      %11944 = vst.msk [vmem:[%s224 + $0x8] sm:$0xff] %vm11942, %v11897
      %11945 = vst.msk [vmem:[%s224 + $0x10] sm:$0xff] %vm11942, %v11899
      %11946 = vst.msk [vmem:[%s224 + $0x18] sm:$0xff] %vm11942, %v11901
      %11947 = vst.msk [vmem:[%s224 + $0x20] sm:$0xff] %vm11942, %v11903
      %11948 = vst.msk [vmem:[%s224 + $0x28] sm:$0xff] %vm11942, %v11905
      %11949 = vst.msk [vmem:[%s224 + $0x30] sm:$0xff] %vm11942, %v11907
      %11950 = vst.msk [vmem:[%s224 + $0x38] sm:$0xff] %vm11942, %v11909
      %11951 = vst.msk [vmem:[%s224 + $0x40] sm:$0xff] %vm11942, %v11911
      %11952 = vst.msk [vmem:[%s224 + $0x48] sm:$0xff] %vm11942, %v11913
      %11953 = vst.msk [vmem:[%s224 + $0x50] sm:$0xff] %vm11942, %v11915
      %11954 = vst.msk [vmem:[%s224 + $0x58] sm:$0xff] %vm11942, %v11917
      %11955 = vst.msk [vmem:[%s224 + $0x60] sm:$0xff] %vm11942, %v11919
      %11956 = vst.msk [vmem:[%s224 + $0x68] sm:$0xff] %vm11942, %v11921
      %11957 = vst.msk [vmem:[%s224 + $0x70] sm:$0xff] %vm11942, %v11923
      %11958 = vst.msk [vmem:[%s224 + $0x78] sm:$0xff] %vm11942, %v11925
      %p11959 = scmp.lt.s32.totalorder %s16, 1
      %s11960 = scalar_select %p11959, %s16, 1
      %s11961 = smul.addr %s11960, 16
      %s11962 = smul.addr %s11961, 8
      %s11963 = scalar_lea.vmem %s5, %s11962
      // Predicated region
      $region41: #{en_layer.1} parent=39 // pred_check
        %p11964 = pneg %p144
      $region42: #{en_layer.1} parent=39 // pred_check_branch
        %11966 = sbr.rel (%p11964) target = $region44
      $region43: #{en_layer.1} parent=39 // pred_region
        _
      $region44: #{en_layer.1} parent=39 // pred_fallthru
        _
    $region40: #{en_layer.1} parent=5 // pred_fallthru
      _
    %p11967 = scmp.le.s32.totalorder 2, %s11
    // Predicated region
    $region45: #{en_layer.1} parent=5 // pred_check
      %p11968 = pneg %p11967
    $region46: #{en_layer.1} parent=5 // pred_check_branch
      %11970 = sbr.rel (%p11968) target = $region48
    $region47: #{en_layer.1} parent=5 // pred_region
      %s11971 = ssub.s32 %s11, 2
      // Predicated region
      $region49: #{en_layer.1} parent=47 // pred_check
        %p11972 = pneg %p150
      $region50: #{en_layer.1} parent=47 // pred_check_branch
        %11974 = sbr.rel (%p11972) target = $region52
      $region51: #{en_layer.1} parent=47 // pred_region
        %p11975 = scmp.lt.s32.totalorder %s17, 1
        %s11976 = scalar_select %p11975, %s17, 1
        %s11977 = smul.addr %s11976, 16
        %s11978 = smul.addr %s11977, 8
        %s11979 = scalar_lea.vmem %s5, %s11978
      $region52: #{en_layer.1} parent=47 // pred_fallthru
        _
    $region48: #{en_layer.1} parent=5 // pred_fallthru
      _
  $region6: #{en_layer.1} parent=0 // loop_footer
    %s15 = sadd.s32 1, %s11
  $region7: #{en_layer.1} parent=0 // loop_footer_branch
    %10 = sbr.rel target = $region3
  $region8: #{en_layer.1} parent=0 // loop_exit
    _

</llo_original>
